<compile_context>
chip_gen: v7x
topology: tpu7x:2x2x1
jax: 0.10.0
libtpu: 0.0.40
codegen_flags: <defaults>
</compile_context>

<pallas_src>
import jax
import jax.numpy as jnp
import numpy as np
from jax.experimental import pallas as pl
from jax.experimental.pallas import tpu as pltpu


# Packed-lane layouts (host-side weight construction must match the kernel):
#   conv1 output lane = (x % 2) * 512 + (x // 2) * 32 + c   (x in 0..27 -> 1024 lanes)
#   conv2 output lane = (x % 2) * 256 + (x // 2) * 32 + c   (x in 0..15 -> 512 lanes)
# so the 2x2 pool along x is simply max(lanes[:half], lanes[half:]).


def _lenet_kernel(x_ref, w1_ref, b1_ref, w2_ref, b2_ref,
                  fc1_ref, fc1b_ref, fc2_ref, fc2b_ref,
                  o_ref, h1p_ref):
    # x_ref   : (bt, 30, 30)   zero-padded 28x28 input (Cin=1 squeezed)
    # w1_ref  : (3, 30, 1024)  conv1 banded weights, one slab per ky
    # b1_ref  : (1, 1024)      conv1 bias tiled over packed x positions
    # w2_ref  : (3, 512, 512)  conv2 banded weights, one slab per ky
    # b2_ref  : (1, 512)
    # fc1_ref : (1792, 128)    fc1 W^T, rows in packed pool2 order, cols 100->128 padded
    # fc1b_ref: (1, 128)
    # fc2_ref : (128, 128)     fc2 W^T, rows 100->128 padded, cols 10->128 padded
    # fc2b_ref: (1, 128)
    # o_ref   : (bt, 128)      lane-dense logits (cols 10..127 are zero)
    # h1p_ref : (bt, 16, 512)  VMEM scratch: y-zero-bordered pooled conv1 output
    bt = x_ref.shape[0]
    f32 = jnp.float32
    xp = x_ref[...]                                            # (bt, 30, 30)

    # ---- conv1: three row-shifted banded MXU matmuls (K=30, N=1024) ---------
    acc1 = jnp.dot(xp[:, 0:28, :].reshape(bt * 28, 30), w1_ref[0],
                   preferred_element_type=f32)
    acc1 += jnp.dot(xp[:, 1:29, :].reshape(bt * 28, 30), w1_ref[1],
                    preferred_element_type=f32)
    acc1 += jnp.dot(xp[:, 2:30, :].reshape(bt * 28, 30), w1_ref[2],
                    preferred_element_type=f32)
    h1 = jnp.maximum(acc1 + b1_ref[...], 0.0)                  # (bt*28, 1024)

    # ---- maxpool1: adjacent row pairs, then the two 512-lane halves ---------
    p1y = jnp.max(h1.reshape(bt, 14, 2, 1024), axis=2)         # (bt, 14, 1024)
    p1 = jnp.maximum(p1y[:, :, :512], p1y[:, :, 512:])         # (bt, 14, 512)

    # ---- stage pooled conv1 output with a zero y-border (rows 0 and 15) -----
    # Border rows are rewritten every step (cheap, ~2/16 of the scratch) so the
    # kernel is correct even when the parallel axis is sharded across cores.
    zrow = jnp.zeros((bt, 1, 512), f32)
    h1p_ref[:, 0:1, :] = zrow
    h1p_ref[:, 15:16, :] = zrow
    h1p_ref[:, 1:15, :] = p1

    # ---- conv2: three row-shifted banded MXU matmuls (K=512, N=512) ---------
    acc2 = jnp.dot(h1p_ref[:, 0:14, :].reshape(bt * 14, 512), w2_ref[0],
                   preferred_element_type=f32)
    acc2 += jnp.dot(h1p_ref[:, 1:15, :].reshape(bt * 14, 512), w2_ref[1],
                    preferred_element_type=f32)
    acc2 += jnp.dot(h1p_ref[:, 2:16, :].reshape(bt * 14, 512), w2_ref[2],
                    preferred_element_type=f32)
    h2 = jnp.maximum(acc2 + b2_ref[...], 0.0)                  # (bt*14, 512)

    # ---- maxpool2 (x padded to 16 -> 8 pooled cols; extra pair is all-zero) --
    p2y = jnp.max(h2.reshape(bt, 7, 2, 512), axis=2)           # (bt, 7, 512)
    p2 = jnp.maximum(p2y[:, :, :256], p2y[:, :, 256:])         # (bt, 7, 256)
    feat = p2.reshape(bt, 7 * 256)                             # (bt, 1792)

    # ---- fc1 + ReLU, fc2 (both lane-padded to 128 outputs) ------------------
    h = jnp.dot(feat, fc1_ref[...], preferred_element_type=f32) + fc1b_ref[...]
    h = jnp.maximum(h, 0.0)                                    # (bt, 128)
    logits = jnp.dot(h, fc2_ref[...], preferred_element_type=f32) + fc2b_ref[...]
    o_ref[...] = logits.astype(o_ref.dtype)                    # (bt, 128)


def _pick_batch_tile(batch, max_tile=32):
    """Full batch as one tile if small (grid=1, block == full dims).  Otherwise
    bt=32 (multiple of 8, decent MXU M-fill) with the batch padded up to a
    multiple of 32; grid>1 then shards across v7x's two TensorCores via the
    "parallel" dimension semantics while keeping per-core M >= 32."""
    if batch <= max_tile:
        return batch, 1
    grid = -(-batch // max_tile)
    return max_tile, grid


@jax.jit
def lenet_forward(params, x_nchw):
    B, C, H, W = x_nchw.shape
    assert (C, H, W) == (1, 28, 28), "LeNet spec requires (B, 1, 28, 28) input"
    bt, grid = _pick_batch_tile(B)
    b_pad = bt * grid

    # Squeeze the single channel, zero-pad spatially, pad the batch to b_pad.
    x = x_nchw.reshape(B, 28, 28).astype(jnp.float32)
    x = jnp.pad(x, ((0, b_pad - B), (1, 1), (1, 1)))           # (b_pad, 30, 30)

    out = pl.pallas_call(
        _lenet_kernel,
        out_shape=jax.ShapeDtypeStruct((b_pad, 128), jnp.float32),
        grid_spec=pltpu.PrefetchScalarGridSpec(
            num_scalar_prefetch=0,
            grid=(grid,),
            in_specs=[
                pl.BlockSpec((bt, 30, 30), lambda i: (i, 0, 0)),   # input tile
                pl.BlockSpec((3, 30, 1024), lambda i: (0, 0, 0)),  # conv1 W (resident)
                pl.BlockSpec((1, 1024), lambda i: (0, 0)),         # conv1 bias (tiled)
                pl.BlockSpec((3, 512, 512), lambda i: (0, 0, 0)),  # conv2 W (resident)
                pl.BlockSpec((1, 512), lambda i: (0, 0)),          # conv2 bias (tiled)
                pl.BlockSpec((1792, 128), lambda i: (0, 0)),       # fc1 W^T packed/padded
                pl.BlockSpec((1, 128), lambda i: (0, 0)),          # fc1 bias (padded)
                pl.BlockSpec((128, 128), lambda i: (0, 0)),        # fc2 W^T (padded)
                pl.BlockSpec((1, 128), lambda i: (0, 0)),          # fc2 bias (padded)
            ],
            out_specs=pl.BlockSpec((bt, 128), lambda i: (i, 0)),
            scratch_shapes=[pltpu.VMEM((bt, 16, 512), jnp.float32)],
        ),
        compiler_params=pltpu.CompilerParams(
            dimension_semantics=("parallel",),
            vmem_limit_bytes=50 * 1024 * 1024),
    )(x, params["w1"], params["b1"], params["w2"], params["b2"],
      params["fc1"], params["fc1b"], params["fc2"], params["fc2b"])
    return out[:B, :10]


# ----------------------------------------------------------------------------
# Parameters (PyTorch layout) and their kernel-side re-layout.
# ----------------------------------------------------------------------------
def init_torch_params(key):
    ks = jax.random.split(key, 8)
    s = 0.05
    return dict(
        conv1_w=jax.random.normal(ks[0], (32, 1, 3, 3), jnp.float32) * s,
        conv1_b=jax.random.normal(ks[1], (32,), jnp.float32) * s,
        conv2_w=jax.random.normal(ks[2], (32, 32, 3, 3), jnp.float32) * s,
        conv2_b=jax.random.normal(ks[3], (32,), jnp.float32) * s,
        fc1_w=jax.random.normal(ks[4], (100, 32 * 7 * 7), jnp.float32) * s,
        fc1_b=jax.random.normal(ks[5], (100,), jnp.float32) * s,
        fc2_w=jax.random.normal(ks[6], (10, 100), jnp.float32) * s,
        fc2_b=jax.random.normal(ks[7], (10,), jnp.float32) * s,
    )


def prepare_kernel_params(tp):
    """Repack PyTorch-layout weights into the kernel's banded / packed-lane
    matrices (host-side, one-time)."""
    c1w = np.asarray(tp["conv1_w"], np.float32)   # (32, 1, 3, 3)
    c1b = np.asarray(tp["conv1_b"], np.float32)
    c2w = np.asarray(tp["conv2_w"], np.float32)   # (32, 32, 3, 3)
    c2b = np.asarray(tp["conv2_b"], np.float32)
    f1w = np.asarray(tp["fc1_w"], np.float32)     # (100, 1568)
    f1b = np.asarray(tp["fc1_b"], np.float32)
    f2w = np.asarray(tp["fc2_w"], np.float32)     # (10, 100)
    f2b = np.asarray(tp["fc2_b"], np.float32)

    # conv1 banded weights: out[b, y, lane1(x,c)] = sum_ky xpad[b, y+ky, :] @ w1[ky]
    #   lane1(x, c) = (x % 2)*512 + (x // 2)*32 + c    (x = output column 0..27)
    w1 = np.zeros((3, 30, 1024), np.float32)
    b1 = np.zeros((1, 1024), np.float32)
    for x in range(28):
        lo = (x % 2) * 512 + (x // 2) * 32
        b1[0, lo:lo + 32] = c1b
        for ky in range(3):
            for kx in range(3):
                w1[ky, x + kx, lo:lo + 32] = c1w[:, 0, ky, kx]

    # conv2 banded weights: pool1 lanes = m*32 + ci (m = 0..13);
    #   lane2(x, co) = (x % 2)*256 + (x // 2)*32 + co  (x = 0..13; 14,15 zero pad)
    w2 = np.zeros((3, 512, 512), np.float32)
    b2 = np.zeros((1, 512), np.float32)
    for x in range(14):
        lo = (x % 2) * 256 + (x // 2) * 32
        b2[0, lo:lo + 32] = c2b
        for ky in range(3):
            for kx in range(3):
                mi = x - 1 + kx
                if 0 <= mi < 14:
                    # rows mi*32 + ci, cols lo + co  <-  w[co, ci, ky, kx]
                    w2[ky, mi * 32:(mi + 1) * 32, lo:lo + 32] = c2w[:, :, ky, kx].T

    # fc1: kernel feature index = j*256 + m*32 + c (m=7 slot is the pool-2 zero
    # padding); PyTorch flatten index = c*49 + j*7 + m.  Pad 100 -> 128 outputs.
    t = f1w.T.reshape(32, 7, 7, 100).transpose(1, 2, 0, 3)     # (j, m, c, 100)
    fc1 = np.zeros((7, 8, 32, 128), np.float32)
    fc1[:, :7, :, :100] = t
    fc1 = fc1.reshape(1792, 128)
    fc1b = np.zeros((1, 128), np.float32)
    fc1b[0, :100] = f1b

    # fc2: pad 100 -> 128 input rows (zeros) and 10 -> 128 output cols (zeros).
    fc2 = np.zeros((128, 128), np.float32)
    fc2[:100, :10] = f2w.T
    fc2b = np.zeros((1, 128), np.float32)
    fc2b[0, :10] = f2b

    packed = dict(w1=w1, b1=b1, w2=w2, b2=b2,
                  fc1=fc1, fc1b=fc1b, fc2=fc2, fc2b=fc2b)
    return {k: jnp.asarray(v) for k, v in packed.items()}


# ----------------------------------------------------------------------------
# Pure-JAX reference (PyTorch semantics) for correctness checking.
# ----------------------------------------------------------------------------
def lenet_reference(tp, x_nchw):
    hp = jax.lax.Precision.HIGHEST

    def conv(x, w, b):
        y = jax.lax.conv_general_dilated(
            x, w, window_strides=(1, 1), padding=((1, 1), (1, 1)),
            dimension_numbers=("NCHW", "OIHW", "NCHW"), precision=hp)
        return y + b[None, :, None, None]

    def pool(x):
        return jax.lax.reduce_window(x, -jnp.inf, jax.lax.max,
                                     (1, 1, 2, 2), (1, 1, 2, 2), "VALID")

    h = pool(jnp.maximum(conv(x_nchw, tp["conv1_w"], tp["conv1_b"]), 0.0))
    h = pool(jnp.maximum(conv(h, tp["conv2_w"], tp["conv2_b"]), 0.0))
    feat = h.reshape(x_nchw.shape[0], -1)                      # NCHW flatten
    h = jnp.maximum(jnp.dot(feat, tp["fc1_w"].T, precision=hp) + tp["fc1_b"], 0.0)
    return jnp.dot(h, tp["fc2_w"].T, precision=hp) + tp["fc2_b"]


if __name__ == "__main__":
    key = jax.random.PRNGKey(0)
    k_param, k_x = jax.random.split(key)
    torch_params = init_torch_params(k_param)
    params = prepare_kernel_params(torch_params)

    # batch=2, 1 channel, 28x28 (spatial size dictated by Linear(32*7*7, 100))
    x = jax.random.normal(k_x, (2, 1, 28, 28), jnp.float32)

    out = lenet_forward(params, x)
    jax.block_until_ready(out)
    assert out.shape == (2, 10) and out.dtype == jnp.float32

    ref = lenet_reference(torch_params, x)
    max_err = float(jnp.max(jnp.abs(out - ref)))
    assert jnp.allclose(out, ref, atol=2e-3, rtol=1e-2), f"max_err={max_err}"
    print("KERNEL_OK")
</pallas_src>

<mosaic_0001>
module attributes {stable_mosaic.version = 11 : i64} {
  func.func @_lenet_kernel(%arg0: i32, %arg1: memref<2x30x30xf32, #tpu.memory_space<vmem>>, %arg2: memref<3x30x1024xf32, #tpu.memory_space<vmem>>, %arg3: memref<1x1024xf32, #tpu.memory_space<vmem>>, %arg4: memref<3x512x512xf32, #tpu.memory_space<vmem>>, %arg5: memref<1x512xf32, #tpu.memory_space<vmem>>, %arg6: memref<1792x128xf32, #tpu.memory_space<vmem>>, %arg7: memref<1x128xf32, #tpu.memory_space<vmem>>, %arg8: memref<128x128xf32, #tpu.memory_space<vmem>>, %arg9: memref<1x128xf32, #tpu.memory_space<vmem>>, %arg10: memref<2x128xf32, #tpu.memory_space<vmem>>, %arg11: memref<2x16x512xf32, #tpu.memory_space<vmem>>) attributes {dimension_semantics = [#tpu.dimension_semantics<parallel>], iteration_bounds = array<i64: 1>, scalar_prefetch = 0 : i64, scratch_operands = 1 : i64, tpu.core_type = #tpu.core_type<tc>, window_params = [{transform_indices = @transform_0, window_bounds = array<i64: 2, 30, 30>}, {pipeline_mode = #tpu.pipeline_mode<synchronous>, transform_indices = @transform_1, window_bounds = array<i64: 3, 30, 1024>}, {pipeline_mode = #tpu.pipeline_mode<synchronous>, transform_indices = @transform_2, window_bounds = array<i64: 1, 1024>}, {pipeline_mode = #tpu.pipeline_mode<synchronous>, transform_indices = @transform_3, window_bounds = array<i64: 3, 512, 512>}, {pipeline_mode = #tpu.pipeline_mode<synchronous>, transform_indices = @transform_4, window_bounds = array<i64: 1, 512>}, {pipeline_mode = #tpu.pipeline_mode<synchronous>, transform_indices = @transform_5, window_bounds = array<i64: 1792, 128>}, {pipeline_mode = #tpu.pipeline_mode<synchronous>, transform_indices = @transform_6, window_bounds = array<i64: 1, 128>}, {pipeline_mode = #tpu.pipeline_mode<synchronous>, transform_indices = @transform_7, window_bounds = array<i64: 128, 128>}, {pipeline_mode = #tpu.pipeline_mode<synchronous>, transform_indices = @transform_8, window_bounds = array<i64: 1, 128>}, {transform_indices = @transform_9, window_bounds = array<i64: 2, 128>}]} {
    %c0 = arith.constant 0 : index
    %c0_0 = arith.constant 0 : index
    %c0_1 = arith.constant 0 : index
    %0 = vector.load %arg1[%c0, %c0_0, %c0_1] : memref<2x30x30xf32, #tpu.memory_space<vmem>>, vector<2x30x30xf32>
    %1 = vector.extract_strided_slice %0 {offsets = [0, 0, 0], sizes = [2, 28, 30], strides = [1, 1, 1]} : vector<2x30x30xf32> to vector<2x28x30xf32>
    %2 = vector.shape_cast %1 : vector<2x28x30xf32> to vector<56x30xf32>
    %c0_2 = arith.constant 0 : index
    %c0_3 = arith.constant 0 : index
    %c0_4 = arith.constant 0 : index
    %3 = vector.load %arg2[%c0_2, %c0_3, %c0_4] : memref<3x30x1024xf32, #tpu.memory_space<vmem>>, vector<1x30x1024xf32>
    %4 = vector.shape_cast %3 : vector<1x30x1024xf32> to vector<30x1024xf32>
    %cst = arith.constant dense<0.000000e+00> : vector<56x1024xf32>
    %5 = tpu.matmul %2, %4, %cst {dimension_numbers = #tpu.dot_dimension_numbers<[1], [0], [0], [1], [0, 0, 1, 1], [], []>} : vector<56x30xf32>, vector<30x1024xf32>, vector<56x1024xf32> -> vector<56x1024xf32>
    %6 = vector.extract_strided_slice %0 {offsets = [0, 1, 0], sizes = [2, 28, 30], strides = [1, 1, 1]} : vector<2x30x30xf32> to vector<2x28x30xf32>
    %7 = vector.shape_cast %6 : vector<2x28x30xf32> to vector<56x30xf32>
    %c1 = arith.constant 1 : index
    %c0_5 = arith.constant 0 : index
    %c0_6 = arith.constant 0 : index
    %8 = vector.load %arg2[%c1, %c0_5, %c0_6] : memref<3x30x1024xf32, #tpu.memory_space<vmem>>, vector<1x30x1024xf32>
    %9 = vector.shape_cast %8 : vector<1x30x1024xf32> to vector<30x1024xf32>
    %cst_7 = arith.constant dense<0.000000e+00> : vector<56x1024xf32>
    %10 = tpu.matmul %7, %9, %cst_7 {dimension_numbers = #tpu.dot_dimension_numbers<[1], [0], [0], [1], [0, 0, 1, 1], [], []>} : vector<56x30xf32>, vector<30x1024xf32>, vector<56x1024xf32> -> vector<56x1024xf32>
    %11 = arith.addf %5, %10 : vector<56x1024xf32>
    %12 = vector.extract_strided_slice %0 {offsets = [0, 2, 0], sizes = [2, 28, 30], strides = [1, 1, 1]} : vector<2x30x30xf32> to vector<2x28x30xf32>
    %13 = vector.shape_cast %12 : vector<2x28x30xf32> to vector<56x30xf32>
    %c2 = arith.constant 2 : index
    %c0_8 = arith.constant 0 : index
    %c0_9 = arith.constant 0 : index
    %14 = vector.load %arg2[%c2, %c0_8, %c0_9] : memref<3x30x1024xf32, #tpu.memory_space<vmem>>, vector<1x30x1024xf32>
    %15 = vector.shape_cast %14 : vector<1x30x1024xf32> to vector<30x1024xf32>
    %cst_10 = arith.constant dense<0.000000e+00> : vector<56x1024xf32>
    %16 = tpu.matmul %13, %15, %cst_10 {dimension_numbers = #tpu.dot_dimension_numbers<[1], [0], [0], [1], [0, 0, 1, 1], [], []>} : vector<56x30xf32>, vector<30x1024xf32>, vector<56x1024xf32> -> vector<56x1024xf32>
    %17 = arith.addf %11, %16 : vector<56x1024xf32>
    %c0_11 = arith.constant 0 : index
    %c0_12 = arith.constant 0 : index
    %18 = vector.load %arg3[%c0_11, %c0_12] : memref<1x1024xf32, #tpu.memory_space<vmem>>, vector<1x1024xf32>
    %19 = vector.broadcast %18 : vector<1x1024xf32> to vector<56x1024xf32>
    %20 = arith.addf %17, %19 : vector<56x1024xf32>
    %cst_13 = arith.constant 0.000000e+00 : f32
    %21 = vector.broadcast %cst_13 : f32 to vector<56x1024xf32>
    %22 = arith.maximumf %20, %21 : vector<56x1024xf32>
    %23 = vector.shape_cast %22 : vector<56x1024xf32> to vector<2x14x2x1024xf32>
    %cst_14 = arith.constant dense<0xFF800000> : vector<2x14x1024xf32>
    %24 = vector.multi_reduction <maximumf>, %23, %cst_14 [2] : vector<2x14x2x1024xf32> to vector<2x14x1024xf32>
    %25 = vector.extract_strided_slice %24 {offsets = [0, 0, 0], sizes = [2, 14, 512], strides = [1, 1, 1]} : vector<2x14x1024xf32> to vector<2x14x512xf32>
    %26 = vector.extract_strided_slice %24 {offsets = [0, 0, 512], sizes = [2, 14, 512], strides = [1, 1, 1]} : vector<2x14x1024xf32> to vector<2x14x512xf32>
    %27 = arith.maximumf %25, %26 : vector<2x14x512xf32>
    %cst_15 = arith.constant 0.000000e+00 : f32
    %28 = vector.broadcast %cst_15 : f32 to vector<2x1x512xf32>
    %c0_16 = arith.constant 0 : index
    %c0_17 = arith.constant 0 : index
    %c0_18 = arith.constant 0 : index
    %29 = vector.load %arg11[%c0_16, %c0_17, %c0_18] : memref<2x16x512xf32, #tpu.memory_space<vmem>>, vector<2x1x512xf32>
    tpu.vector_store %arg11[%c0_16, %c0_17, %c0_18], %28 {strides = array<i32>} : memref<2x16x512xf32, #tpu.memory_space<vmem>>, vector<2x1x512xf32>,
    %c0_19 = arith.constant 0 : index
    %c15 = arith.constant 15 : index
    %c0_20 = arith.constant 0 : index
    %30 = vector.load %arg11[%c0_19, %c15, %c0_20] : memref<2x16x512xf32, #tpu.memory_space<vmem>>, vector<2x1x512xf32>
    tpu.vector_store %arg11[%c0_19, %c15, %c0_20], %28 {strides = array<i32>} : memref<2x16x512xf32, #tpu.memory_space<vmem>>, vector<2x1x512xf32>,
    %c0_21 = arith.constant 0 : index
    %c1_22 = arith.constant 1 : index
    %c0_23 = arith.constant 0 : index
    %31 = vector.load %arg11[%c0_21, %c1_22, %c0_23] : memref<2x16x512xf32, #tpu.memory_space<vmem>>, vector<2x14x512xf32>
    tpu.vector_store %arg11[%c0_21, %c1_22, %c0_23], %27 {strides = array<i32>} : memref<2x16x512xf32, #tpu.memory_space<vmem>>, vector<2x14x512xf32>,
    %c0_24 = arith.constant 0 : index
    %c0_25 = arith.constant 0 : index
    %c0_26 = arith.constant 0 : index
    %32 = vector.load %arg11[%c0_24, %c0_25, %c0_26] : memref<2x16x512xf32, #tpu.memory_space<vmem>>, vector<2x14x512xf32>
    %33 = vector.shape_cast %32 : vector<2x14x512xf32> to vector<28x512xf32>
    %c0_27 = arith.constant 0 : index
    %c0_28 = arith.constant 0 : index
    %c0_29 = arith.constant 0 : index
    %34 = vector.load %arg4[%c0_27, %c0_28, %c0_29] : memref<3x512x512xf32, #tpu.memory_space<vmem>>, vector<1x512x512xf32>
    %35 = vector.shape_cast %34 : vector<1x512x512xf32> to vector<512x512xf32>
    %cst_30 = arith.constant dense<0.000000e+00> : vector<28x512xf32>
    %36 = tpu.matmul %33, %35, %cst_30 {dimension_numbers = #tpu.dot_dimension_numbers<[1], [0], [0], [1], [0, 0, 1, 1], [], []>} : vector<28x512xf32>, vector<512x512xf32>, vector<28x512xf32> -> vector<28x512xf32>
    %c0_31 = arith.constant 0 : index
    %c1_32 = arith.constant 1 : index
    %c0_33 = arith.constant 0 : index
    %37 = vector.load %arg11[%c0_31, %c1_32, %c0_33] : memref<2x16x512xf32, #tpu.memory_space<vmem>>, vector<2x14x512xf32>
    %38 = vector.shape_cast %37 : vector<2x14x512xf32> to vector<28x512xf32>
    %c1_34 = arith.constant 1 : index
    %c0_35 = arith.constant 0 : index
    %c0_36 = arith.constant 0 : index
    %39 = vector.load %arg4[%c1_34, %c0_35, %c0_36] : memref<3x512x512xf32, #tpu.memory_space<vmem>>, vector<1x512x512xf32>
    %40 = vector.shape_cast %39 : vector<1x512x512xf32> to vector<512x512xf32>
    %cst_37 = arith.constant dense<0.000000e+00> : vector<28x512xf32>
    %41 = tpu.matmul %38, %40, %cst_37 {dimension_numbers = #tpu.dot_dimension_numbers<[1], [0], [0], [1], [0, 0, 1, 1], [], []>} : vector<28x512xf32>, vector<512x512xf32>, vector<28x512xf32> -> vector<28x512xf32>
    %42 = arith.addf %36, %41 : vector<28x512xf32>
    %c0_38 = arith.constant 0 : index
    %c2_39 = arith.constant 2 : index
    %c0_40 = arith.constant 0 : index
    %43 = vector.load %arg11[%c0_38, %c2_39, %c0_40] : memref<2x16x512xf32, #tpu.memory_space<vmem>>, vector<2x14x512xf32>
    %44 = vector.shape_cast %43 : vector<2x14x512xf32> to vector<28x512xf32>
    %c2_41 = arith.constant 2 : index
    %c0_42 = arith.constant 0 : index
    %c0_43 = arith.constant 0 : index
    %45 = vector.load %arg4[%c2_41, %c0_42, %c0_43] : memref<3x512x512xf32, #tpu.memory_space<vmem>>, vector<1x512x512xf32>
    %46 = vector.shape_cast %45 : vector<1x512x512xf32> to vector<512x512xf32>
    %cst_44 = arith.constant dense<0.000000e+00> : vector<28x512xf32>
    %47 = tpu.matmul %44, %46, %cst_44 {dimension_numbers = #tpu.dot_dimension_numbers<[1], [0], [0], [1], [0, 0, 1, 1], [], []>} : vector<28x512xf32>, vector<512x512xf32>, vector<28x512xf32> -> vector<28x512xf32>
    %48 = arith.addf %42, %47 : vector<28x512xf32>
    %c0_45 = arith.constant 0 : index
    %c0_46 = arith.constant 0 : index
    %49 = vector.load %arg5[%c0_45, %c0_46] : memref<1x512xf32, #tpu.memory_space<vmem>>, vector<1x512xf32>
    %50 = vector.broadcast %49 : vector<1x512xf32> to vector<28x512xf32>
    %51 = arith.addf %48, %50 : vector<28x512xf32>
    %cst_47 = arith.constant 0.000000e+00 : f32
    %52 = vector.broadcast %cst_47 : f32 to vector<28x512xf32>
    %53 = arith.maximumf %51, %52 : vector<28x512xf32>
    %54 = vector.shape_cast %53 : vector<28x512xf32> to vector<2x7x2x512xf32>
    %cst_48 = arith.constant dense<0xFF800000> : vector<2x7x512xf32>
    %55 = vector.multi_reduction <maximumf>, %54, %cst_48 [2] : vector<2x7x2x512xf32> to vector<2x7x512xf32>
    %56 = vector.extract_strided_slice %55 {offsets = [0, 0, 0], sizes = [2, 7, 256], strides = [1, 1, 1]} : vector<2x7x512xf32> to vector<2x7x256xf32>
    %57 = vector.extract_strided_slice %55 {offsets = [0, 0, 256], sizes = [2, 7, 256], strides = [1, 1, 1]} : vector<2x7x512xf32> to vector<2x7x256xf32>
    %58 = arith.maximumf %56, %57 : vector<2x7x256xf32>
    %59 = vector.shape_cast %58 : vector<2x7x256xf32> to vector<2x1792xf32>
    %c0_49 = arith.constant 0 : index
    %c0_50 = arith.constant 0 : index
    %60 = vector.load %arg6[%c0_49, %c0_50] : memref<1792x128xf32, #tpu.memory_space<vmem>>, vector<1792x128xf32>
    %cst_51 = arith.constant dense<0.000000e+00> : vector<2x128xf32>
    %61 = tpu.matmul %59, %60, %cst_51 {dimension_numbers = #tpu.dot_dimension_numbers<[1], [0], [0], [1], [0, 0, 1, 1], [], []>} : vector<2x1792xf32>, vector<1792x128xf32>, vector<2x128xf32> -> vector<2x128xf32>
    %c0_52 = arith.constant 0 : index
    %c0_53 = arith.constant 0 : index
    %62 = vector.load %arg7[%c0_52, %c0_53] : memref<1x128xf32, #tpu.memory_space<vmem>>, vector<1x128xf32>
    %63 = vector.broadcast %62 : vector<1x128xf32> to vector<2x128xf32>
    %64 = arith.addf %61, %63 : vector<2x128xf32>
    %cst_54 = arith.constant 0.000000e+00 : f32
    %65 = vector.broadcast %cst_54 : f32 to vector<2x128xf32>
    %66 = arith.maximumf %64, %65 : vector<2x128xf32>
    %c0_55 = arith.constant 0 : index
    %c0_56 = arith.constant 0 : index
    %67 = vector.load %arg8[%c0_55, %c0_56] : memref<128x128xf32, #tpu.memory_space<vmem>>, vector<128x128xf32>
    %cst_57 = arith.constant dense<0.000000e+00> : vector<2x128xf32>
    %68 = tpu.matmul %66, %67, %cst_57 {dimension_numbers = #tpu.dot_dimension_numbers<[1], [0], [0], [1], [0, 0, 1, 1], [], []>} : vector<2x128xf32>, vector<128x128xf32>, vector<2x128xf32> -> vector<2x128xf32>
    %c0_58 = arith.constant 0 : index
    %c0_59 = arith.constant 0 : index
    %69 = vector.load %arg9[%c0_58, %c0_59] : memref<1x128xf32, #tpu.memory_space<vmem>>, vector<1x128xf32>
    %70 = vector.broadcast %69 : vector<1x128xf32> to vector<2x128xf32>
    %71 = arith.addf %68, %70 : vector<2x128xf32>
    %c0_60 = arith.constant 0 : index
    %c0_61 = arith.constant 0 : index
    %72 = vector.load %arg10[%c0_60, %c0_61] : memref<2x128xf32, #tpu.memory_space<vmem>>, vector<2x128xf32>
    tpu.vector_store %arg10[%c0_60, %c0_61], %71 {strides = array<i32>} : memref<2x128xf32, #tpu.memory_space<vmem>>, vector<2x128xf32>,
    return
  }
  func.func @transform_0(%arg0: i32) -> (i32, i32, i32) {
    %c0_i32 = arith.constant 0 : i32
    %c0_i32_0 = arith.constant 0 : i32
    %c0_i32_1 = arith.constant 0 : i32
    return %arg0, %c0_i32, %c0_i32_0 : i32, i32, i32
  }
  func.func @transform_1(%arg0: i32) -> (i32, i32, i32) {
    %c0_i32 = arith.constant 0 : i32
    %c0_i32_0 = arith.constant 0 : i32
    %c0_i32_1 = arith.constant 0 : i32
    %c0_i32_2 = arith.constant 0 : i32
    return %c0_i32, %c0_i32_0, %c0_i32_1 : i32, i32, i32
  }
  func.func @transform_2(%arg0: i32) -> (i32, i32) {
    %c0_i32 = arith.constant 0 : i32
    %c0_i32_0 = arith.constant 0 : i32
    %c0_i32_1 = arith.constant 0 : i32
    return %c0_i32, %c0_i32_0 : i32, i32
  }
  func.func @transform_3(%arg0: i32) -> (i32, i32, i32) {
    %c0_i32 = arith.constant 0 : i32
    %c0_i32_0 = arith.constant 0 : i32
    %c0_i32_1 = arith.constant 0 : i32
    %c0_i32_2 = arith.constant 0 : i32
    return %c0_i32, %c0_i32_0, %c0_i32_1 : i32, i32, i32
  }
  func.func @transform_4(%arg0: i32) -> (i32, i32) {
    %c0_i32 = arith.constant 0 : i32
    %c0_i32_0 = arith.constant 0 : i32
    %c0_i32_1 = arith.constant 0 : i32
    return %c0_i32, %c0_i32_0 : i32, i32
  }
  func.func @transform_5(%arg0: i32) -> (i32, i32) {
    %c0_i32 = arith.constant 0 : i32
    %c0_i32_0 = arith.constant 0 : i32
    %c0_i32_1 = arith.constant 0 : i32
    return %c0_i32, %c0_i32_0 : i32, i32
  }
  func.func @transform_6(%arg0: i32) -> (i32, i32) {
    %c0_i32 = arith.constant 0 : i32
    %c0_i32_0 = arith.constant 0 : i32
    %c0_i32_1 = arith.constant 0 : i32
    return %c0_i32, %c0_i32_0 : i32, i32
  }
  func.func @transform_7(%arg0: i32) -> (i32, i32) {
    %c0_i32 = arith.constant 0 : i32
    %c0_i32_0 = arith.constant 0 : i32
    %c0_i32_1 = arith.constant 0 : i32
    return %c0_i32, %c0_i32_0 : i32, i32
  }
  func.func @transform_8(%arg0: i32) -> (i32, i32) {
    %c0_i32 = arith.constant 0 : i32
    %c0_i32_0 = arith.constant 0 : i32
    %c0_i32_1 = arith.constant 0 : i32
    return %c0_i32, %c0_i32_0 : i32, i32
  }
  func.func @transform_9(%arg0: i32) -> (i32, i32) {
    %c0_i32 = arith.constant 0 : i32
    %c0_i32_0 = arith.constant 0 : i32
    return %arg0, %c0_i32 : i32, i32
  }
}

</mosaic_0001>

<llo_original>
// kernel: lenet_forward.1
$region0: #{lenet_forward.1}
  #allocation0 [shape = 'u32[]', space=smem, size = 0x4, offset = 0x4, fixed_abs, tag = 'smem constant byte address 0x4 - core index']
  #allocation1 [shape = 'u32[144,128]{1,0:T(1,128)}', space=vmem, size = 0x12000, scoped, tag = 'internal scratch']
  #allocation2 [shape = 'f32[2,16,512]{2,1,0:T(8,128)}', space=vmem, size = 0x10000, scoped, tag = 'scratch operand']
  %s0 = inlined_call_operand.vmem [shape: f32[2,30,30], index: 0, kind: input, shape index: {}]
  %s1 = inlined_call_operand.hbm [shape: f32[3,30,1024], index: 1, kind: input, shape index: {}]
  %s2 = inlined_call_operand.hbm [shape: f32[1,1024], index: 2, kind: input, shape index: {}]
  %s3 = inlined_call_operand.hbm [shape: f32[3,512,512], index: 3, kind: input, shape index: {}]
  %s4 = inlined_call_operand.hbm [shape: f32[1,512], index: 4, kind: input, shape index: {}]
  %s5 = inlined_call_operand.hbm [shape: f32[1792,128], index: 5, kind: input, shape index: {}]
  %s6 = inlined_call_operand.hbm [shape: f32[1,128], index: 6, kind: input, shape index: {}]
  %s7 = inlined_call_operand.hbm [shape: f32[128,128], index: 7, kind: input, shape index: {}]
  %s8 = inlined_call_operand.hbm [shape: f32[1,128], index: 8, kind: input, shape index: {}]
  %s9 = inlined_call_operand.hbm [shape: f32[2,128], index: 9, kind: output, shape index: {}]
  %s10 = sld [smem:[#allocation0]]
  $region78: #{lenet_forward.1} parent=0
    _
  %s12 = ssub.s32 1, %s10
  %s13 = scalar_select 0, %s12, %s10
  $region1: #{lenet_forward.1} parent=0
    #allocation3 [shape = 'u8[393216]{0}', space=vmem, size = 0x60000, scoped, tag = 'input window, operand 1, single buffered']
    #allocation4 [shape = 's32[1]{0}', space=sflag, size = 0x4, scoped, tag = 'scoped memory for lenet_forward.1']
    #allocation5 [shape = 's32[1]{0}', space=sflag, size = 0x4, scoped, tag = 'scoped memory for lenet_forward.1']
    #allocation6 [shape = 'u8[4096]{0}', space=vmem, size = 0x1000, scoped, tag = 'input window, operand 2, single buffered']
    #allocation7 [shape = 's32[1]{0}', space=sflag, size = 0x4, scoped, tag = 'scoped memory for lenet_forward.1']
    #allocation8 [shape = 'u8[3145728]{0}', space=vmem, size = 0x300000, scoped, tag = 'input window, operand 3, single buffered']
    #allocation9 [shape = 'u8[2048]{0}', space=vmem, size = 0x800, scoped, tag = 'input window, operand 4, single buffered']
    #allocation10 [shape = 's32[1]{0}', space=sflag, size = 0x4, scoped, tag = 'scoped memory for lenet_forward.1']
    #allocation11 [shape = 'u8[917504]{0}', space=vmem, size = 0xe0000, scoped, tag = 'input window, operand 5, single buffered']
    #allocation12 [shape = 'u8[512]{0}', space=vmem, size = 0x400, scoped, tag = 'input window, operand 6, single buffered']
    #allocation13 [shape = 's32[1]{0}', space=sflag, size = 0x4, scoped, tag = 'scoped memory for lenet_forward.1']
    #allocation14 [shape = 'u8[65536]{0}', space=vmem, size = 0x10000, scoped, tag = 'input window, operand 7, single buffered']
    #allocation15 [shape = 'u8[512]{0}', space=vmem, size = 0x400, scoped, tag = 'input window, operand 8, single buffered']
    #allocation16 [shape = 's32[1]{0}', space=sflag, size = 0x4, scoped, tag = 'scoped memory for lenet_forward.1']
    #allocation17 [shape = 'u8[1024]{0}', space=vmem, size = 0x400, scoped, tag = 'output window, operand 0, single buffered']
    %14 = vsyncpa [#allocation4], 0
    %15 = vsyncpa [#allocation7], 0
    %16 = vsyncpa [#allocation10], 0
    %17 = vsyncpa [#allocation13], 0
    %18 = vsyncpa [#allocation16], 0
    %19 = vsyncpa [#allocation5], 0
    // Predicated region
    $region2: #{lenet_forward.1} parent=1 // pred_check
      _
    $region3: #{lenet_forward.1} parent=1 // pred_check_branch
      %21 = sbr.rel (0) target = $region5
    $region4: #{lenet_forward.1} parent=1 // pred_region
      _
    $region5: #{lenet_forward.1} parent=1 // pred_fallthru
      _
    // Predicated region
    $region6: #{lenet_forward.1} parent=1 // pred_check
      _
    $region7: #{lenet_forward.1} parent=1 // pred_check_branch
      %23 = sbr.rel (0) target = $region9
    $region8: #{lenet_forward.1} parent=1 // pred_region
      %s25 = ssub.s32 12288, 12288
      %26 = vsyncadd [#allocation4], %s25
      %s27 = sshll.u32 [#allocation3], 4
      %s28 = int_to_ptr.vmem [resolvable:$true] %s27
      %33 = dma.hbm_to_vmem [thread:$0]  %s1, 12288, %s28, [#allocation4], 1024, 1024, 64
    $region9: #{lenet_forward.1} parent=1 // pred_fallthru
      _
    // Predicated region
    $region10: #{lenet_forward.1} parent=1 // pred_check
      _
    $region11: #{lenet_forward.1} parent=1 // pred_check_branch
      %35 = sbr.rel (0) target = $region13
    $region12: #{lenet_forward.1} parent=1 // pred_region
      %s37 = ssub.s32 128, 128
      %38 = vsyncadd [#allocation7], %s37
      %s40 = sshll.u32 [#allocation6], 4
      %s41 = int_to_ptr.vmem [resolvable:$true] %s40
      %43 = dma.hbm_to_vmem [thread:$0]  %s2, 128, %s41, [#allocation7]
    $region13: #{lenet_forward.1} parent=1 // pred_fallthru
      _
    // Predicated region
    $region14: #{lenet_forward.1} parent=1 // pred_check
      _
    $region15: #{lenet_forward.1} parent=1 // pred_check_branch
      %45 = sbr.rel (0) target = $region17
    $region16: #{lenet_forward.1} parent=1 // pred_region
      %s47 = ssub.s32 98304, 98304
      %48 = vsyncadd [#allocation7], %s47
      %s49 = sshll.u32 [#allocation8], 4
      %s50 = int_to_ptr.vmem [resolvable:$true] %s49
      %55 = dma.hbm_to_vmem [thread:$0]  %s3, 98304, %s50, [#allocation7], 512, 512, 32
    $region17: #{lenet_forward.1} parent=1 // pred_fallthru
      _
    // Predicated region
    $region18: #{lenet_forward.1} parent=1 // pred_check
      _
    $region19: #{lenet_forward.1} parent=1 // pred_check_branch
      %57 = sbr.rel (0) target = $region21
    $region20: #{lenet_forward.1} parent=1 // pred_region
      %s59 = ssub.s32 64, 64
      %60 = vsyncadd [#allocation10], %s59
      %s62 = sshll.u32 [#allocation9], 4
      %s63 = int_to_ptr.vmem [resolvable:$true] %s62
      %65 = dma.hbm_to_vmem [thread:$0]  %s4, 64, %s63, [#allocation10]
    $region21: #{lenet_forward.1} parent=1 // pred_fallthru
      _
    // Predicated region
    $region22: #{lenet_forward.1} parent=1 // pred_check
      _
    $region23: #{lenet_forward.1} parent=1 // pred_check_branch
      %67 = sbr.rel (0) target = $region25
    $region24: #{lenet_forward.1} parent=1 // pred_region
      %s69 = ssub.s32 28672, 28672
      %70 = vsyncadd [#allocation10], %s69
      %s71 = sshll.u32 [#allocation11], 4
      %s72 = int_to_ptr.vmem [resolvable:$true] %s71
      %77 = dma.hbm_to_vmem [thread:$0]  %s5, 28672, %s72, [#allocation10], 128, 128, 8
    $region25: #{lenet_forward.1} parent=1 // pred_fallthru
      _
    // Predicated region
    $region26: #{lenet_forward.1} parent=1 // pred_check
      _
    $region27: #{lenet_forward.1} parent=1 // pred_check_branch
      %79 = sbr.rel (0) target = $region29
    $region28: #{lenet_forward.1} parent=1 // pred_region
      %s81 = ssub.s32 16, 16
      %82 = vsyncadd [#allocation13], %s81
      %s84 = sshll.u32 [#allocation12], 4
      %s85 = int_to_ptr.vmem [resolvable:$true] %s84
      %87 = dma.hbm_to_vmem [thread:$0]  %s6, 16, %s85, [#allocation13]
    $region29: #{lenet_forward.1} parent=1 // pred_fallthru
      _
    // Predicated region
    $region30: #{lenet_forward.1} parent=1 // pred_check
      _
    $region31: #{lenet_forward.1} parent=1 // pred_check_branch
      %89 = sbr.rel (0) target = $region33
    $region32: #{lenet_forward.1} parent=1 // pred_region
      %s91 = ssub.s32 2048, 2048
      %92 = vsyncadd [#allocation13], %s91
      %s93 = sshll.u32 [#allocation14], 4
      %s94 = int_to_ptr.vmem [resolvable:$true] %s93
      %99 = dma.hbm_to_vmem [thread:$0]  %s7, 2048, %s94, [#allocation13], 128, 128, 8
    $region33: #{lenet_forward.1} parent=1 // pred_fallthru
      _
    // Predicated region
    $region34: #{lenet_forward.1} parent=1 // pred_check
      _
    $region35: #{lenet_forward.1} parent=1 // pred_check_branch
      %101 = sbr.rel (0) target = $region37
    $region36: #{lenet_forward.1} parent=1 // pred_region
      %s103 = ssub.s32 16, 16
      %104 = vsyncadd [#allocation16], %s103
      %s106 = sshll.u32 [#allocation15], 4
      %s107 = int_to_ptr.vmem [resolvable:$true] %s106
      %109 = dma.hbm_to_vmem [thread:$0]  %s8, 16, %s107, [#allocation16]
    $region37: #{lenet_forward.1} parent=1 // pred_fallthru
      _
    // Predicated region
    $region38: #{lenet_forward.1} parent=1 // pred_check
      _
    $region39: #{lenet_forward.1} parent=1 // pred_check_branch
      %111 = sbr.rel (0) target = $region41
    $region40: #{lenet_forward.1} parent=1 // pred_region
      %112 = dma.done [#allocation4], 12288
    $region41: #{lenet_forward.1} parent=1 // pred_fallthru
      _
    // Predicated region
    $region42: #{lenet_forward.1} parent=1 // pred_check
      _
    $region43: #{lenet_forward.1} parent=1 // pred_check_branch
      %114 = sbr.rel (0) target = $region45
    $region44: #{lenet_forward.1} parent=1 // pred_region
      %115 = dma.done [#allocation7], 128
    $region45: #{lenet_forward.1} parent=1 // pred_fallthru
      _
    // Predicated region
    $region46: #{lenet_forward.1} parent=1 // pred_check
      _
    $region47: #{lenet_forward.1} parent=1 // pred_check_branch
      %117 = sbr.rel (0) target = $region49
    $region48: #{lenet_forward.1} parent=1 // pred_region
      %118 = dma.done [#allocation7], 98304
    $region49: #{lenet_forward.1} parent=1 // pred_fallthru
      _
    // Predicated region
    $region50: #{lenet_forward.1} parent=1 // pred_check
      _
    $region51: #{lenet_forward.1} parent=1 // pred_check_branch
      %120 = sbr.rel (0) target = $region53
    $region52: #{lenet_forward.1} parent=1 // pred_region
      %121 = dma.done [#allocation10], 64
    $region53: #{lenet_forward.1} parent=1 // pred_fallthru
      _
    // Predicated region
    $region54: #{lenet_forward.1} parent=1 // pred_check
      _
    $region55: #{lenet_forward.1} parent=1 // pred_check_branch
      %123 = sbr.rel (0) target = $region57
    $region56: #{lenet_forward.1} parent=1 // pred_region
      %124 = dma.done [#allocation10], 28672
    $region57: #{lenet_forward.1} parent=1 // pred_fallthru
      _
    // Predicated region
    $region58: #{lenet_forward.1} parent=1 // pred_check
      _
    $region59: #{lenet_forward.1} parent=1 // pred_check_branch
      %126 = sbr.rel (0) target = $region61
    $region60: #{lenet_forward.1} parent=1 // pred_region
      %127 = dma.done [#allocation13], 16
    $region61: #{lenet_forward.1} parent=1 // pred_fallthru
      _
    // Predicated region
    $region62: #{lenet_forward.1} parent=1 // pred_check
      _
    $region63: #{lenet_forward.1} parent=1 // pred_check_branch
      %129 = sbr.rel (0) target = $region65
    $region64: #{lenet_forward.1} parent=1 // pred_region
      %130 = dma.done [#allocation13], 2048
    $region65: #{lenet_forward.1} parent=1 // pred_fallthru
      _
    // Predicated region
    $region66: #{lenet_forward.1} parent=1 // pred_check
      _
    $region67: #{lenet_forward.1} parent=1 // pred_check_branch
      %132 = sbr.rel (0) target = $region69
    $region68: #{lenet_forward.1} parent=1 // pred_region
      %133 = dma.done [#allocation16], 16
    $region69: #{lenet_forward.1} parent=1 // pred_fallthru
      _
    %v134 = vld [vmem:[%s0] sm:$0xff]
    %v135 = vld [vmem:[%s0 + $0x8] sm:$0xff]
    %v136 = vld [vmem:[%s0 + $0x10] sm:$0xff]
    %v137 = vld [vmem:[%s0 + $0x18] sm:$0x3f]
    %v138 = vld [vmem:[%s0 + $0x20] sm:$0xff]
    %v139 = vld [vmem:[%s0 + $0x28] sm:$0xff]
    %v140 = vld [vmem:[%s0 + $0x30] sm:$0xff]
    %v141 = vld [vmem:[%s0 + $0x38] sm:$0x3f]
    %v150 = vcombine.high %v134, %v134
    %v151 = vcombine.high %v135, %v135
    %v152 = vcombine.high %v136, %v136
    %v153 = vcombine.high %v138, %v138
    %v154 = vcombine.high %v139, %v139
    %v155 = vcombine.high %v140, %v140
    %v156 = vld [vmem:[#allocation3] sm:$0xff]
    %v157 = vld [vmem:[#allocation3 + $0x8] sm:$0xff]
    %v158 = vld [vmem:[#allocation3 + $0x10] sm:$0xff]
    %v159 = vld [vmem:[#allocation3 + $0x18] sm:$0xff]
    %v160 = vld [vmem:[#allocation3 + $0x20] sm:$0xff]
    %v161 = vld [vmem:[#allocation3 + $0x28] sm:$0xff]
    %v162 = vld [vmem:[#allocation3 + $0x30] sm:$0xff]
    %v163 = vld [vmem:[#allocation3 + $0x38] sm:$0xff]
    %v164 = vld [vmem:[#allocation3 + $0x40] sm:$0xff]
    %v165 = vld [vmem:[#allocation3 + $0x48] sm:$0xff]
    %v166 = vld [vmem:[#allocation3 + $0x50] sm:$0xff]
    %v167 = vld [vmem:[#allocation3 + $0x58] sm:$0xff]
    %v168 = vld [vmem:[#allocation3 + $0x60] sm:$0xff]
    %v169 = vld [vmem:[#allocation3 + $0x68] sm:$0xff]
    %v170 = vld [vmem:[#allocation3 + $0x70] sm:$0xff]
    %v171 = vld [vmem:[#allocation3 + $0x78] sm:$0xff]
    %v172 = vld [vmem:[#allocation3 + $0x80] sm:$0xff]
    %v173 = vld [vmem:[#allocation3 + $0x88] sm:$0xff]
    %v174 = vld [vmem:[#allocation3 + $0x90] sm:$0xff]
    %v175 = vld [vmem:[#allocation3 + $0x98] sm:$0xff]
    %v176 = vld [vmem:[#allocation3 + $0xa0] sm:$0xff]
    %v177 = vld [vmem:[#allocation3 + $0xa8] sm:$0xff]
    %v178 = vld [vmem:[#allocation3 + $0xb0] sm:$0xff]
    %v179 = vld [vmem:[#allocation3 + $0xb8] sm:$0xff]
    %v180 = vld [vmem:[#allocation3 + $0xc0] sm:$0x3f]
    %v181 = vld [vmem:[#allocation3 + $0xc8] sm:$0x3f]
    %v182 = vld [vmem:[#allocation3 + $0xd0] sm:$0x3f]
    %v183 = vld [vmem:[#allocation3 + $0xd8] sm:$0x3f]
    %v184 = vld [vmem:[#allocation3 + $0xe0] sm:$0x3f]
    %v185 = vld [vmem:[#allocation3 + $0xe8] sm:$0x3f]
    %v186 = vld [vmem:[#allocation3 + $0xf0] sm:$0x3f]
    %v187 = vld [vmem:[#allocation3 + $0xf8] sm:$0x3f]
    %v188 = vcombine.high %v137, %v137
    %v189 = vcombine.high %v141, %v141
    %vm190 = vcmask 1042432
    %vm191 = vcmask 1046532
    %vm192 = vmor %vm190, %vm191
    %v193 = vrot.slane %v134, 5
    %v194 = vrot.slane %v193, 4
    %v195 = vrot.slane %v150, 5
    %v196 = vsel %vm192, %v194, %v195
    %v197 = vrot.slane %v195, 4
    %v198 = vrot.slane %v135, 5
    %v199 = vsel %vm192, %v197, %v198
    %v200 = vrot.slane %v198, 4
    %v201 = vrot.slane %v151, 5
    %v202 = vsel %vm192, %v200, %v201
    %v203 = vrot.slane %v201, 4
    %v204 = vrot.slane %v136, 5
    %v205 = vsel %vm192, %v203, %v204
    %v206 = vrot.slane %v204, 4
    %v207 = vrot.slane %v152, 5
    %v208 = vsel %vm192, %v206, %v207
    %v209 = vrot.slane %v207, 4
    %v210 = vrot.slane %v137, 5
    %v211 = vsel %vm192, %v209, %v210
    %v212 = vrot.slane %v210, 4
    %v213 = vrot.slane %v188, 5
    %v214 = vsel %vm192, %v212, %v213
    %v215 = vrot.slane %v138, 5
    %v216 = vrot.slane %v215, 4
    %v217 = vrot.slane %v153, 5
    %v218 = vsel %vm192, %v216, %v217
    %v219 = vrot.slane %v217, 4
    %v220 = vrot.slane %v139, 5
    %v221 = vsel %vm192, %v219, %v220
    %v222 = vrot.slane %v220, 4
    %v223 = vrot.slane %v154, 5
    %v224 = vsel %vm192, %v222, %v223
    %v225 = vrot.slane %v223, 4
    %v226 = vrot.slane %v140, 5
    %v227 = vsel %vm192, %v225, %v226
    %v228 = vrot.slane %v226, 4
    %v229 = vrot.slane %v155, 5
    %v230 = vsel %vm192, %v228, %v229
    %v231 = vrot.slane %v229, 4
    %v232 = vrot.slane %v141, 5
    %v233 = vsel %vm192, %v231, %v232
    %v234 = vrot.slane %v232, 4
    %v235 = vrot.slane %v189, 5
    %v236 = vsel %vm192, %v234, %v235
    %s237 = scalar_lea.vmem [#allocation3], 256
    %v238 = vld [vmem:[%s237] sm:$0xff]
    %v239 = vld [vmem:[%s237 + $0x8] sm:$0xff]
    %v240 = vld [vmem:[%s237 + $0x10] sm:$0xff]
    %v241 = vld [vmem:[%s237 + $0x18] sm:$0xff]
    %v242 = vld [vmem:[%s237 + $0x20] sm:$0xff]
    %v243 = vld [vmem:[%s237 + $0x28] sm:$0xff]
    %v244 = vld [vmem:[%s237 + $0x30] sm:$0xff]
    %v245 = vld [vmem:[%s237 + $0x38] sm:$0xff]
    %v246 = vld [vmem:[%s237 + $0x40] sm:$0xff]
    %v247 = vld [vmem:[%s237 + $0x48] sm:$0xff]
    %v248 = vld [vmem:[%s237 + $0x50] sm:$0xff]
    %v249 = vld [vmem:[%s237 + $0x58] sm:$0xff]
    %v250 = vld [vmem:[%s237 + $0x60] sm:$0xff]
    %v251 = vld [vmem:[%s237 + $0x68] sm:$0xff]
    %v252 = vld [vmem:[%s237 + $0x70] sm:$0xff]
    %v253 = vld [vmem:[%s237 + $0x78] sm:$0xff]
    %v254 = vld [vmem:[%s237 + $0x80] sm:$0xff]
    %v255 = vld [vmem:[%s237 + $0x88] sm:$0xff]
    %v256 = vld [vmem:[%s237 + $0x90] sm:$0xff]
    %v257 = vld [vmem:[%s237 + $0x98] sm:$0xff]
    %v258 = vld [vmem:[%s237 + $0xa0] sm:$0xff]
    %v259 = vld [vmem:[%s237 + $0xa8] sm:$0xff]
    %v260 = vld [vmem:[%s237 + $0xb0] sm:$0xff]
    %v261 = vld [vmem:[%s237 + $0xb8] sm:$0xff]
    %v262 = vld [vmem:[%s237 + $0xc0] sm:$0x3f]
    %v263 = vld [vmem:[%s237 + $0xc8] sm:$0x3f]
    %v264 = vld [vmem:[%s237 + $0xd0] sm:$0x3f]
    %v265 = vld [vmem:[%s237 + $0xd8] sm:$0x3f]
    %v266 = vld [vmem:[%s237 + $0xe0] sm:$0x3f]
    %v267 = vld [vmem:[%s237 + $0xe8] sm:$0x3f]
    %v268 = vld [vmem:[%s237 + $0xf0] sm:$0x3f]
    %v269 = vld [vmem:[%s237 + $0xf8] sm:$0x3f]
    %v270 = vcombine.low %v196, %v199
    %v271 = vcombine.low %v202, %v205
    %v272 = vcombine.low %v208, %v211
    %v273 = vcombine.low %v214, %v218
    %v274 = vcombine.low %v221, %v224
    %v275 = vcombine.low %v227, %v230
    %v276 = vcombine.low %v233, %v236
    %vm277 = vcmask 244736
    %v278 = vsel %vm277, %v270, 0
    %v280 = vsel %vm277, %v271, 0
    %v282 = vsel %vm277, %v272, 0
    %v284 = vsel %vm277, %v273, 0
    %v286 = vsel %vm277, %v274, 0
    %v288 = vsel %vm277, %v275, 0
    %v290 = vsel %vm277, %v276, 0
    %vm292 = vcmask 1045504
    %v294 = vsel %vm292, %v262, 0
    %v297 = vsel %vm292, %v263, 0
    %v300 = vsel %vm292, %v264, 0
    %v303 = vsel %vm292, %v265, 0
    %v306 = vsel %vm292, %v266, 0
    %v309 = vsel %vm292, %v267, 0
    %v312 = vsel %vm292, %v268, 0
    %v315 = vsel %vm292, %v269, 0
    %317 = vmatprep.subr.mxu0 %v239
    %318 = vmatpush1.msra.mxu0 %v238
    %319 = vmatprep.subr.mxu0 %v247
    %320 = vmatpush1.msra.mxu0 %v246
    %321 = vmatprep.subr.mxu0 %v255
    %322 = vmatpush1.msra.mxu0 %v254
    %323 = vmatprep.subr.mxu0 %v297
    %324 = vmatpush1.msra.mxu0 %v294
    %325 = vmatprep.subr.mxu0 0.0
    %326 = vmatpush1.msra.mxu0 0.0
    %327 = vmatprep.subr.mxu0 0.0
    %328 = vmatpush1.msra.mxu0 0.0
    %329 = vmatprep.subr.mxu0 0.0
    %330 = vmatpush1.msra.mxu0 0.0
    %331 = vmatprep.subr.mxu0 0.0
    %332 = vmatpush1.msra.mxu0 0.0
    %333 = vmatprep.subr.mxu0 0.0
    %334 = vmatpush1.msra.mxu0 0.0
    %335 = vmatprep.subr.mxu0 0.0
    %336 = vmatpush1.msra.mxu0 0.0
    %337 = vmatprep.subr.mxu0 0.0
    %338 = vmatpush1.msra.mxu0 0.0
    %339 = vmatprep.subr.mxu0 0.0
    %340 = vmatpush1.msra.mxu0 0.0
    %341 = vmatprep.subr.mxu0 0.0
    %342 = vmatpush1.msra.mxu0 0.0
    %343 = vmatprep.subr.mxu0 0.0
    %344 = vmatpush1.msra.mxu0 0.0
    %345 = vmatprep.subr.mxu0 0.0
    %346 = vmatpush1.msra.mxu0 0.0
    %347 = vmatprep.subr.mxu0 0.0
    %348 = vmatpush1.msra.mxu0 0.0
    %349 = vmatprep.subr.mxu0 0.0
    %350 = vmatpush1.msra.mxu0 0.0
    %351 = vmatprep.subr.mxu0 0.0
    %352 = vmatpush1.msra.mxu0 0.0
    %353 = vmatprep.subr.mxu0 0.0
    %354 = vmatpush1.msra.mxu0 0.0
    %355 = vmatprep.subr.mxu0 0.0
    %356 = vmatpush1.msra.mxu0 0.0
    %357 = vmatprep.subr.mxu0 0.0
    %358 = vmatpush1.msra.mxu0 0.0
    %359 = vmatprep.subr.mxu0 0.0
    %360 = vmatpush1.msra.mxu0 0.0
    %361 = vmatprep.subr.mxu0 0.0
    %362 = vmatpush1.msra.mxu0 0.0
    %363 = vmatprep.subr.mxu0 0.0
    %364 = vmatpush1.msra.mxu0 0.0
    %365 = vmatprep.subr.mxu0 0.0
    %366 = vmatpush1.msra.mxu0 0.0
    %367 = vmatprep.subr.mxu0 0.0
    %368 = vmatpush1.msra.mxu0 0.0
    %369 = vmatprep.subr.mxu0 0.0
    %370 = vmatpush1.msra.mxu0 0.0
    %371 = vmatprep.subr.mxu0 0.0
    %372 = vmatpush1.msra.mxu0 0.0
    %373 = vmatprep.subr.mxu0 0.0
    %374 = vmatpush1.msra.mxu0 0.0
    %375 = vmatprep.subr.mxu0 0.0
    %376 = vmatpush1.msra.mxu0 0.0
    %377 = vmatprep.subr.mxu0 0.0
    %378 = vmatpush1.msra.mxu0 0.0
    %379 = vmatprep.subr.mxu0 0.0
    %380 = vmatpush1.msra.mxu0 0.0
    %381 = vmatprep.mubr.f32.mxu0 0.0
    %382 = vmatmul.mubr.f32.gmra.mrb[0].mxu0 %v278
    %v383 = vpop.f32.mrb[0].mxu0
    %v384 = vadd.f32 0.0, %v383
    %v385 = vpop.f32.mrb[0].mxu0
    %v386 = vadd.f32 0.0, %v385
    %387 = vmatprep.mubr.f32.mxu0 0.0
    %388 = vmatmul.mubr.f32.gmra.mrb[0].mxu0 %v280
    %v389 = vpop.f32.mrb[0].mxu0
    %v390 = vadd.f32 0.0, %v389
    %v391 = vpop.f32.mrb[0].mxu0
    %v392 = vadd.f32 0.0, %v391
    %393 = vmatprep.mubr.f32.mxu0 0.0
    %394 = vmatmul.mubr.f32.gmra.mrb[0].mxu0 %v282
    %v395 = vpop.f32.mrb[0].mxu0
    %v396 = vadd.f32 0.0, %v395
    %v397 = vpop.f32.mrb[0].mxu0
    %v398 = vadd.f32 0.0, %v397
    %399 = vmatprep.mubr.f32.mxu0 0.0
    %400 = vmatmul.mubr.f32.gmra.mrb[0].mxu0 %v284
    %v401 = vpop.f32.mrb[0].mxu0
    %v402 = vadd.f32 0.0, %v401
    %v403 = vpop.f32.mrb[0].mxu0
    %v404 = vadd.f32 0.0, %v403
    %405 = vmatprep.mubr.f32.mxu0 0.0
    %406 = vmatmul.mubr.f32.gmra.mrb[0].mxu0 %v286
    %v407 = vpop.f32.mrb[0].mxu0
    %v408 = vadd.f32 0.0, %v407
    %v409 = vpop.f32.mrb[0].mxu0
    %v410 = vadd.f32 0.0, %v409
    %411 = vmatprep.mubr.f32.mxu0 0.0
    %412 = vmatmul.mubr.f32.gmra.mrb[0].mxu0 %v288
    %v413 = vpop.f32.mrb[0].mxu0
    %v414 = vadd.f32 0.0, %v413
    %v415 = vpop.f32.mrb[0].mxu0
    %v416 = vadd.f32 0.0, %v415
    %417 = vmatprep.mubr.f32.mxu0 0.0
    %418 = vmatmul.mubr.f32.gmra.mrb[0].mxu0 %v290
    %v419 = vpop.f32.mrb[0].mxu0
    %v420 = vadd.f32 0.0, %v419
    %v421 = vpop.f32.mrb[0].mxu0
    %v422 = vadd.f32 0.0, %v421
    %423 = vdwg.mxu0
    %424 = vmatprep.subr.mxu0 %v241
    %425 = vmatpush1.msra.mxu0 %v240
    %426 = vmatprep.subr.mxu0 %v249
    %427 = vmatpush1.msra.mxu0 %v248
    %428 = vmatprep.subr.mxu0 %v257
    %429 = vmatpush1.msra.mxu0 %v256
    %430 = vmatprep.subr.mxu0 %v303
    %431 = vmatpush1.msra.mxu0 %v300
    %432 = vmatprep.subr.mxu0 0.0
    %433 = vmatpush1.msra.mxu0 0.0
    %434 = vmatprep.subr.mxu0 0.0
    %435 = vmatpush1.msra.mxu0 0.0
    %436 = vmatprep.subr.mxu0 0.0
    %437 = vmatpush1.msra.mxu0 0.0
    %438 = vmatprep.subr.mxu0 0.0
    %439 = vmatpush1.msra.mxu0 0.0
    %440 = vmatprep.subr.mxu0 0.0
    %441 = vmatpush1.msra.mxu0 0.0
    %442 = vmatprep.subr.mxu0 0.0
    %443 = vmatpush1.msra.mxu0 0.0
    %444 = vmatprep.subr.mxu0 0.0
    %445 = vmatpush1.msra.mxu0 0.0
    %446 = vmatprep.subr.mxu0 0.0
    %447 = vmatpush1.msra.mxu0 0.0
    %448 = vmatprep.subr.mxu0 0.0
    %449 = vmatpush1.msra.mxu0 0.0
    %450 = vmatprep.subr.mxu0 0.0
    %451 = vmatpush1.msra.mxu0 0.0
    %452 = vmatprep.subr.mxu0 0.0
    %453 = vmatpush1.msra.mxu0 0.0
    %454 = vmatprep.subr.mxu0 0.0
    %455 = vmatpush1.msra.mxu0 0.0
    %456 = vmatprep.subr.mxu0 0.0
    %457 = vmatpush1.msra.mxu0 0.0
    %458 = vmatprep.subr.mxu0 0.0
    %459 = vmatpush1.msra.mxu0 0.0
    %460 = vmatprep.subr.mxu0 0.0
    %461 = vmatpush1.msra.mxu0 0.0
    %462 = vmatprep.subr.mxu0 0.0
    %463 = vmatpush1.msra.mxu0 0.0
    %464 = vmatprep.subr.mxu0 0.0
    %465 = vmatpush1.msra.mxu0 0.0
    %466 = vmatprep.subr.mxu0 0.0
    %467 = vmatpush1.msra.mxu0 0.0
    %468 = vmatprep.subr.mxu0 0.0
    %469 = vmatpush1.msra.mxu0 0.0
    %470 = vmatprep.subr.mxu0 0.0
    %471 = vmatpush1.msra.mxu0 0.0
    %472 = vmatprep.subr.mxu0 0.0
    %473 = vmatpush1.msra.mxu0 0.0
    %474 = vmatprep.subr.mxu0 0.0
    %475 = vmatpush1.msra.mxu0 0.0
    %476 = vmatprep.subr.mxu0 0.0
    %477 = vmatpush1.msra.mxu0 0.0
    %478 = vmatprep.subr.mxu0 0.0
    %479 = vmatpush1.msra.mxu0 0.0
    %480 = vmatprep.subr.mxu0 0.0
    %481 = vmatpush1.msra.mxu0 0.0
    %482 = vmatprep.subr.mxu0 0.0
    %483 = vmatpush1.msra.mxu0 0.0
    %484 = vmatprep.subr.mxu0 0.0
    %485 = vmatpush1.msra.mxu0 0.0
    %486 = vmatprep.subr.mxu0 0.0
    %487 = vmatpush1.msra.mxu0 0.0
    %488 = vmatprep.mubr.f32.mxu0 0.0
    %489 = vmatmul.mubr.f32.gmra.mrb[0].mxu0 %v278
    %v490 = vpop.f32.mrb[0].mxu0
    %v491 = vadd.f32 0.0, %v490
    %v492 = vpop.f32.mrb[0].mxu0
    %v493 = vadd.f32 0.0, %v492
    %494 = vmatprep.mubr.f32.mxu0 0.0
    %495 = vmatmul.mubr.f32.gmra.mrb[0].mxu0 %v280
    %v496 = vpop.f32.mrb[0].mxu0
    %v497 = vadd.f32 0.0, %v496
    %v498 = vpop.f32.mrb[0].mxu0
    %v499 = vadd.f32 0.0, %v498
    %500 = vmatprep.mubr.f32.mxu0 0.0
    %501 = vmatmul.mubr.f32.gmra.mrb[0].mxu0 %v282
    %v502 = vpop.f32.mrb[0].mxu0
    %v503 = vadd.f32 0.0, %v502
    %v504 = vpop.f32.mrb[0].mxu0
    %v505 = vadd.f32 0.0, %v504
    %506 = vmatprep.mubr.f32.mxu0 0.0
    %507 = vmatmul.mubr.f32.gmra.mrb[0].mxu0 %v284
    %v508 = vpop.f32.mrb[0].mxu0
    %v509 = vadd.f32 0.0, %v508
    %v510 = vpop.f32.mrb[0].mxu0
    %v511 = vadd.f32 0.0, %v510
    %512 = vmatprep.mubr.f32.mxu0 0.0
    %513 = vmatmul.mubr.f32.gmra.mrb[0].mxu0 %v286
    %v514 = vpop.f32.mrb[0].mxu0
    %v515 = vadd.f32 0.0, %v514
    %v516 = vpop.f32.mrb[0].mxu0
    %v517 = vadd.f32 0.0, %v516
    %518 = vmatprep.mubr.f32.mxu0 0.0
    %519 = vmatmul.mubr.f32.gmra.mrb[0].mxu0 %v288
    %v520 = vpop.f32.mrb[0].mxu0
    %v521 = vadd.f32 0.0, %v520
    %v522 = vpop.f32.mrb[0].mxu0
    %v523 = vadd.f32 0.0, %v522
    %524 = vmatprep.mubr.f32.mxu0 0.0
    %525 = vmatmul.mubr.f32.gmra.mrb[0].mxu0 %v290
    %v526 = vpop.f32.mrb[0].mxu0
    %v527 = vadd.f32 0.0, %v526
    %v528 = vpop.f32.mrb[0].mxu0
    %v529 = vadd.f32 0.0, %v528
    %530 = vdwg.mxu0
    %531 = vmatprep.subr.mxu0 %v243
    %532 = vmatpush1.msra.mxu0 %v242
    %533 = vmatprep.subr.mxu0 %v251
    %534 = vmatpush1.msra.mxu0 %v250
    %535 = vmatprep.subr.mxu0 %v259
    %536 = vmatpush1.msra.mxu0 %v258
    %537 = vmatprep.subr.mxu0 %v309
    %538 = vmatpush1.msra.mxu0 %v306
    %539 = vmatprep.subr.mxu0 0.0
    %540 = vmatpush1.msra.mxu0 0.0
    %541 = vmatprep.subr.mxu0 0.0
    %542 = vmatpush1.msra.mxu0 0.0
    %543 = vmatprep.subr.mxu0 0.0
    %544 = vmatpush1.msra.mxu0 0.0
    %545 = vmatprep.subr.mxu0 0.0
    %546 = vmatpush1.msra.mxu0 0.0
    %547 = vmatprep.subr.mxu0 0.0
    %548 = vmatpush1.msra.mxu0 0.0
    %549 = vmatprep.subr.mxu0 0.0
    %550 = vmatpush1.msra.mxu0 0.0
    %551 = vmatprep.subr.mxu0 0.0
    %552 = vmatpush1.msra.mxu0 0.0
    %553 = vmatprep.subr.mxu0 0.0
    %554 = vmatpush1.msra.mxu0 0.0
    %555 = vmatprep.subr.mxu0 0.0
    %556 = vmatpush1.msra.mxu0 0.0
    %557 = vmatprep.subr.mxu0 0.0
    %558 = vmatpush1.msra.mxu0 0.0
    %559 = vmatprep.subr.mxu0 0.0
    %560 = vmatpush1.msra.mxu0 0.0
    %561 = vmatprep.subr.mxu0 0.0
    %562 = vmatpush1.msra.mxu0 0.0
    %563 = vmatprep.subr.mxu0 0.0
    %564 = vmatpush1.msra.mxu0 0.0
    %565 = vmatprep.subr.mxu0 0.0
    %566 = vmatpush1.msra.mxu0 0.0
    %567 = vmatprep.subr.mxu0 0.0
    %568 = vmatpush1.msra.mxu0 0.0
    %569 = vmatprep.subr.mxu0 0.0
    %570 = vmatpush1.msra.mxu0 0.0
    %571 = vmatprep.subr.mxu0 0.0
    %572 = vmatpush1.msra.mxu0 0.0
    %573 = vmatprep.subr.mxu0 0.0
    %574 = vmatpush1.msra.mxu0 0.0
    %575 = vmatprep.subr.mxu0 0.0
    %576 = vmatpush1.msra.mxu0 0.0
    %577 = vmatprep.subr.mxu0 0.0
    %578 = vmatpush1.msra.mxu0 0.0
    %579 = vmatprep.subr.mxu0 0.0
    %580 = vmatpush1.msra.mxu0 0.0
    %581 = vmatprep.subr.mxu0 0.0
    %582 = vmatpush1.msra.mxu0 0.0
    %583 = vmatprep.subr.mxu0 0.0
    %584 = vmatpush1.msra.mxu0 0.0
    %585 = vmatprep.subr.mxu0 0.0
    %586 = vmatpush1.msra.mxu0 0.0
    %587 = vmatprep.subr.mxu0 0.0
    %588 = vmatpush1.msra.mxu0 0.0
    %589 = vmatprep.subr.mxu0 0.0
    %590 = vmatpush1.msra.mxu0 0.0
    %591 = vmatprep.subr.mxu0 0.0
    %592 = vmatpush1.msra.mxu0 0.0
    %593 = vmatprep.subr.mxu0 0.0
    %594 = vmatpush1.msra.mxu0 0.0
    %595 = vmatprep.mubr.f32.mxu0 0.0
    %596 = vmatmul.mubr.f32.gmra.mrb[0].mxu0 %v278
    %v597 = vpop.f32.mrb[0].mxu0
    %v598 = vadd.f32 0.0, %v597
    %v599 = vpop.f32.mrb[0].mxu0
    %v600 = vadd.f32 0.0, %v599
    %601 = vmatprep.mubr.f32.mxu0 0.0
    %602 = vmatmul.mubr.f32.gmra.mrb[0].mxu0 %v280
    %v603 = vpop.f32.mrb[0].mxu0
    %v604 = vadd.f32 0.0, %v603
    %v605 = vpop.f32.mrb[0].mxu0
    %v606 = vadd.f32 0.0, %v605
    %607 = vmatprep.mubr.f32.mxu0 0.0
    %608 = vmatmul.mubr.f32.gmra.mrb[0].mxu0 %v282
    %v609 = vpop.f32.mrb[0].mxu0
    %v610 = vadd.f32 0.0, %v609
    %v611 = vpop.f32.mrb[0].mxu0
    %v612 = vadd.f32 0.0, %v611
    %613 = vmatprep.mubr.f32.mxu0 0.0
    %614 = vmatmul.mubr.f32.gmra.mrb[0].mxu0 %v284
    %v615 = vpop.f32.mrb[0].mxu0
    %v616 = vadd.f32 0.0, %v615
    %v617 = vpop.f32.mrb[0].mxu0
    %v618 = vadd.f32 0.0, %v617
    %619 = vmatprep.mubr.f32.mxu0 0.0
    %620 = vmatmul.mubr.f32.gmra.mrb[0].mxu0 %v286
    %v621 = vpop.f32.mrb[0].mxu0
    %v622 = vadd.f32 0.0, %v621
    %v623 = vpop.f32.mrb[0].mxu0
    %v624 = vadd.f32 0.0, %v623
    %625 = vmatprep.mubr.f32.mxu0 0.0
    %626 = vmatmul.mubr.f32.gmra.mrb[0].mxu0 %v288
    %v627 = vpop.f32.mrb[0].mxu0
    %v628 = vadd.f32 0.0, %v627
    %v629 = vpop.f32.mrb[0].mxu0
    %v630 = vadd.f32 0.0, %v629
    %631 = vmatprep.mubr.f32.mxu0 0.0
    %632 = vmatmul.mubr.f32.gmra.mrb[0].mxu0 %v290
    %v633 = vpop.f32.mrb[0].mxu0
    %v634 = vadd.f32 0.0, %v633
    %v635 = vpop.f32.mrb[0].mxu0
    %v636 = vadd.f32 0.0, %v635
    %637 = vdwg.mxu0
    %638 = vmatprep.subr.mxu0 %v245
    %639 = vmatpush1.msra.mxu0 %v244
    %640 = vmatprep.subr.mxu0 %v253
    %641 = vmatpush1.msra.mxu0 %v252
    %642 = vmatprep.subr.mxu0 %v261
    %643 = vmatpush1.msra.mxu0 %v260
    %644 = vmatprep.subr.mxu0 %v315
    %645 = vmatpush1.msra.mxu0 %v312
    %646 = vmatprep.subr.mxu0 0.0
    %647 = vmatpush1.msra.mxu0 0.0
    %648 = vmatprep.subr.mxu0 0.0
    %649 = vmatpush1.msra.mxu0 0.0
    %650 = vmatprep.subr.mxu0 0.0
    %651 = vmatpush1.msra.mxu0 0.0
    %652 = vmatprep.subr.mxu0 0.0
    %653 = vmatpush1.msra.mxu0 0.0
    %654 = vmatprep.subr.mxu0 0.0
    %655 = vmatpush1.msra.mxu0 0.0
    %656 = vmatprep.subr.mxu0 0.0
    %657 = vmatpush1.msra.mxu0 0.0
    %658 = vmatprep.subr.mxu0 0.0
    %659 = vmatpush1.msra.mxu0 0.0
    %660 = vmatprep.subr.mxu0 0.0
    %661 = vmatpush1.msra.mxu0 0.0
    %662 = vmatprep.subr.mxu0 0.0
    %663 = vmatpush1.msra.mxu0 0.0
    %664 = vmatprep.subr.mxu0 0.0
    %665 = vmatpush1.msra.mxu0 0.0
    %666 = vmatprep.subr.mxu0 0.0
    %667 = vmatpush1.msra.mxu0 0.0
    %668 = vmatprep.subr.mxu0 0.0
    %669 = vmatpush1.msra.mxu0 0.0
    %670 = vmatprep.subr.mxu0 0.0
    %671 = vmatpush1.msra.mxu0 0.0
    %672 = vmatprep.subr.mxu0 0.0
    %673 = vmatpush1.msra.mxu0 0.0
    %674 = vmatprep.subr.mxu0 0.0
    %675 = vmatpush1.msra.mxu0 0.0
    %676 = vmatprep.subr.mxu0 0.0
    %677 = vmatpush1.msra.mxu0 0.0
    %678 = vmatprep.subr.mxu0 0.0
    %679 = vmatpush1.msra.mxu0 0.0
    %680 = vmatprep.subr.mxu0 0.0
    %681 = vmatpush1.msra.mxu0 0.0
    %682 = vmatprep.subr.mxu0 0.0
    %683 = vmatpush1.msra.mxu0 0.0
    %684 = vmatprep.subr.mxu0 0.0
    %685 = vmatpush1.msra.mxu0 0.0
    %686 = vmatprep.subr.mxu0 0.0
    %687 = vmatpush1.msra.mxu0 0.0
    %688 = vmatprep.subr.mxu0 0.0
    %689 = vmatpush1.msra.mxu0 0.0
    %690 = vmatprep.subr.mxu0 0.0
    %691 = vmatpush1.msra.mxu0 0.0
    %692 = vmatprep.subr.mxu0 0.0
    %693 = vmatpush1.msra.mxu0 0.0
    %694 = vmatprep.subr.mxu0 0.0
    %695 = vmatpush1.msra.mxu0 0.0
    %696 = vmatprep.subr.mxu0 0.0
    %697 = vmatpush1.msra.mxu0 0.0
    %698 = vmatprep.subr.mxu0 0.0
    %699 = vmatpush1.msra.mxu0 0.0
    %700 = vmatprep.subr.mxu0 0.0
    %701 = vmatpush1.msra.mxu0 0.0
    %702 = vmatprep.mubr.f32.mxu0 0.0
    %703 = vmatmul.mubr.f32.gmra.mrb[0].mxu0 %v278
    %v704 = vpop.f32.mrb[0].mxu0
    %v705 = vadd.f32 0.0, %v704
    %v706 = vpop.f32.mrb[0].mxu0
    %v707 = vadd.f32 0.0, %v706
    %708 = vmatprep.mubr.f32.mxu0 0.0
    %709 = vmatmul.mubr.f32.gmra.mrb[0].mxu0 %v280
    %v710 = vpop.f32.mrb[0].mxu0
    %v711 = vadd.f32 0.0, %v710
    %v712 = vpop.f32.mrb[0].mxu0
    %v713 = vadd.f32 0.0, %v712
    %714 = vmatprep.mubr.f32.mxu0 0.0
    %715 = vmatmul.mubr.f32.gmra.mrb[0].mxu0 %v282
    %v716 = vpop.f32.mrb[0].mxu0
    %v717 = vadd.f32 0.0, %v716
    %v718 = vpop.f32.mrb[0].mxu0
    %v719 = vadd.f32 0.0, %v718
    %720 = vmatprep.mubr.f32.mxu0 0.0
    %721 = vmatmul.mubr.f32.gmra.mrb[0].mxu0 %v284
    %v722 = vpop.f32.mrb[0].mxu0
    %v723 = vadd.f32 0.0, %v722
    %v724 = vpop.f32.mrb[0].mxu0
    %v725 = vadd.f32 0.0, %v724
    %726 = vmatprep.mubr.f32.mxu0 0.0
    %727 = vmatmul.mubr.f32.gmra.mrb[0].mxu0 %v286
    %v728 = vpop.f32.mrb[0].mxu0
    %v729 = vadd.f32 0.0, %v728
    %v730 = vpop.f32.mrb[0].mxu0
    %v731 = vadd.f32 0.0, %v730
    %732 = vmatprep.mubr.f32.mxu0 0.0
    %733 = vmatmul.mubr.f32.gmra.mrb[0].mxu0 %v288
    %v734 = vpop.f32.mrb[0].mxu0
    %v735 = vadd.f32 0.0, %v734
    %v736 = vpop.f32.mrb[0].mxu0
    %v737 = vadd.f32 0.0, %v736
    %738 = vmatprep.mubr.f32.mxu0 0.0
    %739 = vmatmul.mubr.f32.gmra.mrb[0].mxu0 %v290
    %v740 = vpop.f32.mrb[0].mxu0
    %v741 = vadd.f32 0.0, %v740
    %v742 = vpop.f32.mrb[0].mxu0
    %v743 = vadd.f32 0.0, %v742
    %744 = vdwg.mxu0
    %v745 = vcombine.low %v134, %v150
    %v746 = vcombine.low %v135, %v151
    %v747 = vcombine.low %v136, %v152
    %v748 = vcombine.low %v137, %v138
    %v749 = vcombine.low %v153, %v139
    %v750 = vcombine.low %v154, %v140
    %v751 = vcombine.low %v155, %v141
    %v752 = vsel %vm277, %v745, 0
    %v754 = vsel %vm277, %v746, 0
    %v756 = vsel %vm277, %v747, 0
    %v758 = vsel %vm277, %v748, 0
    %v760 = vsel %vm277, %v749, 0
    %v762 = vsel %vm277, %v750, 0
    %v764 = vsel %vm277, %v751, 0
    %v767 = vsel %vm292, %v180, 0
    %v770 = vsel %vm292, %v181, 0
    %v773 = vsel %vm292, %v182, 0
    %v776 = vsel %vm292, %v183, 0
    %v779 = vsel %vm292, %v184, 0
    %v782 = vsel %vm292, %v185, 0
    %v785 = vsel %vm292, %v186, 0
    %v788 = vsel %vm292, %v187, 0
    %790 = vmatprep.subr.mxu0 %v157
    %791 = vmatpush1.msra.mxu0 %v156
    %792 = vmatprep.subr.mxu0 %v165
    %793 = vmatpush1.msra.mxu0 %v164
    %794 = vmatprep.subr.mxu0 %v173
    %795 = vmatpush1.msra.mxu0 %v172
    %796 = vmatprep.subr.mxu0 %v770
    %797 = vmatpush1.msra.mxu0 %v767
    %798 = vmatprep.subr.mxu0 0.0
    %799 = vmatpush1.msra.mxu0 0.0
    %800 = vmatprep.subr.mxu0 0.0
    %801 = vmatpush1.msra.mxu0 0.0
    %802 = vmatprep.subr.mxu0 0.0
    %803 = vmatpush1.msra.mxu0 0.0
    %804 = vmatprep.subr.mxu0 0.0
    %805 = vmatpush1.msra.mxu0 0.0
    %806 = vmatprep.subr.mxu0 0.0
    %807 = vmatpush1.msra.mxu0 0.0
    %808 = vmatprep.subr.mxu0 0.0
    %809 = vmatpush1.msra.mxu0 0.0
    %810 = vmatprep.subr.mxu0 0.0
    %811 = vmatpush1.msra.mxu0 0.0
    %812 = vmatprep.subr.mxu0 0.0
    %813 = vmatpush1.msra.mxu0 0.0
    %814 = vmatprep.subr.mxu0 0.0
    %815 = vmatpush1.msra.mxu0 0.0
    %816 = vmatprep.subr.mxu0 0.0
    %817 = vmatpush1.msra.mxu0 0.0
    %818 = vmatprep.subr.mxu0 0.0
    %819 = vmatpush1.msra.mxu0 0.0
    %820 = vmatprep.subr.mxu0 0.0
    %821 = vmatpush1.msra.mxu0 0.0
    %822 = vmatprep.subr.mxu0 0.0
    %823 = vmatpush1.msra.mxu0 0.0
    %824 = vmatprep.subr.mxu0 0.0
    %825 = vmatpush1.msra.mxu0 0.0
    %826 = vmatprep.subr.mxu0 0.0
    %827 = vmatpush1.msra.mxu0 0.0
    %828 = vmatprep.subr.mxu0 0.0
    %829 = vmatpush1.msra.mxu0 0.0
    %830 = vmatprep.subr.mxu0 0.0
    %831 = vmatpush1.msra.mxu0 0.0
    %832 = vmatprep.subr.mxu0 0.0
    %833 = vmatpush1.msra.mxu0 0.0
    %834 = vmatprep.subr.mxu0 0.0
    %835 = vmatpush1.msra.mxu0 0.0
    %836 = vmatprep.subr.mxu0 0.0
    %837 = vmatpush1.msra.mxu0 0.0
    %838 = vmatprep.subr.mxu0 0.0
    %839 = vmatpush1.msra.mxu0 0.0
    %840 = vmatprep.subr.mxu0 0.0
    %841 = vmatpush1.msra.mxu0 0.0
    %842 = vmatprep.subr.mxu0 0.0
    %843 = vmatpush1.msra.mxu0 0.0
    %844 = vmatprep.subr.mxu0 0.0
    %845 = vmatpush1.msra.mxu0 0.0
    %846 = vmatprep.subr.mxu0 0.0
    %847 = vmatpush1.msra.mxu0 0.0
    %848 = vmatprep.subr.mxu0 0.0
    %849 = vmatpush1.msra.mxu0 0.0
    %850 = vmatprep.subr.mxu0 0.0
    %851 = vmatpush1.msra.mxu0 0.0
    %852 = vmatprep.subr.mxu0 0.0
    %853 = vmatpush1.msra.mxu0 0.0
    %854 = vmatprep.mubr.f32.mxu0 0.0
    %855 = vmatmul.mubr.f32.gmra.mrb[0].mxu0 %v752
    %v856 = vpop.f32.mrb[0].mxu0
    %v857 = vadd.f32 %v384, %v856
    %v858 = vpop.f32.mrb[0].mxu0
    %v859 = vadd.f32 %v386, %v858
    %860 = vmatprep.mubr.f32.mxu0 0.0
    %861 = vmatmul.mubr.f32.gmra.mrb[0].mxu0 %v754
    %v862 = vpop.f32.mrb[0].mxu0
    %v863 = vadd.f32 %v390, %v862
    %v864 = vpop.f32.mrb[0].mxu0
    %v865 = vadd.f32 %v392, %v864
    %866 = vmatprep.mubr.f32.mxu0 0.0
    %867 = vmatmul.mubr.f32.gmra.mrb[0].mxu0 %v756
    %v868 = vpop.f32.mrb[0].mxu0
    %v869 = vadd.f32 %v396, %v868
    %v870 = vpop.f32.mrb[0].mxu0
    %v871 = vadd.f32 %v398, %v870
    %872 = vmatprep.mubr.f32.mxu0 0.0
    %873 = vmatmul.mubr.f32.gmra.mrb[0].mxu0 %v758
    %v874 = vpop.f32.mrb[0].mxu0
    %v875 = vadd.f32 %v402, %v874
    %v876 = vpop.f32.mrb[0].mxu0
    %v877 = vadd.f32 %v404, %v876
    %878 = vmatprep.mubr.f32.mxu0 0.0
    %879 = vmatmul.mubr.f32.gmra.mrb[0].mxu0 %v760
    %v880 = vpop.f32.mrb[0].mxu0
    %v881 = vadd.f32 %v408, %v880
    %v882 = vpop.f32.mrb[0].mxu0
    %v883 = vadd.f32 %v410, %v882
    %884 = vmatprep.mubr.f32.mxu0 0.0
    %885 = vmatmul.mubr.f32.gmra.mrb[0].mxu0 %v762
    %v886 = vpop.f32.mrb[0].mxu0
    %v887 = vadd.f32 %v414, %v886
    %v888 = vpop.f32.mrb[0].mxu0
    %v889 = vadd.f32 %v416, %v888
    %890 = vmatprep.mubr.f32.mxu0 0.0
    %891 = vmatmul.mubr.f32.gmra.mrb[0].mxu0 %v764
    %v892 = vpop.f32.mrb[0].mxu0
    %v893 = vadd.f32 %v420, %v892
    %v894 = vpop.f32.mrb[0].mxu0
    %v895 = vadd.f32 %v422, %v894
    %896 = vdwg.mxu0
    %897 = vmatprep.subr.mxu0 %v159
    %898 = vmatpush1.msra.mxu0 %v158
    %899 = vmatprep.subr.mxu0 %v167
    %900 = vmatpush1.msra.mxu0 %v166
    %901 = vmatprep.subr.mxu0 %v175
    %902 = vmatpush1.msra.mxu0 %v174
    %903 = vmatprep.subr.mxu0 %v776
    %904 = vmatpush1.msra.mxu0 %v773
    %905 = vmatprep.subr.mxu0 0.0
    %906 = vmatpush1.msra.mxu0 0.0
    %907 = vmatprep.subr.mxu0 0.0
    %908 = vmatpush1.msra.mxu0 0.0
    %909 = vmatprep.subr.mxu0 0.0
    %910 = vmatpush1.msra.mxu0 0.0
    %911 = vmatprep.subr.mxu0 0.0
    %912 = vmatpush1.msra.mxu0 0.0
    %913 = vmatprep.subr.mxu0 0.0
    %914 = vmatpush1.msra.mxu0 0.0
    %915 = vmatprep.subr.mxu0 0.0
    %916 = vmatpush1.msra.mxu0 0.0
    %917 = vmatprep.subr.mxu0 0.0
    %918 = vmatpush1.msra.mxu0 0.0
    %919 = vmatprep.subr.mxu0 0.0
    %920 = vmatpush1.msra.mxu0 0.0
    %921 = vmatprep.subr.mxu0 0.0
    %922 = vmatpush1.msra.mxu0 0.0
    %923 = vmatprep.subr.mxu0 0.0
    %924 = vmatpush1.msra.mxu0 0.0
    %925 = vmatprep.subr.mxu0 0.0
    %926 = vmatpush1.msra.mxu0 0.0
    %927 = vmatprep.subr.mxu0 0.0
    %928 = vmatpush1.msra.mxu0 0.0
    %929 = vmatprep.subr.mxu0 0.0
    %930 = vmatpush1.msra.mxu0 0.0
    %931 = vmatprep.subr.mxu0 0.0
    %932 = vmatpush1.msra.mxu0 0.0
    %933 = vmatprep.subr.mxu0 0.0
    %934 = vmatpush1.msra.mxu0 0.0
    %935 = vmatprep.subr.mxu0 0.0
    %936 = vmatpush1.msra.mxu0 0.0
    %937 = vmatprep.subr.mxu0 0.0
    %938 = vmatpush1.msra.mxu0 0.0
    %939 = vmatprep.subr.mxu0 0.0
    %940 = vmatpush1.msra.mxu0 0.0
    %941 = vmatprep.subr.mxu0 0.0
    %942 = vmatpush1.msra.mxu0 0.0
    %943 = vmatprep.subr.mxu0 0.0
    %944 = vmatpush1.msra.mxu0 0.0
    %945 = vmatprep.subr.mxu0 0.0
    %946 = vmatpush1.msra.mxu0 0.0
    %947 = vmatprep.subr.mxu0 0.0
    %948 = vmatpush1.msra.mxu0 0.0
    %949 = vmatprep.subr.mxu0 0.0
    %950 = vmatpush1.msra.mxu0 0.0
    %951 = vmatprep.subr.mxu0 0.0
    %952 = vmatpush1.msra.mxu0 0.0
    %953 = vmatprep.subr.mxu0 0.0
    %954 = vmatpush1.msra.mxu0 0.0
    %955 = vmatprep.subr.mxu0 0.0
    %956 = vmatpush1.msra.mxu0 0.0
    %957 = vmatprep.subr.mxu0 0.0
    %958 = vmatpush1.msra.mxu0 0.0
    %959 = vmatprep.subr.mxu0 0.0
    %960 = vmatpush1.msra.mxu0 0.0
    %961 = vmatprep.mubr.f32.mxu0 0.0
    %962 = vmatmul.mubr.f32.gmra.mrb[0].mxu0 %v752
    %v963 = vpop.f32.mrb[0].mxu0
    %v964 = vadd.f32 %v491, %v963
    %v965 = vpop.f32.mrb[0].mxu0
    %v966 = vadd.f32 %v493, %v965
    %967 = vmatprep.mubr.f32.mxu0 0.0
    %968 = vmatmul.mubr.f32.gmra.mrb[0].mxu0 %v754
    %v969 = vpop.f32.mrb[0].mxu0
    %v970 = vadd.f32 %v497, %v969
    %v971 = vpop.f32.mrb[0].mxu0
    %v972 = vadd.f32 %v499, %v971
    %973 = vmatprep.mubr.f32.mxu0 0.0
    %974 = vmatmul.mubr.f32.gmra.mrb[0].mxu0 %v756
    %v975 = vpop.f32.mrb[0].mxu0
    %v976 = vadd.f32 %v503, %v975
    %v977 = vpop.f32.mrb[0].mxu0
    %v978 = vadd.f32 %v505, %v977
    %979 = vmatprep.mubr.f32.mxu0 0.0
    %980 = vmatmul.mubr.f32.gmra.mrb[0].mxu0 %v758
    %v981 = vpop.f32.mrb[0].mxu0
    %v982 = vadd.f32 %v509, %v981
    %v983 = vpop.f32.mrb[0].mxu0
    %v984 = vadd.f32 %v511, %v983
    %985 = vmatprep.mubr.f32.mxu0 0.0
    %986 = vmatmul.mubr.f32.gmra.mrb[0].mxu0 %v760
    %v987 = vpop.f32.mrb[0].mxu0
    %v988 = vadd.f32 %v515, %v987
    %v989 = vpop.f32.mrb[0].mxu0
    %v990 = vadd.f32 %v517, %v989
    %991 = vmatprep.mubr.f32.mxu0 0.0
    %992 = vmatmul.mubr.f32.gmra.mrb[0].mxu0 %v762
    %v993 = vpop.f32.mrb[0].mxu0
    %v994 = vadd.f32 %v521, %v993
    %v995 = vpop.f32.mrb[0].mxu0
    %v996 = vadd.f32 %v523, %v995
    %997 = vmatprep.mubr.f32.mxu0 0.0
    %998 = vmatmul.mubr.f32.gmra.mrb[0].mxu0 %v764
    %v999 = vpop.f32.mrb[0].mxu0
    %v1000 = vadd.f32 %v527, %v999
    %v1001 = vpop.f32.mrb[0].mxu0
    %v1002 = vadd.f32 %v529, %v1001
    %1003 = vdwg.mxu0
    %1004 = vmatprep.subr.mxu0 %v161
    %1005 = vmatpush1.msra.mxu0 %v160
    %1006 = vmatprep.subr.mxu0 %v169
    %1007 = vmatpush1.msra.mxu0 %v168
    %1008 = vmatprep.subr.mxu0 %v177
    %1009 = vmatpush1.msra.mxu0 %v176
    %1010 = vmatprep.subr.mxu0 %v782
    %1011 = vmatpush1.msra.mxu0 %v779
    %1012 = vmatprep.subr.mxu0 0.0
    %1013 = vmatpush1.msra.mxu0 0.0
    %1014 = vmatprep.subr.mxu0 0.0
    %1015 = vmatpush1.msra.mxu0 0.0
    %1016 = vmatprep.subr.mxu0 0.0
    %1017 = vmatpush1.msra.mxu0 0.0
    %1018 = vmatprep.subr.mxu0 0.0
    %1019 = vmatpush1.msra.mxu0 0.0
    %1020 = vmatprep.subr.mxu0 0.0
    %1021 = vmatpush1.msra.mxu0 0.0
    %1022 = vmatprep.subr.mxu0 0.0
    %1023 = vmatpush1.msra.mxu0 0.0
    %1024 = vmatprep.subr.mxu0 0.0
    %1025 = vmatpush1.msra.mxu0 0.0
    %1026 = vmatprep.subr.mxu0 0.0
    %1027 = vmatpush1.msra.mxu0 0.0
    %1028 = vmatprep.subr.mxu0 0.0
    %1029 = vmatpush1.msra.mxu0 0.0
    %1030 = vmatprep.subr.mxu0 0.0
    %1031 = vmatpush1.msra.mxu0 0.0
    %1032 = vmatprep.subr.mxu0 0.0
    %1033 = vmatpush1.msra.mxu0 0.0
    %1034 = vmatprep.subr.mxu0 0.0
    %1035 = vmatpush1.msra.mxu0 0.0
    %1036 = vmatprep.subr.mxu0 0.0
    %1037 = vmatpush1.msra.mxu0 0.0
    %1038 = vmatprep.subr.mxu0 0.0
    %1039 = vmatpush1.msra.mxu0 0.0
    %1040 = vmatprep.subr.mxu0 0.0
    %1041 = vmatpush1.msra.mxu0 0.0
    %1042 = vmatprep.subr.mxu0 0.0
    %1043 = vmatpush1.msra.mxu0 0.0
    %1044 = vmatprep.subr.mxu0 0.0
    %1045 = vmatpush1.msra.mxu0 0.0
    %1046 = vmatprep.subr.mxu0 0.0
    %1047 = vmatpush1.msra.mxu0 0.0
    %1048 = vmatprep.subr.mxu0 0.0
    %1049 = vmatpush1.msra.mxu0 0.0
    %1050 = vmatprep.subr.mxu0 0.0
    %1051 = vmatpush1.msra.mxu0 0.0
    %1052 = vmatprep.subr.mxu0 0.0
    %1053 = vmatpush1.msra.mxu0 0.0
    %1054 = vmatprep.subr.mxu0 0.0
    %1055 = vmatpush1.msra.mxu0 0.0
    %1056 = vmatprep.subr.mxu0 0.0
    %1057 = vmatpush1.msra.mxu0 0.0
    %1058 = vmatprep.subr.mxu0 0.0
    %1059 = vmatpush1.msra.mxu0 0.0
    %1060 = vmatprep.subr.mxu0 0.0
    %1061 = vmatpush1.msra.mxu0 0.0
    %1062 = vmatprep.subr.mxu0 0.0
    %1063 = vmatpush1.msra.mxu0 0.0
    %1064 = vmatprep.subr.mxu0 0.0
    %1065 = vmatpush1.msra.mxu0 0.0
    %1066 = vmatprep.subr.mxu0 0.0
    %1067 = vmatpush1.msra.mxu0 0.0
    %1068 = vmatprep.mubr.f32.mxu0 0.0
    %1069 = vmatmul.mubr.f32.gmra.mrb[0].mxu0 %v752
    %v1070 = vpop.f32.mrb[0].mxu0
    %v1071 = vadd.f32 %v598, %v1070
    %v1072 = vpop.f32.mrb[0].mxu0
    %v1073 = vadd.f32 %v600, %v1072
    %1074 = vmatprep.mubr.f32.mxu0 0.0
    %1075 = vmatmul.mubr.f32.gmra.mrb[0].mxu0 %v754
    %v1076 = vpop.f32.mrb[0].mxu0
    %v1077 = vadd.f32 %v604, %v1076
    %v1078 = vpop.f32.mrb[0].mxu0
    %v1079 = vadd.f32 %v606, %v1078
    %1080 = vmatprep.mubr.f32.mxu0 0.0
    %1081 = vmatmul.mubr.f32.gmra.mrb[0].mxu0 %v756
    %v1082 = vpop.f32.mrb[0].mxu0
    %v1083 = vadd.f32 %v610, %v1082
    %v1084 = vpop.f32.mrb[0].mxu0
    %v1085 = vadd.f32 %v612, %v1084
    %1086 = vmatprep.mubr.f32.mxu0 0.0
    %1087 = vmatmul.mubr.f32.gmra.mrb[0].mxu0 %v758
    %v1088 = vpop.f32.mrb[0].mxu0
    %v1089 = vadd.f32 %v616, %v1088
    %v1090 = vpop.f32.mrb[0].mxu0
    %v1091 = vadd.f32 %v618, %v1090
    %1092 = vmatprep.mubr.f32.mxu0 0.0
    %1093 = vmatmul.mubr.f32.gmra.mrb[0].mxu0 %v760
    %v1094 = vpop.f32.mrb[0].mxu0
    %v1095 = vadd.f32 %v622, %v1094
    %v1096 = vpop.f32.mrb[0].mxu0
    %v1097 = vadd.f32 %v624, %v1096
    %1098 = vmatprep.mubr.f32.mxu0 0.0
    %1099 = vmatmul.mubr.f32.gmra.mrb[0].mxu0 %v762
    %v1100 = vpop.f32.mrb[0].mxu0
    %v1101 = vadd.f32 %v628, %v1100
    %v1102 = vpop.f32.mrb[0].mxu0
    %v1103 = vadd.f32 %v630, %v1102
    %1104 = vmatprep.mubr.f32.mxu0 0.0
    %1105 = vmatmul.mubr.f32.gmra.mrb[0].mxu0 %v764
    %v1106 = vpop.f32.mrb[0].mxu0
    %v1107 = vadd.f32 %v634, %v1106
    %v1108 = vpop.f32.mrb[0].mxu0
    %v1109 = vadd.f32 %v636, %v1108
    %1110 = vdwg.mxu0
    %1111 = vmatprep.subr.mxu0 %v163
    %1112 = vmatpush1.msra.mxu0 %v162
    %1113 = vmatprep.subr.mxu0 %v171
    %1114 = vmatpush1.msra.mxu0 %v170
    %1115 = vmatprep.subr.mxu0 %v179
    %1116 = vmatpush1.msra.mxu0 %v178
    %1117 = vmatprep.subr.mxu0 %v788
    %1118 = vmatpush1.msra.mxu0 %v785
    %1119 = vmatprep.subr.mxu0 0.0
    %1120 = vmatpush1.msra.mxu0 0.0
    %1121 = vmatprep.subr.mxu0 0.0
    %1122 = vmatpush1.msra.mxu0 0.0
    %1123 = vmatprep.subr.mxu0 0.0
    %1124 = vmatpush1.msra.mxu0 0.0
    %1125 = vmatprep.subr.mxu0 0.0
    %1126 = vmatpush1.msra.mxu0 0.0
    %1127 = vmatprep.subr.mxu0 0.0
    %1128 = vmatpush1.msra.mxu0 0.0
    %1129 = vmatprep.subr.mxu0 0.0
    %1130 = vmatpush1.msra.mxu0 0.0
    %1131 = vmatprep.subr.mxu0 0.0
    %1132 = vmatpush1.msra.mxu0 0.0
    %1133 = vmatprep.subr.mxu0 0.0
    %1134 = vmatpush1.msra.mxu0 0.0
    %1135 = vmatprep.subr.mxu0 0.0
    %1136 = vmatpush1.msra.mxu0 0.0
    %1137 = vmatprep.subr.mxu0 0.0
    %1138 = vmatpush1.msra.mxu0 0.0
    %1139 = vmatprep.subr.mxu0 0.0
    %1140 = vmatpush1.msra.mxu0 0.0
    %1141 = vmatprep.subr.mxu0 0.0
    %1142 = vmatpush1.msra.mxu0 0.0
    %1143 = vmatprep.subr.mxu0 0.0
    %1144 = vmatpush1.msra.mxu0 0.0
    %1145 = vmatprep.subr.mxu0 0.0
    %1146 = vmatpush1.msra.mxu0 0.0
    %1147 = vmatprep.subr.mxu0 0.0
    %1148 = vmatpush1.msra.mxu0 0.0
    %1149 = vmatprep.subr.mxu0 0.0
    %1150 = vmatpush1.msra.mxu0 0.0
    %1151 = vmatprep.subr.mxu0 0.0
    %1152 = vmatpush1.msra.mxu0 0.0
    %1153 = vmatprep.subr.mxu0 0.0
    %1154 = vmatpush1.msra.mxu0 0.0
    %1155 = vmatprep.subr.mxu0 0.0
    %1156 = vmatpush1.msra.mxu0 0.0
    %1157 = vmatprep.subr.mxu0 0.0
    %1158 = vmatpush1.msra.mxu0 0.0
    %1159 = vmatprep.subr.mxu0 0.0
    %1160 = vmatpush1.msra.mxu0 0.0
    %1161 = vmatprep.subr.mxu0 0.0
    %1162 = vmatpush1.msra.mxu0 0.0
    %1163 = vmatprep.subr.mxu0 0.0
    %1164 = vmatpush1.msra.mxu0 0.0
    %1165 = vmatprep.subr.mxu0 0.0
    %1166 = vmatpush1.msra.mxu0 0.0
    %1167 = vmatprep.subr.mxu0 0.0
    %1168 = vmatpush1.msra.mxu0 0.0
    %1169 = vmatprep.subr.mxu0 0.0
    %1170 = vmatpush1.msra.mxu0 0.0
    %1171 = vmatprep.subr.mxu0 0.0
    %1172 = vmatpush1.msra.mxu0 0.0
    %1173 = vmatprep.subr.mxu0 0.0
    %1174 = vmatpush1.msra.mxu0 0.0
    %1175 = vmatprep.mubr.f32.mxu0 0.0
    %1176 = vmatmul.mubr.f32.gmra.mrb[0].mxu0 %v752
    %v1177 = vpop.f32.mrb[0].mxu0
    %v1178 = vadd.f32 %v705, %v1177
    %v1179 = vpop.f32.mrb[0].mxu0
    %v1180 = vadd.f32 %v707, %v1179
    %1181 = vmatprep.mubr.f32.mxu0 0.0
    %1182 = vmatmul.mubr.f32.gmra.mrb[0].mxu0 %v754
    %v1183 = vpop.f32.mrb[0].mxu0
    %v1184 = vadd.f32 %v711, %v1183
    %v1185 = vpop.f32.mrb[0].mxu0
    %v1186 = vadd.f32 %v713, %v1185
    %1187 = vmatprep.mubr.f32.mxu0 0.0
    %1188 = vmatmul.mubr.f32.gmra.mrb[0].mxu0 %v756
    %v1189 = vpop.f32.mrb[0].mxu0
    %v1190 = vadd.f32 %v717, %v1189
    %v1191 = vpop.f32.mrb[0].mxu0
    %v1192 = vadd.f32 %v719, %v1191
    %1193 = vmatprep.mubr.f32.mxu0 0.0
    %1194 = vmatmul.mubr.f32.gmra.mrb[0].mxu0 %v758
    %v1195 = vpop.f32.mrb[0].mxu0
    %v1196 = vadd.f32 %v723, %v1195
    %v1197 = vpop.f32.mrb[0].mxu0
    %v1198 = vadd.f32 %v725, %v1197
    %1199 = vmatprep.mubr.f32.mxu0 0.0
    %1200 = vmatmul.mubr.f32.gmra.mrb[0].mxu0 %v760
    %v1201 = vpop.f32.mrb[0].mxu0
    %v1202 = vadd.f32 %v729, %v1201
    %v1203 = vpop.f32.mrb[0].mxu0
    %v1204 = vadd.f32 %v731, %v1203
    %1205 = vmatprep.mubr.f32.mxu0 0.0
    %1206 = vmatmul.mubr.f32.gmra.mrb[0].mxu0 %v762
    %v1207 = vpop.f32.mrb[0].mxu0
    %v1208 = vadd.f32 %v735, %v1207
    %v1209 = vpop.f32.mrb[0].mxu0
    %v1210 = vadd.f32 %v737, %v1209
    %1211 = vmatprep.mubr.f32.mxu0 0.0
    %1212 = vmatmul.mubr.f32.gmra.mrb[0].mxu0 %v764
    %v1213 = vpop.f32.mrb[0].mxu0
    %v1214 = vadd.f32 %v741, %v1213
    %v1215 = vpop.f32.mrb[0].mxu0
    %v1216 = vadd.f32 %v743, %v1215
    %1217 = vdwg.mxu0
    %vm1218 = vcmask 1041408
    %vm1219 = vcmask 1045508
    %vm1220 = vmor %vm1218, %vm1219
    %v1221 = vrot.slane %v134, 6
    %v1222 = vrot.slane %v1221, 4
    %v1223 = vrot.slane %v150, 6
    %v1224 = vsel %vm1220, %v1222, %v1223
    %v1225 = vrot.slane %v1223, 4
    %v1226 = vrot.slane %v135, 6
    %v1227 = vsel %vm1220, %v1225, %v1226
    %v1228 = vrot.slane %v1226, 4
    %v1229 = vrot.slane %v151, 6
    %v1230 = vsel %vm1220, %v1228, %v1229
    %v1231 = vrot.slane %v1229, 4
    %v1232 = vrot.slane %v136, 6
    %v1233 = vsel %vm1220, %v1231, %v1232
    %v1234 = vrot.slane %v1232, 4
    %v1235 = vrot.slane %v152, 6
    %v1236 = vsel %vm1220, %v1234, %v1235
    %v1237 = vrot.slane %v1235, 4
    %v1238 = vrot.slane %v137, 6
    %v1239 = vsel %vm1220, %v1237, %v1238
    %v1240 = vrot.slane %v1238, 4
    %v1241 = vrot.slane %v188, 6
    %v1242 = vsel %vm1220, %v1240, %v1241
    %v1243 = vrot.slane %v138, 6
    %v1244 = vrot.slane %v1243, 4
    %v1245 = vrot.slane %v153, 6
    %v1246 = vsel %vm1220, %v1244, %v1245
    %v1247 = vrot.slane %v1245, 4
    %v1248 = vrot.slane %v139, 6
    %v1249 = vsel %vm1220, %v1247, %v1248
    %v1250 = vrot.slane %v1248, 4
    %v1251 = vrot.slane %v154, 6
    %v1252 = vsel %vm1220, %v1250, %v1251
    %v1253 = vrot.slane %v1251, 4
    %v1254 = vrot.slane %v140, 6
    %v1255 = vsel %vm1220, %v1253, %v1254
    %v1256 = vrot.slane %v1254, 4
    %v1257 = vrot.slane %v155, 6
    %v1258 = vsel %vm1220, %v1256, %v1257
    %v1259 = vrot.slane %v1257, 4
    %v1260 = vrot.slane %v141, 6
    %v1261 = vsel %vm1220, %v1259, %v1260
    %v1262 = vrot.slane %v1260, 4
    %v1263 = vrot.slane %v189, 6
    %v1264 = vsel %vm1220, %v1262, %v1263
    %s1265 = scalar_lea.vmem [#allocation3], 512
    %v1266 = vld [vmem:[%s1265] sm:$0xff]
    %v1267 = vld [vmem:[%s1265 + $0x8] sm:$0xff]
    %v1268 = vld [vmem:[%s1265 + $0x10] sm:$0xff]
    %v1269 = vld [vmem:[%s1265 + $0x18] sm:$0xff]
    %v1270 = vld [vmem:[%s1265 + $0x20] sm:$0xff]
    %v1271 = vld [vmem:[%s1265 + $0x28] sm:$0xff]
    %v1272 = vld [vmem:[%s1265 + $0x30] sm:$0xff]
    %v1273 = vld [vmem:[%s1265 + $0x38] sm:$0xff]
    %v1274 = vld [vmem:[%s1265 + $0x40] sm:$0xff]
    %v1275 = vld [vmem:[%s1265 + $0x48] sm:$0xff]
    %v1276 = vld [vmem:[%s1265 + $0x50] sm:$0xff]
    %v1277 = vld [vmem:[%s1265 + $0x58] sm:$0xff]
    %v1278 = vld [vmem:[%s1265 + $0x60] sm:$0xff]
    %v1279 = vld [vmem:[%s1265 + $0x68] sm:$0xff]
    %v1280 = vld [vmem:[%s1265 + $0x70] sm:$0xff]
    %v1281 = vld [vmem:[%s1265 + $0x78] sm:$0xff]
    %v1282 = vld [vmem:[%s1265 + $0x80] sm:$0xff]
    %v1283 = vld [vmem:[%s1265 + $0x88] sm:$0xff]
    %v1284 = vld [vmem:[%s1265 + $0x90] sm:$0xff]
    %v1285 = vld [vmem:[%s1265 + $0x98] sm:$0xff]
    %v1286 = vld [vmem:[%s1265 + $0xa0] sm:$0xff]
    %v1287 = vld [vmem:[%s1265 + $0xa8] sm:$0xff]
    %v1288 = vld [vmem:[%s1265 + $0xb0] sm:$0xff]
    %v1289 = vld [vmem:[%s1265 + $0xb8] sm:$0xff]
    %v1290 = vld [vmem:[%s1265 + $0xc0] sm:$0x3f]
    %v1291 = vld [vmem:[%s1265 + $0xc8] sm:$0x3f]
    %v1292 = vld [vmem:[%s1265 + $0xd0] sm:$0x3f]
    %v1293 = vld [vmem:[%s1265 + $0xd8] sm:$0x3f]
    %v1294 = vld [vmem:[%s1265 + $0xe0] sm:$0x3f]
    %v1295 = vld [vmem:[%s1265 + $0xe8] sm:$0x3f]
    %v1296 = vld [vmem:[%s1265 + $0xf0] sm:$0x3f]
    %v1297 = vld [vmem:[%s1265 + $0xf8] sm:$0x3f]
    %v1298 = vcombine.low %v1224, %v1227
    %v1299 = vcombine.low %v1230, %v1233
    %v1300 = vcombine.low %v1236, %v1239
    %v1301 = vcombine.low %v1242, %v1246
    %v1302 = vcombine.low %v1249, %v1252
    %v1303 = vcombine.low %v1255, %v1258
    %v1304 = vcombine.low %v1261, %v1264
    %v1305 = vsel %vm277, %v1298, 0
    %v1307 = vsel %vm277, %v1299, 0
    %v1309 = vsel %vm277, %v1300, 0
    %v1311 = vsel %vm277, %v1301, 0
    %v1313 = vsel %vm277, %v1302, 0
    %v1315 = vsel %vm277, %v1303, 0
    %v1317 = vsel %vm277, %v1304, 0
    %v1320 = vsel %vm292, %v1290, 0
    %v1323 = vsel %vm292, %v1291, 0
    %v1326 = vsel %vm292, %v1292, 0
    %v1329 = vsel %vm292, %v1293, 0
    %v1332 = vsel %vm292, %v1294, 0
    %v1335 = vsel %vm292, %v1295, 0
    %v1338 = vsel %vm292, %v1296, 0
    %v1341 = vsel %vm292, %v1297, 0
    %1343 = vmatprep.subr.mxu0 %v1267
    %1344 = vmatpush1.msra.mxu0 %v1266
    %1345 = vmatprep.subr.mxu0 %v1275
    %1346 = vmatpush1.msra.mxu0 %v1274
    %1347 = vmatprep.subr.mxu0 %v1283
    %1348 = vmatpush1.msra.mxu0 %v1282
    %1349 = vmatprep.subr.mxu0 %v1323
    %1350 = vmatpush1.msra.mxu0 %v1320
    %1351 = vmatprep.subr.mxu0 0.0
    %1352 = vmatpush1.msra.mxu0 0.0
    %1353 = vmatprep.subr.mxu0 0.0
    %1354 = vmatpush1.msra.mxu0 0.0
    %1355 = vmatprep.subr.mxu0 0.0
    %1356 = vmatpush1.msra.mxu0 0.0
    %1357 = vmatprep.subr.mxu0 0.0
    %1358 = vmatpush1.msra.mxu0 0.0
    %1359 = vmatprep.subr.mxu0 0.0
    %1360 = vmatpush1.msra.mxu0 0.0
    %1361 = vmatprep.subr.mxu0 0.0
    %1362 = vmatpush1.msra.mxu0 0.0
    %1363 = vmatprep.subr.mxu0 0.0
    %1364 = vmatpush1.msra.mxu0 0.0
    %1365 = vmatprep.subr.mxu0 0.0
    %1366 = vmatpush1.msra.mxu0 0.0
    %1367 = vmatprep.subr.mxu0 0.0
    %1368 = vmatpush1.msra.mxu0 0.0
    %1369 = vmatprep.subr.mxu0 0.0
    %1370 = vmatpush1.msra.mxu0 0.0
    %1371 = vmatprep.subr.mxu0 0.0
    %1372 = vmatpush1.msra.mxu0 0.0
    %1373 = vmatprep.subr.mxu0 0.0
    %1374 = vmatpush1.msra.mxu0 0.0
    %1375 = vmatprep.subr.mxu0 0.0
    %1376 = vmatpush1.msra.mxu0 0.0
    %1377 = vmatprep.subr.mxu0 0.0
    %1378 = vmatpush1.msra.mxu0 0.0
    %1379 = vmatprep.subr.mxu0 0.0
    %1380 = vmatpush1.msra.mxu0 0.0
    %1381 = vmatprep.subr.mxu0 0.0
    %1382 = vmatpush1.msra.mxu0 0.0
    %1383 = vmatprep.subr.mxu0 0.0
    %1384 = vmatpush1.msra.mxu0 0.0
    %1385 = vmatprep.subr.mxu0 0.0
    %1386 = vmatpush1.msra.mxu0 0.0
    %1387 = vmatprep.subr.mxu0 0.0
    %1388 = vmatpush1.msra.mxu0 0.0
    %1389 = vmatprep.subr.mxu0 0.0
    %1390 = vmatpush1.msra.mxu0 0.0
    %1391 = vmatprep.subr.mxu0 0.0
    %1392 = vmatpush1.msra.mxu0 0.0
    %1393 = vmatprep.subr.mxu0 0.0
    %1394 = vmatpush1.msra.mxu0 0.0
    %1395 = vmatprep.subr.mxu0 0.0
    %1396 = vmatpush1.msra.mxu0 0.0
    %1397 = vmatprep.subr.mxu0 0.0
    %1398 = vmatpush1.msra.mxu0 0.0
    %1399 = vmatprep.subr.mxu0 0.0
    %1400 = vmatpush1.msra.mxu0 0.0
    %1401 = vmatprep.subr.mxu0 0.0
    %1402 = vmatpush1.msra.mxu0 0.0
    %1403 = vmatprep.subr.mxu0 0.0
    %1404 = vmatpush1.msra.mxu0 0.0
    %1405 = vmatprep.subr.mxu0 0.0
    %1406 = vmatpush1.msra.mxu0 0.0
    %1407 = vmatprep.mubr.f32.mxu0 0.0
    %1408 = vmatmul.mubr.f32.gmra.mrb[0].mxu0 %v1305
    %v1409 = vpop.f32.mrb[0].mxu0
    %v1410 = vadd.f32 0.0, %v1409
    %v1411 = vpop.f32.mrb[0].mxu0
    %v1412 = vadd.f32 0.0, %v1411
    %1413 = vmatprep.mubr.f32.mxu0 0.0
    %1414 = vmatmul.mubr.f32.gmra.mrb[0].mxu0 %v1307
    %v1415 = vpop.f32.mrb[0].mxu0
    %v1416 = vadd.f32 0.0, %v1415
    %v1417 = vpop.f32.mrb[0].mxu0
    %v1418 = vadd.f32 0.0, %v1417
    %1419 = vmatprep.mubr.f32.mxu0 0.0
    %1420 = vmatmul.mubr.f32.gmra.mrb[0].mxu0 %v1309
    %v1421 = vpop.f32.mrb[0].mxu0
    %v1422 = vadd.f32 0.0, %v1421
    %v1423 = vpop.f32.mrb[0].mxu0
    %v1424 = vadd.f32 0.0, %v1423
    %1425 = vmatprep.mubr.f32.mxu0 0.0
    %1426 = vmatmul.mubr.f32.gmra.mrb[0].mxu0 %v1311
    %v1427 = vpop.f32.mrb[0].mxu0
    %v1428 = vadd.f32 0.0, %v1427
    %v1429 = vpop.f32.mrb[0].mxu0
    %v1430 = vadd.f32 0.0, %v1429
    %1431 = vmatprep.mubr.f32.mxu0 0.0
    %1432 = vmatmul.mubr.f32.gmra.mrb[0].mxu0 %v1313
    %v1433 = vpop.f32.mrb[0].mxu0
    %v1434 = vadd.f32 0.0, %v1433
    %v1435 = vpop.f32.mrb[0].mxu0
    %v1436 = vadd.f32 0.0, %v1435
    %1437 = vmatprep.mubr.f32.mxu0 0.0
    %1438 = vmatmul.mubr.f32.gmra.mrb[0].mxu0 %v1315
    %v1439 = vpop.f32.mrb[0].mxu0
    %v1440 = vadd.f32 0.0, %v1439
    %v1441 = vpop.f32.mrb[0].mxu0
    %v1442 = vadd.f32 0.0, %v1441
    %1443 = vmatprep.mubr.f32.mxu0 0.0
    %1444 = vmatmul.mubr.f32.gmra.mrb[0].mxu0 %v1317
    %v1445 = vpop.f32.mrb[0].mxu0
    %v1446 = vadd.f32 0.0, %v1445
    %v1447 = vpop.f32.mrb[0].mxu0
    %v1448 = vadd.f32 0.0, %v1447
    %1449 = vdwg.mxu0
    %1450 = vmatprep.subr.mxu0 %v1269
    %1451 = vmatpush1.msra.mxu0 %v1268
    %1452 = vmatprep.subr.mxu0 %v1277
    %1453 = vmatpush1.msra.mxu0 %v1276
    %1454 = vmatprep.subr.mxu0 %v1285
    %1455 = vmatpush1.msra.mxu0 %v1284
    %1456 = vmatprep.subr.mxu0 %v1329
    %1457 = vmatpush1.msra.mxu0 %v1326
    %1458 = vmatprep.subr.mxu0 0.0
    %1459 = vmatpush1.msra.mxu0 0.0
    %1460 = vmatprep.subr.mxu0 0.0
    %1461 = vmatpush1.msra.mxu0 0.0
    %1462 = vmatprep.subr.mxu0 0.0
    %1463 = vmatpush1.msra.mxu0 0.0
    %1464 = vmatprep.subr.mxu0 0.0
    %1465 = vmatpush1.msra.mxu0 0.0
    %1466 = vmatprep.subr.mxu0 0.0
    %1467 = vmatpush1.msra.mxu0 0.0
    %1468 = vmatprep.subr.mxu0 0.0
    %1469 = vmatpush1.msra.mxu0 0.0
    %1470 = vmatprep.subr.mxu0 0.0
    %1471 = vmatpush1.msra.mxu0 0.0
    %1472 = vmatprep.subr.mxu0 0.0
    %1473 = vmatpush1.msra.mxu0 0.0
    %1474 = vmatprep.subr.mxu0 0.0
    %1475 = vmatpush1.msra.mxu0 0.0
    %1476 = vmatprep.subr.mxu0 0.0
    %1477 = vmatpush1.msra.mxu0 0.0
    %1478 = vmatprep.subr.mxu0 0.0
    %1479 = vmatpush1.msra.mxu0 0.0
    %1480 = vmatprep.subr.mxu0 0.0
    %1481 = vmatpush1.msra.mxu0 0.0
    %1482 = vmatprep.subr.mxu0 0.0
    %1483 = vmatpush1.msra.mxu0 0.0
    %1484 = vmatprep.subr.mxu0 0.0
    %1485 = vmatpush1.msra.mxu0 0.0
    %1486 = vmatprep.subr.mxu0 0.0
    %1487 = vmatpush1.msra.mxu0 0.0
    %1488 = vmatprep.subr.mxu0 0.0
    %1489 = vmatpush1.msra.mxu0 0.0
    %1490 = vmatprep.subr.mxu0 0.0
    %1491 = vmatpush1.msra.mxu0 0.0
    %1492 = vmatprep.subr.mxu0 0.0
    %1493 = vmatpush1.msra.mxu0 0.0
    %1494 = vmatprep.subr.mxu0 0.0
    %1495 = vmatpush1.msra.mxu0 0.0
    %1496 = vmatprep.subr.mxu0 0.0
    %1497 = vmatpush1.msra.mxu0 0.0
    %1498 = vmatprep.subr.mxu0 0.0
    %1499 = vmatpush1.msra.mxu0 0.0
    %1500 = vmatprep.subr.mxu0 0.0
    %1501 = vmatpush1.msra.mxu0 0.0
    %1502 = vmatprep.subr.mxu0 0.0
    %1503 = vmatpush1.msra.mxu0 0.0
    %1504 = vmatprep.subr.mxu0 0.0
    %1505 = vmatpush1.msra.mxu0 0.0
    %1506 = vmatprep.subr.mxu0 0.0
    %1507 = vmatpush1.msra.mxu0 0.0
    %1508 = vmatprep.subr.mxu0 0.0
    %1509 = vmatpush1.msra.mxu0 0.0
    %1510 = vmatprep.subr.mxu0 0.0
    %1511 = vmatpush1.msra.mxu0 0.0
    %1512 = vmatprep.subr.mxu0 0.0
    %1513 = vmatpush1.msra.mxu0 0.0
    %1514 = vmatprep.mubr.f32.mxu0 0.0
    %1515 = vmatmul.mubr.f32.gmra.mrb[0].mxu0 %v1305
    %v1516 = vpop.f32.mrb[0].mxu0
    %v1517 = vadd.f32 0.0, %v1516
    %v1518 = vpop.f32.mrb[0].mxu0
    %v1519 = vadd.f32 0.0, %v1518
    %1520 = vmatprep.mubr.f32.mxu0 0.0
    %1521 = vmatmul.mubr.f32.gmra.mrb[0].mxu0 %v1307
    %v1522 = vpop.f32.mrb[0].mxu0
    %v1523 = vadd.f32 0.0, %v1522
    %v1524 = vpop.f32.mrb[0].mxu0
    %v1525 = vadd.f32 0.0, %v1524
    %1526 = vmatprep.mubr.f32.mxu0 0.0
    %1527 = vmatmul.mubr.f32.gmra.mrb[0].mxu0 %v1309
    %v1528 = vpop.f32.mrb[0].mxu0
    %v1529 = vadd.f32 0.0, %v1528
    %v1530 = vpop.f32.mrb[0].mxu0
    %v1531 = vadd.f32 0.0, %v1530
    %1532 = vmatprep.mubr.f32.mxu0 0.0
    %1533 = vmatmul.mubr.f32.gmra.mrb[0].mxu0 %v1311
    %v1534 = vpop.f32.mrb[0].mxu0
    %v1535 = vadd.f32 0.0, %v1534
    %v1536 = vpop.f32.mrb[0].mxu0
    %v1537 = vadd.f32 0.0, %v1536
    %1538 = vmatprep.mubr.f32.mxu0 0.0
    %1539 = vmatmul.mubr.f32.gmra.mrb[0].mxu0 %v1313
    %v1540 = vpop.f32.mrb[0].mxu0
    %v1541 = vadd.f32 0.0, %v1540
    %v1542 = vpop.f32.mrb[0].mxu0
    %v1543 = vadd.f32 0.0, %v1542
    %1544 = vmatprep.mubr.f32.mxu0 0.0
    %1545 = vmatmul.mubr.f32.gmra.mrb[0].mxu0 %v1315
    %v1546 = vpop.f32.mrb[0].mxu0
    %v1547 = vadd.f32 0.0, %v1546
    %v1548 = vpop.f32.mrb[0].mxu0
    %v1549 = vadd.f32 0.0, %v1548
    %1550 = vmatprep.mubr.f32.mxu0 0.0
    %1551 = vmatmul.mubr.f32.gmra.mrb[0].mxu0 %v1317
    %v1552 = vpop.f32.mrb[0].mxu0
    %v1553 = vadd.f32 0.0, %v1552
    %v1554 = vpop.f32.mrb[0].mxu0
    %v1555 = vadd.f32 0.0, %v1554
    %1556 = vdwg.mxu0
    %1557 = vmatprep.subr.mxu0 %v1271
    %1558 = vmatpush1.msra.mxu0 %v1270
    %1559 = vmatprep.subr.mxu0 %v1279
    %1560 = vmatpush1.msra.mxu0 %v1278
    %1561 = vmatprep.subr.mxu0 %v1287
    %1562 = vmatpush1.msra.mxu0 %v1286
    %1563 = vmatprep.subr.mxu0 %v1335
    %1564 = vmatpush1.msra.mxu0 %v1332
    %1565 = vmatprep.subr.mxu0 0.0
    %1566 = vmatpush1.msra.mxu0 0.0
    %1567 = vmatprep.subr.mxu0 0.0
    %1568 = vmatpush1.msra.mxu0 0.0
    %1569 = vmatprep.subr.mxu0 0.0
    %1570 = vmatpush1.msra.mxu0 0.0
    %1571 = vmatprep.subr.mxu0 0.0
    %1572 = vmatpush1.msra.mxu0 0.0
    %1573 = vmatprep.subr.mxu0 0.0
    %1574 = vmatpush1.msra.mxu0 0.0
    %1575 = vmatprep.subr.mxu0 0.0
    %1576 = vmatpush1.msra.mxu0 0.0
    %1577 = vmatprep.subr.mxu0 0.0
    %1578 = vmatpush1.msra.mxu0 0.0
    %1579 = vmatprep.subr.mxu0 0.0
    %1580 = vmatpush1.msra.mxu0 0.0
    %1581 = vmatprep.subr.mxu0 0.0
    %1582 = vmatpush1.msra.mxu0 0.0
    %1583 = vmatprep.subr.mxu0 0.0
    %1584 = vmatpush1.msra.mxu0 0.0
    %1585 = vmatprep.subr.mxu0 0.0
    %1586 = vmatpush1.msra.mxu0 0.0
    %1587 = vmatprep.subr.mxu0 0.0
    %1588 = vmatpush1.msra.mxu0 0.0
    %1589 = vmatprep.subr.mxu0 0.0
    %1590 = vmatpush1.msra.mxu0 0.0
    %1591 = vmatprep.subr.mxu0 0.0
    %1592 = vmatpush1.msra.mxu0 0.0
    %1593 = vmatprep.subr.mxu0 0.0
    %1594 = vmatpush1.msra.mxu0 0.0
    %1595 = vmatprep.subr.mxu0 0.0
    %1596 = vmatpush1.msra.mxu0 0.0
    %1597 = vmatprep.subr.mxu0 0.0
    %1598 = vmatpush1.msra.mxu0 0.0
    %1599 = vmatprep.subr.mxu0 0.0
    %1600 = vmatpush1.msra.mxu0 0.0
    %1601 = vmatprep.subr.mxu0 0.0
    %1602 = vmatpush1.msra.mxu0 0.0
    %1603 = vmatprep.subr.mxu0 0.0
    %1604 = vmatpush1.msra.mxu0 0.0
    %1605 = vmatprep.subr.mxu0 0.0
    %1606 = vmatpush1.msra.mxu0 0.0
    %1607 = vmatprep.subr.mxu0 0.0
    %1608 = vmatpush1.msra.mxu0 0.0
    %1609 = vmatprep.subr.mxu0 0.0
    %1610 = vmatpush1.msra.mxu0 0.0
    %1611 = vmatprep.subr.mxu0 0.0
    %1612 = vmatpush1.msra.mxu0 0.0
    %1613 = vmatprep.subr.mxu0 0.0
    %1614 = vmatpush1.msra.mxu0 0.0
    %1615 = vmatprep.subr.mxu0 0.0
    %1616 = vmatpush1.msra.mxu0 0.0
    %1617 = vmatprep.subr.mxu0 0.0
    %1618 = vmatpush1.msra.mxu0 0.0
    %1619 = vmatprep.subr.mxu0 0.0
    %1620 = vmatpush1.msra.mxu0 0.0
    %1621 = vmatprep.mubr.f32.mxu0 0.0
    %1622 = vmatmul.mubr.f32.gmra.mrb[0].mxu0 %v1305
    %v1623 = vpop.f32.mrb[0].mxu0
    %v1624 = vadd.f32 0.0, %v1623
    %v1625 = vpop.f32.mrb[0].mxu0
    %v1626 = vadd.f32 0.0, %v1625
    %1627 = vmatprep.mubr.f32.mxu0 0.0
    %1628 = vmatmul.mubr.f32.gmra.mrb[0].mxu0 %v1307
    %v1629 = vpop.f32.mrb[0].mxu0
    %v1630 = vadd.f32 0.0, %v1629
    %v1631 = vpop.f32.mrb[0].mxu0
    %v1632 = vadd.f32 0.0, %v1631
    %1633 = vmatprep.mubr.f32.mxu0 0.0
    %1634 = vmatmul.mubr.f32.gmra.mrb[0].mxu0 %v1309
    %v1635 = vpop.f32.mrb[0].mxu0
    %v1636 = vadd.f32 0.0, %v1635
    %v1637 = vpop.f32.mrb[0].mxu0
    %v1638 = vadd.f32 0.0, %v1637
    %1639 = vmatprep.mubr.f32.mxu0 0.0
    %1640 = vmatmul.mubr.f32.gmra.mrb[0].mxu0 %v1311
    %v1641 = vpop.f32.mrb[0].mxu0
    %v1642 = vadd.f32 0.0, %v1641
    %v1643 = vpop.f32.mrb[0].mxu0
    %v1644 = vadd.f32 0.0, %v1643
    %1645 = vmatprep.mubr.f32.mxu0 0.0
    %1646 = vmatmul.mubr.f32.gmra.mrb[0].mxu0 %v1313
    %v1647 = vpop.f32.mrb[0].mxu0
    %v1648 = vadd.f32 0.0, %v1647
    %v1649 = vpop.f32.mrb[0].mxu0
    %v1650 = vadd.f32 0.0, %v1649
    %1651 = vmatprep.mubr.f32.mxu0 0.0
    %1652 = vmatmul.mubr.f32.gmra.mrb[0].mxu0 %v1315
    %v1653 = vpop.f32.mrb[0].mxu0
    %v1654 = vadd.f32 0.0, %v1653
    %v1655 = vpop.f32.mrb[0].mxu0
    %v1656 = vadd.f32 0.0, %v1655
    %1657 = vmatprep.mubr.f32.mxu0 0.0
    %1658 = vmatmul.mubr.f32.gmra.mrb[0].mxu0 %v1317
    %v1659 = vpop.f32.mrb[0].mxu0
    %v1660 = vadd.f32 0.0, %v1659
    %v1661 = vpop.f32.mrb[0].mxu0
    %v1662 = vadd.f32 0.0, %v1661
    %1663 = vdwg.mxu0
    %1664 = vmatprep.subr.mxu0 %v1273
    %1665 = vmatpush1.msra.mxu0 %v1272
    %1666 = vmatprep.subr.mxu0 %v1281
    %1667 = vmatpush1.msra.mxu0 %v1280
    %1668 = vmatprep.subr.mxu0 %v1289
    %1669 = vmatpush1.msra.mxu0 %v1288
    %1670 = vmatprep.subr.mxu0 %v1341
    %1671 = vmatpush1.msra.mxu0 %v1338
    %1672 = vmatprep.subr.mxu0 0.0
    %1673 = vmatpush1.msra.mxu0 0.0
    %1674 = vmatprep.subr.mxu0 0.0
    %1675 = vmatpush1.msra.mxu0 0.0
    %1676 = vmatprep.subr.mxu0 0.0
    %1677 = vmatpush1.msra.mxu0 0.0
    %1678 = vmatprep.subr.mxu0 0.0
    %1679 = vmatpush1.msra.mxu0 0.0
    %1680 = vmatprep.subr.mxu0 0.0
    %1681 = vmatpush1.msra.mxu0 0.0
    %1682 = vmatprep.subr.mxu0 0.0
    %1683 = vmatpush1.msra.mxu0 0.0
    %1684 = vmatprep.subr.mxu0 0.0
    %1685 = vmatpush1.msra.mxu0 0.0
    %1686 = vmatprep.subr.mxu0 0.0
    %1687 = vmatpush1.msra.mxu0 0.0
    %1688 = vmatprep.subr.mxu0 0.0
    %1689 = vmatpush1.msra.mxu0 0.0
    %1690 = vmatprep.subr.mxu0 0.0
    %1691 = vmatpush1.msra.mxu0 0.0
    %1692 = vmatprep.subr.mxu0 0.0
    %1693 = vmatpush1.msra.mxu0 0.0
    %1694 = vmatprep.subr.mxu0 0.0
    %1695 = vmatpush1.msra.mxu0 0.0
    %1696 = vmatprep.subr.mxu0 0.0
    %1697 = vmatpush1.msra.mxu0 0.0
    %1698 = vmatprep.subr.mxu0 0.0
    %1699 = vmatpush1.msra.mxu0 0.0
    %1700 = vmatprep.subr.mxu0 0.0
    %1701 = vmatpush1.msra.mxu0 0.0
    %1702 = vmatprep.subr.mxu0 0.0
    %1703 = vmatpush1.msra.mxu0 0.0
    %1704 = vmatprep.subr.mxu0 0.0
    %1705 = vmatpush1.msra.mxu0 0.0
    %1706 = vmatprep.subr.mxu0 0.0
    %1707 = vmatpush1.msra.mxu0 0.0
    %1708 = vmatprep.subr.mxu0 0.0
    %1709 = vmatpush1.msra.mxu0 0.0
    %1710 = vmatprep.subr.mxu0 0.0
    %1711 = vmatpush1.msra.mxu0 0.0
    %1712 = vmatprep.subr.mxu0 0.0
    %1713 = vmatpush1.msra.mxu0 0.0
    %1714 = vmatprep.subr.mxu0 0.0
    %1715 = vmatpush1.msra.mxu0 0.0
    %1716 = vmatprep.subr.mxu0 0.0
    %1717 = vmatpush1.msra.mxu0 0.0
    %1718 = vmatprep.subr.mxu0 0.0
    %1719 = vmatpush1.msra.mxu0 0.0
    %1720 = vmatprep.subr.mxu0 0.0
    %1721 = vmatpush1.msra.mxu0 0.0
    %1722 = vmatprep.subr.mxu0 0.0
    %1723 = vmatpush1.msra.mxu0 0.0
    %1724 = vmatprep.subr.mxu0 0.0
    %1725 = vmatpush1.msra.mxu0 0.0
    %1726 = vmatprep.subr.mxu0 0.0
    %1727 = vmatpush1.msra.mxu0 0.0
    %1728 = vmatprep.mubr.f32.mxu0 0.0
    %1729 = vmatmul.mubr.f32.gmra.mrb[0].mxu0 %v1305
    %v1730 = vpop.f32.mrb[0].mxu0
    %v1731 = vadd.f32 0.0, %v1730
    %v1732 = vpop.f32.mrb[0].mxu0
    %v1733 = vadd.f32 0.0, %v1732
    %1734 = vmatprep.mubr.f32.mxu0 0.0
    %1735 = vmatmul.mubr.f32.gmra.mrb[0].mxu0 %v1307
    %v1736 = vpop.f32.mrb[0].mxu0
    %v1737 = vadd.f32 0.0, %v1736
    %v1738 = vpop.f32.mrb[0].mxu0
    %v1739 = vadd.f32 0.0, %v1738
    %1740 = vmatprep.mubr.f32.mxu0 0.0
    %1741 = vmatmul.mubr.f32.gmra.mrb[0].mxu0 %v1309
    %v1742 = vpop.f32.mrb[0].mxu0
    %v1743 = vadd.f32 0.0, %v1742
    %v1744 = vpop.f32.mrb[0].mxu0
    %v1745 = vadd.f32 0.0, %v1744
    %1746 = vmatprep.mubr.f32.mxu0 0.0
    %1747 = vmatmul.mubr.f32.gmra.mrb[0].mxu0 %v1311
    %v1748 = vpop.f32.mrb[0].mxu0
    %v1749 = vadd.f32 0.0, %v1748
    %v1750 = vpop.f32.mrb[0].mxu0
    %v1751 = vadd.f32 0.0, %v1750
    %1752 = vmatprep.mubr.f32.mxu0 0.0
    %1753 = vmatmul.mubr.f32.gmra.mrb[0].mxu0 %v1313
    %v1754 = vpop.f32.mrb[0].mxu0
    %v1755 = vadd.f32 0.0, %v1754
    %v1756 = vpop.f32.mrb[0].mxu0
    %v1757 = vadd.f32 0.0, %v1756
    %1758 = vmatprep.mubr.f32.mxu0 0.0
    %1759 = vmatmul.mubr.f32.gmra.mrb[0].mxu0 %v1315
    %v1760 = vpop.f32.mrb[0].mxu0
    %v1761 = vadd.f32 0.0, %v1760
    %v1762 = vpop.f32.mrb[0].mxu0
    %v1763 = vadd.f32 0.0, %v1762
    %1764 = vmatprep.mubr.f32.mxu0 0.0
    %1765 = vmatmul.mubr.f32.gmra.mrb[0].mxu0 %v1317
    %v1766 = vpop.f32.mrb[0].mxu0
    %v1767 = vadd.f32 0.0, %v1766
    %v1768 = vpop.f32.mrb[0].mxu0
    %v1769 = vadd.f32 0.0, %v1768
    %1770 = vdwg.mxu0
    %v1771 = vadd.f32 %v857, %v1410
    %v1772 = vadd.f32 %v859, %v1412
    %v1773 = vadd.f32 %v964, %v1517
    %v1774 = vadd.f32 %v966, %v1519
    %v1775 = vadd.f32 %v1071, %v1624
    %v1776 = vadd.f32 %v1073, %v1626
    %v1777 = vadd.f32 %v1178, %v1731
    %v1778 = vadd.f32 %v1180, %v1733
    %v1779 = vadd.f32 %v863, %v1416
    %v1780 = vadd.f32 %v865, %v1418
    %v1781 = vadd.f32 %v970, %v1523
    %v1782 = vadd.f32 %v972, %v1525
    %v1783 = vadd.f32 %v1077, %v1630
    %v1784 = vadd.f32 %v1079, %v1632
    %v1785 = vadd.f32 %v1184, %v1737
    %v1786 = vadd.f32 %v1186, %v1739
    %v1787 = vadd.f32 %v869, %v1422
    %v1788 = vadd.f32 %v871, %v1424
    %v1789 = vadd.f32 %v976, %v1529
    %v1790 = vadd.f32 %v978, %v1531
    %v1791 = vadd.f32 %v1083, %v1636
    %v1792 = vadd.f32 %v1085, %v1638
    %v1793 = vadd.f32 %v1190, %v1743
    %v1794 = vadd.f32 %v1192, %v1745
    %v1795 = vadd.f32 %v875, %v1428
    %v1796 = vadd.f32 %v877, %v1430
    %v1797 = vadd.f32 %v982, %v1535
    %v1798 = vadd.f32 %v984, %v1537
    %v1799 = vadd.f32 %v1089, %v1642
    %v1800 = vadd.f32 %v1091, %v1644
    %v1801 = vadd.f32 %v1196, %v1749
    %v1802 = vadd.f32 %v1198, %v1751
    %v1803 = vadd.f32 %v881, %v1434
    %v1804 = vadd.f32 %v883, %v1436
    %v1805 = vadd.f32 %v988, %v1541
    %v1806 = vadd.f32 %v990, %v1543
    %v1807 = vadd.f32 %v1095, %v1648
    %v1808 = vadd.f32 %v1097, %v1650
    %v1809 = vadd.f32 %v1202, %v1755
    %v1810 = vadd.f32 %v1204, %v1757
    %v1811 = vadd.f32 %v887, %v1440
    %v1812 = vadd.f32 %v889, %v1442
    %v1813 = vadd.f32 %v994, %v1547
    %v1814 = vadd.f32 %v996, %v1549
    %v1815 = vadd.f32 %v1101, %v1654
    %v1816 = vadd.f32 %v1103, %v1656
    %v1817 = vadd.f32 %v1208, %v1761
    %v1818 = vadd.f32 %v1210, %v1763
    %v1819 = vadd.f32 %v893, %v1446
    %v1820 = vadd.f32 %v895, %v1448
    %v1821 = vadd.f32 %v1000, %v1553
    %v1822 = vadd.f32 %v1002, %v1555
    %v1823 = vadd.f32 %v1107, %v1660
    %v1824 = vadd.f32 %v1109, %v1662
    %v1825 = vadd.f32 %v1214, %v1767
    %v1826 = vadd.f32 %v1216, %v1769
    %v1827 = vld [vmem:[#allocation6] sm:$0xff]
    %v1829 = vlaneseq
    %v1830 = vshrl.u32 %v1829, 7
    %v1831 = vsub.s32 0, %v1830
    %v1832 = vrot.slane %v1827, %v1831
    %v1833 = vlaneseq
    %v1834 = vshrl.u32 %v1833, 7
    %v1835 = vsub.s32 1, %v1834
    %v1836 = vrot.slane %v1827, %v1835
    %v1837 = vlaneseq
    %v1838 = vshrl.u32 %v1837, 7
    %v1839 = vsub.s32 2, %v1838
    %v1840 = vrot.slane %v1827, %v1839
    %v1841 = vlaneseq
    %v1842 = vshrl.u32 %v1841, 7
    %v1843 = vsub.s32 3, %v1842
    %v1844 = vrot.slane %v1827, %v1843
    %v1845 = vlaneseq
    %v1846 = vshrl.u32 %v1845, 7
    %v1847 = vsub.s32 4, %v1846
    %v1848 = vrot.slane %v1827, %v1847
    %v1849 = vlaneseq
    %v1850 = vshrl.u32 %v1849, 7
    %v1851 = vsub.s32 5, %v1850
    %v1852 = vrot.slane %v1827, %v1851
    %v1853 = vlaneseq
    %v1854 = vshrl.u32 %v1853, 7
    %v1855 = vsub.s32 6, %v1854
    %v1856 = vrot.slane %v1827, %v1855
    %v1857 = vlaneseq
    %v1858 = vshrl.u32 %v1857, 7
    %v1859 = vsub.s32 7, %v1858
    %v1860 = vrot.slane %v1827, %v1859
    %v1869 = vadd.f32 %v1771, %v1832
    %v1870 = vadd.f32 %v1772, %v1836
    %v1871 = vadd.f32 %v1773, %v1840
    %v1872 = vadd.f32 %v1774, %v1844
    %v1873 = vadd.f32 %v1775, %v1848
    %v1874 = vadd.f32 %v1776, %v1852
    %v1875 = vadd.f32 %v1777, %v1856
    %v1876 = vadd.f32 %v1778, %v1860
    %v1877 = vadd.f32 %v1779, %v1832
    %v1878 = vadd.f32 %v1780, %v1836
    %v1879 = vadd.f32 %v1781, %v1840
    %v1880 = vadd.f32 %v1782, %v1844
    %v1881 = vadd.f32 %v1783, %v1848
    %v1882 = vadd.f32 %v1784, %v1852
    %v1883 = vadd.f32 %v1785, %v1856
    %v1884 = vadd.f32 %v1786, %v1860
    %v1885 = vadd.f32 %v1787, %v1832
    %v1886 = vadd.f32 %v1788, %v1836
    %v1887 = vadd.f32 %v1789, %v1840
    %v1888 = vadd.f32 %v1790, %v1844
    %v1889 = vadd.f32 %v1791, %v1848
    %v1890 = vadd.f32 %v1792, %v1852
    %v1891 = vadd.f32 %v1793, %v1856
    %v1892 = vadd.f32 %v1794, %v1860
    %v1893 = vadd.f32 %v1795, %v1832
    %v1894 = vadd.f32 %v1796, %v1836
    %v1895 = vadd.f32 %v1797, %v1840
    %v1896 = vadd.f32 %v1798, %v1844
    %v1897 = vadd.f32 %v1799, %v1848
    %v1898 = vadd.f32 %v1800, %v1852
    %v1899 = vadd.f32 %v1801, %v1856
    %v1900 = vadd.f32 %v1802, %v1860
    %v1901 = vadd.f32 %v1803, %v1832
    %v1902 = vadd.f32 %v1804, %v1836
    %v1903 = vadd.f32 %v1805, %v1840
    %v1904 = vadd.f32 %v1806, %v1844
    %v1905 = vadd.f32 %v1807, %v1848
    %v1906 = vadd.f32 %v1808, %v1852
    %v1907 = vadd.f32 %v1809, %v1856
    %v1908 = vadd.f32 %v1810, %v1860
    %v1909 = vadd.f32 %v1811, %v1832
    %v1910 = vadd.f32 %v1812, %v1836
    %v1911 = vadd.f32 %v1813, %v1840
    %v1912 = vadd.f32 %v1814, %v1844
    %v1913 = vadd.f32 %v1815, %v1848
    %v1914 = vadd.f32 %v1816, %v1852
    %v1915 = vadd.f32 %v1817, %v1856
    %v1916 = vadd.f32 %v1818, %v1860
    %v1917 = vadd.f32 %v1819, %v1832
    %v1918 = vadd.f32 %v1820, %v1836
    %v1919 = vadd.f32 %v1821, %v1840
    %v1920 = vadd.f32 %v1822, %v1844
    %v1921 = vadd.f32 %v1823, %v1848
    %v1922 = vadd.f32 %v1824, %v1852
    %v1923 = vadd.f32 %v1825, %v1856
    %v1924 = vadd.f32 %v1826, %v1860
    %v1925 = vmax.f32 %v1869, 0.0
    %v1926 = vmax.f32 %v1870, 0.0
    %v1927 = vmax.f32 %v1871, 0.0
    %v1928 = vmax.f32 %v1872, 0.0
    %v1929 = vmax.f32 %v1873, 0.0
    %v1930 = vmax.f32 %v1874, 0.0
    %v1931 = vmax.f32 %v1875, 0.0
    %v1932 = vmax.f32 %v1876, 0.0
    %v1933 = vmax.f32 %v1877, 0.0
    %v1934 = vmax.f32 %v1878, 0.0
    %v1935 = vmax.f32 %v1879, 0.0
    %v1936 = vmax.f32 %v1880, 0.0
    %v1937 = vmax.f32 %v1881, 0.0
    %v1938 = vmax.f32 %v1882, 0.0
    %v1939 = vmax.f32 %v1883, 0.0
    %v1940 = vmax.f32 %v1884, 0.0
    %v1941 = vmax.f32 %v1885, 0.0
    %v1942 = vmax.f32 %v1886, 0.0
    %v1943 = vmax.f32 %v1887, 0.0
    %v1944 = vmax.f32 %v1888, 0.0
    %v1945 = vmax.f32 %v1889, 0.0
    %v1946 = vmax.f32 %v1890, 0.0
    %v1947 = vmax.f32 %v1891, 0.0
    %v1948 = vmax.f32 %v1892, 0.0
    %v1949 = vmax.f32 %v1893, 0.0
    %v1950 = vmax.f32 %v1894, 0.0
    %v1951 = vmax.f32 %v1895, 0.0
    %v1952 = vmax.f32 %v1896, 0.0
    %v1953 = vmax.f32 %v1897, 0.0
    %v1954 = vmax.f32 %v1898, 0.0
    %v1955 = vmax.f32 %v1899, 0.0
    %v1956 = vmax.f32 %v1900, 0.0
    %v1957 = vmax.f32 %v1901, 0.0
    %v1958 = vmax.f32 %v1902, 0.0
    %v1959 = vmax.f32 %v1903, 0.0
    %v1960 = vmax.f32 %v1904, 0.0
    %v1961 = vmax.f32 %v1905, 0.0
    %v1962 = vmax.f32 %v1906, 0.0
    %v1963 = vmax.f32 %v1907, 0.0
    %v1964 = vmax.f32 %v1908, 0.0
    %v1965 = vmax.f32 %v1909, 0.0
    %v1966 = vmax.f32 %v1910, 0.0
    %v1967 = vmax.f32 %v1911, 0.0
    %v1968 = vmax.f32 %v1912, 0.0
    %v1969 = vmax.f32 %v1913, 0.0
    %v1970 = vmax.f32 %v1914, 0.0
    %v1971 = vmax.f32 %v1915, 0.0
    %v1972 = vmax.f32 %v1916, 0.0
    %v1973 = vmax.f32 %v1917, 0.0
    %v1974 = vmax.f32 %v1918, 0.0
    %v1975 = vmax.f32 %v1919, 0.0
    %v1976 = vmax.f32 %v1920, 0.0
    %v1977 = vmax.f32 %v1921, 0.0
    %v1978 = vmax.f32 %v1922, 0.0
    %v1979 = vmax.f32 %v1923, 0.0
    %v1980 = vmax.f32 %v1924, 0.0
    %v2037 = vcombine.low %v1925, %v1926
    %v2038 = vcombine.high %v1925, %v1926
    %v2039 = vcombine.low %v1927, %v1928
    %v2040 = vcombine.high %v1927, %v1928
    %v2042 = vunpack.c.l.s4 1983009808
    %v2043 = vunpack.c.0.s8 %v2042
    %v2044 = vlaneseq
    %v2045 = vshrl.u32 %v2044, 7
    %v2046 = vsub.s32 %v2043, %v2045
    %v2047 = vrot.slane %v2037, %v2046
    %v2049 = vunpack.c.l.s4 1983009808
    %v2050 = vunpack.c.0.s8 %v2049
    %v2051 = vlaneseq
    %v2052 = vshrl.u32 %v2051, 7
    %v2053 = vsub.s32 %v2050, %v2052
    %v2054 = vrot.slane %v2038, %v2053
    %v2056 = vunpack.c.l.s4 1983009808
    %v2057 = vunpack.c.0.s8 %v2056
    %v2058 = vlaneseq
    %v2059 = vshrl.u32 %v2058, 7
    %v2060 = vsub.s32 %v2057, %v2059
    %v2061 = vrot.slane %v2039, %v2060
    %v2063 = vunpack.c.l.s4 1983009808
    %v2064 = vunpack.c.0.s8 %v2063
    %v2065 = vlaneseq
    %v2066 = vshrl.u32 %v2065, 7
    %v2067 = vsub.s32 %v2064, %v2066
    %v2068 = vrot.slane %v2040, %v2067
    %v2069 = vcombine.low %v2047, %v2061
    %v2070 = vcombine.high %v2047, %v2061
    %v2071 = vcombine.low %v2054, %v2068
    %v2072 = vcombine.high %v2054, %v2068
    %v2073 = vcombine.low %v1929, %v1930
    %v2074 = vcombine.high %v1929, %v1930
    %v2075 = vcombine.low %v1931, %v1932
    %v2076 = vcombine.high %v1931, %v1932
    %v2078 = vunpack.c.l.s4 1983009808
    %v2079 = vunpack.c.0.s8 %v2078
    %v2080 = vlaneseq
    %v2081 = vshrl.u32 %v2080, 7
    %v2082 = vsub.s32 %v2079, %v2081
    %v2083 = vrot.slane %v2073, %v2082
    %v2085 = vunpack.c.l.s4 1983009808
    %v2086 = vunpack.c.0.s8 %v2085
    %v2087 = vlaneseq
    %v2088 = vshrl.u32 %v2087, 7
    %v2089 = vsub.s32 %v2086, %v2088
    %v2090 = vrot.slane %v2074, %v2089
    %v2092 = vunpack.c.l.s4 1983009808
    %v2093 = vunpack.c.0.s8 %v2092
    %v2094 = vlaneseq
    %v2095 = vshrl.u32 %v2094, 7
    %v2096 = vsub.s32 %v2093, %v2095
    %v2097 = vrot.slane %v2075, %v2096
    %v2099 = vunpack.c.l.s4 1983009808
    %v2100 = vunpack.c.0.s8 %v2099
    %v2101 = vlaneseq
    %v2102 = vshrl.u32 %v2101, 7
    %v2103 = vsub.s32 %v2100, %v2102
    %v2104 = vrot.slane %v2076, %v2103
    %v2105 = vcombine.low %v2083, %v2097
    %v2106 = vcombine.high %v2083, %v2097
    %v2107 = vcombine.low %v2090, %v2104
    %v2108 = vcombine.high %v2090, %v2104
    %v2109 = vcombine.low %v1933, %v1934
    %v2110 = vcombine.high %v1933, %v1934
    %v2111 = vcombine.low %v1935, %v1936
    %v2112 = vcombine.high %v1935, %v1936
    %v2114 = vunpack.c.l.s4 1983009808
    %v2115 = vunpack.c.0.s8 %v2114
    %v2116 = vlaneseq
    %v2117 = vshrl.u32 %v2116, 7
    %v2118 = vsub.s32 %v2115, %v2117
    %v2119 = vrot.slane %v2109, %v2118
    %v2121 = vunpack.c.l.s4 1983009808
    %v2122 = vunpack.c.0.s8 %v2121
    %v2123 = vlaneseq
    %v2124 = vshrl.u32 %v2123, 7
    %v2125 = vsub.s32 %v2122, %v2124
    %v2126 = vrot.slane %v2110, %v2125
    %v2128 = vunpack.c.l.s4 1983009808
    %v2129 = vunpack.c.0.s8 %v2128
    %v2130 = vlaneseq
    %v2131 = vshrl.u32 %v2130, 7
    %v2132 = vsub.s32 %v2129, %v2131
    %v2133 = vrot.slane %v2111, %v2132
    %v2135 = vunpack.c.l.s4 1983009808
    %v2136 = vunpack.c.0.s8 %v2135
    %v2137 = vlaneseq
    %v2138 = vshrl.u32 %v2137, 7
    %v2139 = vsub.s32 %v2136, %v2138
    %v2140 = vrot.slane %v2112, %v2139
    %v2141 = vcombine.low %v2119, %v2133
    %v2142 = vcombine.high %v2119, %v2133
    %v2143 = vcombine.low %v2126, %v2140
    %v2144 = vcombine.high %v2126, %v2140
    %v2145 = vcombine.low %v1937, %v1938
    %v2146 = vcombine.high %v1937, %v1938
    %v2147 = vcombine.low %v1939, %v1940
    %v2148 = vcombine.high %v1939, %v1940
    %v2150 = vunpack.c.l.s4 1983009808
    %v2151 = vunpack.c.0.s8 %v2150
    %v2152 = vlaneseq
    %v2153 = vshrl.u32 %v2152, 7
    %v2154 = vsub.s32 %v2151, %v2153
    %v2155 = vrot.slane %v2145, %v2154
    %v2157 = vunpack.c.l.s4 1983009808
    %v2158 = vunpack.c.0.s8 %v2157
    %v2159 = vlaneseq
    %v2160 = vshrl.u32 %v2159, 7
    %v2161 = vsub.s32 %v2158, %v2160
    %v2162 = vrot.slane %v2146, %v2161
    %v2164 = vunpack.c.l.s4 1983009808
    %v2165 = vunpack.c.0.s8 %v2164
    %v2166 = vlaneseq
    %v2167 = vshrl.u32 %v2166, 7
    %v2168 = vsub.s32 %v2165, %v2167
    %v2169 = vrot.slane %v2147, %v2168
    %v2171 = vunpack.c.l.s4 1983009808
    %v2172 = vunpack.c.0.s8 %v2171
    %v2173 = vlaneseq
    %v2174 = vshrl.u32 %v2173, 7
    %v2175 = vsub.s32 %v2172, %v2174
    %v2176 = vrot.slane %v2148, %v2175
    %v2177 = vcombine.low %v2155, %v2169
    %v2178 = vcombine.high %v2155, %v2169
    %v2179 = vcombine.low %v2162, %v2176
    %v2180 = vcombine.high %v2162, %v2176
    %v2181 = vcombine.low %v1941, %v1942
    %v2182 = vcombine.high %v1941, %v1942
    %v2183 = vcombine.low %v1943, %v1944
    %v2184 = vcombine.high %v1943, %v1944
    %v2186 = vunpack.c.l.s4 1983009808
    %v2187 = vunpack.c.0.s8 %v2186
    %v2188 = vlaneseq
    %v2189 = vshrl.u32 %v2188, 7
    %v2190 = vsub.s32 %v2187, %v2189
    %v2191 = vrot.slane %v2181, %v2190
    %v2193 = vunpack.c.l.s4 1983009808
    %v2194 = vunpack.c.0.s8 %v2193
    %v2195 = vlaneseq
    %v2196 = vshrl.u32 %v2195, 7
    %v2197 = vsub.s32 %v2194, %v2196
    %v2198 = vrot.slane %v2182, %v2197
    %v2200 = vunpack.c.l.s4 1983009808
    %v2201 = vunpack.c.0.s8 %v2200
    %v2202 = vlaneseq
    %v2203 = vshrl.u32 %v2202, 7
    %v2204 = vsub.s32 %v2201, %v2203
    %v2205 = vrot.slane %v2183, %v2204
    %v2207 = vunpack.c.l.s4 1983009808
    %v2208 = vunpack.c.0.s8 %v2207
    %v2209 = vlaneseq
    %v2210 = vshrl.u32 %v2209, 7
    %v2211 = vsub.s32 %v2208, %v2210
    %v2212 = vrot.slane %v2184, %v2211
    %v2213 = vcombine.low %v2191, %v2205
    %v2214 = vcombine.high %v2191, %v2205
    %v2215 = vcombine.low %v2198, %v2212
    %v2216 = vcombine.high %v2198, %v2212
    %v2217 = vcombine.low %v1945, %v1946
    %v2218 = vcombine.high %v1945, %v1946
    %v2219 = vcombine.low %v1947, %v1948
    %v2220 = vcombine.high %v1947, %v1948
    %v2222 = vunpack.c.l.s4 1983009808
    %v2223 = vunpack.c.0.s8 %v2222
    %v2224 = vlaneseq
    %v2225 = vshrl.u32 %v2224, 7
    %v2226 = vsub.s32 %v2223, %v2225
    %v2227 = vrot.slane %v2217, %v2226
    %v2229 = vunpack.c.l.s4 1983009808
    %v2230 = vunpack.c.0.s8 %v2229
    %v2231 = vlaneseq
    %v2232 = vshrl.u32 %v2231, 7
    %v2233 = vsub.s32 %v2230, %v2232
    %v2234 = vrot.slane %v2218, %v2233
    %v2236 = vunpack.c.l.s4 1983009808
    %v2237 = vunpack.c.0.s8 %v2236
    %v2238 = vlaneseq
    %v2239 = vshrl.u32 %v2238, 7
    %v2240 = vsub.s32 %v2237, %v2239
    %v2241 = vrot.slane %v2219, %v2240
    %v2243 = vunpack.c.l.s4 1983009808
    %v2244 = vunpack.c.0.s8 %v2243
    %v2245 = vlaneseq
    %v2246 = vshrl.u32 %v2245, 7
    %v2247 = vsub.s32 %v2244, %v2246
    %v2248 = vrot.slane %v2220, %v2247
    %v2249 = vcombine.low %v2227, %v2241
    %v2250 = vcombine.high %v2227, %v2241
    %v2251 = vcombine.low %v2234, %v2248
    %v2252 = vcombine.high %v2234, %v2248
    %v2253 = vcombine.low %v1949, %v1950
    %v2254 = vcombine.high %v1949, %v1950
    %v2255 = vcombine.low %v1951, %v1952
    %v2256 = vcombine.high %v1951, %v1952
    %v2258 = vunpack.c.l.s4 1983009808
    %v2259 = vunpack.c.0.s8 %v2258
    %v2260 = vlaneseq
    %v2261 = vshrl.u32 %v2260, 7
    %v2262 = vsub.s32 %v2259, %v2261
    %v2263 = vrot.slane %v2253, %v2262
    %v2265 = vunpack.c.l.s4 1983009808
    %v2266 = vunpack.c.0.s8 %v2265
    %v2267 = vlaneseq
    %v2268 = vshrl.u32 %v2267, 7
    %v2269 = vsub.s32 %v2266, %v2268
    %v2270 = vrot.slane %v2254, %v2269
    %v2272 = vunpack.c.l.s4 1983009808
    %v2273 = vunpack.c.0.s8 %v2272
    %v2274 = vlaneseq
    %v2275 = vshrl.u32 %v2274, 7
    %v2276 = vsub.s32 %v2273, %v2275
    %v2277 = vrot.slane %v2255, %v2276
    %v2279 = vunpack.c.l.s4 1983009808
    %v2280 = vunpack.c.0.s8 %v2279
    %v2281 = vlaneseq
    %v2282 = vshrl.u32 %v2281, 7
    %v2283 = vsub.s32 %v2280, %v2282
    %v2284 = vrot.slane %v2256, %v2283
    %v2285 = vcombine.low %v2263, %v2277
    %v2286 = vcombine.high %v2263, %v2277
    %v2287 = vcombine.low %v2270, %v2284
    %v2288 = vcombine.high %v2270, %v2284
    %v2289 = vcombine.low %v1953, %v1954
    %v2290 = vcombine.high %v1953, %v1954
    %v2291 = vcombine.low %v1955, %v1956
    %v2292 = vcombine.high %v1955, %v1956
    %v2294 = vunpack.c.l.s4 1983009808
    %v2295 = vunpack.c.0.s8 %v2294
    %v2296 = vlaneseq
    %v2297 = vshrl.u32 %v2296, 7
    %v2298 = vsub.s32 %v2295, %v2297
    %v2299 = vrot.slane %v2289, %v2298
    %v2301 = vunpack.c.l.s4 1983009808
    %v2302 = vunpack.c.0.s8 %v2301
    %v2303 = vlaneseq
    %v2304 = vshrl.u32 %v2303, 7
    %v2305 = vsub.s32 %v2302, %v2304
    %v2306 = vrot.slane %v2290, %v2305
    %v2308 = vunpack.c.l.s4 1983009808
    %v2309 = vunpack.c.0.s8 %v2308
    %v2310 = vlaneseq
    %v2311 = vshrl.u32 %v2310, 7
    %v2312 = vsub.s32 %v2309, %v2311
    %v2313 = vrot.slane %v2291, %v2312
    %v2315 = vunpack.c.l.s4 1983009808
    %v2316 = vunpack.c.0.s8 %v2315
    %v2317 = vlaneseq
    %v2318 = vshrl.u32 %v2317, 7
    %v2319 = vsub.s32 %v2316, %v2318
    %v2320 = vrot.slane %v2292, %v2319
    %v2321 = vcombine.low %v2299, %v2313
    %v2322 = vcombine.high %v2299, %v2313
    %v2323 = vcombine.low %v2306, %v2320
    %v2324 = vcombine.high %v2306, %v2320
    %v2325 = vcombine.low %v1957, %v1958
    %v2326 = vcombine.high %v1957, %v1958
    %v2327 = vcombine.low %v1959, %v1960
    %v2328 = vcombine.high %v1959, %v1960
    %v2330 = vunpack.c.l.s4 1983009808
    %v2331 = vunpack.c.0.s8 %v2330
    %v2332 = vlaneseq
    %v2333 = vshrl.u32 %v2332, 7
    %v2334 = vsub.s32 %v2331, %v2333
    %v2335 = vrot.slane %v2325, %v2334
    %v2337 = vunpack.c.l.s4 1983009808
    %v2338 = vunpack.c.0.s8 %v2337
    %v2339 = vlaneseq
    %v2340 = vshrl.u32 %v2339, 7
    %v2341 = vsub.s32 %v2338, %v2340
    %v2342 = vrot.slane %v2326, %v2341
    %v2344 = vunpack.c.l.s4 1983009808
    %v2345 = vunpack.c.0.s8 %v2344
    %v2346 = vlaneseq
    %v2347 = vshrl.u32 %v2346, 7
    %v2348 = vsub.s32 %v2345, %v2347
    %v2349 = vrot.slane %v2327, %v2348
    %v2351 = vunpack.c.l.s4 1983009808
    %v2352 = vunpack.c.0.s8 %v2351
    %v2353 = vlaneseq
    %v2354 = vshrl.u32 %v2353, 7
    %v2355 = vsub.s32 %v2352, %v2354
    %v2356 = vrot.slane %v2328, %v2355
    %v2357 = vcombine.low %v2335, %v2349
    %v2358 = vcombine.high %v2335, %v2349
    %v2359 = vcombine.low %v2342, %v2356
    %v2360 = vcombine.high %v2342, %v2356
    %v2361 = vcombine.low %v1961, %v1962
    %v2362 = vcombine.high %v1961, %v1962
    %v2363 = vcombine.low %v1963, %v1964
    %v2364 = vcombine.high %v1963, %v1964
    %v2366 = vunpack.c.l.s4 1983009808
    %v2367 = vunpack.c.0.s8 %v2366
    %v2368 = vlaneseq
    %v2369 = vshrl.u32 %v2368, 7
    %v2370 = vsub.s32 %v2367, %v2369
    %v2371 = vrot.slane %v2361, %v2370
    %v2373 = vunpack.c.l.s4 1983009808
    %v2374 = vunpack.c.0.s8 %v2373
    %v2375 = vlaneseq
    %v2376 = vshrl.u32 %v2375, 7
    %v2377 = vsub.s32 %v2374, %v2376
    %v2378 = vrot.slane %v2362, %v2377
    %v2380 = vunpack.c.l.s4 1983009808
    %v2381 = vunpack.c.0.s8 %v2380
    %v2382 = vlaneseq
    %v2383 = vshrl.u32 %v2382, 7
    %v2384 = vsub.s32 %v2381, %v2383
    %v2385 = vrot.slane %v2363, %v2384
    %v2387 = vunpack.c.l.s4 1983009808
    %v2388 = vunpack.c.0.s8 %v2387
    %v2389 = vlaneseq
    %v2390 = vshrl.u32 %v2389, 7
    %v2391 = vsub.s32 %v2388, %v2390
    %v2392 = vrot.slane %v2364, %v2391
    %v2393 = vcombine.low %v2371, %v2385
    %v2394 = vcombine.high %v2371, %v2385
    %v2395 = vcombine.low %v2378, %v2392
    %v2396 = vcombine.high %v2378, %v2392
    %v2397 = vcombine.low %v1965, %v1966
    %v2398 = vcombine.high %v1965, %v1966
    %v2399 = vcombine.low %v1967, %v1968
    %v2400 = vcombine.high %v1967, %v1968
    %v2402 = vunpack.c.l.s4 1983009808
    %v2403 = vunpack.c.0.s8 %v2402
    %v2404 = vlaneseq
    %v2405 = vshrl.u32 %v2404, 7
    %v2406 = vsub.s32 %v2403, %v2405
    %v2407 = vrot.slane %v2397, %v2406
    %v2409 = vunpack.c.l.s4 1983009808
    %v2410 = vunpack.c.0.s8 %v2409
    %v2411 = vlaneseq
    %v2412 = vshrl.u32 %v2411, 7
    %v2413 = vsub.s32 %v2410, %v2412
    %v2414 = vrot.slane %v2398, %v2413
    %v2416 = vunpack.c.l.s4 1983009808
    %v2417 = vunpack.c.0.s8 %v2416
    %v2418 = vlaneseq
    %v2419 = vshrl.u32 %v2418, 7
    %v2420 = vsub.s32 %v2417, %v2419
    %v2421 = vrot.slane %v2399, %v2420
    %v2423 = vunpack.c.l.s4 1983009808
    %v2424 = vunpack.c.0.s8 %v2423
    %v2425 = vlaneseq
    %v2426 = vshrl.u32 %v2425, 7
    %v2427 = vsub.s32 %v2424, %v2426
    %v2428 = vrot.slane %v2400, %v2427
    %v2429 = vcombine.low %v2407, %v2421
    %v2430 = vcombine.high %v2407, %v2421
    %v2431 = vcombine.low %v2414, %v2428
    %v2432 = vcombine.high %v2414, %v2428
    %v2433 = vcombine.low %v1969, %v1970
    %v2434 = vcombine.high %v1969, %v1970
    %v2435 = vcombine.low %v1971, %v1972
    %v2436 = vcombine.high %v1971, %v1972
    %v2438 = vunpack.c.l.s4 1983009808
    %v2439 = vunpack.c.0.s8 %v2438
    %v2440 = vlaneseq
    %v2441 = vshrl.u32 %v2440, 7
    %v2442 = vsub.s32 %v2439, %v2441
    %v2443 = vrot.slane %v2433, %v2442
    %v2445 = vunpack.c.l.s4 1983009808
    %v2446 = vunpack.c.0.s8 %v2445
    %v2447 = vlaneseq
    %v2448 = vshrl.u32 %v2447, 7
    %v2449 = vsub.s32 %v2446, %v2448
    %v2450 = vrot.slane %v2434, %v2449
    %v2452 = vunpack.c.l.s4 1983009808
    %v2453 = vunpack.c.0.s8 %v2452
    %v2454 = vlaneseq
    %v2455 = vshrl.u32 %v2454, 7
    %v2456 = vsub.s32 %v2453, %v2455
    %v2457 = vrot.slane %v2435, %v2456
    %v2459 = vunpack.c.l.s4 1983009808
    %v2460 = vunpack.c.0.s8 %v2459
    %v2461 = vlaneseq
    %v2462 = vshrl.u32 %v2461, 7
    %v2463 = vsub.s32 %v2460, %v2462
    %v2464 = vrot.slane %v2436, %v2463
    %v2465 = vcombine.low %v2443, %v2457
    %v2466 = vcombine.high %v2443, %v2457
    %v2467 = vcombine.low %v2450, %v2464
    %v2468 = vcombine.high %v2450, %v2464
    %v2469 = vcombine.low %v1973, %v1974
    %v2470 = vcombine.high %v1973, %v1974
    %v2471 = vcombine.low %v1975, %v1976
    %v2472 = vcombine.high %v1975, %v1976
    %v2474 = vunpack.c.l.s4 1983009808
    %v2475 = vunpack.c.0.s8 %v2474
    %v2476 = vlaneseq
    %v2477 = vshrl.u32 %v2476, 7
    %v2478 = vsub.s32 %v2475, %v2477
    %v2479 = vrot.slane %v2469, %v2478
    %v2481 = vunpack.c.l.s4 1983009808
    %v2482 = vunpack.c.0.s8 %v2481
    %v2483 = vlaneseq
    %v2484 = vshrl.u32 %v2483, 7
    %v2485 = vsub.s32 %v2482, %v2484
    %v2486 = vrot.slane %v2470, %v2485
    %v2488 = vunpack.c.l.s4 1983009808
    %v2489 = vunpack.c.0.s8 %v2488
    %v2490 = vlaneseq
    %v2491 = vshrl.u32 %v2490, 7
    %v2492 = vsub.s32 %v2489, %v2491
    %v2493 = vrot.slane %v2471, %v2492
    %v2495 = vunpack.c.l.s4 1983009808
    %v2496 = vunpack.c.0.s8 %v2495
    %v2497 = vlaneseq
    %v2498 = vshrl.u32 %v2497, 7
    %v2499 = vsub.s32 %v2496, %v2498
    %v2500 = vrot.slane %v2472, %v2499
    %v2501 = vcombine.low %v2479, %v2493
    %v2502 = vcombine.high %v2479, %v2493
    %v2503 = vcombine.low %v2486, %v2500
    %v2504 = vcombine.high %v2486, %v2500
    %v2505 = vcombine.low %v1977, %v1978
    %v2506 = vcombine.high %v1977, %v1978
    %v2507 = vcombine.low %v1979, %v1980
    %v2508 = vcombine.high %v1979, %v1980
    %v2510 = vunpack.c.l.s4 1983009808
    %v2511 = vunpack.c.0.s8 %v2510
    %v2512 = vlaneseq
    %v2513 = vshrl.u32 %v2512, 7
    %v2514 = vsub.s32 %v2511, %v2513
    %v2515 = vrot.slane %v2505, %v2514
    %v2517 = vunpack.c.l.s4 1983009808
    %v2518 = vunpack.c.0.s8 %v2517
    %v2519 = vlaneseq
    %v2520 = vshrl.u32 %v2519, 7
    %v2521 = vsub.s32 %v2518, %v2520
    %v2522 = vrot.slane %v2506, %v2521
    %v2524 = vunpack.c.l.s4 1983009808
    %v2525 = vunpack.c.0.s8 %v2524
    %v2526 = vlaneseq
    %v2527 = vshrl.u32 %v2526, 7
    %v2528 = vsub.s32 %v2525, %v2527
    %v2529 = vrot.slane %v2507, %v2528
    %v2531 = vunpack.c.l.s4 1983009808
    %v2532 = vunpack.c.0.s8 %v2531
    %v2533 = vlaneseq
    %v2534 = vshrl.u32 %v2533, 7
    %v2535 = vsub.s32 %v2532, %v2534
    %v2536 = vrot.slane %v2508, %v2535
    %v2537 = vcombine.low %v2515, %v2529
    %v2538 = vcombine.high %v2515, %v2529
    %v2539 = vcombine.low %v2522, %v2536
    %v2540 = vcombine.high %v2522, %v2536
    %v2541 = vcombine.high %v2069, %v2069
    %v2543 = vunpack.c.l.s4 1983009808
    %v2544 = vunpack.c.0.s8 %v2543
    %v2545 = vlaneseq
    %v2546 = vshrl.u32 %v2545, 7
    %v2547 = vsub.s32 %v2544, %v2546
    %v2548 = vrot.slane %v2069, %v2547
    %v2550 = vunpack.c.l.s4 1983009808
    %v2551 = vunpack.c.0.s8 %v2550
    %v2552 = vlaneseq
    %v2553 = vshrl.u32 %v2552, 7
    %v2554 = vsub.s32 %v2551, %v2553
    %v2555 = vrot.slane %v2541, %v2554
    %v2556 = vcombine.high %v2548, %v2548
    %v2557 = vcombine.high %v2555, %v2555
    %v2558 = vcombine.high %v2105, %v2105
    %v2560 = vunpack.c.l.s4 1983009808
    %v2561 = vunpack.c.0.s8 %v2560
    %v2562 = vlaneseq
    %v2563 = vshrl.u32 %v2562, 7
    %v2564 = vsub.s32 %v2561, %v2563
    %v2565 = vrot.slane %v2105, %v2564
    %v2567 = vunpack.c.l.s4 1983009808
    %v2568 = vunpack.c.0.s8 %v2567
    %v2569 = vlaneseq
    %v2570 = vshrl.u32 %v2569, 7
    %v2571 = vsub.s32 %v2568, %v2570
    %v2572 = vrot.slane %v2558, %v2571
    %v2573 = vcombine.high %v2565, %v2565
    %v2574 = vcombine.high %v2572, %v2572
    %v2575 = vcombine.high %v2070, %v2070
    %v2577 = vunpack.c.l.s4 1983009808
    %v2578 = vunpack.c.0.s8 %v2577
    %v2579 = vlaneseq
    %v2580 = vshrl.u32 %v2579, 7
    %v2581 = vsub.s32 %v2578, %v2580
    %v2582 = vrot.slane %v2070, %v2581
    %v2584 = vunpack.c.l.s4 1983009808
    %v2585 = vunpack.c.0.s8 %v2584
    %v2586 = vlaneseq
    %v2587 = vshrl.u32 %v2586, 7
    %v2588 = vsub.s32 %v2585, %v2587
    %v2589 = vrot.slane %v2575, %v2588
    %v2590 = vcombine.high %v2582, %v2582
    %v2591 = vcombine.high %v2589, %v2589
    %v2592 = vcombine.high %v2106, %v2106
    %v2594 = vunpack.c.l.s4 1983009808
    %v2595 = vunpack.c.0.s8 %v2594
    %v2596 = vlaneseq
    %v2597 = vshrl.u32 %v2596, 7
    %v2598 = vsub.s32 %v2595, %v2597
    %v2599 = vrot.slane %v2106, %v2598
    %v2601 = vunpack.c.l.s4 1983009808
    %v2602 = vunpack.c.0.s8 %v2601
    %v2603 = vlaneseq
    %v2604 = vshrl.u32 %v2603, 7
    %v2605 = vsub.s32 %v2602, %v2604
    %v2606 = vrot.slane %v2592, %v2605
    %v2607 = vcombine.high %v2599, %v2599
    %v2608 = vcombine.high %v2606, %v2606
    %v2609 = vcombine.high %v2071, %v2071
    %v2611 = vunpack.c.l.s4 1983009808
    %v2612 = vunpack.c.0.s8 %v2611
    %v2613 = vlaneseq
    %v2614 = vshrl.u32 %v2613, 7
    %v2615 = vsub.s32 %v2612, %v2614
    %v2616 = vrot.slane %v2071, %v2615
    %v2618 = vunpack.c.l.s4 1983009808
    %v2619 = vunpack.c.0.s8 %v2618
    %v2620 = vlaneseq
    %v2621 = vshrl.u32 %v2620, 7
    %v2622 = vsub.s32 %v2619, %v2621
    %v2623 = vrot.slane %v2609, %v2622
    %v2624 = vcombine.high %v2616, %v2616
    %v2625 = vcombine.high %v2623, %v2623
    %v2626 = vcombine.high %v2107, %v2107
    %v2628 = vunpack.c.l.s4 1983009808
    %v2629 = vunpack.c.0.s8 %v2628
    %v2630 = vlaneseq
    %v2631 = vshrl.u32 %v2630, 7
    %v2632 = vsub.s32 %v2629, %v2631
    %v2633 = vrot.slane %v2107, %v2632
    %v2635 = vunpack.c.l.s4 1983009808
    %v2636 = vunpack.c.0.s8 %v2635
    %v2637 = vlaneseq
    %v2638 = vshrl.u32 %v2637, 7
    %v2639 = vsub.s32 %v2636, %v2638
    %v2640 = vrot.slane %v2626, %v2639
    %v2641 = vcombine.high %v2633, %v2633
    %v2642 = vcombine.high %v2640, %v2640
    %v2643 = vcombine.high %v2072, %v2072
    %v2645 = vunpack.c.l.s4 1983009808
    %v2646 = vunpack.c.0.s8 %v2645
    %v2647 = vlaneseq
    %v2648 = vshrl.u32 %v2647, 7
    %v2649 = vsub.s32 %v2646, %v2648
    %v2650 = vrot.slane %v2072, %v2649
    %v2652 = vunpack.c.l.s4 1983009808
    %v2653 = vunpack.c.0.s8 %v2652
    %v2654 = vlaneseq
    %v2655 = vshrl.u32 %v2654, 7
    %v2656 = vsub.s32 %v2653, %v2655
    %v2657 = vrot.slane %v2643, %v2656
    %v2658 = vcombine.high %v2650, %v2650
    %v2659 = vcombine.high %v2657, %v2657
    %v2660 = vcombine.high %v2108, %v2108
    %v2662 = vunpack.c.l.s4 1983009808
    %v2663 = vunpack.c.0.s8 %v2662
    %v2664 = vlaneseq
    %v2665 = vshrl.u32 %v2664, 7
    %v2666 = vsub.s32 %v2663, %v2665
    %v2667 = vrot.slane %v2108, %v2666
    %v2669 = vunpack.c.l.s4 1983009808
    %v2670 = vunpack.c.0.s8 %v2669
    %v2671 = vlaneseq
    %v2672 = vshrl.u32 %v2671, 7
    %v2673 = vsub.s32 %v2670, %v2672
    %v2674 = vrot.slane %v2660, %v2673
    %v2675 = vcombine.high %v2667, %v2667
    %v2676 = vcombine.high %v2674, %v2674
    %v2677 = vcombine.high %v2141, %v2141
    %v2679 = vunpack.c.l.s4 1983009808
    %v2680 = vunpack.c.0.s8 %v2679
    %v2681 = vlaneseq
    %v2682 = vshrl.u32 %v2681, 7
    %v2683 = vsub.s32 %v2680, %v2682
    %v2684 = vrot.slane %v2141, %v2683
    %v2686 = vunpack.c.l.s4 1983009808
    %v2687 = vunpack.c.0.s8 %v2686
    %v2688 = vlaneseq
    %v2689 = vshrl.u32 %v2688, 7
    %v2690 = vsub.s32 %v2687, %v2689
    %v2691 = vrot.slane %v2677, %v2690
    %v2692 = vcombine.high %v2684, %v2684
    %v2693 = vcombine.high %v2691, %v2691
    %v2694 = vcombine.high %v2177, %v2177
    %v2696 = vunpack.c.l.s4 1983009808
    %v2697 = vunpack.c.0.s8 %v2696
    %v2698 = vlaneseq
    %v2699 = vshrl.u32 %v2698, 7
    %v2700 = vsub.s32 %v2697, %v2699
    %v2701 = vrot.slane %v2177, %v2700
    %v2703 = vunpack.c.l.s4 1983009808
    %v2704 = vunpack.c.0.s8 %v2703
    %v2705 = vlaneseq
    %v2706 = vshrl.u32 %v2705, 7
    %v2707 = vsub.s32 %v2704, %v2706
    %v2708 = vrot.slane %v2694, %v2707
    %v2709 = vcombine.high %v2701, %v2701
    %v2710 = vcombine.high %v2708, %v2708
    %v2711 = vcombine.high %v2142, %v2142
    %v2713 = vunpack.c.l.s4 1983009808
    %v2714 = vunpack.c.0.s8 %v2713
    %v2715 = vlaneseq
    %v2716 = vshrl.u32 %v2715, 7
    %v2717 = vsub.s32 %v2714, %v2716
    %v2718 = vrot.slane %v2142, %v2717
    %v2720 = vunpack.c.l.s4 1983009808
    %v2721 = vunpack.c.0.s8 %v2720
    %v2722 = vlaneseq
    %v2723 = vshrl.u32 %v2722, 7
    %v2724 = vsub.s32 %v2721, %v2723
    %v2725 = vrot.slane %v2711, %v2724
    %v2726 = vcombine.high %v2718, %v2718
    %v2727 = vcombine.high %v2725, %v2725
    %v2728 = vcombine.high %v2178, %v2178
    %v2730 = vunpack.c.l.s4 1983009808
    %v2731 = vunpack.c.0.s8 %v2730
    %v2732 = vlaneseq
    %v2733 = vshrl.u32 %v2732, 7
    %v2734 = vsub.s32 %v2731, %v2733
    %v2735 = vrot.slane %v2178, %v2734
    %v2737 = vunpack.c.l.s4 1983009808
    %v2738 = vunpack.c.0.s8 %v2737
    %v2739 = vlaneseq
    %v2740 = vshrl.u32 %v2739, 7
    %v2741 = vsub.s32 %v2738, %v2740
    %v2742 = vrot.slane %v2728, %v2741
    %v2743 = vcombine.high %v2735, %v2735
    %v2744 = vcombine.high %v2742, %v2742
    %v2745 = vcombine.high %v2143, %v2143
    %v2747 = vunpack.c.l.s4 1983009808
    %v2748 = vunpack.c.0.s8 %v2747
    %v2749 = vlaneseq
    %v2750 = vshrl.u32 %v2749, 7
    %v2751 = vsub.s32 %v2748, %v2750
    %v2752 = vrot.slane %v2143, %v2751
    %v2754 = vunpack.c.l.s4 1983009808
    %v2755 = vunpack.c.0.s8 %v2754
    %v2756 = vlaneseq
    %v2757 = vshrl.u32 %v2756, 7
    %v2758 = vsub.s32 %v2755, %v2757
    %v2759 = vrot.slane %v2745, %v2758
    %v2760 = vcombine.high %v2752, %v2752
    %v2761 = vcombine.high %v2759, %v2759
    %v2762 = vcombine.high %v2179, %v2179
    %v2764 = vunpack.c.l.s4 1983009808
    %v2765 = vunpack.c.0.s8 %v2764
    %v2766 = vlaneseq
    %v2767 = vshrl.u32 %v2766, 7
    %v2768 = vsub.s32 %v2765, %v2767
    %v2769 = vrot.slane %v2179, %v2768
    %v2771 = vunpack.c.l.s4 1983009808
    %v2772 = vunpack.c.0.s8 %v2771
    %v2773 = vlaneseq
    %v2774 = vshrl.u32 %v2773, 7
    %v2775 = vsub.s32 %v2772, %v2774
    %v2776 = vrot.slane %v2762, %v2775
    %v2777 = vcombine.high %v2769, %v2769
    %v2778 = vcombine.high %v2776, %v2776
    %v2779 = vcombine.high %v2144, %v2144
    %v2781 = vunpack.c.l.s4 1983009808
    %v2782 = vunpack.c.0.s8 %v2781
    %v2783 = vlaneseq
    %v2784 = vshrl.u32 %v2783, 7
    %v2785 = vsub.s32 %v2782, %v2784
    %v2786 = vrot.slane %v2144, %v2785
    %v2788 = vunpack.c.l.s4 1983009808
    %v2789 = vunpack.c.0.s8 %v2788
    %v2790 = vlaneseq
    %v2791 = vshrl.u32 %v2790, 7
    %v2792 = vsub.s32 %v2789, %v2791
    %v2793 = vrot.slane %v2779, %v2792
    %v2794 = vcombine.high %v2786, %v2786
    %v2795 = vcombine.high %v2793, %v2793
    %v2796 = vcombine.high %v2180, %v2180
    %v2798 = vunpack.c.l.s4 1983009808
    %v2799 = vunpack.c.0.s8 %v2798
    %v2800 = vlaneseq
    %v2801 = vshrl.u32 %v2800, 7
    %v2802 = vsub.s32 %v2799, %v2801
    %v2803 = vrot.slane %v2180, %v2802
    %v2805 = vunpack.c.l.s4 1983009808
    %v2806 = vunpack.c.0.s8 %v2805
    %v2807 = vlaneseq
    %v2808 = vshrl.u32 %v2807, 7
    %v2809 = vsub.s32 %v2806, %v2808
    %v2810 = vrot.slane %v2796, %v2809
    %v2811 = vcombine.high %v2803, %v2803
    %v2812 = vcombine.high %v2810, %v2810
    %v2813 = vcombine.high %v2213, %v2213
    %v2815 = vunpack.c.l.s4 1983009808
    %v2816 = vunpack.c.0.s8 %v2815
    %v2817 = vlaneseq
    %v2818 = vshrl.u32 %v2817, 7
    %v2819 = vsub.s32 %v2816, %v2818
    %v2820 = vrot.slane %v2213, %v2819
    %v2822 = vunpack.c.l.s4 1983009808
    %v2823 = vunpack.c.0.s8 %v2822
    %v2824 = vlaneseq
    %v2825 = vshrl.u32 %v2824, 7
    %v2826 = vsub.s32 %v2823, %v2825
    %v2827 = vrot.slane %v2813, %v2826
    %v2828 = vcombine.high %v2820, %v2820
    %v2829 = vcombine.high %v2827, %v2827
    %v2830 = vcombine.high %v2249, %v2249
    %v2832 = vunpack.c.l.s4 1983009808
    %v2833 = vunpack.c.0.s8 %v2832
    %v2834 = vlaneseq
    %v2835 = vshrl.u32 %v2834, 7
    %v2836 = vsub.s32 %v2833, %v2835
    %v2837 = vrot.slane %v2249, %v2836
    %v2839 = vunpack.c.l.s4 1983009808
    %v2840 = vunpack.c.0.s8 %v2839
    %v2841 = vlaneseq
    %v2842 = vshrl.u32 %v2841, 7
    %v2843 = vsub.s32 %v2840, %v2842
    %v2844 = vrot.slane %v2830, %v2843
    %v2845 = vcombine.high %v2837, %v2837
    %v2846 = vcombine.high %v2844, %v2844
    %v2847 = vcombine.high %v2214, %v2214
    %v2849 = vunpack.c.l.s4 1983009808
    %v2850 = vunpack.c.0.s8 %v2849
    %v2851 = vlaneseq
    %v2852 = vshrl.u32 %v2851, 7
    %v2853 = vsub.s32 %v2850, %v2852
    %v2854 = vrot.slane %v2214, %v2853
    %v2856 = vunpack.c.l.s4 1983009808
    %v2857 = vunpack.c.0.s8 %v2856
    %v2858 = vlaneseq
    %v2859 = vshrl.u32 %v2858, 7
    %v2860 = vsub.s32 %v2857, %v2859
    %v2861 = vrot.slane %v2847, %v2860
    %v2862 = vcombine.high %v2854, %v2854
    %v2863 = vcombine.high %v2861, %v2861
    %v2864 = vcombine.high %v2250, %v2250
    %v2866 = vunpack.c.l.s4 1983009808
    %v2867 = vunpack.c.0.s8 %v2866
    %v2868 = vlaneseq
    %v2869 = vshrl.u32 %v2868, 7
    %v2870 = vsub.s32 %v2867, %v2869
    %v2871 = vrot.slane %v2250, %v2870
    %v2873 = vunpack.c.l.s4 1983009808
    %v2874 = vunpack.c.0.s8 %v2873
    %v2875 = vlaneseq
    %v2876 = vshrl.u32 %v2875, 7
    %v2877 = vsub.s32 %v2874, %v2876
    %v2878 = vrot.slane %v2864, %v2877
    %v2879 = vcombine.high %v2871, %v2871
    %v2880 = vcombine.high %v2878, %v2878
    %v2881 = vcombine.high %v2215, %v2215
    %v2883 = vunpack.c.l.s4 1983009808
    %v2884 = vunpack.c.0.s8 %v2883
    %v2885 = vlaneseq
    %v2886 = vshrl.u32 %v2885, 7
    %v2887 = vsub.s32 %v2884, %v2886
    %v2888 = vrot.slane %v2215, %v2887
    %v2890 = vunpack.c.l.s4 1983009808
    %v2891 = vunpack.c.0.s8 %v2890
    %v2892 = vlaneseq
    %v2893 = vshrl.u32 %v2892, 7
    %v2894 = vsub.s32 %v2891, %v2893
    %v2895 = vrot.slane %v2881, %v2894
    %v2896 = vcombine.high %v2888, %v2888
    %v2897 = vcombine.high %v2895, %v2895
    %v2898 = vcombine.high %v2251, %v2251
    %v2900 = vunpack.c.l.s4 1983009808
    %v2901 = vunpack.c.0.s8 %v2900
    %v2902 = vlaneseq
    %v2903 = vshrl.u32 %v2902, 7
    %v2904 = vsub.s32 %v2901, %v2903
    %v2905 = vrot.slane %v2251, %v2904
    %v2907 = vunpack.c.l.s4 1983009808
    %v2908 = vunpack.c.0.s8 %v2907
    %v2909 = vlaneseq
    %v2910 = vshrl.u32 %v2909, 7
    %v2911 = vsub.s32 %v2908, %v2910
    %v2912 = vrot.slane %v2898, %v2911
    %v2913 = vcombine.high %v2905, %v2905
    %v2914 = vcombine.high %v2912, %v2912
    %v2915 = vcombine.high %v2216, %v2216
    %v2917 = vunpack.c.l.s4 1983009808
    %v2918 = vunpack.c.0.s8 %v2917
    %v2919 = vlaneseq
    %v2920 = vshrl.u32 %v2919, 7
    %v2921 = vsub.s32 %v2918, %v2920
    %v2922 = vrot.slane %v2216, %v2921
    %v2924 = vunpack.c.l.s4 1983009808
    %v2925 = vunpack.c.0.s8 %v2924
    %v2926 = vlaneseq
    %v2927 = vshrl.u32 %v2926, 7
    %v2928 = vsub.s32 %v2925, %v2927
    %v2929 = vrot.slane %v2915, %v2928
    %v2930 = vcombine.high %v2922, %v2922
    %v2931 = vcombine.high %v2929, %v2929
    %v2932 = vcombine.high %v2252, %v2252
    %v2934 = vunpack.c.l.s4 1983009808
    %v2935 = vunpack.c.0.s8 %v2934
    %v2936 = vlaneseq
    %v2937 = vshrl.u32 %v2936, 7
    %v2938 = vsub.s32 %v2935, %v2937
    %v2939 = vrot.slane %v2252, %v2938
    %v2941 = vunpack.c.l.s4 1983009808
    %v2942 = vunpack.c.0.s8 %v2941
    %v2943 = vlaneseq
    %v2944 = vshrl.u32 %v2943, 7
    %v2945 = vsub.s32 %v2942, %v2944
    %v2946 = vrot.slane %v2932, %v2945
    %v2947 = vcombine.high %v2939, %v2939
    %v2948 = vcombine.high %v2946, %v2946
    %v2949 = vcombine.high %v2285, %v2285
    %v2951 = vunpack.c.l.s4 1983009808
    %v2952 = vunpack.c.0.s8 %v2951
    %v2953 = vlaneseq
    %v2954 = vshrl.u32 %v2953, 7
    %v2955 = vsub.s32 %v2952, %v2954
    %v2956 = vrot.slane %v2285, %v2955
    %v2958 = vunpack.c.l.s4 1983009808
    %v2959 = vunpack.c.0.s8 %v2958
    %v2960 = vlaneseq
    %v2961 = vshrl.u32 %v2960, 7
    %v2962 = vsub.s32 %v2959, %v2961
    %v2963 = vrot.slane %v2949, %v2962
    %v2964 = vcombine.high %v2956, %v2956
    %v2965 = vcombine.high %v2963, %v2963
    %v2966 = vcombine.high %v2321, %v2321
    %v2968 = vunpack.c.l.s4 1983009808
    %v2969 = vunpack.c.0.s8 %v2968
    %v2970 = vlaneseq
    %v2971 = vshrl.u32 %v2970, 7
    %v2972 = vsub.s32 %v2969, %v2971
    %v2973 = vrot.slane %v2321, %v2972
    %v2975 = vunpack.c.l.s4 1983009808
    %v2976 = vunpack.c.0.s8 %v2975
    %v2977 = vlaneseq
    %v2978 = vshrl.u32 %v2977, 7
    %v2979 = vsub.s32 %v2976, %v2978
    %v2980 = vrot.slane %v2966, %v2979
    %v2981 = vcombine.high %v2973, %v2973
    %v2982 = vcombine.high %v2980, %v2980
    %v2983 = vcombine.high %v2286, %v2286
    %v2985 = vunpack.c.l.s4 1983009808
    %v2986 = vunpack.c.0.s8 %v2985
    %v2987 = vlaneseq
    %v2988 = vshrl.u32 %v2987, 7
    %v2989 = vsub.s32 %v2986, %v2988
    %v2990 = vrot.slane %v2286, %v2989
    %v2992 = vunpack.c.l.s4 1983009808
    %v2993 = vunpack.c.0.s8 %v2992
    %v2994 = vlaneseq
    %v2995 = vshrl.u32 %v2994, 7
    %v2996 = vsub.s32 %v2993, %v2995
    %v2997 = vrot.slane %v2983, %v2996
    %v2998 = vcombine.high %v2990, %v2990
    %v2999 = vcombine.high %v2997, %v2997
    %v3000 = vcombine.high %v2322, %v2322
    %v3002 = vunpack.c.l.s4 1983009808
    %v3003 = vunpack.c.0.s8 %v3002
    %v3004 = vlaneseq
    %v3005 = vshrl.u32 %v3004, 7
    %v3006 = vsub.s32 %v3003, %v3005
    %v3007 = vrot.slane %v2322, %v3006
    %v3009 = vunpack.c.l.s4 1983009808
    %v3010 = vunpack.c.0.s8 %v3009
    %v3011 = vlaneseq
    %v3012 = vshrl.u32 %v3011, 7
    %v3013 = vsub.s32 %v3010, %v3012
    %v3014 = vrot.slane %v3000, %v3013
    %v3015 = vcombine.high %v3007, %v3007
    %v3016 = vcombine.high %v3014, %v3014
    %v3017 = vcombine.high %v2287, %v2287
    %v3019 = vunpack.c.l.s4 1983009808
    %v3020 = vunpack.c.0.s8 %v3019
    %v3021 = vlaneseq
    %v3022 = vshrl.u32 %v3021, 7
    %v3023 = vsub.s32 %v3020, %v3022
    %v3024 = vrot.slane %v2287, %v3023
    %v3026 = vunpack.c.l.s4 1983009808
    %v3027 = vunpack.c.0.s8 %v3026
    %v3028 = vlaneseq
    %v3029 = vshrl.u32 %v3028, 7
    %v3030 = vsub.s32 %v3027, %v3029
    %v3031 = vrot.slane %v3017, %v3030
    %v3032 = vcombine.high %v3024, %v3024
    %v3033 = vcombine.high %v3031, %v3031
    %v3034 = vcombine.high %v2323, %v2323
    %v3036 = vunpack.c.l.s4 1983009808
    %v3037 = vunpack.c.0.s8 %v3036
    %v3038 = vlaneseq
    %v3039 = vshrl.u32 %v3038, 7
    %v3040 = vsub.s32 %v3037, %v3039
    %v3041 = vrot.slane %v2323, %v3040
    %v3043 = vunpack.c.l.s4 1983009808
    %v3044 = vunpack.c.0.s8 %v3043
    %v3045 = vlaneseq
    %v3046 = vshrl.u32 %v3045, 7
    %v3047 = vsub.s32 %v3044, %v3046
    %v3048 = vrot.slane %v3034, %v3047
    %v3049 = vcombine.high %v3041, %v3041
    %v3050 = vcombine.high %v3048, %v3048
    %v3051 = vcombine.high %v2288, %v2288
    %v3053 = vunpack.c.l.s4 1983009808
    %v3054 = vunpack.c.0.s8 %v3053
    %v3055 = vlaneseq
    %v3056 = vshrl.u32 %v3055, 7
    %v3057 = vsub.s32 %v3054, %v3056
    %v3058 = vrot.slane %v2288, %v3057
    %v3060 = vunpack.c.l.s4 1983009808
    %v3061 = vunpack.c.0.s8 %v3060
    %v3062 = vlaneseq
    %v3063 = vshrl.u32 %v3062, 7
    %v3064 = vsub.s32 %v3061, %v3063
    %v3065 = vrot.slane %v3051, %v3064
    %v3066 = vcombine.high %v3058, %v3058
    %v3067 = vcombine.high %v3065, %v3065
    %v3068 = vcombine.high %v2324, %v2324
    %v3070 = vunpack.c.l.s4 1983009808
    %v3071 = vunpack.c.0.s8 %v3070
    %v3072 = vlaneseq
    %v3073 = vshrl.u32 %v3072, 7
    %v3074 = vsub.s32 %v3071, %v3073
    %v3075 = vrot.slane %v2324, %v3074
    %v3077 = vunpack.c.l.s4 1983009808
    %v3078 = vunpack.c.0.s8 %v3077
    %v3079 = vlaneseq
    %v3080 = vshrl.u32 %v3079, 7
    %v3081 = vsub.s32 %v3078, %v3080
    %v3082 = vrot.slane %v3068, %v3081
    %v3083 = vcombine.high %v3075, %v3075
    %v3084 = vcombine.high %v3082, %v3082
    %v3085 = vcombine.high %v2357, %v2357
    %v3087 = vunpack.c.l.s4 1983009808
    %v3088 = vunpack.c.0.s8 %v3087
    %v3089 = vlaneseq
    %v3090 = vshrl.u32 %v3089, 7
    %v3091 = vsub.s32 %v3088, %v3090
    %v3092 = vrot.slane %v2357, %v3091
    %v3094 = vunpack.c.l.s4 1983009808
    %v3095 = vunpack.c.0.s8 %v3094
    %v3096 = vlaneseq
    %v3097 = vshrl.u32 %v3096, 7
    %v3098 = vsub.s32 %v3095, %v3097
    %v3099 = vrot.slane %v3085, %v3098
    %v3100 = vcombine.high %v3092, %v3092
    %v3101 = vcombine.high %v3099, %v3099
    %v3102 = vcombine.high %v2393, %v2393
    %v3104 = vunpack.c.l.s4 1983009808
    %v3105 = vunpack.c.0.s8 %v3104
    %v3106 = vlaneseq
    %v3107 = vshrl.u32 %v3106, 7
    %v3108 = vsub.s32 %v3105, %v3107
    %v3109 = vrot.slane %v2393, %v3108
    %v3111 = vunpack.c.l.s4 1983009808
    %v3112 = vunpack.c.0.s8 %v3111
    %v3113 = vlaneseq
    %v3114 = vshrl.u32 %v3113, 7
    %v3115 = vsub.s32 %v3112, %v3114
    %v3116 = vrot.slane %v3102, %v3115
    %v3117 = vcombine.high %v3109, %v3109
    %v3118 = vcombine.high %v3116, %v3116
    %v3119 = vcombine.high %v2358, %v2358
    %v3121 = vunpack.c.l.s4 1983009808
    %v3122 = vunpack.c.0.s8 %v3121
    %v3123 = vlaneseq
    %v3124 = vshrl.u32 %v3123, 7
    %v3125 = vsub.s32 %v3122, %v3124
    %v3126 = vrot.slane %v2358, %v3125
    %v3128 = vunpack.c.l.s4 1983009808
    %v3129 = vunpack.c.0.s8 %v3128
    %v3130 = vlaneseq
    %v3131 = vshrl.u32 %v3130, 7
    %v3132 = vsub.s32 %v3129, %v3131
    %v3133 = vrot.slane %v3119, %v3132
    %v3134 = vcombine.high %v3126, %v3126
    %v3135 = vcombine.high %v3133, %v3133
    %v3136 = vcombine.high %v2394, %v2394
    %v3138 = vunpack.c.l.s4 1983009808
    %v3139 = vunpack.c.0.s8 %v3138
    %v3140 = vlaneseq
    %v3141 = vshrl.u32 %v3140, 7
    %v3142 = vsub.s32 %v3139, %v3141
    %v3143 = vrot.slane %v2394, %v3142
    %v3145 = vunpack.c.l.s4 1983009808
    %v3146 = vunpack.c.0.s8 %v3145
    %v3147 = vlaneseq
    %v3148 = vshrl.u32 %v3147, 7
    %v3149 = vsub.s32 %v3146, %v3148
    %v3150 = vrot.slane %v3136, %v3149
    %v3151 = vcombine.high %v3143, %v3143
    %v3152 = vcombine.high %v3150, %v3150
    %v3153 = vcombine.high %v2359, %v2359
    %v3155 = vunpack.c.l.s4 1983009808
    %v3156 = vunpack.c.0.s8 %v3155
    %v3157 = vlaneseq
    %v3158 = vshrl.u32 %v3157, 7
    %v3159 = vsub.s32 %v3156, %v3158
    %v3160 = vrot.slane %v2359, %v3159
    %v3162 = vunpack.c.l.s4 1983009808
    %v3163 = vunpack.c.0.s8 %v3162
    %v3164 = vlaneseq
    %v3165 = vshrl.u32 %v3164, 7
    %v3166 = vsub.s32 %v3163, %v3165
    %v3167 = vrot.slane %v3153, %v3166
    %v3168 = vcombine.high %v3160, %v3160
    %v3169 = vcombine.high %v3167, %v3167
    %v3170 = vcombine.high %v2395, %v2395
    %v3172 = vunpack.c.l.s4 1983009808
    %v3173 = vunpack.c.0.s8 %v3172
    %v3174 = vlaneseq
    %v3175 = vshrl.u32 %v3174, 7
    %v3176 = vsub.s32 %v3173, %v3175
    %v3177 = vrot.slane %v2395, %v3176
    %v3179 = vunpack.c.l.s4 1983009808
    %v3180 = vunpack.c.0.s8 %v3179
    %v3181 = vlaneseq
    %v3182 = vshrl.u32 %v3181, 7
    %v3183 = vsub.s32 %v3180, %v3182
    %v3184 = vrot.slane %v3170, %v3183
    %v3185 = vcombine.high %v3177, %v3177
    %v3186 = vcombine.high %v3184, %v3184
    %v3187 = vcombine.high %v2360, %v2360
    %v3189 = vunpack.c.l.s4 1983009808
    %v3190 = vunpack.c.0.s8 %v3189
    %v3191 = vlaneseq
    %v3192 = vshrl.u32 %v3191, 7
    %v3193 = vsub.s32 %v3190, %v3192
    %v3194 = vrot.slane %v2360, %v3193
    %v3196 = vunpack.c.l.s4 1983009808
    %v3197 = vunpack.c.0.s8 %v3196
    %v3198 = vlaneseq
    %v3199 = vshrl.u32 %v3198, 7
    %v3200 = vsub.s32 %v3197, %v3199
    %v3201 = vrot.slane %v3187, %v3200
    %v3202 = vcombine.high %v3194, %v3194
    %v3203 = vcombine.high %v3201, %v3201
    %v3204 = vcombine.high %v2396, %v2396
    %v3206 = vunpack.c.l.s4 1983009808
    %v3207 = vunpack.c.0.s8 %v3206
    %v3208 = vlaneseq
    %v3209 = vshrl.u32 %v3208, 7
    %v3210 = vsub.s32 %v3207, %v3209
    %v3211 = vrot.slane %v2396, %v3210
    %v3213 = vunpack.c.l.s4 1983009808
    %v3214 = vunpack.c.0.s8 %v3213
    %v3215 = vlaneseq
    %v3216 = vshrl.u32 %v3215, 7
    %v3217 = vsub.s32 %v3214, %v3216
    %v3218 = vrot.slane %v3204, %v3217
    %v3219 = vcombine.high %v3211, %v3211
    %v3220 = vcombine.high %v3218, %v3218
    %v3221 = vcombine.high %v2429, %v2429
    %v3223 = vunpack.c.l.s4 1983009808
    %v3224 = vunpack.c.0.s8 %v3223
    %v3225 = vlaneseq
    %v3226 = vshrl.u32 %v3225, 7
    %v3227 = vsub.s32 %v3224, %v3226
    %v3228 = vrot.slane %v2429, %v3227
    %v3230 = vunpack.c.l.s4 1983009808
    %v3231 = vunpack.c.0.s8 %v3230
    %v3232 = vlaneseq
    %v3233 = vshrl.u32 %v3232, 7
    %v3234 = vsub.s32 %v3231, %v3233
    %v3235 = vrot.slane %v3221, %v3234
    %v3236 = vcombine.high %v3228, %v3228
    %v3237 = vcombine.high %v3235, %v3235
    %v3238 = vcombine.high %v2465, %v2465
    %v3240 = vunpack.c.l.s4 1983009808
    %v3241 = vunpack.c.0.s8 %v3240
    %v3242 = vlaneseq
    %v3243 = vshrl.u32 %v3242, 7
    %v3244 = vsub.s32 %v3241, %v3243
    %v3245 = vrot.slane %v2465, %v3244
    %v3247 = vunpack.c.l.s4 1983009808
    %v3248 = vunpack.c.0.s8 %v3247
    %v3249 = vlaneseq
    %v3250 = vshrl.u32 %v3249, 7
    %v3251 = vsub.s32 %v3248, %v3250
    %v3252 = vrot.slane %v3238, %v3251
    %v3253 = vcombine.high %v3245, %v3245
    %v3254 = vcombine.high %v3252, %v3252
    %v3255 = vcombine.high %v2430, %v2430
    %v3257 = vunpack.c.l.s4 1983009808
    %v3258 = vunpack.c.0.s8 %v3257
    %v3259 = vlaneseq
    %v3260 = vshrl.u32 %v3259, 7
    %v3261 = vsub.s32 %v3258, %v3260
    %v3262 = vrot.slane %v2430, %v3261
    %v3264 = vunpack.c.l.s4 1983009808
    %v3265 = vunpack.c.0.s8 %v3264
    %v3266 = vlaneseq
    %v3267 = vshrl.u32 %v3266, 7
    %v3268 = vsub.s32 %v3265, %v3267
    %v3269 = vrot.slane %v3255, %v3268
    %v3270 = vcombine.high %v3262, %v3262
    %v3271 = vcombine.high %v3269, %v3269
    %v3272 = vcombine.high %v2466, %v2466
    %v3274 = vunpack.c.l.s4 1983009808
    %v3275 = vunpack.c.0.s8 %v3274
    %v3276 = vlaneseq
    %v3277 = vshrl.u32 %v3276, 7
    %v3278 = vsub.s32 %v3275, %v3277
    %v3279 = vrot.slane %v2466, %v3278
    %v3281 = vunpack.c.l.s4 1983009808
    %v3282 = vunpack.c.0.s8 %v3281
    %v3283 = vlaneseq
    %v3284 = vshrl.u32 %v3283, 7
    %v3285 = vsub.s32 %v3282, %v3284
    %v3286 = vrot.slane %v3272, %v3285
    %v3287 = vcombine.high %v3279, %v3279
    %v3288 = vcombine.high %v3286, %v3286
    %v3289 = vcombine.high %v2431, %v2431
    %v3291 = vunpack.c.l.s4 1983009808
    %v3292 = vunpack.c.0.s8 %v3291
    %v3293 = vlaneseq
    %v3294 = vshrl.u32 %v3293, 7
    %v3295 = vsub.s32 %v3292, %v3294
    %v3296 = vrot.slane %v2431, %v3295
    %v3298 = vunpack.c.l.s4 1983009808
    %v3299 = vunpack.c.0.s8 %v3298
    %v3300 = vlaneseq
    %v3301 = vshrl.u32 %v3300, 7
    %v3302 = vsub.s32 %v3299, %v3301
    %v3303 = vrot.slane %v3289, %v3302
    %v3304 = vcombine.high %v3296, %v3296
    %v3305 = vcombine.high %v3303, %v3303
    %v3306 = vcombine.high %v2467, %v2467
    %v3308 = vunpack.c.l.s4 1983009808
    %v3309 = vunpack.c.0.s8 %v3308
    %v3310 = vlaneseq
    %v3311 = vshrl.u32 %v3310, 7
    %v3312 = vsub.s32 %v3309, %v3311
    %v3313 = vrot.slane %v2467, %v3312
    %v3315 = vunpack.c.l.s4 1983009808
    %v3316 = vunpack.c.0.s8 %v3315
    %v3317 = vlaneseq
    %v3318 = vshrl.u32 %v3317, 7
    %v3319 = vsub.s32 %v3316, %v3318
    %v3320 = vrot.slane %v3306, %v3319
    %v3321 = vcombine.high %v3313, %v3313
    %v3322 = vcombine.high %v3320, %v3320
    %v3323 = vcombine.high %v2432, %v2432
    %v3325 = vunpack.c.l.s4 1983009808
    %v3326 = vunpack.c.0.s8 %v3325
    %v3327 = vlaneseq
    %v3328 = vshrl.u32 %v3327, 7
    %v3329 = vsub.s32 %v3326, %v3328
    %v3330 = vrot.slane %v2432, %v3329
    %v3332 = vunpack.c.l.s4 1983009808
    %v3333 = vunpack.c.0.s8 %v3332
    %v3334 = vlaneseq
    %v3335 = vshrl.u32 %v3334, 7
    %v3336 = vsub.s32 %v3333, %v3335
    %v3337 = vrot.slane %v3323, %v3336
    %v3338 = vcombine.high %v3330, %v3330
    %v3339 = vcombine.high %v3337, %v3337
    %v3340 = vcombine.high %v2468, %v2468
    %v3342 = vunpack.c.l.s4 1983009808
    %v3343 = vunpack.c.0.s8 %v3342
    %v3344 = vlaneseq
    %v3345 = vshrl.u32 %v3344, 7
    %v3346 = vsub.s32 %v3343, %v3345
    %v3347 = vrot.slane %v2468, %v3346
    %v3349 = vunpack.c.l.s4 1983009808
    %v3350 = vunpack.c.0.s8 %v3349
    %v3351 = vlaneseq
    %v3352 = vshrl.u32 %v3351, 7
    %v3353 = vsub.s32 %v3350, %v3352
    %v3354 = vrot.slane %v3340, %v3353
    %v3355 = vcombine.high %v3347, %v3347
    %v3356 = vcombine.high %v3354, %v3354
    %v3357 = vcombine.high %v2501, %v2501
    %v3359 = vunpack.c.l.s4 1983009808
    %v3360 = vunpack.c.0.s8 %v3359
    %v3361 = vlaneseq
    %v3362 = vshrl.u32 %v3361, 7
    %v3363 = vsub.s32 %v3360, %v3362
    %v3364 = vrot.slane %v2501, %v3363
    %v3366 = vunpack.c.l.s4 1983009808
    %v3367 = vunpack.c.0.s8 %v3366
    %v3368 = vlaneseq
    %v3369 = vshrl.u32 %v3368, 7
    %v3370 = vsub.s32 %v3367, %v3369
    %v3371 = vrot.slane %v3357, %v3370
    %v3372 = vcombine.high %v3364, %v3364
    %v3373 = vcombine.high %v3371, %v3371
    %v3374 = vcombine.high %v2537, %v2537
    %v3376 = vunpack.c.l.s4 1983009808
    %v3377 = vunpack.c.0.s8 %v3376
    %v3378 = vlaneseq
    %v3379 = vshrl.u32 %v3378, 7
    %v3380 = vsub.s32 %v3377, %v3379
    %v3381 = vrot.slane %v2537, %v3380
    %v3383 = vunpack.c.l.s4 1983009808
    %v3384 = vunpack.c.0.s8 %v3383
    %v3385 = vlaneseq
    %v3386 = vshrl.u32 %v3385, 7
    %v3387 = vsub.s32 %v3384, %v3386
    %v3388 = vrot.slane %v3374, %v3387
    %v3389 = vcombine.high %v3381, %v3381
    %v3390 = vcombine.high %v3388, %v3388
    %v3391 = vcombine.high %v2502, %v2502
    %v3393 = vunpack.c.l.s4 1983009808
    %v3394 = vunpack.c.0.s8 %v3393
    %v3395 = vlaneseq
    %v3396 = vshrl.u32 %v3395, 7
    %v3397 = vsub.s32 %v3394, %v3396
    %v3398 = vrot.slane %v2502, %v3397
    %v3400 = vunpack.c.l.s4 1983009808
    %v3401 = vunpack.c.0.s8 %v3400
    %v3402 = vlaneseq
    %v3403 = vshrl.u32 %v3402, 7
    %v3404 = vsub.s32 %v3401, %v3403
    %v3405 = vrot.slane %v3391, %v3404
    %v3406 = vcombine.high %v3398, %v3398
    %v3407 = vcombine.high %v3405, %v3405
    %v3408 = vcombine.high %v2538, %v2538
    %v3410 = vunpack.c.l.s4 1983009808
    %v3411 = vunpack.c.0.s8 %v3410
    %v3412 = vlaneseq
    %v3413 = vshrl.u32 %v3412, 7
    %v3414 = vsub.s32 %v3411, %v3413
    %v3415 = vrot.slane %v2538, %v3414
    %v3417 = vunpack.c.l.s4 1983009808
    %v3418 = vunpack.c.0.s8 %v3417
    %v3419 = vlaneseq
    %v3420 = vshrl.u32 %v3419, 7
    %v3421 = vsub.s32 %v3418, %v3420
    %v3422 = vrot.slane %v3408, %v3421
    %v3423 = vcombine.high %v3415, %v3415
    %v3424 = vcombine.high %v3422, %v3422
    %v3425 = vcombine.high %v2503, %v2503
    %v3427 = vunpack.c.l.s4 1983009808
    %v3428 = vunpack.c.0.s8 %v3427
    %v3429 = vlaneseq
    %v3430 = vshrl.u32 %v3429, 7
    %v3431 = vsub.s32 %v3428, %v3430
    %v3432 = vrot.slane %v2503, %v3431
    %v3434 = vunpack.c.l.s4 1983009808
    %v3435 = vunpack.c.0.s8 %v3434
    %v3436 = vlaneseq
    %v3437 = vshrl.u32 %v3436, 7
    %v3438 = vsub.s32 %v3435, %v3437
    %v3439 = vrot.slane %v3425, %v3438
    %v3440 = vcombine.high %v3432, %v3432
    %v3441 = vcombine.high %v3439, %v3439
    %v3442 = vcombine.high %v2539, %v2539
    %v3444 = vunpack.c.l.s4 1983009808
    %v3445 = vunpack.c.0.s8 %v3444
    %v3446 = vlaneseq
    %v3447 = vshrl.u32 %v3446, 7
    %v3448 = vsub.s32 %v3445, %v3447
    %v3449 = vrot.slane %v2539, %v3448
    %v3451 = vunpack.c.l.s4 1983009808
    %v3452 = vunpack.c.0.s8 %v3451
    %v3453 = vlaneseq
    %v3454 = vshrl.u32 %v3453, 7
    %v3455 = vsub.s32 %v3452, %v3454
    %v3456 = vrot.slane %v3442, %v3455
    %v3457 = vcombine.high %v3449, %v3449
    %v3458 = vcombine.high %v3456, %v3456
    %v3459 = vcombine.high %v2504, %v2504
    %v3461 = vunpack.c.l.s4 1983009808
    %v3462 = vunpack.c.0.s8 %v3461
    %v3463 = vlaneseq
    %v3464 = vshrl.u32 %v3463, 7
    %v3465 = vsub.s32 %v3462, %v3464
    %v3466 = vrot.slane %v2504, %v3465
    %v3468 = vunpack.c.l.s4 1983009808
    %v3469 = vunpack.c.0.s8 %v3468
    %v3470 = vlaneseq
    %v3471 = vshrl.u32 %v3470, 7
    %v3472 = vsub.s32 %v3469, %v3471
    %v3473 = vrot.slane %v3459, %v3472
    %v3474 = vcombine.high %v3466, %v3466
    %v3475 = vcombine.high %v3473, %v3473
    %v3476 = vcombine.high %v2540, %v2540
    %v3478 = vunpack.c.l.s4 1983009808
    %v3479 = vunpack.c.0.s8 %v3478
    %v3480 = vlaneseq
    %v3481 = vshrl.u32 %v3480, 7
    %v3482 = vsub.s32 %v3479, %v3481
    %v3483 = vrot.slane %v2540, %v3482
    %v3485 = vunpack.c.l.s4 1983009808
    %v3486 = vunpack.c.0.s8 %v3485
    %v3487 = vlaneseq
    %v3488 = vshrl.u32 %v3487, 7
    %v3489 = vsub.s32 %v3486, %v3488
    %v3490 = vrot.slane %v3476, %v3489
    %v3491 = vcombine.high %v3483, %v3483
    %v3492 = vcombine.high %v3490, %v3490
    %v3717 = vsel %vm1218, %v2548, -inf
    %v3718 = vrot.slane %v3717, 4
    %v3719 = vmax.f32 %v3717, %v3718
    %v3720 = vrot.slane %v3719, 2
    %v3721 = vmax.f32 %v3719, %v3720
    %v3722 = vrot.slane %v3721, 1
    %v3723 = vmax.f32 %v3721, %v3722
    %v3724 = vsel %vm1218, %v2556, -inf
    %v3725 = vrot.slane %v3724, 4
    %v3726 = vmax.f32 %v3724, %v3725
    %v3727 = vrot.slane %v3726, 2
    %v3728 = vmax.f32 %v3726, %v3727
    %v3729 = vrot.slane %v3728, 1
    %v3730 = vmax.f32 %v3728, %v3729
    %v3731 = vsel %vm1218, %v2555, -inf
    %v3732 = vrot.slane %v3731, 4
    %v3733 = vmax.f32 %v3731, %v3732
    %v3734 = vrot.slane %v3733, 2
    %v3735 = vmax.f32 %v3733, %v3734
    %v3736 = vrot.slane %v3735, 1
    %v3737 = vmax.f32 %v3735, %v3736
    %v3738 = vsel %vm1218, %v2557, -inf
    %v3739 = vrot.slane %v3738, 4
    %v3740 = vmax.f32 %v3738, %v3739
    %v3741 = vrot.slane %v3740, 2
    %v3742 = vmax.f32 %v3740, %v3741
    %v3743 = vrot.slane %v3742, 1
    %v3744 = vmax.f32 %v3742, %v3743
    %v3745 = vsel %vm1218, %v2565, -inf
    %v3746 = vrot.slane %v3745, 4
    %v3747 = vmax.f32 %v3745, %v3746
    %v3748 = vrot.slane %v3747, 2
    %v3749 = vmax.f32 %v3747, %v3748
    %v3750 = vrot.slane %v3749, 1
    %v3751 = vmax.f32 %v3749, %v3750
    %v3752 = vsel %vm1218, %v2573, -inf
    %v3753 = vrot.slane %v3752, 4
    %v3754 = vmax.f32 %v3752, %v3753
    %v3755 = vrot.slane %v3754, 2
    %v3756 = vmax.f32 %v3754, %v3755
    %v3757 = vrot.slane %v3756, 1
    %v3758 = vmax.f32 %v3756, %v3757
    %v3759 = vsel %vm1218, %v2572, -inf
    %v3760 = vrot.slane %v3759, 4
    %v3761 = vmax.f32 %v3759, %v3760
    %v3762 = vrot.slane %v3761, 2
    %v3763 = vmax.f32 %v3761, %v3762
    %v3764 = vrot.slane %v3763, 1
    %v3765 = vmax.f32 %v3763, %v3764
    %v3766 = vsel %vm1218, %v2574, -inf
    %v3767 = vrot.slane %v3766, 4
    %v3768 = vmax.f32 %v3766, %v3767
    %v3769 = vrot.slane %v3768, 2
    %v3770 = vmax.f32 %v3768, %v3769
    %v3771 = vrot.slane %v3770, 1
    %v3772 = vmax.f32 %v3770, %v3771
    %v3773 = vsel %vm1218, %v2582, -inf
    %v3774 = vrot.slane %v3773, 4
    %v3775 = vmax.f32 %v3773, %v3774
    %v3776 = vrot.slane %v3775, 2
    %v3777 = vmax.f32 %v3775, %v3776
    %v3778 = vrot.slane %v3777, 1
    %v3779 = vmax.f32 %v3777, %v3778
    %v3780 = vsel %vm1218, %v2590, -inf
    %v3781 = vrot.slane %v3780, 4
    %v3782 = vmax.f32 %v3780, %v3781
    %v3783 = vrot.slane %v3782, 2
    %v3784 = vmax.f32 %v3782, %v3783
    %v3785 = vrot.slane %v3784, 1
    %v3786 = vmax.f32 %v3784, %v3785
    %v3787 = vsel %vm1218, %v2589, -inf
    %v3788 = vrot.slane %v3787, 4
    %v3789 = vmax.f32 %v3787, %v3788
    %v3790 = vrot.slane %v3789, 2
    %v3791 = vmax.f32 %v3789, %v3790
    %v3792 = vrot.slane %v3791, 1
    %v3793 = vmax.f32 %v3791, %v3792
    %v3794 = vsel %vm1218, %v2591, -inf
    %v3795 = vrot.slane %v3794, 4
    %v3796 = vmax.f32 %v3794, %v3795
    %v3797 = vrot.slane %v3796, 2
    %v3798 = vmax.f32 %v3796, %v3797
    %v3799 = vrot.slane %v3798, 1
    %v3800 = vmax.f32 %v3798, %v3799
    %v3801 = vsel %vm1218, %v2599, -inf
    %v3802 = vrot.slane %v3801, 4
    %v3803 = vmax.f32 %v3801, %v3802
    %v3804 = vrot.slane %v3803, 2
    %v3805 = vmax.f32 %v3803, %v3804
    %v3806 = vrot.slane %v3805, 1
    %v3807 = vmax.f32 %v3805, %v3806
    %v3808 = vsel %vm1218, %v2607, -inf
    %v3809 = vrot.slane %v3808, 4
    %v3810 = vmax.f32 %v3808, %v3809
    %v3811 = vrot.slane %v3810, 2
    %v3812 = vmax.f32 %v3810, %v3811
    %v3813 = vrot.slane %v3812, 1
    %v3814 = vmax.f32 %v3812, %v3813
    %v3815 = vsel %vm1218, %v2606, -inf
    %v3816 = vrot.slane %v3815, 4
    %v3817 = vmax.f32 %v3815, %v3816
    %v3818 = vrot.slane %v3817, 2
    %v3819 = vmax.f32 %v3817, %v3818
    %v3820 = vrot.slane %v3819, 1
    %v3821 = vmax.f32 %v3819, %v3820
    %v3822 = vsel %vm1218, %v2608, -inf
    %v3823 = vrot.slane %v3822, 4
    %v3824 = vmax.f32 %v3822, %v3823
    %v3825 = vrot.slane %v3824, 2
    %v3826 = vmax.f32 %v3824, %v3825
    %v3827 = vrot.slane %v3826, 1
    %v3828 = vmax.f32 %v3826, %v3827
    %v3829 = vsel %vm1218, %v2616, -inf
    %v3830 = vrot.slane %v3829, 4
    %v3831 = vmax.f32 %v3829, %v3830
    %v3832 = vrot.slane %v3831, 2
    %v3833 = vmax.f32 %v3831, %v3832
    %v3834 = vrot.slane %v3833, 1
    %v3835 = vmax.f32 %v3833, %v3834
    %v3836 = vsel %vm1218, %v2624, -inf
    %v3837 = vrot.slane %v3836, 4
    %v3838 = vmax.f32 %v3836, %v3837
    %v3839 = vrot.slane %v3838, 2
    %v3840 = vmax.f32 %v3838, %v3839
    %v3841 = vrot.slane %v3840, 1
    %v3842 = vmax.f32 %v3840, %v3841
    %v3843 = vsel %vm1218, %v2623, -inf
    %v3844 = vrot.slane %v3843, 4
    %v3845 = vmax.f32 %v3843, %v3844
    %v3846 = vrot.slane %v3845, 2
    %v3847 = vmax.f32 %v3845, %v3846
    %v3848 = vrot.slane %v3847, 1
    %v3849 = vmax.f32 %v3847, %v3848
    %v3850 = vsel %vm1218, %v2625, -inf
    %v3851 = vrot.slane %v3850, 4
    %v3852 = vmax.f32 %v3850, %v3851
    %v3853 = vrot.slane %v3852, 2
    %v3854 = vmax.f32 %v3852, %v3853
    %v3855 = vrot.slane %v3854, 1
    %v3856 = vmax.f32 %v3854, %v3855
    %v3857 = vsel %vm1218, %v2633, -inf
    %v3858 = vrot.slane %v3857, 4
    %v3859 = vmax.f32 %v3857, %v3858
    %v3860 = vrot.slane %v3859, 2
    %v3861 = vmax.f32 %v3859, %v3860
    %v3862 = vrot.slane %v3861, 1
    %v3863 = vmax.f32 %v3861, %v3862
    %v3864 = vsel %vm1218, %v2641, -inf
    %v3865 = vrot.slane %v3864, 4
    %v3866 = vmax.f32 %v3864, %v3865
    %v3867 = vrot.slane %v3866, 2
    %v3868 = vmax.f32 %v3866, %v3867
    %v3869 = vrot.slane %v3868, 1
    %v3870 = vmax.f32 %v3868, %v3869
    %v3871 = vsel %vm1218, %v2640, -inf
    %v3872 = vrot.slane %v3871, 4
    %v3873 = vmax.f32 %v3871, %v3872
    %v3874 = vrot.slane %v3873, 2
    %v3875 = vmax.f32 %v3873, %v3874
    %v3876 = vrot.slane %v3875, 1
    %v3877 = vmax.f32 %v3875, %v3876
    %v3878 = vsel %vm1218, %v2642, -inf
    %v3879 = vrot.slane %v3878, 4
    %v3880 = vmax.f32 %v3878, %v3879
    %v3881 = vrot.slane %v3880, 2
    %v3882 = vmax.f32 %v3880, %v3881
    %v3883 = vrot.slane %v3882, 1
    %v3884 = vmax.f32 %v3882, %v3883
    %v3885 = vsel %vm1218, %v2650, -inf
    %v3886 = vrot.slane %v3885, 4
    %v3887 = vmax.f32 %v3885, %v3886
    %v3888 = vrot.slane %v3887, 2
    %v3889 = vmax.f32 %v3887, %v3888
    %v3890 = vrot.slane %v3889, 1
    %v3891 = vmax.f32 %v3889, %v3890
    %v3892 = vsel %vm1218, %v2658, -inf
    %v3893 = vrot.slane %v3892, 4
    %v3894 = vmax.f32 %v3892, %v3893
    %v3895 = vrot.slane %v3894, 2
    %v3896 = vmax.f32 %v3894, %v3895
    %v3897 = vrot.slane %v3896, 1
    %v3898 = vmax.f32 %v3896, %v3897
    %v3899 = vsel %vm1218, %v2657, -inf
    %v3900 = vrot.slane %v3899, 4
    %v3901 = vmax.f32 %v3899, %v3900
    %v3902 = vrot.slane %v3901, 2
    %v3903 = vmax.f32 %v3901, %v3902
    %v3904 = vrot.slane %v3903, 1
    %v3905 = vmax.f32 %v3903, %v3904
    %v3906 = vsel %vm1218, %v2659, -inf
    %v3907 = vrot.slane %v3906, 4
    %v3908 = vmax.f32 %v3906, %v3907
    %v3909 = vrot.slane %v3908, 2
    %v3910 = vmax.f32 %v3908, %v3909
    %v3911 = vrot.slane %v3910, 1
    %v3912 = vmax.f32 %v3910, %v3911
    %v3913 = vsel %vm1218, %v2667, -inf
    %v3914 = vrot.slane %v3913, 4
    %v3915 = vmax.f32 %v3913, %v3914
    %v3916 = vrot.slane %v3915, 2
    %v3917 = vmax.f32 %v3915, %v3916
    %v3918 = vrot.slane %v3917, 1
    %v3919 = vmax.f32 %v3917, %v3918
    %v3920 = vsel %vm1218, %v2675, -inf
    %v3921 = vrot.slane %v3920, 4
    %v3922 = vmax.f32 %v3920, %v3921
    %v3923 = vrot.slane %v3922, 2
    %v3924 = vmax.f32 %v3922, %v3923
    %v3925 = vrot.slane %v3924, 1
    %v3926 = vmax.f32 %v3924, %v3925
    %v3927 = vsel %vm1218, %v2674, -inf
    %v3928 = vrot.slane %v3927, 4
    %v3929 = vmax.f32 %v3927, %v3928
    %v3930 = vrot.slane %v3929, 2
    %v3931 = vmax.f32 %v3929, %v3930
    %v3932 = vrot.slane %v3931, 1
    %v3933 = vmax.f32 %v3931, %v3932
    %v3934 = vsel %vm1218, %v2676, -inf
    %v3935 = vrot.slane %v3934, 4
    %v3936 = vmax.f32 %v3934, %v3935
    %v3937 = vrot.slane %v3936, 2
    %v3938 = vmax.f32 %v3936, %v3937
    %v3939 = vrot.slane %v3938, 1
    %v3940 = vmax.f32 %v3938, %v3939
    %v3941 = vsel %vm1218, %v2684, -inf
    %v3942 = vrot.slane %v3941, 4
    %v3943 = vmax.f32 %v3941, %v3942
    %v3944 = vrot.slane %v3943, 2
    %v3945 = vmax.f32 %v3943, %v3944
    %v3946 = vrot.slane %v3945, 1
    %v3947 = vmax.f32 %v3945, %v3946
    %v3948 = vsel %vm1218, %v2692, -inf
    %v3949 = vrot.slane %v3948, 4
    %v3950 = vmax.f32 %v3948, %v3949
    %v3951 = vrot.slane %v3950, 2
    %v3952 = vmax.f32 %v3950, %v3951
    %v3953 = vrot.slane %v3952, 1
    %v3954 = vmax.f32 %v3952, %v3953
    %v3955 = vsel %vm1218, %v2691, -inf
    %v3956 = vrot.slane %v3955, 4
    %v3957 = vmax.f32 %v3955, %v3956
    %v3958 = vrot.slane %v3957, 2
    %v3959 = vmax.f32 %v3957, %v3958
    %v3960 = vrot.slane %v3959, 1
    %v3961 = vmax.f32 %v3959, %v3960
    %v3962 = vsel %vm1218, %v2693, -inf
    %v3963 = vrot.slane %v3962, 4
    %v3964 = vmax.f32 %v3962, %v3963
    %v3965 = vrot.slane %v3964, 2
    %v3966 = vmax.f32 %v3964, %v3965
    %v3967 = vrot.slane %v3966, 1
    %v3968 = vmax.f32 %v3966, %v3967
    %v3969 = vsel %vm1218, %v2701, -inf
    %v3970 = vrot.slane %v3969, 4
    %v3971 = vmax.f32 %v3969, %v3970
    %v3972 = vrot.slane %v3971, 2
    %v3973 = vmax.f32 %v3971, %v3972
    %v3974 = vrot.slane %v3973, 1
    %v3975 = vmax.f32 %v3973, %v3974
    %v3976 = vsel %vm1218, %v2709, -inf
    %v3977 = vrot.slane %v3976, 4
    %v3978 = vmax.f32 %v3976, %v3977
    %v3979 = vrot.slane %v3978, 2
    %v3980 = vmax.f32 %v3978, %v3979
    %v3981 = vrot.slane %v3980, 1
    %v3982 = vmax.f32 %v3980, %v3981
    %v3983 = vsel %vm1218, %v2708, -inf
    %v3984 = vrot.slane %v3983, 4
    %v3985 = vmax.f32 %v3983, %v3984
    %v3986 = vrot.slane %v3985, 2
    %v3987 = vmax.f32 %v3985, %v3986
    %v3988 = vrot.slane %v3987, 1
    %v3989 = vmax.f32 %v3987, %v3988
    %v3990 = vsel %vm1218, %v2710, -inf
    %v3991 = vrot.slane %v3990, 4
    %v3992 = vmax.f32 %v3990, %v3991
    %v3993 = vrot.slane %v3992, 2
    %v3994 = vmax.f32 %v3992, %v3993
    %v3995 = vrot.slane %v3994, 1
    %v3996 = vmax.f32 %v3994, %v3995
    %v3997 = vsel %vm1218, %v2718, -inf
    %v3998 = vrot.slane %v3997, 4
    %v3999 = vmax.f32 %v3997, %v3998
    %v4000 = vrot.slane %v3999, 2
    %v4001 = vmax.f32 %v3999, %v4000
    %v4002 = vrot.slane %v4001, 1
    %v4003 = vmax.f32 %v4001, %v4002
    %v4004 = vsel %vm1218, %v2726, -inf
    %v4005 = vrot.slane %v4004, 4
    %v4006 = vmax.f32 %v4004, %v4005
    %v4007 = vrot.slane %v4006, 2
    %v4008 = vmax.f32 %v4006, %v4007
    %v4009 = vrot.slane %v4008, 1
    %v4010 = vmax.f32 %v4008, %v4009
    %v4011 = vsel %vm1218, %v2725, -inf
    %v4012 = vrot.slane %v4011, 4
    %v4013 = vmax.f32 %v4011, %v4012
    %v4014 = vrot.slane %v4013, 2
    %v4015 = vmax.f32 %v4013, %v4014
    %v4016 = vrot.slane %v4015, 1
    %v4017 = vmax.f32 %v4015, %v4016
    %v4018 = vsel %vm1218, %v2727, -inf
    %v4019 = vrot.slane %v4018, 4
    %v4020 = vmax.f32 %v4018, %v4019
    %v4021 = vrot.slane %v4020, 2
    %v4022 = vmax.f32 %v4020, %v4021
    %v4023 = vrot.slane %v4022, 1
    %v4024 = vmax.f32 %v4022, %v4023
    %v4025 = vsel %vm1218, %v2735, -inf
    %v4026 = vrot.slane %v4025, 4
    %v4027 = vmax.f32 %v4025, %v4026
    %v4028 = vrot.slane %v4027, 2
    %v4029 = vmax.f32 %v4027, %v4028
    %v4030 = vrot.slane %v4029, 1
    %v4031 = vmax.f32 %v4029, %v4030
    %v4032 = vsel %vm1218, %v2743, -inf
    %v4033 = vrot.slane %v4032, 4
    %v4034 = vmax.f32 %v4032, %v4033
    %v4035 = vrot.slane %v4034, 2
    %v4036 = vmax.f32 %v4034, %v4035
    %v4037 = vrot.slane %v4036, 1
    %v4038 = vmax.f32 %v4036, %v4037
    %v4039 = vsel %vm1218, %v2742, -inf
    %v4040 = vrot.slane %v4039, 4
    %v4041 = vmax.f32 %v4039, %v4040
    %v4042 = vrot.slane %v4041, 2
    %v4043 = vmax.f32 %v4041, %v4042
    %v4044 = vrot.slane %v4043, 1
    %v4045 = vmax.f32 %v4043, %v4044
    %v4046 = vsel %vm1218, %v2744, -inf
    %v4047 = vrot.slane %v4046, 4
    %v4048 = vmax.f32 %v4046, %v4047
    %v4049 = vrot.slane %v4048, 2
    %v4050 = vmax.f32 %v4048, %v4049
    %v4051 = vrot.slane %v4050, 1
    %v4052 = vmax.f32 %v4050, %v4051
    %v4053 = vsel %vm1218, %v2752, -inf
    %v4054 = vrot.slane %v4053, 4
    %v4055 = vmax.f32 %v4053, %v4054
    %v4056 = vrot.slane %v4055, 2
    %v4057 = vmax.f32 %v4055, %v4056
    %v4058 = vrot.slane %v4057, 1
    %v4059 = vmax.f32 %v4057, %v4058
    %v4060 = vsel %vm1218, %v2760, -inf
    %v4061 = vrot.slane %v4060, 4
    %v4062 = vmax.f32 %v4060, %v4061
    %v4063 = vrot.slane %v4062, 2
    %v4064 = vmax.f32 %v4062, %v4063
    %v4065 = vrot.slane %v4064, 1
    %v4066 = vmax.f32 %v4064, %v4065
    %v4067 = vsel %vm1218, %v2759, -inf
    %v4068 = vrot.slane %v4067, 4
    %v4069 = vmax.f32 %v4067, %v4068
    %v4070 = vrot.slane %v4069, 2
    %v4071 = vmax.f32 %v4069, %v4070
    %v4072 = vrot.slane %v4071, 1
    %v4073 = vmax.f32 %v4071, %v4072
    %v4074 = vsel %vm1218, %v2761, -inf
    %v4075 = vrot.slane %v4074, 4
    %v4076 = vmax.f32 %v4074, %v4075
    %v4077 = vrot.slane %v4076, 2
    %v4078 = vmax.f32 %v4076, %v4077
    %v4079 = vrot.slane %v4078, 1
    %v4080 = vmax.f32 %v4078, %v4079
    %v4081 = vsel %vm1218, %v2769, -inf
    %v4082 = vrot.slane %v4081, 4
    %v4083 = vmax.f32 %v4081, %v4082
    %v4084 = vrot.slane %v4083, 2
    %v4085 = vmax.f32 %v4083, %v4084
    %v4086 = vrot.slane %v4085, 1
    %v4087 = vmax.f32 %v4085, %v4086
    %v4088 = vsel %vm1218, %v2777, -inf
    %v4089 = vrot.slane %v4088, 4
    %v4090 = vmax.f32 %v4088, %v4089
    %v4091 = vrot.slane %v4090, 2
    %v4092 = vmax.f32 %v4090, %v4091
    %v4093 = vrot.slane %v4092, 1
    %v4094 = vmax.f32 %v4092, %v4093
    %v4095 = vsel %vm1218, %v2776, -inf
    %v4096 = vrot.slane %v4095, 4
    %v4097 = vmax.f32 %v4095, %v4096
    %v4098 = vrot.slane %v4097, 2
    %v4099 = vmax.f32 %v4097, %v4098
    %v4100 = vrot.slane %v4099, 1
    %v4101 = vmax.f32 %v4099, %v4100
    %v4102 = vsel %vm1218, %v2778, -inf
    %v4103 = vrot.slane %v4102, 4
    %v4104 = vmax.f32 %v4102, %v4103
    %v4105 = vrot.slane %v4104, 2
    %v4106 = vmax.f32 %v4104, %v4105
    %v4107 = vrot.slane %v4106, 1
    %v4108 = vmax.f32 %v4106, %v4107
    %v4109 = vsel %vm1218, %v2786, -inf
    %v4110 = vrot.slane %v4109, 4
    %v4111 = vmax.f32 %v4109, %v4110
    %v4112 = vrot.slane %v4111, 2
    %v4113 = vmax.f32 %v4111, %v4112
    %v4114 = vrot.slane %v4113, 1
    %v4115 = vmax.f32 %v4113, %v4114
    %v4116 = vsel %vm1218, %v2794, -inf
    %v4117 = vrot.slane %v4116, 4
    %v4118 = vmax.f32 %v4116, %v4117
    %v4119 = vrot.slane %v4118, 2
    %v4120 = vmax.f32 %v4118, %v4119
    %v4121 = vrot.slane %v4120, 1
    %v4122 = vmax.f32 %v4120, %v4121
    %v4123 = vsel %vm1218, %v2793, -inf
    %v4124 = vrot.slane %v4123, 4
    %v4125 = vmax.f32 %v4123, %v4124
    %v4126 = vrot.slane %v4125, 2
    %v4127 = vmax.f32 %v4125, %v4126
    %v4128 = vrot.slane %v4127, 1
    %v4129 = vmax.f32 %v4127, %v4128
    %v4130 = vsel %vm1218, %v2795, -inf
    %v4131 = vrot.slane %v4130, 4
    %v4132 = vmax.f32 %v4130, %v4131
    %v4133 = vrot.slane %v4132, 2
    %v4134 = vmax.f32 %v4132, %v4133
    %v4135 = vrot.slane %v4134, 1
    %v4136 = vmax.f32 %v4134, %v4135
    %v4137 = vsel %vm1218, %v2803, -inf
    %v4138 = vrot.slane %v4137, 4
    %v4139 = vmax.f32 %v4137, %v4138
    %v4140 = vrot.slane %v4139, 2
    %v4141 = vmax.f32 %v4139, %v4140
    %v4142 = vrot.slane %v4141, 1
    %v4143 = vmax.f32 %v4141, %v4142
    %v4144 = vsel %vm1218, %v2811, -inf
    %v4145 = vrot.slane %v4144, 4
    %v4146 = vmax.f32 %v4144, %v4145
    %v4147 = vrot.slane %v4146, 2
    %v4148 = vmax.f32 %v4146, %v4147
    %v4149 = vrot.slane %v4148, 1
    %v4150 = vmax.f32 %v4148, %v4149
    %v4151 = vsel %vm1218, %v2810, -inf
    %v4152 = vrot.slane %v4151, 4
    %v4153 = vmax.f32 %v4151, %v4152
    %v4154 = vrot.slane %v4153, 2
    %v4155 = vmax.f32 %v4153, %v4154
    %v4156 = vrot.slane %v4155, 1
    %v4157 = vmax.f32 %v4155, %v4156
    %v4158 = vsel %vm1218, %v2812, -inf
    %v4159 = vrot.slane %v4158, 4
    %v4160 = vmax.f32 %v4158, %v4159
    %v4161 = vrot.slane %v4160, 2
    %v4162 = vmax.f32 %v4160, %v4161
    %v4163 = vrot.slane %v4162, 1
    %v4164 = vmax.f32 %v4162, %v4163
    %v4165 = vsel %vm1218, %v2820, -inf
    %v4166 = vrot.slane %v4165, 4
    %v4167 = vmax.f32 %v4165, %v4166
    %v4168 = vrot.slane %v4167, 2
    %v4169 = vmax.f32 %v4167, %v4168
    %v4170 = vrot.slane %v4169, 1
    %v4171 = vmax.f32 %v4169, %v4170
    %v4172 = vsel %vm1218, %v2828, -inf
    %v4173 = vrot.slane %v4172, 4
    %v4174 = vmax.f32 %v4172, %v4173
    %v4175 = vrot.slane %v4174, 2
    %v4176 = vmax.f32 %v4174, %v4175
    %v4177 = vrot.slane %v4176, 1
    %v4178 = vmax.f32 %v4176, %v4177
    %v4179 = vsel %vm1218, %v2827, -inf
    %v4180 = vrot.slane %v4179, 4
    %v4181 = vmax.f32 %v4179, %v4180
    %v4182 = vrot.slane %v4181, 2
    %v4183 = vmax.f32 %v4181, %v4182
    %v4184 = vrot.slane %v4183, 1
    %v4185 = vmax.f32 %v4183, %v4184
    %v4186 = vsel %vm1218, %v2829, -inf
    %v4187 = vrot.slane %v4186, 4
    %v4188 = vmax.f32 %v4186, %v4187
    %v4189 = vrot.slane %v4188, 2
    %v4190 = vmax.f32 %v4188, %v4189
    %v4191 = vrot.slane %v4190, 1
    %v4192 = vmax.f32 %v4190, %v4191
    %v4193 = vsel %vm1218, %v2837, -inf
    %v4194 = vrot.slane %v4193, 4
    %v4195 = vmax.f32 %v4193, %v4194
    %v4196 = vrot.slane %v4195, 2
    %v4197 = vmax.f32 %v4195, %v4196
    %v4198 = vrot.slane %v4197, 1
    %v4199 = vmax.f32 %v4197, %v4198
    %v4200 = vsel %vm1218, %v2845, -inf
    %v4201 = vrot.slane %v4200, 4
    %v4202 = vmax.f32 %v4200, %v4201
    %v4203 = vrot.slane %v4202, 2
    %v4204 = vmax.f32 %v4202, %v4203
    %v4205 = vrot.slane %v4204, 1
    %v4206 = vmax.f32 %v4204, %v4205
    %v4207 = vsel %vm1218, %v2844, -inf
    %v4208 = vrot.slane %v4207, 4
    %v4209 = vmax.f32 %v4207, %v4208
    %v4210 = vrot.slane %v4209, 2
    %v4211 = vmax.f32 %v4209, %v4210
    %v4212 = vrot.slane %v4211, 1
    %v4213 = vmax.f32 %v4211, %v4212
    %v4214 = vsel %vm1218, %v2846, -inf
    %v4215 = vrot.slane %v4214, 4
    %v4216 = vmax.f32 %v4214, %v4215
    %v4217 = vrot.slane %v4216, 2
    %v4218 = vmax.f32 %v4216, %v4217
    %v4219 = vrot.slane %v4218, 1
    %v4220 = vmax.f32 %v4218, %v4219
    %v4221 = vsel %vm1218, %v2854, -inf
    %v4222 = vrot.slane %v4221, 4
    %v4223 = vmax.f32 %v4221, %v4222
    %v4224 = vrot.slane %v4223, 2
    %v4225 = vmax.f32 %v4223, %v4224
    %v4226 = vrot.slane %v4225, 1
    %v4227 = vmax.f32 %v4225, %v4226
    %v4228 = vsel %vm1218, %v2862, -inf
    %v4229 = vrot.slane %v4228, 4
    %v4230 = vmax.f32 %v4228, %v4229
    %v4231 = vrot.slane %v4230, 2
    %v4232 = vmax.f32 %v4230, %v4231
    %v4233 = vrot.slane %v4232, 1
    %v4234 = vmax.f32 %v4232, %v4233
    %v4235 = vsel %vm1218, %v2861, -inf
    %v4236 = vrot.slane %v4235, 4
    %v4237 = vmax.f32 %v4235, %v4236
    %v4238 = vrot.slane %v4237, 2
    %v4239 = vmax.f32 %v4237, %v4238
    %v4240 = vrot.slane %v4239, 1
    %v4241 = vmax.f32 %v4239, %v4240
    %v4242 = vsel %vm1218, %v2863, -inf
    %v4243 = vrot.slane %v4242, 4
    %v4244 = vmax.f32 %v4242, %v4243
    %v4245 = vrot.slane %v4244, 2
    %v4246 = vmax.f32 %v4244, %v4245
    %v4247 = vrot.slane %v4246, 1
    %v4248 = vmax.f32 %v4246, %v4247
    %v4249 = vsel %vm1218, %v2871, -inf
    %v4250 = vrot.slane %v4249, 4
    %v4251 = vmax.f32 %v4249, %v4250
    %v4252 = vrot.slane %v4251, 2
    %v4253 = vmax.f32 %v4251, %v4252
    %v4254 = vrot.slane %v4253, 1
    %v4255 = vmax.f32 %v4253, %v4254
    %v4256 = vsel %vm1218, %v2879, -inf
    %v4257 = vrot.slane %v4256, 4
    %v4258 = vmax.f32 %v4256, %v4257
    %v4259 = vrot.slane %v4258, 2
    %v4260 = vmax.f32 %v4258, %v4259
    %v4261 = vrot.slane %v4260, 1
    %v4262 = vmax.f32 %v4260, %v4261
    %v4263 = vsel %vm1218, %v2878, -inf
    %v4264 = vrot.slane %v4263, 4
    %v4265 = vmax.f32 %v4263, %v4264
    %v4266 = vrot.slane %v4265, 2
    %v4267 = vmax.f32 %v4265, %v4266
    %v4268 = vrot.slane %v4267, 1
    %v4269 = vmax.f32 %v4267, %v4268
    %v4270 = vsel %vm1218, %v2880, -inf
    %v4271 = vrot.slane %v4270, 4
    %v4272 = vmax.f32 %v4270, %v4271
    %v4273 = vrot.slane %v4272, 2
    %v4274 = vmax.f32 %v4272, %v4273
    %v4275 = vrot.slane %v4274, 1
    %v4276 = vmax.f32 %v4274, %v4275
    %v4277 = vsel %vm1218, %v2888, -inf
    %v4278 = vrot.slane %v4277, 4
    %v4279 = vmax.f32 %v4277, %v4278
    %v4280 = vrot.slane %v4279, 2
    %v4281 = vmax.f32 %v4279, %v4280
    %v4282 = vrot.slane %v4281, 1
    %v4283 = vmax.f32 %v4281, %v4282
    %v4284 = vsel %vm1218, %v2896, -inf
    %v4285 = vrot.slane %v4284, 4
    %v4286 = vmax.f32 %v4284, %v4285
    %v4287 = vrot.slane %v4286, 2
    %v4288 = vmax.f32 %v4286, %v4287
    %v4289 = vrot.slane %v4288, 1
    %v4290 = vmax.f32 %v4288, %v4289
    %v4291 = vsel %vm1218, %v2895, -inf
    %v4292 = vrot.slane %v4291, 4
    %v4293 = vmax.f32 %v4291, %v4292
    %v4294 = vrot.slane %v4293, 2
    %v4295 = vmax.f32 %v4293, %v4294
    %v4296 = vrot.slane %v4295, 1
    %v4297 = vmax.f32 %v4295, %v4296
    %v4298 = vsel %vm1218, %v2897, -inf
    %v4299 = vrot.slane %v4298, 4
    %v4300 = vmax.f32 %v4298, %v4299
    %v4301 = vrot.slane %v4300, 2
    %v4302 = vmax.f32 %v4300, %v4301
    %v4303 = vrot.slane %v4302, 1
    %v4304 = vmax.f32 %v4302, %v4303
    %v4305 = vsel %vm1218, %v2905, -inf
    %v4306 = vrot.slane %v4305, 4
    %v4307 = vmax.f32 %v4305, %v4306
    %v4308 = vrot.slane %v4307, 2
    %v4309 = vmax.f32 %v4307, %v4308
    %v4310 = vrot.slane %v4309, 1
    %v4311 = vmax.f32 %v4309, %v4310
    %v4312 = vsel %vm1218, %v2913, -inf
    %v4313 = vrot.slane %v4312, 4
    %v4314 = vmax.f32 %v4312, %v4313
    %v4315 = vrot.slane %v4314, 2
    %v4316 = vmax.f32 %v4314, %v4315
    %v4317 = vrot.slane %v4316, 1
    %v4318 = vmax.f32 %v4316, %v4317
    %v4319 = vsel %vm1218, %v2912, -inf
    %v4320 = vrot.slane %v4319, 4
    %v4321 = vmax.f32 %v4319, %v4320
    %v4322 = vrot.slane %v4321, 2
    %v4323 = vmax.f32 %v4321, %v4322
    %v4324 = vrot.slane %v4323, 1
    %v4325 = vmax.f32 %v4323, %v4324
    %v4326 = vsel %vm1218, %v2914, -inf
    %v4327 = vrot.slane %v4326, 4
    %v4328 = vmax.f32 %v4326, %v4327
    %v4329 = vrot.slane %v4328, 2
    %v4330 = vmax.f32 %v4328, %v4329
    %v4331 = vrot.slane %v4330, 1
    %v4332 = vmax.f32 %v4330, %v4331
    %v4333 = vsel %vm1218, %v2922, -inf
    %v4334 = vrot.slane %v4333, 4
    %v4335 = vmax.f32 %v4333, %v4334
    %v4336 = vrot.slane %v4335, 2
    %v4337 = vmax.f32 %v4335, %v4336
    %v4338 = vrot.slane %v4337, 1
    %v4339 = vmax.f32 %v4337, %v4338
    %v4340 = vsel %vm1218, %v2930, -inf
    %v4341 = vrot.slane %v4340, 4
    %v4342 = vmax.f32 %v4340, %v4341
    %v4343 = vrot.slane %v4342, 2
    %v4344 = vmax.f32 %v4342, %v4343
    %v4345 = vrot.slane %v4344, 1
    %v4346 = vmax.f32 %v4344, %v4345
    %v4347 = vsel %vm1218, %v2929, -inf
    %v4348 = vrot.slane %v4347, 4
    %v4349 = vmax.f32 %v4347, %v4348
    %v4350 = vrot.slane %v4349, 2
    %v4351 = vmax.f32 %v4349, %v4350
    %v4352 = vrot.slane %v4351, 1
    %v4353 = vmax.f32 %v4351, %v4352
    %v4354 = vsel %vm1218, %v2931, -inf
    %v4355 = vrot.slane %v4354, 4
    %v4356 = vmax.f32 %v4354, %v4355
    %v4357 = vrot.slane %v4356, 2
    %v4358 = vmax.f32 %v4356, %v4357
    %v4359 = vrot.slane %v4358, 1
    %v4360 = vmax.f32 %v4358, %v4359
    %v4361 = vsel %vm1218, %v2939, -inf
    %v4362 = vrot.slane %v4361, 4
    %v4363 = vmax.f32 %v4361, %v4362
    %v4364 = vrot.slane %v4363, 2
    %v4365 = vmax.f32 %v4363, %v4364
    %v4366 = vrot.slane %v4365, 1
    %v4367 = vmax.f32 %v4365, %v4366
    %v4368 = vsel %vm1218, %v2947, -inf
    %v4369 = vrot.slane %v4368, 4
    %v4370 = vmax.f32 %v4368, %v4369
    %v4371 = vrot.slane %v4370, 2
    %v4372 = vmax.f32 %v4370, %v4371
    %v4373 = vrot.slane %v4372, 1
    %v4374 = vmax.f32 %v4372, %v4373
    %v4375 = vsel %vm1218, %v2946, -inf
    %v4376 = vrot.slane %v4375, 4
    %v4377 = vmax.f32 %v4375, %v4376
    %v4378 = vrot.slane %v4377, 2
    %v4379 = vmax.f32 %v4377, %v4378
    %v4380 = vrot.slane %v4379, 1
    %v4381 = vmax.f32 %v4379, %v4380
    %v4382 = vsel %vm1218, %v2948, -inf
    %v4383 = vrot.slane %v4382, 4
    %v4384 = vmax.f32 %v4382, %v4383
    %v4385 = vrot.slane %v4384, 2
    %v4386 = vmax.f32 %v4384, %v4385
    %v4387 = vrot.slane %v4386, 1
    %v4388 = vmax.f32 %v4386, %v4387
    %v4389 = vsel %vm1218, %v2956, -inf
    %v4390 = vrot.slane %v4389, 4
    %v4391 = vmax.f32 %v4389, %v4390
    %v4392 = vrot.slane %v4391, 2
    %v4393 = vmax.f32 %v4391, %v4392
    %v4394 = vrot.slane %v4393, 1
    %v4395 = vmax.f32 %v4393, %v4394
    %v4396 = vsel %vm1218, %v2964, -inf
    %v4397 = vrot.slane %v4396, 4
    %v4398 = vmax.f32 %v4396, %v4397
    %v4399 = vrot.slane %v4398, 2
    %v4400 = vmax.f32 %v4398, %v4399
    %v4401 = vrot.slane %v4400, 1
    %v4402 = vmax.f32 %v4400, %v4401
    %v4403 = vsel %vm1218, %v2963, -inf
    %v4404 = vrot.slane %v4403, 4
    %v4405 = vmax.f32 %v4403, %v4404
    %v4406 = vrot.slane %v4405, 2
    %v4407 = vmax.f32 %v4405, %v4406
    %v4408 = vrot.slane %v4407, 1
    %v4409 = vmax.f32 %v4407, %v4408
    %v4410 = vsel %vm1218, %v2965, -inf
    %v4411 = vrot.slane %v4410, 4
    %v4412 = vmax.f32 %v4410, %v4411
    %v4413 = vrot.slane %v4412, 2
    %v4414 = vmax.f32 %v4412, %v4413
    %v4415 = vrot.slane %v4414, 1
    %v4416 = vmax.f32 %v4414, %v4415
    %v4417 = vsel %vm1218, %v2973, -inf
    %v4418 = vrot.slane %v4417, 4
    %v4419 = vmax.f32 %v4417, %v4418
    %v4420 = vrot.slane %v4419, 2
    %v4421 = vmax.f32 %v4419, %v4420
    %v4422 = vrot.slane %v4421, 1
    %v4423 = vmax.f32 %v4421, %v4422
    %v4424 = vsel %vm1218, %v2981, -inf
    %v4425 = vrot.slane %v4424, 4
    %v4426 = vmax.f32 %v4424, %v4425
    %v4427 = vrot.slane %v4426, 2
    %v4428 = vmax.f32 %v4426, %v4427
    %v4429 = vrot.slane %v4428, 1
    %v4430 = vmax.f32 %v4428, %v4429
    %v4431 = vsel %vm1218, %v2980, -inf
    %v4432 = vrot.slane %v4431, 4
    %v4433 = vmax.f32 %v4431, %v4432
    %v4434 = vrot.slane %v4433, 2
    %v4435 = vmax.f32 %v4433, %v4434
    %v4436 = vrot.slane %v4435, 1
    %v4437 = vmax.f32 %v4435, %v4436
    %v4438 = vsel %vm1218, %v2982, -inf
    %v4439 = vrot.slane %v4438, 4
    %v4440 = vmax.f32 %v4438, %v4439
    %v4441 = vrot.slane %v4440, 2
    %v4442 = vmax.f32 %v4440, %v4441
    %v4443 = vrot.slane %v4442, 1
    %v4444 = vmax.f32 %v4442, %v4443
    %v4445 = vsel %vm1218, %v2990, -inf
    %v4446 = vrot.slane %v4445, 4
    %v4447 = vmax.f32 %v4445, %v4446
    %v4448 = vrot.slane %v4447, 2
    %v4449 = vmax.f32 %v4447, %v4448
    %v4450 = vrot.slane %v4449, 1
    %v4451 = vmax.f32 %v4449, %v4450
    %v4452 = vsel %vm1218, %v2998, -inf
    %v4453 = vrot.slane %v4452, 4
    %v4454 = vmax.f32 %v4452, %v4453
    %v4455 = vrot.slane %v4454, 2
    %v4456 = vmax.f32 %v4454, %v4455
    %v4457 = vrot.slane %v4456, 1
    %v4458 = vmax.f32 %v4456, %v4457
    %v4459 = vsel %vm1218, %v2997, -inf
    %v4460 = vrot.slane %v4459, 4
    %v4461 = vmax.f32 %v4459, %v4460
    %v4462 = vrot.slane %v4461, 2
    %v4463 = vmax.f32 %v4461, %v4462
    %v4464 = vrot.slane %v4463, 1
    %v4465 = vmax.f32 %v4463, %v4464
    %v4466 = vsel %vm1218, %v2999, -inf
    %v4467 = vrot.slane %v4466, 4
    %v4468 = vmax.f32 %v4466, %v4467
    %v4469 = vrot.slane %v4468, 2
    %v4470 = vmax.f32 %v4468, %v4469
    %v4471 = vrot.slane %v4470, 1
    %v4472 = vmax.f32 %v4470, %v4471
    %v4473 = vsel %vm1218, %v3007, -inf
    %v4474 = vrot.slane %v4473, 4
    %v4475 = vmax.f32 %v4473, %v4474
    %v4476 = vrot.slane %v4475, 2
    %v4477 = vmax.f32 %v4475, %v4476
    %v4478 = vrot.slane %v4477, 1
    %v4479 = vmax.f32 %v4477, %v4478
    %v4480 = vsel %vm1218, %v3015, -inf
    %v4481 = vrot.slane %v4480, 4
    %v4482 = vmax.f32 %v4480, %v4481
    %v4483 = vrot.slane %v4482, 2
    %v4484 = vmax.f32 %v4482, %v4483
    %v4485 = vrot.slane %v4484, 1
    %v4486 = vmax.f32 %v4484, %v4485
    %v4487 = vsel %vm1218, %v3014, -inf
    %v4488 = vrot.slane %v4487, 4
    %v4489 = vmax.f32 %v4487, %v4488
    %v4490 = vrot.slane %v4489, 2
    %v4491 = vmax.f32 %v4489, %v4490
    %v4492 = vrot.slane %v4491, 1
    %v4493 = vmax.f32 %v4491, %v4492
    %v4494 = vsel %vm1218, %v3016, -inf
    %v4495 = vrot.slane %v4494, 4
    %v4496 = vmax.f32 %v4494, %v4495
    %v4497 = vrot.slane %v4496, 2
    %v4498 = vmax.f32 %v4496, %v4497
    %v4499 = vrot.slane %v4498, 1
    %v4500 = vmax.f32 %v4498, %v4499
    %v4501 = vsel %vm1218, %v3024, -inf
    %v4502 = vrot.slane %v4501, 4
    %v4503 = vmax.f32 %v4501, %v4502
    %v4504 = vrot.slane %v4503, 2
    %v4505 = vmax.f32 %v4503, %v4504
    %v4506 = vrot.slane %v4505, 1
    %v4507 = vmax.f32 %v4505, %v4506
    %v4508 = vsel %vm1218, %v3032, -inf
    %v4509 = vrot.slane %v4508, 4
    %v4510 = vmax.f32 %v4508, %v4509
    %v4511 = vrot.slane %v4510, 2
    %v4512 = vmax.f32 %v4510, %v4511
    %v4513 = vrot.slane %v4512, 1
    %v4514 = vmax.f32 %v4512, %v4513
    %v4515 = vsel %vm1218, %v3031, -inf
    %v4516 = vrot.slane %v4515, 4
    %v4517 = vmax.f32 %v4515, %v4516
    %v4518 = vrot.slane %v4517, 2
    %v4519 = vmax.f32 %v4517, %v4518
    %v4520 = vrot.slane %v4519, 1
    %v4521 = vmax.f32 %v4519, %v4520
    %v4522 = vsel %vm1218, %v3033, -inf
    %v4523 = vrot.slane %v4522, 4
    %v4524 = vmax.f32 %v4522, %v4523
    %v4525 = vrot.slane %v4524, 2
    %v4526 = vmax.f32 %v4524, %v4525
    %v4527 = vrot.slane %v4526, 1
    %v4528 = vmax.f32 %v4526, %v4527
    %v4529 = vsel %vm1218, %v3041, -inf
    %v4530 = vrot.slane %v4529, 4
    %v4531 = vmax.f32 %v4529, %v4530
    %v4532 = vrot.slane %v4531, 2
    %v4533 = vmax.f32 %v4531, %v4532
    %v4534 = vrot.slane %v4533, 1
    %v4535 = vmax.f32 %v4533, %v4534
    %v4536 = vsel %vm1218, %v3049, -inf
    %v4537 = vrot.slane %v4536, 4
    %v4538 = vmax.f32 %v4536, %v4537
    %v4539 = vrot.slane %v4538, 2
    %v4540 = vmax.f32 %v4538, %v4539
    %v4541 = vrot.slane %v4540, 1
    %v4542 = vmax.f32 %v4540, %v4541
    %v4543 = vsel %vm1218, %v3048, -inf
    %v4544 = vrot.slane %v4543, 4
    %v4545 = vmax.f32 %v4543, %v4544
    %v4546 = vrot.slane %v4545, 2
    %v4547 = vmax.f32 %v4545, %v4546
    %v4548 = vrot.slane %v4547, 1
    %v4549 = vmax.f32 %v4547, %v4548
    %v4550 = vsel %vm1218, %v3050, -inf
    %v4551 = vrot.slane %v4550, 4
    %v4552 = vmax.f32 %v4550, %v4551
    %v4553 = vrot.slane %v4552, 2
    %v4554 = vmax.f32 %v4552, %v4553
    %v4555 = vrot.slane %v4554, 1
    %v4556 = vmax.f32 %v4554, %v4555
    %v4557 = vsel %vm1218, %v3058, -inf
    %v4558 = vrot.slane %v4557, 4
    %v4559 = vmax.f32 %v4557, %v4558
    %v4560 = vrot.slane %v4559, 2
    %v4561 = vmax.f32 %v4559, %v4560
    %v4562 = vrot.slane %v4561, 1
    %v4563 = vmax.f32 %v4561, %v4562
    %v4564 = vsel %vm1218, %v3066, -inf
    %v4565 = vrot.slane %v4564, 4
    %v4566 = vmax.f32 %v4564, %v4565
    %v4567 = vrot.slane %v4566, 2
    %v4568 = vmax.f32 %v4566, %v4567
    %v4569 = vrot.slane %v4568, 1
    %v4570 = vmax.f32 %v4568, %v4569
    %v4571 = vsel %vm1218, %v3065, -inf
    %v4572 = vrot.slane %v4571, 4
    %v4573 = vmax.f32 %v4571, %v4572
    %v4574 = vrot.slane %v4573, 2
    %v4575 = vmax.f32 %v4573, %v4574
    %v4576 = vrot.slane %v4575, 1
    %v4577 = vmax.f32 %v4575, %v4576
    %v4578 = vsel %vm1218, %v3067, -inf
    %v4579 = vrot.slane %v4578, 4
    %v4580 = vmax.f32 %v4578, %v4579
    %v4581 = vrot.slane %v4580, 2
    %v4582 = vmax.f32 %v4580, %v4581
    %v4583 = vrot.slane %v4582, 1
    %v4584 = vmax.f32 %v4582, %v4583
    %v4585 = vsel %vm1218, %v3075, -inf
    %v4586 = vrot.slane %v4585, 4
    %v4587 = vmax.f32 %v4585, %v4586
    %v4588 = vrot.slane %v4587, 2
    %v4589 = vmax.f32 %v4587, %v4588
    %v4590 = vrot.slane %v4589, 1
    %v4591 = vmax.f32 %v4589, %v4590
    %v4592 = vsel %vm1218, %v3083, -inf
    %v4593 = vrot.slane %v4592, 4
    %v4594 = vmax.f32 %v4592, %v4593
    %v4595 = vrot.slane %v4594, 2
    %v4596 = vmax.f32 %v4594, %v4595
    %v4597 = vrot.slane %v4596, 1
    %v4598 = vmax.f32 %v4596, %v4597
    %v4599 = vsel %vm1218, %v3082, -inf
    %v4600 = vrot.slane %v4599, 4
    %v4601 = vmax.f32 %v4599, %v4600
    %v4602 = vrot.slane %v4601, 2
    %v4603 = vmax.f32 %v4601, %v4602
    %v4604 = vrot.slane %v4603, 1
    %v4605 = vmax.f32 %v4603, %v4604
    %v4606 = vsel %vm1218, %v3084, -inf
    %v4607 = vrot.slane %v4606, 4
    %v4608 = vmax.f32 %v4606, %v4607
    %v4609 = vrot.slane %v4608, 2
    %v4610 = vmax.f32 %v4608, %v4609
    %v4611 = vrot.slane %v4610, 1
    %v4612 = vmax.f32 %v4610, %v4611
    %v4613 = vsel %vm1218, %v3092, -inf
    %v4614 = vrot.slane %v4613, 4
    %v4615 = vmax.f32 %v4613, %v4614
    %v4616 = vrot.slane %v4615, 2
    %v4617 = vmax.f32 %v4615, %v4616
    %v4618 = vrot.slane %v4617, 1
    %v4619 = vmax.f32 %v4617, %v4618
    %v4620 = vsel %vm1218, %v3100, -inf
    %v4621 = vrot.slane %v4620, 4
    %v4622 = vmax.f32 %v4620, %v4621
    %v4623 = vrot.slane %v4622, 2
    %v4624 = vmax.f32 %v4622, %v4623
    %v4625 = vrot.slane %v4624, 1
    %v4626 = vmax.f32 %v4624, %v4625
    %v4627 = vsel %vm1218, %v3099, -inf
    %v4628 = vrot.slane %v4627, 4
    %v4629 = vmax.f32 %v4627, %v4628
    %v4630 = vrot.slane %v4629, 2
    %v4631 = vmax.f32 %v4629, %v4630
    %v4632 = vrot.slane %v4631, 1
    %v4633 = vmax.f32 %v4631, %v4632
    %v4634 = vsel %vm1218, %v3101, -inf
    %v4635 = vrot.slane %v4634, 4
    %v4636 = vmax.f32 %v4634, %v4635
    %v4637 = vrot.slane %v4636, 2
    %v4638 = vmax.f32 %v4636, %v4637
    %v4639 = vrot.slane %v4638, 1
    %v4640 = vmax.f32 %v4638, %v4639
    %v4641 = vsel %vm1218, %v3109, -inf
    %v4642 = vrot.slane %v4641, 4
    %v4643 = vmax.f32 %v4641, %v4642
    %v4644 = vrot.slane %v4643, 2
    %v4645 = vmax.f32 %v4643, %v4644
    %v4646 = vrot.slane %v4645, 1
    %v4647 = vmax.f32 %v4645, %v4646
    %v4648 = vsel %vm1218, %v3117, -inf
    %v4649 = vrot.slane %v4648, 4
    %v4650 = vmax.f32 %v4648, %v4649
    %v4651 = vrot.slane %v4650, 2
    %v4652 = vmax.f32 %v4650, %v4651
    %v4653 = vrot.slane %v4652, 1
    %v4654 = vmax.f32 %v4652, %v4653
    %v4655 = vsel %vm1218, %v3116, -inf
    %v4656 = vrot.slane %v4655, 4
    %v4657 = vmax.f32 %v4655, %v4656
    %v4658 = vrot.slane %v4657, 2
    %v4659 = vmax.f32 %v4657, %v4658
    %v4660 = vrot.slane %v4659, 1
    %v4661 = vmax.f32 %v4659, %v4660
    %v4662 = vsel %vm1218, %v3118, -inf
    %v4663 = vrot.slane %v4662, 4
    %v4664 = vmax.f32 %v4662, %v4663
    %v4665 = vrot.slane %v4664, 2
    %v4666 = vmax.f32 %v4664, %v4665
    %v4667 = vrot.slane %v4666, 1
    %v4668 = vmax.f32 %v4666, %v4667
    %v4669 = vsel %vm1218, %v3126, -inf
    %v4670 = vrot.slane %v4669, 4
    %v4671 = vmax.f32 %v4669, %v4670
    %v4672 = vrot.slane %v4671, 2
    %v4673 = vmax.f32 %v4671, %v4672
    %v4674 = vrot.slane %v4673, 1
    %v4675 = vmax.f32 %v4673, %v4674
    %v4676 = vsel %vm1218, %v3134, -inf
    %v4677 = vrot.slane %v4676, 4
    %v4678 = vmax.f32 %v4676, %v4677
    %v4679 = vrot.slane %v4678, 2
    %v4680 = vmax.f32 %v4678, %v4679
    %v4681 = vrot.slane %v4680, 1
    %v4682 = vmax.f32 %v4680, %v4681
    %v4683 = vsel %vm1218, %v3133, -inf
    %v4684 = vrot.slane %v4683, 4
    %v4685 = vmax.f32 %v4683, %v4684
    %v4686 = vrot.slane %v4685, 2
    %v4687 = vmax.f32 %v4685, %v4686
    %v4688 = vrot.slane %v4687, 1
    %v4689 = vmax.f32 %v4687, %v4688
    %v4690 = vsel %vm1218, %v3135, -inf
    %v4691 = vrot.slane %v4690, 4
    %v4692 = vmax.f32 %v4690, %v4691
    %v4693 = vrot.slane %v4692, 2
    %v4694 = vmax.f32 %v4692, %v4693
    %v4695 = vrot.slane %v4694, 1
    %v4696 = vmax.f32 %v4694, %v4695
    %v4697 = vsel %vm1218, %v3143, -inf
    %v4698 = vrot.slane %v4697, 4
    %v4699 = vmax.f32 %v4697, %v4698
    %v4700 = vrot.slane %v4699, 2
    %v4701 = vmax.f32 %v4699, %v4700
    %v4702 = vrot.slane %v4701, 1
    %v4703 = vmax.f32 %v4701, %v4702
    %v4704 = vsel %vm1218, %v3151, -inf
    %v4705 = vrot.slane %v4704, 4
    %v4706 = vmax.f32 %v4704, %v4705
    %v4707 = vrot.slane %v4706, 2
    %v4708 = vmax.f32 %v4706, %v4707
    %v4709 = vrot.slane %v4708, 1
    %v4710 = vmax.f32 %v4708, %v4709
    %v4711 = vsel %vm1218, %v3150, -inf
    %v4712 = vrot.slane %v4711, 4
    %v4713 = vmax.f32 %v4711, %v4712
    %v4714 = vrot.slane %v4713, 2
    %v4715 = vmax.f32 %v4713, %v4714
    %v4716 = vrot.slane %v4715, 1
    %v4717 = vmax.f32 %v4715, %v4716
    %v4718 = vsel %vm1218, %v3152, -inf
    %v4719 = vrot.slane %v4718, 4
    %v4720 = vmax.f32 %v4718, %v4719
    %v4721 = vrot.slane %v4720, 2
    %v4722 = vmax.f32 %v4720, %v4721
    %v4723 = vrot.slane %v4722, 1
    %v4724 = vmax.f32 %v4722, %v4723
    %v4725 = vsel %vm1218, %v3160, -inf
    %v4726 = vrot.slane %v4725, 4
    %v4727 = vmax.f32 %v4725, %v4726
    %v4728 = vrot.slane %v4727, 2
    %v4729 = vmax.f32 %v4727, %v4728
    %v4730 = vrot.slane %v4729, 1
    %v4731 = vmax.f32 %v4729, %v4730
    %v4732 = vsel %vm1218, %v3168, -inf
    %v4733 = vrot.slane %v4732, 4
    %v4734 = vmax.f32 %v4732, %v4733
    %v4735 = vrot.slane %v4734, 2
    %v4736 = vmax.f32 %v4734, %v4735
    %v4737 = vrot.slane %v4736, 1
    %v4738 = vmax.f32 %v4736, %v4737
    %v4739 = vsel %vm1218, %v3167, -inf
    %v4740 = vrot.slane %v4739, 4
    %v4741 = vmax.f32 %v4739, %v4740
    %v4742 = vrot.slane %v4741, 2
    %v4743 = vmax.f32 %v4741, %v4742
    %v4744 = vrot.slane %v4743, 1
    %v4745 = vmax.f32 %v4743, %v4744
    %v4746 = vsel %vm1218, %v3169, -inf
    %v4747 = vrot.slane %v4746, 4
    %v4748 = vmax.f32 %v4746, %v4747
    %v4749 = vrot.slane %v4748, 2
    %v4750 = vmax.f32 %v4748, %v4749
    %v4751 = vrot.slane %v4750, 1
    %v4752 = vmax.f32 %v4750, %v4751
    %v4753 = vsel %vm1218, %v3177, -inf
    %v4754 = vrot.slane %v4753, 4
    %v4755 = vmax.f32 %v4753, %v4754
    %v4756 = vrot.slane %v4755, 2
    %v4757 = vmax.f32 %v4755, %v4756
    %v4758 = vrot.slane %v4757, 1
    %v4759 = vmax.f32 %v4757, %v4758
    %v4760 = vsel %vm1218, %v3185, -inf
    %v4761 = vrot.slane %v4760, 4
    %v4762 = vmax.f32 %v4760, %v4761
    %v4763 = vrot.slane %v4762, 2
    %v4764 = vmax.f32 %v4762, %v4763
    %v4765 = vrot.slane %v4764, 1
    %v4766 = vmax.f32 %v4764, %v4765
    %v4767 = vsel %vm1218, %v3184, -inf
    %v4768 = vrot.slane %v4767, 4
    %v4769 = vmax.f32 %v4767, %v4768
    %v4770 = vrot.slane %v4769, 2
    %v4771 = vmax.f32 %v4769, %v4770
    %v4772 = vrot.slane %v4771, 1
    %v4773 = vmax.f32 %v4771, %v4772
    %v4774 = vsel %vm1218, %v3186, -inf
    %v4775 = vrot.slane %v4774, 4
    %v4776 = vmax.f32 %v4774, %v4775
    %v4777 = vrot.slane %v4776, 2
    %v4778 = vmax.f32 %v4776, %v4777
    %v4779 = vrot.slane %v4778, 1
    %v4780 = vmax.f32 %v4778, %v4779
    %v4781 = vsel %vm1218, %v3194, -inf
    %v4782 = vrot.slane %v4781, 4
    %v4783 = vmax.f32 %v4781, %v4782
    %v4784 = vrot.slane %v4783, 2
    %v4785 = vmax.f32 %v4783, %v4784
    %v4786 = vrot.slane %v4785, 1
    %v4787 = vmax.f32 %v4785, %v4786
    %v4788 = vsel %vm1218, %v3202, -inf
    %v4789 = vrot.slane %v4788, 4
    %v4790 = vmax.f32 %v4788, %v4789
    %v4791 = vrot.slane %v4790, 2
    %v4792 = vmax.f32 %v4790, %v4791
    %v4793 = vrot.slane %v4792, 1
    %v4794 = vmax.f32 %v4792, %v4793
    %v4795 = vsel %vm1218, %v3201, -inf
    %v4796 = vrot.slane %v4795, 4
    %v4797 = vmax.f32 %v4795, %v4796
    %v4798 = vrot.slane %v4797, 2
    %v4799 = vmax.f32 %v4797, %v4798
    %v4800 = vrot.slane %v4799, 1
    %v4801 = vmax.f32 %v4799, %v4800
    %v4802 = vsel %vm1218, %v3203, -inf
    %v4803 = vrot.slane %v4802, 4
    %v4804 = vmax.f32 %v4802, %v4803
    %v4805 = vrot.slane %v4804, 2
    %v4806 = vmax.f32 %v4804, %v4805
    %v4807 = vrot.slane %v4806, 1
    %v4808 = vmax.f32 %v4806, %v4807
    %v4809 = vsel %vm1218, %v3211, -inf
    %v4810 = vrot.slane %v4809, 4
    %v4811 = vmax.f32 %v4809, %v4810
    %v4812 = vrot.slane %v4811, 2
    %v4813 = vmax.f32 %v4811, %v4812
    %v4814 = vrot.slane %v4813, 1
    %v4815 = vmax.f32 %v4813, %v4814
    %v4816 = vsel %vm1218, %v3219, -inf
    %v4817 = vrot.slane %v4816, 4
    %v4818 = vmax.f32 %v4816, %v4817
    %v4819 = vrot.slane %v4818, 2
    %v4820 = vmax.f32 %v4818, %v4819
    %v4821 = vrot.slane %v4820, 1
    %v4822 = vmax.f32 %v4820, %v4821
    %v4823 = vsel %vm1218, %v3218, -inf
    %v4824 = vrot.slane %v4823, 4
    %v4825 = vmax.f32 %v4823, %v4824
    %v4826 = vrot.slane %v4825, 2
    %v4827 = vmax.f32 %v4825, %v4826
    %v4828 = vrot.slane %v4827, 1
    %v4829 = vmax.f32 %v4827, %v4828
    %v4830 = vsel %vm1218, %v3220, -inf
    %v4831 = vrot.slane %v4830, 4
    %v4832 = vmax.f32 %v4830, %v4831
    %v4833 = vrot.slane %v4832, 2
    %v4834 = vmax.f32 %v4832, %v4833
    %v4835 = vrot.slane %v4834, 1
    %v4836 = vmax.f32 %v4834, %v4835
    %v4837 = vsel %vm1218, %v3228, -inf
    %v4838 = vrot.slane %v4837, 4
    %v4839 = vmax.f32 %v4837, %v4838
    %v4840 = vrot.slane %v4839, 2
    %v4841 = vmax.f32 %v4839, %v4840
    %v4842 = vrot.slane %v4841, 1
    %v4843 = vmax.f32 %v4841, %v4842
    %v4844 = vsel %vm1218, %v3236, -inf
    %v4845 = vrot.slane %v4844, 4
    %v4846 = vmax.f32 %v4844, %v4845
    %v4847 = vrot.slane %v4846, 2
    %v4848 = vmax.f32 %v4846, %v4847
    %v4849 = vrot.slane %v4848, 1
    %v4850 = vmax.f32 %v4848, %v4849
    %v4851 = vsel %vm1218, %v3235, -inf
    %v4852 = vrot.slane %v4851, 4
    %v4853 = vmax.f32 %v4851, %v4852
    %v4854 = vrot.slane %v4853, 2
    %v4855 = vmax.f32 %v4853, %v4854
    %v4856 = vrot.slane %v4855, 1
    %v4857 = vmax.f32 %v4855, %v4856
    %v4858 = vsel %vm1218, %v3237, -inf
    %v4859 = vrot.slane %v4858, 4
    %v4860 = vmax.f32 %v4858, %v4859
    %v4861 = vrot.slane %v4860, 2
    %v4862 = vmax.f32 %v4860, %v4861
    %v4863 = vrot.slane %v4862, 1
    %v4864 = vmax.f32 %v4862, %v4863
    %v4865 = vsel %vm1218, %v3245, -inf
    %v4866 = vrot.slane %v4865, 4
    %v4867 = vmax.f32 %v4865, %v4866
    %v4868 = vrot.slane %v4867, 2
    %v4869 = vmax.f32 %v4867, %v4868
    %v4870 = vrot.slane %v4869, 1
    %v4871 = vmax.f32 %v4869, %v4870
    %v4872 = vsel %vm1218, %v3253, -inf
    %v4873 = vrot.slane %v4872, 4
    %v4874 = vmax.f32 %v4872, %v4873
    %v4875 = vrot.slane %v4874, 2
    %v4876 = vmax.f32 %v4874, %v4875
    %v4877 = vrot.slane %v4876, 1
    %v4878 = vmax.f32 %v4876, %v4877
    %v4879 = vsel %vm1218, %v3252, -inf
    %v4880 = vrot.slane %v4879, 4
    %v4881 = vmax.f32 %v4879, %v4880
    %v4882 = vrot.slane %v4881, 2
    %v4883 = vmax.f32 %v4881, %v4882
    %v4884 = vrot.slane %v4883, 1
    %v4885 = vmax.f32 %v4883, %v4884
    %v4886 = vsel %vm1218, %v3254, -inf
    %v4887 = vrot.slane %v4886, 4
    %v4888 = vmax.f32 %v4886, %v4887
    %v4889 = vrot.slane %v4888, 2
    %v4890 = vmax.f32 %v4888, %v4889
    %v4891 = vrot.slane %v4890, 1
    %v4892 = vmax.f32 %v4890, %v4891
    %v4893 = vsel %vm1218, %v3262, -inf
    %v4894 = vrot.slane %v4893, 4
    %v4895 = vmax.f32 %v4893, %v4894
    %v4896 = vrot.slane %v4895, 2
    %v4897 = vmax.f32 %v4895, %v4896
    %v4898 = vrot.slane %v4897, 1
    %v4899 = vmax.f32 %v4897, %v4898
    %v4900 = vsel %vm1218, %v3270, -inf
    %v4901 = vrot.slane %v4900, 4
    %v4902 = vmax.f32 %v4900, %v4901
    %v4903 = vrot.slane %v4902, 2
    %v4904 = vmax.f32 %v4902, %v4903
    %v4905 = vrot.slane %v4904, 1
    %v4906 = vmax.f32 %v4904, %v4905
    %v4907 = vsel %vm1218, %v3269, -inf
    %v4908 = vrot.slane %v4907, 4
    %v4909 = vmax.f32 %v4907, %v4908
    %v4910 = vrot.slane %v4909, 2
    %v4911 = vmax.f32 %v4909, %v4910
    %v4912 = vrot.slane %v4911, 1
    %v4913 = vmax.f32 %v4911, %v4912
    %v4914 = vsel %vm1218, %v3271, -inf
    %v4915 = vrot.slane %v4914, 4
    %v4916 = vmax.f32 %v4914, %v4915
    %v4917 = vrot.slane %v4916, 2
    %v4918 = vmax.f32 %v4916, %v4917
    %v4919 = vrot.slane %v4918, 1
    %v4920 = vmax.f32 %v4918, %v4919
    %v4921 = vsel %vm1218, %v3279, -inf
    %v4922 = vrot.slane %v4921, 4
    %v4923 = vmax.f32 %v4921, %v4922
    %v4924 = vrot.slane %v4923, 2
    %v4925 = vmax.f32 %v4923, %v4924
    %v4926 = vrot.slane %v4925, 1
    %v4927 = vmax.f32 %v4925, %v4926
    %v4928 = vsel %vm1218, %v3287, -inf
    %v4929 = vrot.slane %v4928, 4
    %v4930 = vmax.f32 %v4928, %v4929
    %v4931 = vrot.slane %v4930, 2
    %v4932 = vmax.f32 %v4930, %v4931
    %v4933 = vrot.slane %v4932, 1
    %v4934 = vmax.f32 %v4932, %v4933
    %v4935 = vsel %vm1218, %v3286, -inf
    %v4936 = vrot.slane %v4935, 4
    %v4937 = vmax.f32 %v4935, %v4936
    %v4938 = vrot.slane %v4937, 2
    %v4939 = vmax.f32 %v4937, %v4938
    %v4940 = vrot.slane %v4939, 1
    %v4941 = vmax.f32 %v4939, %v4940
    %v4942 = vsel %vm1218, %v3288, -inf
    %v4943 = vrot.slane %v4942, 4
    %v4944 = vmax.f32 %v4942, %v4943
    %v4945 = vrot.slane %v4944, 2
    %v4946 = vmax.f32 %v4944, %v4945
    %v4947 = vrot.slane %v4946, 1
    %v4948 = vmax.f32 %v4946, %v4947
    %v4949 = vsel %vm1218, %v3296, -inf
    %v4950 = vrot.slane %v4949, 4
    %v4951 = vmax.f32 %v4949, %v4950
    %v4952 = vrot.slane %v4951, 2
    %v4953 = vmax.f32 %v4951, %v4952
    %v4954 = vrot.slane %v4953, 1
    %v4955 = vmax.f32 %v4953, %v4954
    %v4956 = vsel %vm1218, %v3304, -inf
    %v4957 = vrot.slane %v4956, 4
    %v4958 = vmax.f32 %v4956, %v4957
    %v4959 = vrot.slane %v4958, 2
    %v4960 = vmax.f32 %v4958, %v4959
    %v4961 = vrot.slane %v4960, 1
    %v4962 = vmax.f32 %v4960, %v4961
    %v4963 = vsel %vm1218, %v3303, -inf
    %v4964 = vrot.slane %v4963, 4
    %v4965 = vmax.f32 %v4963, %v4964
    %v4966 = vrot.slane %v4965, 2
    %v4967 = vmax.f32 %v4965, %v4966
    %v4968 = vrot.slane %v4967, 1
    %v4969 = vmax.f32 %v4967, %v4968
    %v4970 = vsel %vm1218, %v3305, -inf
    %v4971 = vrot.slane %v4970, 4
    %v4972 = vmax.f32 %v4970, %v4971
    %v4973 = vrot.slane %v4972, 2
    %v4974 = vmax.f32 %v4972, %v4973
    %v4975 = vrot.slane %v4974, 1
    %v4976 = vmax.f32 %v4974, %v4975
    %v4977 = vsel %vm1218, %v3313, -inf
    %v4978 = vrot.slane %v4977, 4
    %v4979 = vmax.f32 %v4977, %v4978
    %v4980 = vrot.slane %v4979, 2
    %v4981 = vmax.f32 %v4979, %v4980
    %v4982 = vrot.slane %v4981, 1
    %v4983 = vmax.f32 %v4981, %v4982
    %v4984 = vsel %vm1218, %v3321, -inf
    %v4985 = vrot.slane %v4984, 4
    %v4986 = vmax.f32 %v4984, %v4985
    %v4987 = vrot.slane %v4986, 2
    %v4988 = vmax.f32 %v4986, %v4987
    %v4989 = vrot.slane %v4988, 1
    %v4990 = vmax.f32 %v4988, %v4989
    %v4991 = vsel %vm1218, %v3320, -inf
    %v4992 = vrot.slane %v4991, 4
    %v4993 = vmax.f32 %v4991, %v4992
    %v4994 = vrot.slane %v4993, 2
    %v4995 = vmax.f32 %v4993, %v4994
    %v4996 = vrot.slane %v4995, 1
    %v4997 = vmax.f32 %v4995, %v4996
    %v4998 = vsel %vm1218, %v3322, -inf
    %v4999 = vrot.slane %v4998, 4
    %v5000 = vmax.f32 %v4998, %v4999
    %v5001 = vrot.slane %v5000, 2
    %v5002 = vmax.f32 %v5000, %v5001
    %v5003 = vrot.slane %v5002, 1
    %v5004 = vmax.f32 %v5002, %v5003
    %v5005 = vsel %vm1218, %v3330, -inf
    %v5006 = vrot.slane %v5005, 4
    %v5007 = vmax.f32 %v5005, %v5006
    %v5008 = vrot.slane %v5007, 2
    %v5009 = vmax.f32 %v5007, %v5008
    %v5010 = vrot.slane %v5009, 1
    %v5011 = vmax.f32 %v5009, %v5010
    %v5012 = vsel %vm1218, %v3338, -inf
    %v5013 = vrot.slane %v5012, 4
    %v5014 = vmax.f32 %v5012, %v5013
    %v5015 = vrot.slane %v5014, 2
    %v5016 = vmax.f32 %v5014, %v5015
    %v5017 = vrot.slane %v5016, 1
    %v5018 = vmax.f32 %v5016, %v5017
    %v5019 = vsel %vm1218, %v3337, -inf
    %v5020 = vrot.slane %v5019, 4
    %v5021 = vmax.f32 %v5019, %v5020
    %v5022 = vrot.slane %v5021, 2
    %v5023 = vmax.f32 %v5021, %v5022
    %v5024 = vrot.slane %v5023, 1
    %v5025 = vmax.f32 %v5023, %v5024
    %v5026 = vsel %vm1218, %v3339, -inf
    %v5027 = vrot.slane %v5026, 4
    %v5028 = vmax.f32 %v5026, %v5027
    %v5029 = vrot.slane %v5028, 2
    %v5030 = vmax.f32 %v5028, %v5029
    %v5031 = vrot.slane %v5030, 1
    %v5032 = vmax.f32 %v5030, %v5031
    %v5033 = vsel %vm1218, %v3347, -inf
    %v5034 = vrot.slane %v5033, 4
    %v5035 = vmax.f32 %v5033, %v5034
    %v5036 = vrot.slane %v5035, 2
    %v5037 = vmax.f32 %v5035, %v5036
    %v5038 = vrot.slane %v5037, 1
    %v5039 = vmax.f32 %v5037, %v5038
    %v5040 = vsel %vm1218, %v3355, -inf
    %v5041 = vrot.slane %v5040, 4
    %v5042 = vmax.f32 %v5040, %v5041
    %v5043 = vrot.slane %v5042, 2
    %v5044 = vmax.f32 %v5042, %v5043
    %v5045 = vrot.slane %v5044, 1
    %v5046 = vmax.f32 %v5044, %v5045
    %v5047 = vsel %vm1218, %v3354, -inf
    %v5048 = vrot.slane %v5047, 4
    %v5049 = vmax.f32 %v5047, %v5048
    %v5050 = vrot.slane %v5049, 2
    %v5051 = vmax.f32 %v5049, %v5050
    %v5052 = vrot.slane %v5051, 1
    %v5053 = vmax.f32 %v5051, %v5052
    %v5054 = vsel %vm1218, %v3356, -inf
    %v5055 = vrot.slane %v5054, 4
    %v5056 = vmax.f32 %v5054, %v5055
    %v5057 = vrot.slane %v5056, 2
    %v5058 = vmax.f32 %v5056, %v5057
    %v5059 = vrot.slane %v5058, 1
    %v5060 = vmax.f32 %v5058, %v5059
    %v5061 = vsel %vm1218, %v3364, -inf
    %v5062 = vrot.slane %v5061, 4
    %v5063 = vmax.f32 %v5061, %v5062
    %v5064 = vrot.slane %v5063, 2
    %v5065 = vmax.f32 %v5063, %v5064
    %v5066 = vrot.slane %v5065, 1
    %v5067 = vmax.f32 %v5065, %v5066
    %v5068 = vsel %vm1218, %v3372, -inf
    %v5069 = vrot.slane %v5068, 4
    %v5070 = vmax.f32 %v5068, %v5069
    %v5071 = vrot.slane %v5070, 2
    %v5072 = vmax.f32 %v5070, %v5071
    %v5073 = vrot.slane %v5072, 1
    %v5074 = vmax.f32 %v5072, %v5073
    %v5075 = vsel %vm1218, %v3371, -inf
    %v5076 = vrot.slane %v5075, 4
    %v5077 = vmax.f32 %v5075, %v5076
    %v5078 = vrot.slane %v5077, 2
    %v5079 = vmax.f32 %v5077, %v5078
    %v5080 = vrot.slane %v5079, 1
    %v5081 = vmax.f32 %v5079, %v5080
    %v5082 = vsel %vm1218, %v3373, -inf
    %v5083 = vrot.slane %v5082, 4
    %v5084 = vmax.f32 %v5082, %v5083
    %v5085 = vrot.slane %v5084, 2
    %v5086 = vmax.f32 %v5084, %v5085
    %v5087 = vrot.slane %v5086, 1
    %v5088 = vmax.f32 %v5086, %v5087
    %v5089 = vsel %vm1218, %v3381, -inf
    %v5090 = vrot.slane %v5089, 4
    %v5091 = vmax.f32 %v5089, %v5090
    %v5092 = vrot.slane %v5091, 2
    %v5093 = vmax.f32 %v5091, %v5092
    %v5094 = vrot.slane %v5093, 1
    %v5095 = vmax.f32 %v5093, %v5094
    %v5096 = vsel %vm1218, %v3389, -inf
    %v5097 = vrot.slane %v5096, 4
    %v5098 = vmax.f32 %v5096, %v5097
    %v5099 = vrot.slane %v5098, 2
    %v5100 = vmax.f32 %v5098, %v5099
    %v5101 = vrot.slane %v5100, 1
    %v5102 = vmax.f32 %v5100, %v5101
    %v5103 = vsel %vm1218, %v3388, -inf
    %v5104 = vrot.slane %v5103, 4
    %v5105 = vmax.f32 %v5103, %v5104
    %v5106 = vrot.slane %v5105, 2
    %v5107 = vmax.f32 %v5105, %v5106
    %v5108 = vrot.slane %v5107, 1
    %v5109 = vmax.f32 %v5107, %v5108
    %v5110 = vsel %vm1218, %v3390, -inf
    %v5111 = vrot.slane %v5110, 4
    %v5112 = vmax.f32 %v5110, %v5111
    %v5113 = vrot.slane %v5112, 2
    %v5114 = vmax.f32 %v5112, %v5113
    %v5115 = vrot.slane %v5114, 1
    %v5116 = vmax.f32 %v5114, %v5115
    %v5117 = vsel %vm1218, %v3398, -inf
    %v5118 = vrot.slane %v5117, 4
    %v5119 = vmax.f32 %v5117, %v5118
    %v5120 = vrot.slane %v5119, 2
    %v5121 = vmax.f32 %v5119, %v5120
    %v5122 = vrot.slane %v5121, 1
    %v5123 = vmax.f32 %v5121, %v5122
    %v5124 = vsel %vm1218, %v3406, -inf
    %v5125 = vrot.slane %v5124, 4
    %v5126 = vmax.f32 %v5124, %v5125
    %v5127 = vrot.slane %v5126, 2
    %v5128 = vmax.f32 %v5126, %v5127
    %v5129 = vrot.slane %v5128, 1
    %v5130 = vmax.f32 %v5128, %v5129
    %v5131 = vsel %vm1218, %v3405, -inf
    %v5132 = vrot.slane %v5131, 4
    %v5133 = vmax.f32 %v5131, %v5132
    %v5134 = vrot.slane %v5133, 2
    %v5135 = vmax.f32 %v5133, %v5134
    %v5136 = vrot.slane %v5135, 1
    %v5137 = vmax.f32 %v5135, %v5136
    %v5138 = vsel %vm1218, %v3407, -inf
    %v5139 = vrot.slane %v5138, 4
    %v5140 = vmax.f32 %v5138, %v5139
    %v5141 = vrot.slane %v5140, 2
    %v5142 = vmax.f32 %v5140, %v5141
    %v5143 = vrot.slane %v5142, 1
    %v5144 = vmax.f32 %v5142, %v5143
    %v5145 = vsel %vm1218, %v3415, -inf
    %v5146 = vrot.slane %v5145, 4
    %v5147 = vmax.f32 %v5145, %v5146
    %v5148 = vrot.slane %v5147, 2
    %v5149 = vmax.f32 %v5147, %v5148
    %v5150 = vrot.slane %v5149, 1
    %v5151 = vmax.f32 %v5149, %v5150
    %v5152 = vsel %vm1218, %v3423, -inf
    %v5153 = vrot.slane %v5152, 4
    %v5154 = vmax.f32 %v5152, %v5153
    %v5155 = vrot.slane %v5154, 2
    %v5156 = vmax.f32 %v5154, %v5155
    %v5157 = vrot.slane %v5156, 1
    %v5158 = vmax.f32 %v5156, %v5157
    %v5159 = vsel %vm1218, %v3422, -inf
    %v5160 = vrot.slane %v5159, 4
    %v5161 = vmax.f32 %v5159, %v5160
    %v5162 = vrot.slane %v5161, 2
    %v5163 = vmax.f32 %v5161, %v5162
    %v5164 = vrot.slane %v5163, 1
    %v5165 = vmax.f32 %v5163, %v5164
    %v5166 = vsel %vm1218, %v3424, -inf
    %v5167 = vrot.slane %v5166, 4
    %v5168 = vmax.f32 %v5166, %v5167
    %v5169 = vrot.slane %v5168, 2
    %v5170 = vmax.f32 %v5168, %v5169
    %v5171 = vrot.slane %v5170, 1
    %v5172 = vmax.f32 %v5170, %v5171
    %v5173 = vsel %vm1218, %v3432, -inf
    %v5174 = vrot.slane %v5173, 4
    %v5175 = vmax.f32 %v5173, %v5174
    %v5176 = vrot.slane %v5175, 2
    %v5177 = vmax.f32 %v5175, %v5176
    %v5178 = vrot.slane %v5177, 1
    %v5179 = vmax.f32 %v5177, %v5178
    %v5180 = vsel %vm1218, %v3440, -inf
    %v5181 = vrot.slane %v5180, 4
    %v5182 = vmax.f32 %v5180, %v5181
    %v5183 = vrot.slane %v5182, 2
    %v5184 = vmax.f32 %v5182, %v5183
    %v5185 = vrot.slane %v5184, 1
    %v5186 = vmax.f32 %v5184, %v5185
    %v5187 = vsel %vm1218, %v3439, -inf
    %v5188 = vrot.slane %v5187, 4
    %v5189 = vmax.f32 %v5187, %v5188
    %v5190 = vrot.slane %v5189, 2
    %v5191 = vmax.f32 %v5189, %v5190
    %v5192 = vrot.slane %v5191, 1
    %v5193 = vmax.f32 %v5191, %v5192
    %v5194 = vsel %vm1218, %v3441, -inf
    %v5195 = vrot.slane %v5194, 4
    %v5196 = vmax.f32 %v5194, %v5195
    %v5197 = vrot.slane %v5196, 2
    %v5198 = vmax.f32 %v5196, %v5197
    %v5199 = vrot.slane %v5198, 1
    %v5200 = vmax.f32 %v5198, %v5199
    %v5201 = vsel %vm1218, %v3449, -inf
    %v5202 = vrot.slane %v5201, 4
    %v5203 = vmax.f32 %v5201, %v5202
    %v5204 = vrot.slane %v5203, 2
    %v5205 = vmax.f32 %v5203, %v5204
    %v5206 = vrot.slane %v5205, 1
    %v5207 = vmax.f32 %v5205, %v5206
    %v5208 = vsel %vm1218, %v3457, -inf
    %v5209 = vrot.slane %v5208, 4
    %v5210 = vmax.f32 %v5208, %v5209
    %v5211 = vrot.slane %v5210, 2
    %v5212 = vmax.f32 %v5210, %v5211
    %v5213 = vrot.slane %v5212, 1
    %v5214 = vmax.f32 %v5212, %v5213
    %v5215 = vsel %vm1218, %v3456, -inf
    %v5216 = vrot.slane %v5215, 4
    %v5217 = vmax.f32 %v5215, %v5216
    %v5218 = vrot.slane %v5217, 2
    %v5219 = vmax.f32 %v5217, %v5218
    %v5220 = vrot.slane %v5219, 1
    %v5221 = vmax.f32 %v5219, %v5220
    %v5222 = vsel %vm1218, %v3458, -inf
    %v5223 = vrot.slane %v5222, 4
    %v5224 = vmax.f32 %v5222, %v5223
    %v5225 = vrot.slane %v5224, 2
    %v5226 = vmax.f32 %v5224, %v5225
    %v5227 = vrot.slane %v5226, 1
    %v5228 = vmax.f32 %v5226, %v5227
    %v5229 = vsel %vm1218, %v3466, -inf
    %v5230 = vrot.slane %v5229, 4
    %v5231 = vmax.f32 %v5229, %v5230
    %v5232 = vrot.slane %v5231, 2
    %v5233 = vmax.f32 %v5231, %v5232
    %v5234 = vrot.slane %v5233, 1
    %v5235 = vmax.f32 %v5233, %v5234
    %v5236 = vsel %vm1218, %v3474, -inf
    %v5237 = vrot.slane %v5236, 4
    %v5238 = vmax.f32 %v5236, %v5237
    %v5239 = vrot.slane %v5238, 2
    %v5240 = vmax.f32 %v5238, %v5239
    %v5241 = vrot.slane %v5240, 1
    %v5242 = vmax.f32 %v5240, %v5241
    %v5243 = vsel %vm1218, %v3473, -inf
    %v5244 = vrot.slane %v5243, 4
    %v5245 = vmax.f32 %v5243, %v5244
    %v5246 = vrot.slane %v5245, 2
    %v5247 = vmax.f32 %v5245, %v5246
    %v5248 = vrot.slane %v5247, 1
    %v5249 = vmax.f32 %v5247, %v5248
    %v5250 = vsel %vm1218, %v3475, -inf
    %v5251 = vrot.slane %v5250, 4
    %v5252 = vmax.f32 %v5250, %v5251
    %v5253 = vrot.slane %v5252, 2
    %v5254 = vmax.f32 %v5252, %v5253
    %v5255 = vrot.slane %v5254, 1
    %v5256 = vmax.f32 %v5254, %v5255
    %v5257 = vsel %vm1218, %v3483, -inf
    %v5258 = vrot.slane %v5257, 4
    %v5259 = vmax.f32 %v5257, %v5258
    %v5260 = vrot.slane %v5259, 2
    %v5261 = vmax.f32 %v5259, %v5260
    %v5262 = vrot.slane %v5261, 1
    %v5263 = vmax.f32 %v5261, %v5262
    %v5264 = vsel %vm1218, %v3491, -inf
    %v5265 = vrot.slane %v5264, 4
    %v5266 = vmax.f32 %v5264, %v5265
    %v5267 = vrot.slane %v5266, 2
    %v5268 = vmax.f32 %v5266, %v5267
    %v5269 = vrot.slane %v5268, 1
    %v5270 = vmax.f32 %v5268, %v5269
    %v5271 = vsel %vm1218, %v3490, -inf
    %v5272 = vrot.slane %v5271, 4
    %v5273 = vmax.f32 %v5271, %v5272
    %v5274 = vrot.slane %v5273, 2
    %v5275 = vmax.f32 %v5273, %v5274
    %v5276 = vrot.slane %v5275, 1
    %v5277 = vmax.f32 %v5275, %v5276
    %v5278 = vsel %vm1218, %v3492, -inf
    %v5279 = vrot.slane %v5278, 4
    %v5280 = vmax.f32 %v5278, %v5279
    %v5281 = vrot.slane %v5280, 2
    %v5282 = vmax.f32 %v5280, %v5281
    %v5283 = vrot.slane %v5282, 1
    %v5284 = vmax.f32 %v5282, %v5283
    %v5285 = vmax.f32 %v3723, %v3751
    %v5286 = vmax.f32 %v3730, %v3758
    %v5287 = vmax.f32 %v3737, %v3765
    %v5288 = vmax.f32 %v3744, %v3772
    %v5289 = vmax.f32 %v3779, %v3807
    %v5290 = vmax.f32 %v3786, %v3814
    %v5291 = vmax.f32 %v3793, %v3821
    %v5292 = vmax.f32 %v3800, %v3828
    %v5293 = vmax.f32 %v3835, %v3863
    %v5294 = vmax.f32 %v3842, %v3870
    %v5295 = vmax.f32 %v3849, %v3877
    %v5296 = vmax.f32 %v3856, %v3884
    %v5297 = vmax.f32 %v3891, %v3919
    %v5298 = vmax.f32 %v3898, %v3926
    %v5299 = vmax.f32 %v3905, %v3933
    %v5300 = vmax.f32 %v3912, %v3940
    %v5301 = vmax.f32 %v3947, %v3975
    %v5302 = vmax.f32 %v3954, %v3982
    %v5303 = vmax.f32 %v3961, %v3989
    %v5304 = vmax.f32 %v3968, %v3996
    %v5305 = vmax.f32 %v4003, %v4031
    %v5306 = vmax.f32 %v4010, %v4038
    %v5307 = vmax.f32 %v4017, %v4045
    %v5308 = vmax.f32 %v4024, %v4052
    %v5309 = vmax.f32 %v4059, %v4087
    %v5310 = vmax.f32 %v4066, %v4094
    %v5311 = vmax.f32 %v4073, %v4101
    %v5312 = vmax.f32 %v4080, %v4108
    %v5313 = vmax.f32 %v4115, %v4143
    %v5314 = vmax.f32 %v4122, %v4150
    %v5315 = vmax.f32 %v4129, %v4157
    %v5316 = vmax.f32 %v4136, %v4164
    %v5317 = vmax.f32 %v4171, %v4199
    %v5318 = vmax.f32 %v4178, %v4206
    %v5319 = vmax.f32 %v4185, %v4213
    %v5320 = vmax.f32 %v4192, %v4220
    %v5321 = vmax.f32 %v4227, %v4255
    %v5322 = vmax.f32 %v4234, %v4262
    %v5323 = vmax.f32 %v4241, %v4269
    %v5324 = vmax.f32 %v4248, %v4276
    %v5325 = vmax.f32 %v4283, %v4311
    %v5326 = vmax.f32 %v4290, %v4318
    %v5327 = vmax.f32 %v4297, %v4325
    %v5328 = vmax.f32 %v4304, %v4332
    %v5329 = vmax.f32 %v4339, %v4367
    %v5330 = vmax.f32 %v4346, %v4374
    %v5331 = vmax.f32 %v4353, %v4381
    %v5332 = vmax.f32 %v4360, %v4388
    %v5333 = vmax.f32 %v4395, %v4423
    %v5334 = vmax.f32 %v4402, %v4430
    %v5335 = vmax.f32 %v4409, %v4437
    %v5336 = vmax.f32 %v4416, %v4444
    %v5337 = vmax.f32 %v4451, %v4479
    %v5338 = vmax.f32 %v4458, %v4486
    %v5339 = vmax.f32 %v4465, %v4493
    %v5340 = vmax.f32 %v4472, %v4500
    %v5341 = vmax.f32 %v4507, %v4535
    %v5342 = vmax.f32 %v4514, %v4542
    %v5343 = vmax.f32 %v4521, %v4549
    %v5344 = vmax.f32 %v4528, %v4556
    %v5345 = vmax.f32 %v4563, %v4591
    %v5346 = vmax.f32 %v4570, %v4598
    %v5347 = vmax.f32 %v4577, %v4605
    %v5348 = vmax.f32 %v4584, %v4612
    %v5349 = vmax.f32 %v4619, %v4647
    %v5350 = vmax.f32 %v4626, %v4654
    %v5351 = vmax.f32 %v4633, %v4661
    %v5352 = vmax.f32 %v4640, %v4668
    %v5353 = vmax.f32 %v4675, %v4703
    %v5354 = vmax.f32 %v4682, %v4710
    %v5355 = vmax.f32 %v4689, %v4717
    %v5356 = vmax.f32 %v4696, %v4724
    %v5357 = vmax.f32 %v4731, %v4759
    %v5358 = vmax.f32 %v4738, %v4766
    %v5359 = vmax.f32 %v4745, %v4773
    %v5360 = vmax.f32 %v4752, %v4780
    %v5361 = vmax.f32 %v4787, %v4815
    %v5362 = vmax.f32 %v4794, %v4822
    %v5363 = vmax.f32 %v4801, %v4829
    %v5364 = vmax.f32 %v4808, %v4836
    %v5365 = vmax.f32 %v4843, %v4871
    %v5366 = vmax.f32 %v4850, %v4878
    %v5367 = vmax.f32 %v4857, %v4885
    %v5368 = vmax.f32 %v4864, %v4892
    %v5369 = vmax.f32 %v4899, %v4927
    %v5370 = vmax.f32 %v4906, %v4934
    %v5371 = vmax.f32 %v4913, %v4941
    %v5372 = vmax.f32 %v4920, %v4948
    %v5373 = vmax.f32 %v4955, %v4983
    %v5374 = vmax.f32 %v4962, %v4990
    %v5375 = vmax.f32 %v4969, %v4997
    %v5376 = vmax.f32 %v4976, %v5004
    %v5377 = vmax.f32 %v5011, %v5039
    %v5378 = vmax.f32 %v5018, %v5046
    %v5379 = vmax.f32 %v5025, %v5053
    %v5380 = vmax.f32 %v5032, %v5060
    %v5381 = vmax.f32 %v5067, %v5095
    %v5382 = vmax.f32 %v5074, %v5102
    %v5383 = vmax.f32 %v5081, %v5109
    %v5384 = vmax.f32 %v5088, %v5116
    %v5385 = vmax.f32 %v5123, %v5151
    %v5386 = vmax.f32 %v5130, %v5158
    %v5387 = vmax.f32 %v5137, %v5165
    %v5388 = vmax.f32 %v5144, %v5172
    %v5389 = vmax.f32 %v5179, %v5207
    %v5390 = vmax.f32 %v5186, %v5214
    %v5391 = vmax.f32 %v5193, %v5221
    %v5392 = vmax.f32 %v5200, %v5228
    %v5393 = vmax.f32 %v5235, %v5263
    %v5394 = vmax.f32 %v5242, %v5270
    %v5395 = vmax.f32 %v5249, %v5277
    %v5396 = vmax.f32 %v5256, %v5284
    %v5397 = vlaneseq
    %vm5398 = vcmp.ge.s32.totalorder %v5397, 0
    %vm5399 = vcmp.lt.s32.totalorder %v5397, 512
    %vm5400 = vmand %vm5398, %vm5399
    %5401 = vst.msk [vmem:[#allocation2] ss:$8 sm:$0xf] %vm5400, 0.0
    %5402 = vst.msk [vmem:[#allocation2] ss:$8 sm:$0x0] %vm5400, 0.0
    %s5403 = scalar_lea.vmem [#allocation2], 64
    %5404 = vst.msk [vmem:[%s5403] ss:$8 sm:$0xf] %vm5400, 0.0
    %5405 = vst.msk [vmem:[%s5403] ss:$8 sm:$0x0] %vm5400, 0.0
    %s5406 = scalar_lea.vmem [#allocation2], 39
    %5407 = vst.msk [vmem:[%s5406] ss:$8 sm:$0xf] %vm5400, 0.0
    %5408 = vst.msk [vmem:[%s5406] ss:$8 sm:$0x0] %vm5400, 0.0
    %s5409 = scalar_lea.vmem [#allocation2], 103
    %5410 = vst.msk [vmem:[%s5409] ss:$8 sm:$0xf] %vm5400, 0.0
    %5411 = vst.msk [vmem:[%s5409] ss:$8 sm:$0x0] %vm5400, 0.0
    %vm5524 = vcmask 1042434
    %v5525 = vsel %vm5524, %v5289, %v5285
    %vm5526 = vcmask 1043459
    %v5527 = vsel %vm5526, %v5293, %v5525
    %vm5528 = vcmask 1044484
    %v5529 = vsel %vm5528, %v5297, %v5527
    %vm5530 = vcmask 1045509
    %v5531 = vsel %vm5530, %v5301, %v5529
    %vm5532 = vcmask 1046534
    %v5533 = vsel %vm5532, %v5305, %v5531
    %vm5534 = vcmask 1047559
    %v5535 = vsel %vm5534, %v5309, %v5533
    %v5536 = vsel %vm5524, %v5290, %v5286
    %v5537 = vsel %vm5526, %v5294, %v5536
    %v5538 = vsel %vm5528, %v5298, %v5537
    %v5539 = vsel %vm5530, %v5302, %v5538
    %v5540 = vsel %vm5532, %v5306, %v5539
    %v5541 = vsel %vm5534, %v5310, %v5540
    %v5542 = vsel %vm5524, %v5291, %v5287
    %v5543 = vsel %vm5526, %v5295, %v5542
    %v5544 = vsel %vm5528, %v5299, %v5543
    %v5545 = vsel %vm5530, %v5303, %v5544
    %v5546 = vsel %vm5532, %v5307, %v5545
    %v5547 = vsel %vm5534, %v5311, %v5546
    %v5548 = vsel %vm5524, %v5292, %v5288
    %v5549 = vsel %vm5526, %v5296, %v5548
    %v5550 = vsel %vm5528, %v5300, %v5549
    %v5551 = vsel %vm5530, %v5304, %v5550
    %v5552 = vsel %vm5532, %v5308, %v5551
    %v5553 = vsel %vm5534, %v5312, %v5552
    %vm5554 = vcmask 1041409
    %v5555 = vsel %vm5554, %v5317, %v5313
    %v5556 = vsel %vm5524, %v5321, %v5555
    %v5557 = vsel %vm5526, %v5325, %v5556
    %v5558 = vsel %vm5528, %v5329, %v5557
    %v5559 = vsel %vm5530, %v5333, %v5558
    %v5560 = vsel %vm5532, %v5337, %v5559
    %v5561 = vsel %vm5554, %v5318, %v5314
    %v5562 = vsel %vm5524, %v5322, %v5561
    %v5563 = vsel %vm5526, %v5326, %v5562
    %v5564 = vsel %vm5528, %v5330, %v5563
    %v5565 = vsel %vm5530, %v5334, %v5564
    %v5566 = vsel %vm5532, %v5338, %v5565
    %v5567 = vsel %vm5554, %v5319, %v5315
    %v5568 = vsel %vm5524, %v5323, %v5567
    %v5569 = vsel %vm5526, %v5327, %v5568
    %v5570 = vsel %vm5528, %v5331, %v5569
    %v5571 = vsel %vm5530, %v5335, %v5570
    %v5572 = vsel %vm5532, %v5339, %v5571
    %v5573 = vsel %vm5554, %v5320, %v5316
    %v5574 = vsel %vm5524, %v5324, %v5573
    %v5575 = vsel %vm5526, %v5328, %v5574
    %v5576 = vsel %vm5528, %v5332, %v5575
    %v5577 = vsel %vm5530, %v5336, %v5576
    %v5578 = vsel %vm5532, %v5340, %v5577
    %v5579 = vsel %vm5524, %v5345, %v5341
    %v5580 = vsel %vm5526, %v5349, %v5579
    %v5581 = vsel %vm5528, %v5353, %v5580
    %v5582 = vsel %vm5530, %v5357, %v5581
    %v5583 = vsel %vm5532, %v5361, %v5582
    %v5584 = vsel %vm5534, %v5365, %v5583
    %v5585 = vsel %vm5524, %v5346, %v5342
    %v5586 = vsel %vm5526, %v5350, %v5585
    %v5587 = vsel %vm5528, %v5354, %v5586
    %v5588 = vsel %vm5530, %v5358, %v5587
    %v5589 = vsel %vm5532, %v5362, %v5588
    %v5590 = vsel %vm5534, %v5366, %v5589
    %v5591 = vsel %vm5524, %v5347, %v5343
    %v5592 = vsel %vm5526, %v5351, %v5591
    %v5593 = vsel %vm5528, %v5355, %v5592
    %v5594 = vsel %vm5530, %v5359, %v5593
    %v5595 = vsel %vm5532, %v5363, %v5594
    %v5596 = vsel %vm5534, %v5367, %v5595
    %v5597 = vsel %vm5524, %v5348, %v5344
    %v5598 = vsel %vm5526, %v5352, %v5597
    %v5599 = vsel %vm5528, %v5356, %v5598
    %v5600 = vsel %vm5530, %v5360, %v5599
    %v5601 = vsel %vm5532, %v5364, %v5600
    %v5602 = vsel %vm5534, %v5368, %v5601
    %v5603 = vsel %vm5554, %v5373, %v5369
    %v5604 = vsel %vm5524, %v5377, %v5603
    %v5605 = vsel %vm5526, %v5381, %v5604
    %v5606 = vsel %vm5528, %v5385, %v5605
    %v5607 = vsel %vm5530, %v5389, %v5606
    %v5608 = vsel %vm5532, %v5393, %v5607
    %v5609 = vsel %vm5554, %v5374, %v5370
    %v5610 = vsel %vm5524, %v5378, %v5609
    %v5611 = vsel %vm5526, %v5382, %v5610
    %v5612 = vsel %vm5528, %v5386, %v5611
    %v5613 = vsel %vm5530, %v5390, %v5612
    %v5614 = vsel %vm5532, %v5394, %v5613
    %v5615 = vsel %vm5554, %v5375, %v5371
    %v5616 = vsel %vm5524, %v5379, %v5615
    %v5617 = vsel %vm5526, %v5383, %v5616
    %v5618 = vsel %vm5528, %v5387, %v5617
    %v5619 = vsel %vm5530, %v5391, %v5618
    %v5620 = vsel %vm5532, %v5395, %v5619
    %v5621 = vsel %vm5554, %v5376, %v5372
    %v5622 = vsel %vm5524, %v5380, %v5621
    %v5623 = vsel %vm5526, %v5384, %v5622
    %v5624 = vsel %vm5528, %v5388, %v5623
    %v5625 = vsel %vm5530, %v5392, %v5624
    %v5626 = vsel %vm5532, %v5396, %v5625
    %5643 = vst [vmem:[#allocation2] sm:$0xfe] %v5535
    %5644 = vst [vmem:[#allocation2 + $0x8] sm:$0xfe] %v5541
    %5645 = vst [vmem:[#allocation2 + $0x10] sm:$0xfe] %v5547
    %5646 = vst [vmem:[#allocation2 + $0x18] sm:$0xfe] %v5553
    %5647 = vst [vmem:[#allocation2 + $0x20] sm:$0x7f] %v5560
    %5648 = vst [vmem:[#allocation2 + $0x28] sm:$0x7f] %v5566
    %5649 = vst [vmem:[#allocation2 + $0x30] sm:$0x7f] %v5572
    %5650 = vst [vmem:[#allocation2 + $0x38] sm:$0x7f] %v5578
    %5651 = vst [vmem:[#allocation2 + $0x40] sm:$0xfe] %v5584
    %5652 = vst [vmem:[#allocation2 + $0x48] sm:$0xfe] %v5590
    %5653 = vst [vmem:[#allocation2 + $0x50] sm:$0xfe] %v5596
    %5654 = vst [vmem:[#allocation2 + $0x58] sm:$0xfe] %v5602
    %5655 = vst [vmem:[#allocation2 + $0x60] sm:$0x7f] %v5608
    %5656 = vst [vmem:[#allocation2 + $0x68] sm:$0x7f] %v5614
    %5657 = vst [vmem:[#allocation2 + $0x70] sm:$0x7f] %v5620
    %5658 = vst [vmem:[#allocation2 + $0x78] sm:$0x7f] %v5626
    %v5659 = vld [vmem:[#allocation2] sm:$0xff]
    %v5660 = vld [vmem:[#allocation2 + $0x8] sm:$0xff]
    %v5661 = vld [vmem:[#allocation2 + $0x10] sm:$0xff]
    %v5662 = vld [vmem:[#allocation2 + $0x18] sm:$0xff]
    %v5663 = vld [vmem:[#allocation2 + $0x20] sm:$0x3f]
    %v5664 = vld [vmem:[#allocation2 + $0x28] sm:$0x3f]
    %v5665 = vld [vmem:[#allocation2 + $0x30] sm:$0x3f]
    %v5666 = vld [vmem:[#allocation2 + $0x38] sm:$0x3f]
    %v5667 = vld [vmem:[#allocation2 + $0x40] sm:$0xff]
    %v5668 = vld [vmem:[#allocation2 + $0x48] sm:$0xff]
    %v5669 = vld [vmem:[#allocation2 + $0x50] sm:$0xff]
    %v5670 = vld [vmem:[#allocation2 + $0x58] sm:$0xff]
    %v5671 = vld [vmem:[#allocation2 + $0x60] sm:$0x3f]
    %v5672 = vld [vmem:[#allocation2 + $0x68] sm:$0x3f]
    %v5673 = vld [vmem:[#allocation2 + $0x70] sm:$0x3f]
    %v5674 = vld [vmem:[#allocation2 + $0x78] sm:$0x3f]
    %v5691 = vcombine.low %v5659, %v5660
    %v5692 = vcombine.high %v5659, %v5660
    %v5693 = vcombine.low %v5661, %v5662
    %v5694 = vcombine.high %v5661, %v5662
    %v5696 = vunpack.c.l.s4 1983009808
    %v5697 = vunpack.c.0.s8 %v5696
    %v5698 = vlaneseq
    %v5699 = vshrl.u32 %v5698, 7
    %v5700 = vsub.s32 %v5697, %v5699
    %v5701 = vrot.slane %v5691, %v5700
    %v5703 = vunpack.c.l.s4 1983009808
    %v5704 = vunpack.c.0.s8 %v5703
    %v5705 = vlaneseq
    %v5706 = vshrl.u32 %v5705, 7
    %v5707 = vsub.s32 %v5704, %v5706
    %v5708 = vrot.slane %v5692, %v5707
    %v5710 = vunpack.c.l.s4 1983009808
    %v5711 = vunpack.c.0.s8 %v5710
    %v5712 = vlaneseq
    %v5713 = vshrl.u32 %v5712, 7
    %v5714 = vsub.s32 %v5711, %v5713
    %v5715 = vrot.slane %v5693, %v5714
    %v5717 = vunpack.c.l.s4 1983009808
    %v5718 = vunpack.c.0.s8 %v5717
    %v5719 = vlaneseq
    %v5720 = vshrl.u32 %v5719, 7
    %v5721 = vsub.s32 %v5718, %v5720
    %v5722 = vrot.slane %v5694, %v5721
    %v5723 = vcombine.low %v5701, %v5715
    %v5724 = vcombine.high %v5701, %v5715
    %v5725 = vcombine.low %v5708, %v5722
    %v5726 = vcombine.high %v5708, %v5722
    %v5727 = vcombine.low %v5663, %v5664
    %v5728 = vcombine.high %v5663, %v5664
    %v5729 = vcombine.low %v5665, %v5666
    %v5730 = vcombine.high %v5665, %v5666
    %v5732 = vunpack.c.l.s4 1983009808
    %v5733 = vunpack.c.0.s8 %v5732
    %v5734 = vlaneseq
    %v5735 = vshrl.u32 %v5734, 7
    %v5736 = vsub.s32 %v5733, %v5735
    %v5737 = vrot.slane %v5727, %v5736
    %v5739 = vunpack.c.l.s4 1983009808
    %v5740 = vunpack.c.0.s8 %v5739
    %v5741 = vlaneseq
    %v5742 = vshrl.u32 %v5741, 7
    %v5743 = vsub.s32 %v5740, %v5742
    %v5744 = vrot.slane %v5728, %v5743
    %v5746 = vunpack.c.l.s4 1983009808
    %v5747 = vunpack.c.0.s8 %v5746
    %v5748 = vlaneseq
    %v5749 = vshrl.u32 %v5748, 7
    %v5750 = vsub.s32 %v5747, %v5749
    %v5751 = vrot.slane %v5729, %v5750
    %v5753 = vunpack.c.l.s4 1983009808
    %v5754 = vunpack.c.0.s8 %v5753
    %v5755 = vlaneseq
    %v5756 = vshrl.u32 %v5755, 7
    %v5757 = vsub.s32 %v5754, %v5756
    %v5758 = vrot.slane %v5730, %v5757
    %v5759 = vcombine.low %v5737, %v5751
    %v5760 = vcombine.high %v5737, %v5751
    %v5761 = vcombine.low %v5744, %v5758
    %v5762 = vcombine.low %v5667, %v5668
    %v5763 = vcombine.high %v5667, %v5668
    %v5764 = vcombine.low %v5669, %v5670
    %v5765 = vcombine.high %v5669, %v5670
    %v5767 = vunpack.c.l.s4 1983009808
    %v5768 = vunpack.c.0.s8 %v5767
    %v5769 = vlaneseq
    %v5770 = vshrl.u32 %v5769, 7
    %v5771 = vsub.s32 %v5768, %v5770
    %v5772 = vrot.slane %v5762, %v5771
    %v5774 = vunpack.c.l.s4 1983009808
    %v5775 = vunpack.c.0.s8 %v5774
    %v5776 = vlaneseq
    %v5777 = vshrl.u32 %v5776, 7
    %v5778 = vsub.s32 %v5775, %v5777
    %v5779 = vrot.slane %v5763, %v5778
    %v5781 = vunpack.c.l.s4 1983009808
    %v5782 = vunpack.c.0.s8 %v5781
    %v5783 = vlaneseq
    %v5784 = vshrl.u32 %v5783, 7
    %v5785 = vsub.s32 %v5782, %v5784
    %v5786 = vrot.slane %v5764, %v5785
    %v5788 = vunpack.c.l.s4 1983009808
    %v5789 = vunpack.c.0.s8 %v5788
    %v5790 = vlaneseq
    %v5791 = vshrl.u32 %v5790, 7
    %v5792 = vsub.s32 %v5789, %v5791
    %v5793 = vrot.slane %v5765, %v5792
    %v5794 = vcombine.low %v5772, %v5786
    %v5795 = vcombine.high %v5772, %v5786
    %v5796 = vcombine.low %v5779, %v5793
    %v5797 = vcombine.high %v5779, %v5793
    %v5798 = vcombine.low %v5671, %v5672
    %v5799 = vcombine.high %v5671, %v5672
    %v5800 = vcombine.low %v5673, %v5674
    %v5801 = vcombine.high %v5673, %v5674
    %v5803 = vunpack.c.l.s4 1983009808
    %v5804 = vunpack.c.0.s8 %v5803
    %v5805 = vlaneseq
    %v5806 = vshrl.u32 %v5805, 7
    %v5807 = vsub.s32 %v5804, %v5806
    %v5808 = vrot.slane %v5798, %v5807
    %v5810 = vunpack.c.l.s4 1983009808
    %v5811 = vunpack.c.0.s8 %v5810
    %v5812 = vlaneseq
    %v5813 = vshrl.u32 %v5812, 7
    %v5814 = vsub.s32 %v5811, %v5813
    %v5815 = vrot.slane %v5799, %v5814
    %v5817 = vunpack.c.l.s4 1983009808
    %v5818 = vunpack.c.0.s8 %v5817
    %v5819 = vlaneseq
    %v5820 = vshrl.u32 %v5819, 7
    %v5821 = vsub.s32 %v5818, %v5820
    %v5822 = vrot.slane %v5800, %v5821
    %v5824 = vunpack.c.l.s4 1983009808
    %v5825 = vunpack.c.0.s8 %v5824
    %v5826 = vlaneseq
    %v5827 = vshrl.u32 %v5826, 7
    %v5828 = vsub.s32 %v5825, %v5827
    %v5829 = vrot.slane %v5801, %v5828
    %v5830 = vcombine.low %v5808, %v5822
    %v5831 = vcombine.high %v5808, %v5822
    %v5832 = vcombine.low %v5815, %v5829
    %v5833 = vld [vmem:[#allocation8] sm:$0xff]
    %v5834 = vld [vmem:[#allocation8 + $0x8] sm:$0xff]
    %v5835 = vld [vmem:[#allocation8 + $0x10] sm:$0xff]
    %v5836 = vld [vmem:[#allocation8 + $0x18] sm:$0xff]
    %v5837 = vld [vmem:[#allocation8 + $0x20] sm:$0xff]
    %v5838 = vld [vmem:[#allocation8 + $0x28] sm:$0xff]
    %v5839 = vld [vmem:[#allocation8 + $0x30] sm:$0xff]
    %v5840 = vld [vmem:[#allocation8 + $0x38] sm:$0xff]
    %v5841 = vld [vmem:[#allocation8 + $0x40] sm:$0xff]
    %v5842 = vld [vmem:[#allocation8 + $0x48] sm:$0xff]
    %v5843 = vld [vmem:[#allocation8 + $0x50] sm:$0xff]
    %v5844 = vld [vmem:[#allocation8 + $0x58] sm:$0xff]
    %v5845 = vld [vmem:[#allocation8 + $0x60] sm:$0xff]
    %v5846 = vld [vmem:[#allocation8 + $0x68] sm:$0xff]
    %v5847 = vld [vmem:[#allocation8 + $0x70] sm:$0xff]
    %v5848 = vld [vmem:[#allocation8 + $0x78] sm:$0xff]
    %v5849 = vld [vmem:[#allocation8 + $0x80] sm:$0xff]
    %v5850 = vld [vmem:[#allocation8 + $0x88] sm:$0xff]
    %v5851 = vld [vmem:[#allocation8 + $0x90] sm:$0xff]
    %v5852 = vld [vmem:[#allocation8 + $0x98] sm:$0xff]
    %v5853 = vld [vmem:[#allocation8 + $0xa0] sm:$0xff]
    %v5854 = vld [vmem:[#allocation8 + $0xa8] sm:$0xff]
    %v5855 = vld [vmem:[#allocation8 + $0xb0] sm:$0xff]
    %v5856 = vld [vmem:[#allocation8 + $0xb8] sm:$0xff]
    %v5857 = vld [vmem:[#allocation8 + $0xc0] sm:$0xff]
    %v5858 = vld [vmem:[#allocation8 + $0xc8] sm:$0xff]
    %v5859 = vld [vmem:[#allocation8 + $0xd0] sm:$0xff]
    %v5860 = vld [vmem:[#allocation8 + $0xd8] sm:$0xff]
    %v5861 = vld [vmem:[#allocation8 + $0xe0] sm:$0xff]
    %v5862 = vld [vmem:[#allocation8 + $0xe8] sm:$0xff]
    %v5863 = vld [vmem:[#allocation8 + $0xf0] sm:$0xff]
    %v5864 = vld [vmem:[#allocation8 + $0xf8] sm:$0xff]
    %v5865 = vld [vmem:[#allocation8 + $0x100] sm:$0xff]
    %v5866 = vld [vmem:[#allocation8 + $0x108] sm:$0xff]
    %v5867 = vld [vmem:[#allocation8 + $0x110] sm:$0xff]
    %v5868 = vld [vmem:[#allocation8 + $0x118] sm:$0xff]
    %v5869 = vld [vmem:[#allocation8 + $0x120] sm:$0xff]
    %v5870 = vld [vmem:[#allocation8 + $0x128] sm:$0xff]
    %v5871 = vld [vmem:[#allocation8 + $0x130] sm:$0xff]
    %v5872 = vld [vmem:[#allocation8 + $0x138] sm:$0xff]
    %v5873 = vld [vmem:[#allocation8 + $0x140] sm:$0xff]
    %v5874 = vld [vmem:[#allocation8 + $0x148] sm:$0xff]
    %v5875 = vld [vmem:[#allocation8 + $0x150] sm:$0xff]
    %v5876 = vld [vmem:[#allocation8 + $0x158] sm:$0xff]
    %v5877 = vld [vmem:[#allocation8 + $0x160] sm:$0xff]
    %v5878 = vld [vmem:[#allocation8 + $0x168] sm:$0xff]
    %v5879 = vld [vmem:[#allocation8 + $0x170] sm:$0xff]
    %v5880 = vld [vmem:[#allocation8 + $0x178] sm:$0xff]
    %v5881 = vld [vmem:[#allocation8 + $0x180] sm:$0xff]
    %v5882 = vld [vmem:[#allocation8 + $0x188] sm:$0xff]
    %v5883 = vld [vmem:[#allocation8 + $0x190] sm:$0xff]
    %v5884 = vld [vmem:[#allocation8 + $0x198] sm:$0xff]
    %v5885 = vld [vmem:[#allocation8 + $0x1a0] sm:$0xff]
    %v5886 = vld [vmem:[#allocation8 + $0x1a8] sm:$0xff]
    %v5887 = vld [vmem:[#allocation8 + $0x1b0] sm:$0xff]
    %v5888 = vld [vmem:[#allocation8 + $0x1b8] sm:$0xff]
    %v5889 = vld [vmem:[#allocation8 + $0x1c0] sm:$0xff]
    %v5890 = vld [vmem:[#allocation8 + $0x1c8] sm:$0xff]
    %v5891 = vld [vmem:[#allocation8 + $0x1d0] sm:$0xff]
    %v5892 = vld [vmem:[#allocation8 + $0x1d8] sm:$0xff]
    %v5893 = vld [vmem:[#allocation8 + $0x1e0] sm:$0xff]
    %v5894 = vld [vmem:[#allocation8 + $0x1e8] sm:$0xff]
    %v5895 = vld [vmem:[#allocation8 + $0x1f0] sm:$0xff]
    %v5896 = vld [vmem:[#allocation8 + $0x1f8] sm:$0xff]
    %v5897 = vld [vmem:[#allocation8 + $0x200] sm:$0xff]
    %v5898 = vld [vmem:[#allocation8 + $0x208] sm:$0xff]
    %v5899 = vld [vmem:[#allocation8 + $0x210] sm:$0xff]
    %v5900 = vld [vmem:[#allocation8 + $0x218] sm:$0xff]
    %v5901 = vld [vmem:[#allocation8 + $0x220] sm:$0xff]
    %v5902 = vld [vmem:[#allocation8 + $0x228] sm:$0xff]
    %v5903 = vld [vmem:[#allocation8 + $0x230] sm:$0xff]
    %v5904 = vld [vmem:[#allocation8 + $0x238] sm:$0xff]
    %v5905 = vld [vmem:[#allocation8 + $0x240] sm:$0xff]
    %v5906 = vld [vmem:[#allocation8 + $0x248] sm:$0xff]
    %v5907 = vld [vmem:[#allocation8 + $0x250] sm:$0xff]
    %v5908 = vld [vmem:[#allocation8 + $0x258] sm:$0xff]
    %v5909 = vld [vmem:[#allocation8 + $0x260] sm:$0xff]
    %v5910 = vld [vmem:[#allocation8 + $0x268] sm:$0xff]
    %v5911 = vld [vmem:[#allocation8 + $0x270] sm:$0xff]
    %v5912 = vld [vmem:[#allocation8 + $0x278] sm:$0xff]
    %v5913 = vld [vmem:[#allocation8 + $0x280] sm:$0xff]
    %v5914 = vld [vmem:[#allocation8 + $0x288] sm:$0xff]
    %v5915 = vld [vmem:[#allocation8 + $0x290] sm:$0xff]
    %v5916 = vld [vmem:[#allocation8 + $0x298] sm:$0xff]
    %v5917 = vld [vmem:[#allocation8 + $0x2a0] sm:$0xff]
    %v5918 = vld [vmem:[#allocation8 + $0x2a8] sm:$0xff]
    %v5919 = vld [vmem:[#allocation8 + $0x2b0] sm:$0xff]
    %v5920 = vld [vmem:[#allocation8 + $0x2b8] sm:$0xff]
    %v5921 = vld [vmem:[#allocation8 + $0x2c0] sm:$0xff]
    %v5922 = vld [vmem:[#allocation8 + $0x2c8] sm:$0xff]
    %v5923 = vld [vmem:[#allocation8 + $0x2d0] sm:$0xff]
    %v5924 = vld [vmem:[#allocation8 + $0x2d8] sm:$0xff]
    %v5925 = vld [vmem:[#allocation8 + $0x2e0] sm:$0xff]
    %v5926 = vld [vmem:[#allocation8 + $0x2e8] sm:$0xff]
    %v5927 = vld [vmem:[#allocation8 + $0x2f0] sm:$0xff]
    %v5928 = vld [vmem:[#allocation8 + $0x2f8] sm:$0xff]
    %v5929 = vld [vmem:[#allocation8 + $0x300] sm:$0xff]
    %v5930 = vld [vmem:[#allocation8 + $0x308] sm:$0xff]
    %v5931 = vld [vmem:[#allocation8 + $0x310] sm:$0xff]
    %v5932 = vld [vmem:[#allocation8 + $0x318] sm:$0xff]
    %v5933 = vld [vmem:[#allocation8 + $0x320] sm:$0xff]
    %v5934 = vld [vmem:[#allocation8 + $0x328] sm:$0xff]
    %v5935 = vld [vmem:[#allocation8 + $0x330] sm:$0xff]
    %v5936 = vld [vmem:[#allocation8 + $0x338] sm:$0xff]
    %v5937 = vld [vmem:[#allocation8 + $0x340] sm:$0xff]
    %v5938 = vld [vmem:[#allocation8 + $0x348] sm:$0xff]
    %v5939 = vld [vmem:[#allocation8 + $0x350] sm:$0xff]
    %v5940 = vld [vmem:[#allocation8 + $0x358] sm:$0xff]
    %v5941 = vld [vmem:[#allocation8 + $0x360] sm:$0xff]
    %v5942 = vld [vmem:[#allocation8 + $0x368] sm:$0xff]
    %v5943 = vld [vmem:[#allocation8 + $0x370] sm:$0xff]
    %v5944 = vld [vmem:[#allocation8 + $0x378] sm:$0xff]
    %v5945 = vld [vmem:[#allocation8 + $0x380] sm:$0xff]
    %v5946 = vld [vmem:[#allocation8 + $0x388] sm:$0xff]
    %v5947 = vld [vmem:[#allocation8 + $0x390] sm:$0xff]
    %v5948 = vld [vmem:[#allocation8 + $0x398] sm:$0xff]
    %v5949 = vld [vmem:[#allocation8 + $0x3a0] sm:$0xff]
    %v5950 = vld [vmem:[#allocation8 + $0x3a8] sm:$0xff]
    %v5951 = vld [vmem:[#allocation8 + $0x3b0] sm:$0xff]
    %v5952 = vld [vmem:[#allocation8 + $0x3b8] sm:$0xff]
    %v5953 = vld [vmem:[#allocation8 + $0x3c0] sm:$0xff]
    %v5954 = vld [vmem:[#allocation8 + $0x3c8] sm:$0xff]
    %v5955 = vld [vmem:[#allocation8 + $0x3d0] sm:$0xff]
    %v5956 = vld [vmem:[#allocation8 + $0x3d8] sm:$0xff]
    %v5957 = vld [vmem:[#allocation8 + $0x3e0] sm:$0xff]
    %v5958 = vld [vmem:[#allocation8 + $0x3e8] sm:$0xff]
    %v5959 = vld [vmem:[#allocation8 + $0x3f0] sm:$0xff]
    %v5960 = vld [vmem:[#allocation8 + $0x3f8] sm:$0xff]
    %v5961 = vld [vmem:[#allocation8 + $0x400] sm:$0xff]
    %v5962 = vld [vmem:[#allocation8 + $0x408] sm:$0xff]
    %v5963 = vld [vmem:[#allocation8 + $0x410] sm:$0xff]
    %v5964 = vld [vmem:[#allocation8 + $0x418] sm:$0xff]
    %v5965 = vld [vmem:[#allocation8 + $0x420] sm:$0xff]
    %v5966 = vld [vmem:[#allocation8 + $0x428] sm:$0xff]
    %v5967 = vld [vmem:[#allocation8 + $0x430] sm:$0xff]
    %v5968 = vld [vmem:[#allocation8 + $0x438] sm:$0xff]
    %v5969 = vld [vmem:[#allocation8 + $0x440] sm:$0xff]
    %v5970 = vld [vmem:[#allocation8 + $0x448] sm:$0xff]
    %v5971 = vld [vmem:[#allocation8 + $0x450] sm:$0xff]
    %v5972 = vld [vmem:[#allocation8 + $0x458] sm:$0xff]
    %v5973 = vld [vmem:[#allocation8 + $0x460] sm:$0xff]
    %v5974 = vld [vmem:[#allocation8 + $0x468] sm:$0xff]
    %v5975 = vld [vmem:[#allocation8 + $0x470] sm:$0xff]
    %v5976 = vld [vmem:[#allocation8 + $0x478] sm:$0xff]
    %v5977 = vld [vmem:[#allocation8 + $0x480] sm:$0xff]
    %v5978 = vld [vmem:[#allocation8 + $0x488] sm:$0xff]
    %v5979 = vld [vmem:[#allocation8 + $0x490] sm:$0xff]
    %v5980 = vld [vmem:[#allocation8 + $0x498] sm:$0xff]
    %v5981 = vld [vmem:[#allocation8 + $0x4a0] sm:$0xff]
    %v5982 = vld [vmem:[#allocation8 + $0x4a8] sm:$0xff]
    %v5983 = vld [vmem:[#allocation8 + $0x4b0] sm:$0xff]
    %v5984 = vld [vmem:[#allocation8 + $0x4b8] sm:$0xff]
    %v5985 = vld [vmem:[#allocation8 + $0x4c0] sm:$0xff]
    %v5986 = vld [vmem:[#allocation8 + $0x4c8] sm:$0xff]
    %v5987 = vld [vmem:[#allocation8 + $0x4d0] sm:$0xff]
    %v5988 = vld [vmem:[#allocation8 + $0x4d8] sm:$0xff]
    %v5989 = vld [vmem:[#allocation8 + $0x4e0] sm:$0xff]
    %v5990 = vld [vmem:[#allocation8 + $0x4e8] sm:$0xff]
    %v5991 = vld [vmem:[#allocation8 + $0x4f0] sm:$0xff]
    %v5992 = vld [vmem:[#allocation8 + $0x4f8] sm:$0xff]
    %v5993 = vld [vmem:[#allocation8 + $0x500] sm:$0xff]
    %v5994 = vld [vmem:[#allocation8 + $0x508] sm:$0xff]
    %v5995 = vld [vmem:[#allocation8 + $0x510] sm:$0xff]
    %v5996 = vld [vmem:[#allocation8 + $0x518] sm:$0xff]
    %v5997 = vld [vmem:[#allocation8 + $0x520] sm:$0xff]
    %v5998 = vld [vmem:[#allocation8 + $0x528] sm:$0xff]
    %v5999 = vld [vmem:[#allocation8 + $0x530] sm:$0xff]
    %v6000 = vld [vmem:[#allocation8 + $0x538] sm:$0xff]
    %v6001 = vld [vmem:[#allocation8 + $0x540] sm:$0xff]
    %v6002 = vld [vmem:[#allocation8 + $0x548] sm:$0xff]
    %v6003 = vld [vmem:[#allocation8 + $0x550] sm:$0xff]
    %v6004 = vld [vmem:[#allocation8 + $0x558] sm:$0xff]
    %v6005 = vld [vmem:[#allocation8 + $0x560] sm:$0xff]
    %v6006 = vld [vmem:[#allocation8 + $0x568] sm:$0xff]
    %v6007 = vld [vmem:[#allocation8 + $0x570] sm:$0xff]
    %v6008 = vld [vmem:[#allocation8 + $0x578] sm:$0xff]
    %v6009 = vld [vmem:[#allocation8 + $0x580] sm:$0xff]
    %v6010 = vld [vmem:[#allocation8 + $0x588] sm:$0xff]
    %v6011 = vld [vmem:[#allocation8 + $0x590] sm:$0xff]
    %v6012 = vld [vmem:[#allocation8 + $0x598] sm:$0xff]
    %v6013 = vld [vmem:[#allocation8 + $0x5a0] sm:$0xff]
    %v6014 = vld [vmem:[#allocation8 + $0x5a8] sm:$0xff]
    %v6015 = vld [vmem:[#allocation8 + $0x5b0] sm:$0xff]
    %v6016 = vld [vmem:[#allocation8 + $0x5b8] sm:$0xff]
    %v6017 = vld [vmem:[#allocation8 + $0x5c0] sm:$0xff]
    %v6018 = vld [vmem:[#allocation8 + $0x5c8] sm:$0xff]
    %v6019 = vld [vmem:[#allocation8 + $0x5d0] sm:$0xff]
    %v6020 = vld [vmem:[#allocation8 + $0x5d8] sm:$0xff]
    %v6021 = vld [vmem:[#allocation8 + $0x5e0] sm:$0xff]
    %v6022 = vld [vmem:[#allocation8 + $0x5e8] sm:$0xff]
    %v6023 = vld [vmem:[#allocation8 + $0x5f0] sm:$0xff]
    %v6024 = vld [vmem:[#allocation8 + $0x5f8] sm:$0xff]
    %v6025 = vld [vmem:[#allocation8 + $0x600] sm:$0xff]
    %v6026 = vld [vmem:[#allocation8 + $0x608] sm:$0xff]
    %v6027 = vld [vmem:[#allocation8 + $0x610] sm:$0xff]
    %v6028 = vld [vmem:[#allocation8 + $0x618] sm:$0xff]
    %v6029 = vld [vmem:[#allocation8 + $0x620] sm:$0xff]
    %v6030 = vld [vmem:[#allocation8 + $0x628] sm:$0xff]
    %v6031 = vld [vmem:[#allocation8 + $0x630] sm:$0xff]
    %v6032 = vld [vmem:[#allocation8 + $0x638] sm:$0xff]
    %v6033 = vld [vmem:[#allocation8 + $0x640] sm:$0xff]
    %v6034 = vld [vmem:[#allocation8 + $0x648] sm:$0xff]
    %v6035 = vld [vmem:[#allocation8 + $0x650] sm:$0xff]
    %v6036 = vld [vmem:[#allocation8 + $0x658] sm:$0xff]
    %v6037 = vld [vmem:[#allocation8 + $0x660] sm:$0xff]
    %v6038 = vld [vmem:[#allocation8 + $0x668] sm:$0xff]
    %v6039 = vld [vmem:[#allocation8 + $0x670] sm:$0xff]
    %v6040 = vld [vmem:[#allocation8 + $0x678] sm:$0xff]
    %v6041 = vld [vmem:[#allocation8 + $0x680] sm:$0xff]
    %v6042 = vld [vmem:[#allocation8 + $0x688] sm:$0xff]
    %v6043 = vld [vmem:[#allocation8 + $0x690] sm:$0xff]
    %v6044 = vld [vmem:[#allocation8 + $0x698] sm:$0xff]
    %v6045 = vld [vmem:[#allocation8 + $0x6a0] sm:$0xff]
    %v6046 = vld [vmem:[#allocation8 + $0x6a8] sm:$0xff]
    %v6047 = vld [vmem:[#allocation8 + $0x6b0] sm:$0xff]
    %v6048 = vld [vmem:[#allocation8 + $0x6b8] sm:$0xff]
    %v6049 = vld [vmem:[#allocation8 + $0x6c0] sm:$0xff]
    %v6050 = vld [vmem:[#allocation8 + $0x6c8] sm:$0xff]
    %v6051 = vld [vmem:[#allocation8 + $0x6d0] sm:$0xff]
    %v6052 = vld [vmem:[#allocation8 + $0x6d8] sm:$0xff]
    %v6053 = vld [vmem:[#allocation8 + $0x6e0] sm:$0xff]
    %v6054 = vld [vmem:[#allocation8 + $0x6e8] sm:$0xff]
    %v6055 = vld [vmem:[#allocation8 + $0x6f0] sm:$0xff]
    %v6056 = vld [vmem:[#allocation8 + $0x6f8] sm:$0xff]
    %v6057 = vld [vmem:[#allocation8 + $0x700] sm:$0xff]
    %v6058 = vld [vmem:[#allocation8 + $0x708] sm:$0xff]
    %v6059 = vld [vmem:[#allocation8 + $0x710] sm:$0xff]
    %v6060 = vld [vmem:[#allocation8 + $0x718] sm:$0xff]
    %v6061 = vld [vmem:[#allocation8 + $0x720] sm:$0xff]
    %v6062 = vld [vmem:[#allocation8 + $0x728] sm:$0xff]
    %v6063 = vld [vmem:[#allocation8 + $0x730] sm:$0xff]
    %v6064 = vld [vmem:[#allocation8 + $0x738] sm:$0xff]
    %v6065 = vld [vmem:[#allocation8 + $0x740] sm:$0xff]
    %v6066 = vld [vmem:[#allocation8 + $0x748] sm:$0xff]
    %v6067 = vld [vmem:[#allocation8 + $0x750] sm:$0xff]
    %v6068 = vld [vmem:[#allocation8 + $0x758] sm:$0xff]
    %v6069 = vld [vmem:[#allocation8 + $0x760] sm:$0xff]
    %v6070 = vld [vmem:[#allocation8 + $0x768] sm:$0xff]
    %v6071 = vld [vmem:[#allocation8 + $0x770] sm:$0xff]
    %v6072 = vld [vmem:[#allocation8 + $0x778] sm:$0xff]
    %v6073 = vld [vmem:[#allocation8 + $0x780] sm:$0xff]
    %v6074 = vld [vmem:[#allocation8 + $0x788] sm:$0xff]
    %v6075 = vld [vmem:[#allocation8 + $0x790] sm:$0xff]
    %v6076 = vld [vmem:[#allocation8 + $0x798] sm:$0xff]
    %v6077 = vld [vmem:[#allocation8 + $0x7a0] sm:$0xff]
    %v6078 = vld [vmem:[#allocation8 + $0x7a8] sm:$0xff]
    %v6079 = vld [vmem:[#allocation8 + $0x7b0] sm:$0xff]
    %v6080 = vld [vmem:[#allocation8 + $0x7b8] sm:$0xff]
    %v6081 = vld [vmem:[#allocation8 + $0x7c0] sm:$0xff]
    %v6082 = vld [vmem:[#allocation8 + $0x7c8] sm:$0xff]
    %v6083 = vld [vmem:[#allocation8 + $0x7d0] sm:$0xff]
    %v6084 = vld [vmem:[#allocation8 + $0x7d8] sm:$0xff]
    %v6085 = vld [vmem:[#allocation8 + $0x7e0] sm:$0xff]
    %v6086 = vld [vmem:[#allocation8 + $0x7e8] sm:$0xff]
    %v6087 = vld [vmem:[#allocation8 + $0x7f0] sm:$0xff]
    %v6088 = vld [vmem:[#allocation8 + $0x7f8] sm:$0xff]
    %v6089 = vld [vmem:[#allocation2] sm:$0xfe]
    %v6090 = vld [vmem:[#allocation2 + $0x8] sm:$0xfe]
    %v6091 = vld [vmem:[#allocation2 + $0x10] sm:$0xfe]
    %v6092 = vld [vmem:[#allocation2 + $0x18] sm:$0xfe]
    %v6093 = vld [vmem:[#allocation2 + $0x20] sm:$0x7f]
    %v6094 = vld [vmem:[#allocation2 + $0x28] sm:$0x7f]
    %v6095 = vld [vmem:[#allocation2 + $0x30] sm:$0x7f]
    %v6096 = vld [vmem:[#allocation2 + $0x38] sm:$0x7f]
    %v6097 = vld [vmem:[#allocation2 + $0x40] sm:$0xfe]
    %v6098 = vld [vmem:[#allocation2 + $0x48] sm:$0xfe]
    %v6099 = vld [vmem:[#allocation2 + $0x50] sm:$0xfe]
    %v6100 = vld [vmem:[#allocation2 + $0x58] sm:$0xfe]
    %v6101 = vld [vmem:[#allocation2 + $0x60] sm:$0x7f]
    %v6102 = vld [vmem:[#allocation2 + $0x68] sm:$0x7f]
    %v6103 = vld [vmem:[#allocation2 + $0x70] sm:$0x7f]
    %v6104 = vld [vmem:[#allocation2 + $0x78] sm:$0x7f]
    %v6121 = vcombine.low %v6089, %v6090
    %v6122 = vcombine.high %v6089, %v6090
    %v6123 = vcombine.low %v6091, %v6092
    %v6124 = vcombine.high %v6091, %v6092
    %v6126 = vunpack.c.l.s4 1983009808
    %v6127 = vunpack.c.0.s8 %v6126
    %v6128 = vlaneseq
    %v6129 = vshrl.u32 %v6128, 7
    %v6130 = vsub.s32 %v6127, %v6129
    %v6131 = vrot.slane %v6121, %v6130
    %v6133 = vunpack.c.l.s4 1983009808
    %v6134 = vunpack.c.0.s8 %v6133
    %v6135 = vlaneseq
    %v6136 = vshrl.u32 %v6135, 7
    %v6137 = vsub.s32 %v6134, %v6136
    %v6138 = vrot.slane %v6122, %v6137
    %v6140 = vunpack.c.l.s4 1983009808
    %v6141 = vunpack.c.0.s8 %v6140
    %v6142 = vlaneseq
    %v6143 = vshrl.u32 %v6142, 7
    %v6144 = vsub.s32 %v6141, %v6143
    %v6145 = vrot.slane %v6123, %v6144
    %v6147 = vunpack.c.l.s4 1983009808
    %v6148 = vunpack.c.0.s8 %v6147
    %v6149 = vlaneseq
    %v6150 = vshrl.u32 %v6149, 7
    %v6151 = vsub.s32 %v6148, %v6150
    %v6152 = vrot.slane %v6124, %v6151
    %v6153 = vcombine.low %v6131, %v6145
    %v6154 = vcombine.high %v6131, %v6145
    %v6155 = vcombine.low %v6138, %v6152
    %v6156 = vcombine.high %v6138, %v6152
    %v6157 = vcombine.low %v6093, %v6094
    %v6158 = vcombine.high %v6093, %v6094
    %v6159 = vcombine.low %v6095, %v6096
    %v6160 = vcombine.high %v6095, %v6096
    %v6162 = vunpack.c.l.s4 1983009808
    %v6163 = vunpack.c.0.s8 %v6162
    %v6164 = vlaneseq
    %v6165 = vshrl.u32 %v6164, 7
    %v6166 = vsub.s32 %v6163, %v6165
    %v6167 = vrot.slane %v6157, %v6166
    %v6169 = vunpack.c.l.s4 1983009808
    %v6170 = vunpack.c.0.s8 %v6169
    %v6171 = vlaneseq
    %v6172 = vshrl.u32 %v6171, 7
    %v6173 = vsub.s32 %v6170, %v6172
    %v6174 = vrot.slane %v6158, %v6173
    %v6176 = vunpack.c.l.s4 1983009808
    %v6177 = vunpack.c.0.s8 %v6176
    %v6178 = vlaneseq
    %v6179 = vshrl.u32 %v6178, 7
    %v6180 = vsub.s32 %v6177, %v6179
    %v6181 = vrot.slane %v6159, %v6180
    %v6183 = vunpack.c.l.s4 1983009808
    %v6184 = vunpack.c.0.s8 %v6183
    %v6185 = vlaneseq
    %v6186 = vshrl.u32 %v6185, 7
    %v6187 = vsub.s32 %v6184, %v6186
    %v6188 = vrot.slane %v6160, %v6187
    %v6189 = vcombine.low %v6167, %v6181
    %v6190 = vcombine.high %v6167, %v6181
    %v6191 = vcombine.low %v6174, %v6188
    %v6192 = vcombine.high %v6174, %v6188
    %v6193 = vcombine.low %v6097, %v6098
    %v6194 = vcombine.high %v6097, %v6098
    %v6195 = vcombine.low %v6099, %v6100
    %v6196 = vcombine.high %v6099, %v6100
    %v6198 = vunpack.c.l.s4 1983009808
    %v6199 = vunpack.c.0.s8 %v6198
    %v6200 = vlaneseq
    %v6201 = vshrl.u32 %v6200, 7
    %v6202 = vsub.s32 %v6199, %v6201
    %v6203 = vrot.slane %v6193, %v6202
    %v6205 = vunpack.c.l.s4 1983009808
    %v6206 = vunpack.c.0.s8 %v6205
    %v6207 = vlaneseq
    %v6208 = vshrl.u32 %v6207, 7
    %v6209 = vsub.s32 %v6206, %v6208
    %v6210 = vrot.slane %v6194, %v6209
    %v6212 = vunpack.c.l.s4 1983009808
    %v6213 = vunpack.c.0.s8 %v6212
    %v6214 = vlaneseq
    %v6215 = vshrl.u32 %v6214, 7
    %v6216 = vsub.s32 %v6213, %v6215
    %v6217 = vrot.slane %v6195, %v6216
    %v6219 = vunpack.c.l.s4 1983009808
    %v6220 = vunpack.c.0.s8 %v6219
    %v6221 = vlaneseq
    %v6222 = vshrl.u32 %v6221, 7
    %v6223 = vsub.s32 %v6220, %v6222
    %v6224 = vrot.slane %v6196, %v6223
    %v6225 = vcombine.low %v6203, %v6217
    %v6226 = vcombine.high %v6203, %v6217
    %v6227 = vcombine.low %v6210, %v6224
    %v6228 = vcombine.high %v6210, %v6224
    %v6229 = vcombine.low %v6101, %v6102
    %v6230 = vcombine.high %v6101, %v6102
    %v6231 = vcombine.low %v6103, %v6104
    %v6232 = vcombine.high %v6103, %v6104
    %v6234 = vunpack.c.l.s4 1983009808
    %v6235 = vunpack.c.0.s8 %v6234
    %v6236 = vlaneseq
    %v6237 = vshrl.u32 %v6236, 7
    %v6238 = vsub.s32 %v6235, %v6237
    %v6239 = vrot.slane %v6229, %v6238
    %v6241 = vunpack.c.l.s4 1983009808
    %v6242 = vunpack.c.0.s8 %v6241
    %v6243 = vlaneseq
    %v6244 = vshrl.u32 %v6243, 7
    %v6245 = vsub.s32 %v6242, %v6244
    %v6246 = vrot.slane %v6230, %v6245
    %v6248 = vunpack.c.l.s4 1983009808
    %v6249 = vunpack.c.0.s8 %v6248
    %v6250 = vlaneseq
    %v6251 = vshrl.u32 %v6250, 7
    %v6252 = vsub.s32 %v6249, %v6251
    %v6253 = vrot.slane %v6231, %v6252
    %v6255 = vunpack.c.l.s4 1983009808
    %v6256 = vunpack.c.0.s8 %v6255
    %v6257 = vlaneseq
    %v6258 = vshrl.u32 %v6257, 7
    %v6259 = vsub.s32 %v6256, %v6258
    %v6260 = vrot.slane %v6232, %v6259
    %v6261 = vcombine.low %v6239, %v6253
    %v6262 = vcombine.high %v6239, %v6253
    %v6263 = vcombine.low %v6246, %v6260
    %v6264 = vcombine.high %v6246, %v6260
    %vm6265 = vcmask 1040384
    %vm6266 = vmor %vm6265, %vm5524
    %vm6267 = vmor %vm6266, %vm5528
    %vm6268 = vmor %vm6267, %vm5532
    %v6269 = vrot.slane %v6153, 7
    %v6270 = vrot.slane %v6269, 2
    %v6271 = vrot.slane %v6154, 7
    %v6272 = vsel %vm6268, %v6270, %v6271
    %v6273 = vrot.slane %v6271, 2
    %v6274 = vrot.slane %v6155, 7
    %v6275 = vsel %vm6268, %v6273, %v6274
    %v6276 = vrot.slane %v6274, 2
    %v6277 = vrot.slane %v6156, 7
    %v6278 = vsel %vm6268, %v6276, %v6277
    %v6279 = vrot.slane %v6277, 2
    %v6280 = vrot.slane %v6189, 7
    %v6281 = vsel %vm6268, %v6279, %v6280
    %v6282 = vrot.slane %v6280, 2
    %v6283 = vrot.slane %v6190, 7
    %v6284 = vsel %vm6268, %v6282, %v6283
    %v6285 = vrot.slane %v6283, 2
    %v6286 = vrot.slane %v6191, 7
    %v6287 = vsel %vm6268, %v6285, %v6286
    %v6288 = vrot.slane %v6286, 2
    %v6289 = vrot.slane %v6192, 7
    %v6290 = vsel %vm6268, %v6288, %v6289
    %v6291 = vrot.slane %v6225, 7
    %v6292 = vrot.slane %v6291, 2
    %v6293 = vrot.slane %v6226, 7
    %v6294 = vsel %vm6268, %v6292, %v6293
    %v6295 = vrot.slane %v6293, 2
    %v6296 = vrot.slane %v6227, 7
    %v6297 = vsel %vm6268, %v6295, %v6296
    %v6298 = vrot.slane %v6296, 2
    %v6299 = vrot.slane %v6228, 7
    %v6300 = vsel %vm6268, %v6298, %v6299
    %v6301 = vrot.slane %v6299, 2
    %v6302 = vrot.slane %v6261, 7
    %v6303 = vsel %vm6268, %v6301, %v6302
    %v6304 = vrot.slane %v6302, 2
    %v6305 = vrot.slane %v6262, 7
    %v6306 = vsel %vm6268, %v6304, %v6305
    %v6307 = vrot.slane %v6305, 2
    %v6308 = vrot.slane %v6263, 7
    %v6309 = vsel %vm6268, %v6307, %v6308
    %v6310 = vrot.slane %v6308, 2
    %v6311 = vrot.slane %v6264, 7
    %v6312 = vsel %vm6268, %v6310, %v6311
    %s6313 = scalar_lea.vmem [#allocation8], 2048
    %v6314 = vld [vmem:[%s6313] sm:$0xff]
    %v6315 = vld [vmem:[%s6313 + $0x8] sm:$0xff]
    %v6316 = vld [vmem:[%s6313 + $0x10] sm:$0xff]
    %v6317 = vld [vmem:[%s6313 + $0x18] sm:$0xff]
    %v6318 = vld [vmem:[%s6313 + $0x20] sm:$0xff]
    %v6319 = vld [vmem:[%s6313 + $0x28] sm:$0xff]
    %v6320 = vld [vmem:[%s6313 + $0x30] sm:$0xff]
    %v6321 = vld [vmem:[%s6313 + $0x38] sm:$0xff]
    %v6322 = vld [vmem:[%s6313 + $0x40] sm:$0xff]
    %v6323 = vld [vmem:[%s6313 + $0x48] sm:$0xff]
    %v6324 = vld [vmem:[%s6313 + $0x50] sm:$0xff]
    %v6325 = vld [vmem:[%s6313 + $0x58] sm:$0xff]
    %v6326 = vld [vmem:[%s6313 + $0x60] sm:$0xff]
    %v6327 = vld [vmem:[%s6313 + $0x68] sm:$0xff]
    %v6328 = vld [vmem:[%s6313 + $0x70] sm:$0xff]
    %v6329 = vld [vmem:[%s6313 + $0x78] sm:$0xff]
    %v6330 = vld [vmem:[%s6313 + $0x80] sm:$0xff]
    %v6331 = vld [vmem:[%s6313 + $0x88] sm:$0xff]
    %v6332 = vld [vmem:[%s6313 + $0x90] sm:$0xff]
    %v6333 = vld [vmem:[%s6313 + $0x98] sm:$0xff]
    %v6334 = vld [vmem:[%s6313 + $0xa0] sm:$0xff]
    %v6335 = vld [vmem:[%s6313 + $0xa8] sm:$0xff]
    %v6336 = vld [vmem:[%s6313 + $0xb0] sm:$0xff]
    %v6337 = vld [vmem:[%s6313 + $0xb8] sm:$0xff]
    %v6338 = vld [vmem:[%s6313 + $0xc0] sm:$0xff]
    %v6339 = vld [vmem:[%s6313 + $0xc8] sm:$0xff]
    %v6340 = vld [vmem:[%s6313 + $0xd0] sm:$0xff]
    %v6341 = vld [vmem:[%s6313 + $0xd8] sm:$0xff]
    %v6342 = vld [vmem:[%s6313 + $0xe0] sm:$0xff]
    %v6343 = vld [vmem:[%s6313 + $0xe8] sm:$0xff]
    %v6344 = vld [vmem:[%s6313 + $0xf0] sm:$0xff]
    %v6345 = vld [vmem:[%s6313 + $0xf8] sm:$0xff]
    %v6346 = vld [vmem:[%s6313 + $0x100] sm:$0xff]
    %v6347 = vld [vmem:[%s6313 + $0x108] sm:$0xff]
    %v6348 = vld [vmem:[%s6313 + $0x110] sm:$0xff]
    %v6349 = vld [vmem:[%s6313 + $0x118] sm:$0xff]
    %v6350 = vld [vmem:[%s6313 + $0x120] sm:$0xff]
    %v6351 = vld [vmem:[%s6313 + $0x128] sm:$0xff]
    %v6352 = vld [vmem:[%s6313 + $0x130] sm:$0xff]
    %v6353 = vld [vmem:[%s6313 + $0x138] sm:$0xff]
    %v6354 = vld [vmem:[%s6313 + $0x140] sm:$0xff]
    %v6355 = vld [vmem:[%s6313 + $0x148] sm:$0xff]
    %v6356 = vld [vmem:[%s6313 + $0x150] sm:$0xff]
    %v6357 = vld [vmem:[%s6313 + $0x158] sm:$0xff]
    %v6358 = vld [vmem:[%s6313 + $0x160] sm:$0xff]
    %v6359 = vld [vmem:[%s6313 + $0x168] sm:$0xff]
    %v6360 = vld [vmem:[%s6313 + $0x170] sm:$0xff]
    %v6361 = vld [vmem:[%s6313 + $0x178] sm:$0xff]
    %v6362 = vld [vmem:[%s6313 + $0x180] sm:$0xff]
    %v6363 = vld [vmem:[%s6313 + $0x188] sm:$0xff]
    %v6364 = vld [vmem:[%s6313 + $0x190] sm:$0xff]
    %v6365 = vld [vmem:[%s6313 + $0x198] sm:$0xff]
    %v6366 = vld [vmem:[%s6313 + $0x1a0] sm:$0xff]
    %v6367 = vld [vmem:[%s6313 + $0x1a8] sm:$0xff]
    %v6368 = vld [vmem:[%s6313 + $0x1b0] sm:$0xff]
    %v6369 = vld [vmem:[%s6313 + $0x1b8] sm:$0xff]
    %v6370 = vld [vmem:[%s6313 + $0x1c0] sm:$0xff]
    %v6371 = vld [vmem:[%s6313 + $0x1c8] sm:$0xff]
    %v6372 = vld [vmem:[%s6313 + $0x1d0] sm:$0xff]
    %v6373 = vld [vmem:[%s6313 + $0x1d8] sm:$0xff]
    %v6374 = vld [vmem:[%s6313 + $0x1e0] sm:$0xff]
    %v6375 = vld [vmem:[%s6313 + $0x1e8] sm:$0xff]
    %v6376 = vld [vmem:[%s6313 + $0x1f0] sm:$0xff]
    %v6377 = vld [vmem:[%s6313 + $0x1f8] sm:$0xff]
    %v6378 = vld [vmem:[%s6313 + $0x200] sm:$0xff]
    %v6379 = vld [vmem:[%s6313 + $0x208] sm:$0xff]
    %v6380 = vld [vmem:[%s6313 + $0x210] sm:$0xff]
    %v6381 = vld [vmem:[%s6313 + $0x218] sm:$0xff]
    %v6382 = vld [vmem:[%s6313 + $0x220] sm:$0xff]
    %v6383 = vld [vmem:[%s6313 + $0x228] sm:$0xff]
    %v6384 = vld [vmem:[%s6313 + $0x230] sm:$0xff]
    %v6385 = vld [vmem:[%s6313 + $0x238] sm:$0xff]
    %v6386 = vld [vmem:[%s6313 + $0x240] sm:$0xff]
    %v6387 = vld [vmem:[%s6313 + $0x248] sm:$0xff]
    %v6388 = vld [vmem:[%s6313 + $0x250] sm:$0xff]
    %v6389 = vld [vmem:[%s6313 + $0x258] sm:$0xff]
    %v6390 = vld [vmem:[%s6313 + $0x260] sm:$0xff]
    %v6391 = vld [vmem:[%s6313 + $0x268] sm:$0xff]
    %v6392 = vld [vmem:[%s6313 + $0x270] sm:$0xff]
    %v6393 = vld [vmem:[%s6313 + $0x278] sm:$0xff]
    %v6394 = vld [vmem:[%s6313 + $0x280] sm:$0xff]
    %v6395 = vld [vmem:[%s6313 + $0x288] sm:$0xff]
    %v6396 = vld [vmem:[%s6313 + $0x290] sm:$0xff]
    %v6397 = vld [vmem:[%s6313 + $0x298] sm:$0xff]
    %v6398 = vld [vmem:[%s6313 + $0x2a0] sm:$0xff]
    %v6399 = vld [vmem:[%s6313 + $0x2a8] sm:$0xff]
    %v6400 = vld [vmem:[%s6313 + $0x2b0] sm:$0xff]
    %v6401 = vld [vmem:[%s6313 + $0x2b8] sm:$0xff]
    %v6402 = vld [vmem:[%s6313 + $0x2c0] sm:$0xff]
    %v6403 = vld [vmem:[%s6313 + $0x2c8] sm:$0xff]
    %v6404 = vld [vmem:[%s6313 + $0x2d0] sm:$0xff]
    %v6405 = vld [vmem:[%s6313 + $0x2d8] sm:$0xff]
    %v6406 = vld [vmem:[%s6313 + $0x2e0] sm:$0xff]
    %v6407 = vld [vmem:[%s6313 + $0x2e8] sm:$0xff]
    %v6408 = vld [vmem:[%s6313 + $0x2f0] sm:$0xff]
    %v6409 = vld [vmem:[%s6313 + $0x2f8] sm:$0xff]
    %v6410 = vld [vmem:[%s6313 + $0x300] sm:$0xff]
    %v6411 = vld [vmem:[%s6313 + $0x308] sm:$0xff]
    %v6412 = vld [vmem:[%s6313 + $0x310] sm:$0xff]
    %v6413 = vld [vmem:[%s6313 + $0x318] sm:$0xff]
    %v6414 = vld [vmem:[%s6313 + $0x320] sm:$0xff]
    %v6415 = vld [vmem:[%s6313 + $0x328] sm:$0xff]
    %v6416 = vld [vmem:[%s6313 + $0x330] sm:$0xff]
    %v6417 = vld [vmem:[%s6313 + $0x338] sm:$0xff]
    %v6418 = vld [vmem:[%s6313 + $0x340] sm:$0xff]
    %v6419 = vld [vmem:[%s6313 + $0x348] sm:$0xff]
    %v6420 = vld [vmem:[%s6313 + $0x350] sm:$0xff]
    %v6421 = vld [vmem:[%s6313 + $0x358] sm:$0xff]
    %v6422 = vld [vmem:[%s6313 + $0x360] sm:$0xff]
    %v6423 = vld [vmem:[%s6313 + $0x368] sm:$0xff]
    %v6424 = vld [vmem:[%s6313 + $0x370] sm:$0xff]
    %v6425 = vld [vmem:[%s6313 + $0x378] sm:$0xff]
    %v6426 = vld [vmem:[%s6313 + $0x380] sm:$0xff]
    %v6427 = vld [vmem:[%s6313 + $0x388] sm:$0xff]
    %v6428 = vld [vmem:[%s6313 + $0x390] sm:$0xff]
    %v6429 = vld [vmem:[%s6313 + $0x398] sm:$0xff]
    %v6430 = vld [vmem:[%s6313 + $0x3a0] sm:$0xff]
    %v6431 = vld [vmem:[%s6313 + $0x3a8] sm:$0xff]
    %v6432 = vld [vmem:[%s6313 + $0x3b0] sm:$0xff]
    %v6433 = vld [vmem:[%s6313 + $0x3b8] sm:$0xff]
    %v6434 = vld [vmem:[%s6313 + $0x3c0] sm:$0xff]
    %v6435 = vld [vmem:[%s6313 + $0x3c8] sm:$0xff]
    %v6436 = vld [vmem:[%s6313 + $0x3d0] sm:$0xff]
    %v6437 = vld [vmem:[%s6313 + $0x3d8] sm:$0xff]
    %v6438 = vld [vmem:[%s6313 + $0x3e0] sm:$0xff]
    %v6439 = vld [vmem:[%s6313 + $0x3e8] sm:$0xff]
    %v6440 = vld [vmem:[%s6313 + $0x3f0] sm:$0xff]
    %v6441 = vld [vmem:[%s6313 + $0x3f8] sm:$0xff]
    %v6442 = vld [vmem:[%s6313 + $0x400] sm:$0xff]
    %v6443 = vld [vmem:[%s6313 + $0x408] sm:$0xff]
    %v6444 = vld [vmem:[%s6313 + $0x410] sm:$0xff]
    %v6445 = vld [vmem:[%s6313 + $0x418] sm:$0xff]
    %v6446 = vld [vmem:[%s6313 + $0x420] sm:$0xff]
    %v6447 = vld [vmem:[%s6313 + $0x428] sm:$0xff]
    %v6448 = vld [vmem:[%s6313 + $0x430] sm:$0xff]
    %v6449 = vld [vmem:[%s6313 + $0x438] sm:$0xff]
    %v6450 = vld [vmem:[%s6313 + $0x440] sm:$0xff]
    %v6451 = vld [vmem:[%s6313 + $0x448] sm:$0xff]
    %v6452 = vld [vmem:[%s6313 + $0x450] sm:$0xff]
    %v6453 = vld [vmem:[%s6313 + $0x458] sm:$0xff]
    %v6454 = vld [vmem:[%s6313 + $0x460] sm:$0xff]
    %v6455 = vld [vmem:[%s6313 + $0x468] sm:$0xff]
    %v6456 = vld [vmem:[%s6313 + $0x470] sm:$0xff]
    %v6457 = vld [vmem:[%s6313 + $0x478] sm:$0xff]
    %v6458 = vld [vmem:[%s6313 + $0x480] sm:$0xff]
    %v6459 = vld [vmem:[%s6313 + $0x488] sm:$0xff]
    %v6460 = vld [vmem:[%s6313 + $0x490] sm:$0xff]
    %v6461 = vld [vmem:[%s6313 + $0x498] sm:$0xff]
    %v6462 = vld [vmem:[%s6313 + $0x4a0] sm:$0xff]
    %v6463 = vld [vmem:[%s6313 + $0x4a8] sm:$0xff]
    %v6464 = vld [vmem:[%s6313 + $0x4b0] sm:$0xff]
    %v6465 = vld [vmem:[%s6313 + $0x4b8] sm:$0xff]
    %v6466 = vld [vmem:[%s6313 + $0x4c0] sm:$0xff]
    %v6467 = vld [vmem:[%s6313 + $0x4c8] sm:$0xff]
    %v6468 = vld [vmem:[%s6313 + $0x4d0] sm:$0xff]
    %v6469 = vld [vmem:[%s6313 + $0x4d8] sm:$0xff]
    %v6470 = vld [vmem:[%s6313 + $0x4e0] sm:$0xff]
    %v6471 = vld [vmem:[%s6313 + $0x4e8] sm:$0xff]
    %v6472 = vld [vmem:[%s6313 + $0x4f0] sm:$0xff]
    %v6473 = vld [vmem:[%s6313 + $0x4f8] sm:$0xff]
    %v6474 = vld [vmem:[%s6313 + $0x500] sm:$0xff]
    %v6475 = vld [vmem:[%s6313 + $0x508] sm:$0xff]
    %v6476 = vld [vmem:[%s6313 + $0x510] sm:$0xff]
    %v6477 = vld [vmem:[%s6313 + $0x518] sm:$0xff]
    %v6478 = vld [vmem:[%s6313 + $0x520] sm:$0xff]
    %v6479 = vld [vmem:[%s6313 + $0x528] sm:$0xff]
    %v6480 = vld [vmem:[%s6313 + $0x530] sm:$0xff]
    %v6481 = vld [vmem:[%s6313 + $0x538] sm:$0xff]
    %v6482 = vld [vmem:[%s6313 + $0x540] sm:$0xff]
    %v6483 = vld [vmem:[%s6313 + $0x548] sm:$0xff]
    %v6484 = vld [vmem:[%s6313 + $0x550] sm:$0xff]
    %v6485 = vld [vmem:[%s6313 + $0x558] sm:$0xff]
    %v6486 = vld [vmem:[%s6313 + $0x560] sm:$0xff]
    %v6487 = vld [vmem:[%s6313 + $0x568] sm:$0xff]
    %v6488 = vld [vmem:[%s6313 + $0x570] sm:$0xff]
    %v6489 = vld [vmem:[%s6313 + $0x578] sm:$0xff]
    %v6490 = vld [vmem:[%s6313 + $0x580] sm:$0xff]
    %v6491 = vld [vmem:[%s6313 + $0x588] sm:$0xff]
    %v6492 = vld [vmem:[%s6313 + $0x590] sm:$0xff]
    %v6493 = vld [vmem:[%s6313 + $0x598] sm:$0xff]
    %v6494 = vld [vmem:[%s6313 + $0x5a0] sm:$0xff]
    %v6495 = vld [vmem:[%s6313 + $0x5a8] sm:$0xff]
    %v6496 = vld [vmem:[%s6313 + $0x5b0] sm:$0xff]
    %v6497 = vld [vmem:[%s6313 + $0x5b8] sm:$0xff]
    %v6498 = vld [vmem:[%s6313 + $0x5c0] sm:$0xff]
    %v6499 = vld [vmem:[%s6313 + $0x5c8] sm:$0xff]
    %v6500 = vld [vmem:[%s6313 + $0x5d0] sm:$0xff]
    %v6501 = vld [vmem:[%s6313 + $0x5d8] sm:$0xff]
    %v6502 = vld [vmem:[%s6313 + $0x5e0] sm:$0xff]
    %v6503 = vld [vmem:[%s6313 + $0x5e8] sm:$0xff]
    %v6504 = vld [vmem:[%s6313 + $0x5f0] sm:$0xff]
    %v6505 = vld [vmem:[%s6313 + $0x5f8] sm:$0xff]
    %v6506 = vld [vmem:[%s6313 + $0x600] sm:$0xff]
    %v6507 = vld [vmem:[%s6313 + $0x608] sm:$0xff]
    %v6508 = vld [vmem:[%s6313 + $0x610] sm:$0xff]
    %v6509 = vld [vmem:[%s6313 + $0x618] sm:$0xff]
    %v6510 = vld [vmem:[%s6313 + $0x620] sm:$0xff]
    %v6511 = vld [vmem:[%s6313 + $0x628] sm:$0xff]
    %v6512 = vld [vmem:[%s6313 + $0x630] sm:$0xff]
    %v6513 = vld [vmem:[%s6313 + $0x638] sm:$0xff]
    %v6514 = vld [vmem:[%s6313 + $0x640] sm:$0xff]
    %v6515 = vld [vmem:[%s6313 + $0x648] sm:$0xff]
    %v6516 = vld [vmem:[%s6313 + $0x650] sm:$0xff]
    %v6517 = vld [vmem:[%s6313 + $0x658] sm:$0xff]
    %v6518 = vld [vmem:[%s6313 + $0x660] sm:$0xff]
    %v6519 = vld [vmem:[%s6313 + $0x668] sm:$0xff]
    %v6520 = vld [vmem:[%s6313 + $0x670] sm:$0xff]
    %v6521 = vld [vmem:[%s6313 + $0x678] sm:$0xff]
    %v6522 = vld [vmem:[%s6313 + $0x680] sm:$0xff]
    %v6523 = vld [vmem:[%s6313 + $0x688] sm:$0xff]
    %v6524 = vld [vmem:[%s6313 + $0x690] sm:$0xff]
    %v6525 = vld [vmem:[%s6313 + $0x698] sm:$0xff]
    %v6526 = vld [vmem:[%s6313 + $0x6a0] sm:$0xff]
    %v6527 = vld [vmem:[%s6313 + $0x6a8] sm:$0xff]
    %v6528 = vld [vmem:[%s6313 + $0x6b0] sm:$0xff]
    %v6529 = vld [vmem:[%s6313 + $0x6b8] sm:$0xff]
    %v6530 = vld [vmem:[%s6313 + $0x6c0] sm:$0xff]
    %v6531 = vld [vmem:[%s6313 + $0x6c8] sm:$0xff]
    %v6532 = vld [vmem:[%s6313 + $0x6d0] sm:$0xff]
    %v6533 = vld [vmem:[%s6313 + $0x6d8] sm:$0xff]
    %v6534 = vld [vmem:[%s6313 + $0x6e0] sm:$0xff]
    %v6535 = vld [vmem:[%s6313 + $0x6e8] sm:$0xff]
    %v6536 = vld [vmem:[%s6313 + $0x6f0] sm:$0xff]
    %v6537 = vld [vmem:[%s6313 + $0x6f8] sm:$0xff]
    %v6538 = vld [vmem:[%s6313 + $0x700] sm:$0xff]
    %v6539 = vld [vmem:[%s6313 + $0x708] sm:$0xff]
    %v6540 = vld [vmem:[%s6313 + $0x710] sm:$0xff]
    %v6541 = vld [vmem:[%s6313 + $0x718] sm:$0xff]
    %v6542 = vld [vmem:[%s6313 + $0x720] sm:$0xff]
    %v6543 = vld [vmem:[%s6313 + $0x728] sm:$0xff]
    %v6544 = vld [vmem:[%s6313 + $0x730] sm:$0xff]
    %v6545 = vld [vmem:[%s6313 + $0x738] sm:$0xff]
    %v6546 = vld [vmem:[%s6313 + $0x740] sm:$0xff]
    %v6547 = vld [vmem:[%s6313 + $0x748] sm:$0xff]
    %v6548 = vld [vmem:[%s6313 + $0x750] sm:$0xff]
    %v6549 = vld [vmem:[%s6313 + $0x758] sm:$0xff]
    %v6550 = vld [vmem:[%s6313 + $0x760] sm:$0xff]
    %v6551 = vld [vmem:[%s6313 + $0x768] sm:$0xff]
    %v6552 = vld [vmem:[%s6313 + $0x770] sm:$0xff]
    %v6553 = vld [vmem:[%s6313 + $0x778] sm:$0xff]
    %v6554 = vld [vmem:[%s6313 + $0x780] sm:$0xff]
    %v6555 = vld [vmem:[%s6313 + $0x788] sm:$0xff]
    %v6556 = vld [vmem:[%s6313 + $0x790] sm:$0xff]
    %v6557 = vld [vmem:[%s6313 + $0x798] sm:$0xff]
    %v6558 = vld [vmem:[%s6313 + $0x7a0] sm:$0xff]
    %v6559 = vld [vmem:[%s6313 + $0x7a8] sm:$0xff]
    %v6560 = vld [vmem:[%s6313 + $0x7b0] sm:$0xff]
    %v6561 = vld [vmem:[%s6313 + $0x7b8] sm:$0xff]
    %v6562 = vld [vmem:[%s6313 + $0x7c0] sm:$0xff]
    %v6563 = vld [vmem:[%s6313 + $0x7c8] sm:$0xff]
    %v6564 = vld [vmem:[%s6313 + $0x7d0] sm:$0xff]
    %v6565 = vld [vmem:[%s6313 + $0x7d8] sm:$0xff]
    %v6566 = vld [vmem:[%s6313 + $0x7e0] sm:$0xff]
    %v6567 = vld [vmem:[%s6313 + $0x7e8] sm:$0xff]
    %v6568 = vld [vmem:[%s6313 + $0x7f0] sm:$0xff]
    %v6569 = vld [vmem:[%s6313 + $0x7f8] sm:$0xff]
    %v6570 = vcombine.low %v6272, %v6275
    %v6571 = vcombine.high %v6272, %v6275
    %v6572 = vcombine.low %v6278, %v6281
    %v6573 = vcombine.high %v6278, %v6281
    %v6575 = vunpack.c.l.s4 1983009808
    %v6576 = vunpack.c.0.s8 %v6575
    %v6577 = vlaneseq
    %v6578 = vshrl.u32 %v6577, 7
    %v6579 = vsub.s32 %v6576, %v6578
    %v6580 = vrot.slane %v6570, %v6579
    %v6582 = vunpack.c.l.s4 1983009808
    %v6583 = vunpack.c.0.s8 %v6582
    %v6584 = vlaneseq
    %v6585 = vshrl.u32 %v6584, 7
    %v6586 = vsub.s32 %v6583, %v6585
    %v6587 = vrot.slane %v6571, %v6586
    %v6589 = vunpack.c.l.s4 1983009808
    %v6590 = vunpack.c.0.s8 %v6589
    %v6591 = vlaneseq
    %v6592 = vshrl.u32 %v6591, 7
    %v6593 = vsub.s32 %v6590, %v6592
    %v6594 = vrot.slane %v6572, %v6593
    %v6596 = vunpack.c.l.s4 1983009808
    %v6597 = vunpack.c.0.s8 %v6596
    %v6598 = vlaneseq
    %v6599 = vshrl.u32 %v6598, 7
    %v6600 = vsub.s32 %v6597, %v6599
    %v6601 = vrot.slane %v6573, %v6600
    %v6602 = vcombine.low %v6580, %v6594
    %v6603 = vcombine.high %v6580, %v6594
    %v6604 = vcombine.low %v6587, %v6601
    %v6605 = vcombine.high %v6587, %v6601
    %v6606 = vcombine.low %v6284, %v6287
    %v6607 = vcombine.high %v6284, %v6287
    %v6608 = vcombine.low %v6290, %v6294
    %v6609 = vcombine.high %v6290, %v6294
    %v6611 = vunpack.c.l.s4 1983009808
    %v6612 = vunpack.c.0.s8 %v6611
    %v6613 = vlaneseq
    %v6614 = vshrl.u32 %v6613, 7
    %v6615 = vsub.s32 %v6612, %v6614
    %v6616 = vrot.slane %v6606, %v6615
    %v6618 = vunpack.c.l.s4 1983009808
    %v6619 = vunpack.c.0.s8 %v6618
    %v6620 = vlaneseq
    %v6621 = vshrl.u32 %v6620, 7
    %v6622 = vsub.s32 %v6619, %v6621
    %v6623 = vrot.slane %v6607, %v6622
    %v6625 = vunpack.c.l.s4 1983009808
    %v6626 = vunpack.c.0.s8 %v6625
    %v6627 = vlaneseq
    %v6628 = vshrl.u32 %v6627, 7
    %v6629 = vsub.s32 %v6626, %v6628
    %v6630 = vrot.slane %v6608, %v6629
    %v6632 = vunpack.c.l.s4 1983009808
    %v6633 = vunpack.c.0.s8 %v6632
    %v6634 = vlaneseq
    %v6635 = vshrl.u32 %v6634, 7
    %v6636 = vsub.s32 %v6633, %v6635
    %v6637 = vrot.slane %v6609, %v6636
    %v6638 = vcombine.low %v6616, %v6630
    %v6639 = vcombine.high %v6616, %v6630
    %v6640 = vcombine.low %v6623, %v6637
    %v6641 = vcombine.high %v6623, %v6637
    %v6642 = vcombine.low %v6297, %v6300
    %v6643 = vcombine.high %v6297, %v6300
    %v6644 = vcombine.low %v6303, %v6306
    %v6645 = vcombine.high %v6303, %v6306
    %v6647 = vunpack.c.l.s4 1983009808
    %v6648 = vunpack.c.0.s8 %v6647
    %v6649 = vlaneseq
    %v6650 = vshrl.u32 %v6649, 7
    %v6651 = vsub.s32 %v6648, %v6650
    %v6652 = vrot.slane %v6642, %v6651
    %v6654 = vunpack.c.l.s4 1983009808
    %v6655 = vunpack.c.0.s8 %v6654
    %v6656 = vlaneseq
    %v6657 = vshrl.u32 %v6656, 7
    %v6658 = vsub.s32 %v6655, %v6657
    %v6659 = vrot.slane %v6643, %v6658
    %v6661 = vunpack.c.l.s4 1983009808
    %v6662 = vunpack.c.0.s8 %v6661
    %v6663 = vlaneseq
    %v6664 = vshrl.u32 %v6663, 7
    %v6665 = vsub.s32 %v6662, %v6664
    %v6666 = vrot.slane %v6644, %v6665
    %v6668 = vunpack.c.l.s4 1983009808
    %v6669 = vunpack.c.0.s8 %v6668
    %v6670 = vlaneseq
    %v6671 = vshrl.u32 %v6670, 7
    %v6672 = vsub.s32 %v6669, %v6671
    %v6673 = vrot.slane %v6645, %v6672
    %v6674 = vcombine.low %v6652, %v6666
    %v6675 = vcombine.high %v6652, %v6666
    %v6676 = vcombine.low %v6659, %v6673
    %v6677 = vcombine.high %v6659, %v6673
    %v6678 = vcombine.low %v6309, %v6312
    %v6679 = vcombine.high %v6309, %v6312
    %v6681 = vunpack.c.l.s4 1983009808
    %v6682 = vunpack.c.0.s8 %v6681
    %v6683 = vlaneseq
    %v6684 = vshrl.u32 %v6683, 7
    %v6685 = vsub.s32 %v6682, %v6684
    %v6686 = vrot.slane %v6678, %v6685
    %v6688 = vunpack.c.l.s4 1983009808
    %v6689 = vunpack.c.0.s8 %v6688
    %v6690 = vlaneseq
    %v6691 = vshrl.u32 %v6690, 7
    %v6692 = vsub.s32 %v6689, %v6691
    %v6693 = vrot.slane %v6679, %v6692
    %v6694 = vcombine.high %v6686, %v6686
    %v6695 = vcombine.high %v6693, %v6693
    %6712 = vmatprep.subr.mxu0 %v6315
    %6713 = vmatpush1.msra.mxu0 %v6314
    %6714 = vmatprep.subr.mxu0 %v6319
    %6715 = vmatpush1.msra.mxu0 %v6318
    %6716 = vmatprep.subr.mxu0 %v6323
    %6717 = vmatpush1.msra.mxu0 %v6322
    %6718 = vmatprep.subr.mxu0 %v6327
    %6719 = vmatpush1.msra.mxu0 %v6326
    %6720 = vmatprep.subr.mxu0 %v6331
    %6721 = vmatpush1.msra.mxu0 %v6330
    %6722 = vmatprep.subr.mxu0 %v6335
    %6723 = vmatpush1.msra.mxu0 %v6334
    %6724 = vmatprep.subr.mxu0 %v6339
    %6725 = vmatpush1.msra.mxu0 %v6338
    %6726 = vmatprep.subr.mxu0 %v6343
    %6727 = vmatpush1.msra.mxu0 %v6342
    %6728 = vmatprep.subr.mxu0 %v6347
    %6729 = vmatpush1.msra.mxu0 %v6346
    %6730 = vmatprep.subr.mxu0 %v6351
    %6731 = vmatpush1.msra.mxu0 %v6350
    %6732 = vmatprep.subr.mxu0 %v6355
    %6733 = vmatpush1.msra.mxu0 %v6354
    %6734 = vmatprep.subr.mxu0 %v6359
    %6735 = vmatpush1.msra.mxu0 %v6358
    %6736 = vmatprep.subr.mxu0 %v6363
    %6737 = vmatpush1.msra.mxu0 %v6362
    %6738 = vmatprep.subr.mxu0 %v6367
    %6739 = vmatpush1.msra.mxu0 %v6366
    %6740 = vmatprep.subr.mxu0 %v6371
    %6741 = vmatpush1.msra.mxu0 %v6370
    %6742 = vmatprep.subr.mxu0 %v6375
    %6743 = vmatpush1.msra.mxu0 %v6374
    %6744 = vmatprep.subr.mxu0 %v6379
    %6745 = vmatpush1.msra.mxu0 %v6378
    %6746 = vmatprep.subr.mxu0 %v6383
    %6747 = vmatpush1.msra.mxu0 %v6382
    %6748 = vmatprep.subr.mxu0 %v6387
    %6749 = vmatpush1.msra.mxu0 %v6386
    %6750 = vmatprep.subr.mxu0 %v6391
    %6751 = vmatpush1.msra.mxu0 %v6390
    %6752 = vmatprep.subr.mxu0 %v6395
    %6753 = vmatpush1.msra.mxu0 %v6394
    %6754 = vmatprep.subr.mxu0 %v6399
    %6755 = vmatpush1.msra.mxu0 %v6398
    %6756 = vmatprep.subr.mxu0 %v6403
    %6757 = vmatpush1.msra.mxu0 %v6402
    %6758 = vmatprep.subr.mxu0 %v6407
    %6759 = vmatpush1.msra.mxu0 %v6406
    %6760 = vmatprep.subr.mxu0 %v6411
    %6761 = vmatpush1.msra.mxu0 %v6410
    %6762 = vmatprep.subr.mxu0 %v6415
    %6763 = vmatpush1.msra.mxu0 %v6414
    %6764 = vmatprep.subr.mxu0 %v6419
    %6765 = vmatpush1.msra.mxu0 %v6418
    %6766 = vmatprep.subr.mxu0 %v6423
    %6767 = vmatpush1.msra.mxu0 %v6422
    %6768 = vmatprep.subr.mxu0 %v6427
    %6769 = vmatpush1.msra.mxu0 %v6426
    %6770 = vmatprep.subr.mxu0 %v6431
    %6771 = vmatpush1.msra.mxu0 %v6430
    %6772 = vmatprep.subr.mxu0 %v6435
    %6773 = vmatpush1.msra.mxu0 %v6434
    %6774 = vmatprep.subr.mxu0 %v6439
    %6775 = vmatpush1.msra.mxu0 %v6438
    %6776 = vmatprep.mubr.f32.mxu0 %v6603
    %6777 = vmatmul.mubr.f32.gmra.mrb[0].mxu0 %v6602
    %v6778 = vpop.f32.mrb[0].mxu0
    %v6779 = vadd.f32 0.0, %v6778
    %v6780 = vpop.f32.mrb[0].mxu0
    %v6781 = vadd.f32 0.0, %v6780
    %6782 = vmatprep.mubr.f32.mxu0 %v6639
    %6783 = vmatmul.mubr.f32.gmra.mrb[0].mxu0 %v6638
    %v6784 = vpop.f32.mrb[0].mxu0
    %v6785 = vadd.f32 0.0, %v6784
    %v6786 = vpop.f32.mrb[0].mxu0
    %v6787 = vadd.f32 0.0, %v6786
    %6788 = vmatprep.mubr.f32.mxu0 %v6675
    %6789 = vmatmul.mubr.f32.gmra.mrb[0].mxu0 %v6674
    %v6790 = vpop.f32.mrb[0].mxu0
    %v6791 = vadd.f32 0.0, %v6790
    %v6792 = vpop.f32.mrb[0].mxu0
    %v6793 = vadd.f32 0.0, %v6792
    %6794 = vmatprep.mubr.f32.mxu0 %v6694
    %6795 = vmatmul.mubr.f32.gmra.mrb[0].mxu0 %v6686
    %v6796 = vpop.f32.mrb[0].mxu0
    %v6797 = vadd.f32 0.0, %v6796
    %v6798 = vpop.f32.mrb[0].mxu0
    %v6799 = vadd.f32 0.0, %v6798
    %6800 = vdwg.mxu0
    %6801 = vmatprep.subr.mxu0 %v6443
    %6802 = vmatpush1.msra.mxu0 %v6442
    %6803 = vmatprep.subr.mxu0 %v6447
    %6804 = vmatpush1.msra.mxu0 %v6446
    %6805 = vmatprep.subr.mxu0 %v6451
    %6806 = vmatpush1.msra.mxu0 %v6450
    %6807 = vmatprep.subr.mxu0 %v6455
    %6808 = vmatpush1.msra.mxu0 %v6454
    %6809 = vmatprep.subr.mxu0 %v6459
    %6810 = vmatpush1.msra.mxu0 %v6458
    %6811 = vmatprep.subr.mxu0 %v6463
    %6812 = vmatpush1.msra.mxu0 %v6462
    %6813 = vmatprep.subr.mxu0 %v6467
    %6814 = vmatpush1.msra.mxu0 %v6466
    %6815 = vmatprep.subr.mxu0 %v6471
    %6816 = vmatpush1.msra.mxu0 %v6470
    %6817 = vmatprep.subr.mxu0 %v6475
    %6818 = vmatpush1.msra.mxu0 %v6474
    %6819 = vmatprep.subr.mxu0 %v6479
    %6820 = vmatpush1.msra.mxu0 %v6478
    %6821 = vmatprep.subr.mxu0 %v6483
    %6822 = vmatpush1.msra.mxu0 %v6482
    %6823 = vmatprep.subr.mxu0 %v6487
    %6824 = vmatpush1.msra.mxu0 %v6486
    %6825 = vmatprep.subr.mxu0 %v6491
    %6826 = vmatpush1.msra.mxu0 %v6490
    %6827 = vmatprep.subr.mxu0 %v6495
    %6828 = vmatpush1.msra.mxu0 %v6494
    %6829 = vmatprep.subr.mxu0 %v6499
    %6830 = vmatpush1.msra.mxu0 %v6498
    %6831 = vmatprep.subr.mxu0 %v6503
    %6832 = vmatpush1.msra.mxu0 %v6502
    %6833 = vmatprep.subr.mxu0 %v6507
    %6834 = vmatpush1.msra.mxu0 %v6506
    %6835 = vmatprep.subr.mxu0 %v6511
    %6836 = vmatpush1.msra.mxu0 %v6510
    %6837 = vmatprep.subr.mxu0 %v6515
    %6838 = vmatpush1.msra.mxu0 %v6514
    %6839 = vmatprep.subr.mxu0 %v6519
    %6840 = vmatpush1.msra.mxu0 %v6518
    %6841 = vmatprep.subr.mxu0 %v6523
    %6842 = vmatpush1.msra.mxu0 %v6522
    %6843 = vmatprep.subr.mxu0 %v6527
    %6844 = vmatpush1.msra.mxu0 %v6526
    %6845 = vmatprep.subr.mxu0 %v6531
    %6846 = vmatpush1.msra.mxu0 %v6530
    %6847 = vmatprep.subr.mxu0 %v6535
    %6848 = vmatpush1.msra.mxu0 %v6534
    %6849 = vmatprep.subr.mxu0 %v6539
    %6850 = vmatpush1.msra.mxu0 %v6538
    %6851 = vmatprep.subr.mxu0 %v6543
    %6852 = vmatpush1.msra.mxu0 %v6542
    %6853 = vmatprep.subr.mxu0 %v6547
    %6854 = vmatpush1.msra.mxu0 %v6546
    %6855 = vmatprep.subr.mxu0 %v6551
    %6856 = vmatpush1.msra.mxu0 %v6550
    %6857 = vmatprep.subr.mxu0 %v6555
    %6858 = vmatpush1.msra.mxu0 %v6554
    %6859 = vmatprep.subr.mxu0 %v6559
    %6860 = vmatpush1.msra.mxu0 %v6558
    %6861 = vmatprep.subr.mxu0 %v6563
    %6862 = vmatpush1.msra.mxu0 %v6562
    %6863 = vmatprep.subr.mxu0 %v6567
    %6864 = vmatpush1.msra.mxu0 %v6566
    %6865 = vmatprep.mubr.f32.mxu0 %v6605
    %6866 = vmatmul.mubr.f32.gmra.mrb[0].mxu0 %v6604
    %v6867 = vpop.f32.mrb[0].mxu0
    %v6868 = vadd.f32 %v6779, %v6867
    %v6869 = vpop.f32.mrb[0].mxu0
    %v6870 = vadd.f32 %v6781, %v6869
    %6871 = vmatprep.mubr.f32.mxu0 %v6641
    %6872 = vmatmul.mubr.f32.gmra.mrb[0].mxu0 %v6640
    %v6873 = vpop.f32.mrb[0].mxu0
    %v6874 = vadd.f32 %v6785, %v6873
    %v6875 = vpop.f32.mrb[0].mxu0
    %v6876 = vadd.f32 %v6787, %v6875
    %6877 = vmatprep.mubr.f32.mxu0 %v6677
    %6878 = vmatmul.mubr.f32.gmra.mrb[0].mxu0 %v6676
    %v6879 = vpop.f32.mrb[0].mxu0
    %v6880 = vadd.f32 %v6791, %v6879
    %v6881 = vpop.f32.mrb[0].mxu0
    %v6882 = vadd.f32 %v6793, %v6881
    %6883 = vmatprep.mubr.f32.mxu0 %v6695
    %6884 = vmatmul.mubr.f32.gmra.mrb[0].mxu0 %v6693
    %v6885 = vpop.f32.mrb[0].mxu0
    %v6886 = vadd.f32 %v6797, %v6885
    %v6887 = vpop.f32.mrb[0].mxu0
    %v6888 = vadd.f32 %v6799, %v6887
    %6889 = vdwg.mxu0
    %6890 = vmatprep.subr.mxu0 %v6317
    %6891 = vmatpush1.msra.mxu0 %v6316
    %6892 = vmatprep.subr.mxu0 %v6321
    %6893 = vmatpush1.msra.mxu0 %v6320
    %6894 = vmatprep.subr.mxu0 %v6325
    %6895 = vmatpush1.msra.mxu0 %v6324
    %6896 = vmatprep.subr.mxu0 %v6329
    %6897 = vmatpush1.msra.mxu0 %v6328
    %6898 = vmatprep.subr.mxu0 %v6333
    %6899 = vmatpush1.msra.mxu0 %v6332
    %6900 = vmatprep.subr.mxu0 %v6337
    %6901 = vmatpush1.msra.mxu0 %v6336
    %6902 = vmatprep.subr.mxu0 %v6341
    %6903 = vmatpush1.msra.mxu0 %v6340
    %6904 = vmatprep.subr.mxu0 %v6345
    %6905 = vmatpush1.msra.mxu0 %v6344
    %6906 = vmatprep.subr.mxu0 %v6349
    %6907 = vmatpush1.msra.mxu0 %v6348
    %6908 = vmatprep.subr.mxu0 %v6353
    %6909 = vmatpush1.msra.mxu0 %v6352
    %6910 = vmatprep.subr.mxu0 %v6357
    %6911 = vmatpush1.msra.mxu0 %v6356
    %6912 = vmatprep.subr.mxu0 %v6361
    %6913 = vmatpush1.msra.mxu0 %v6360
    %6914 = vmatprep.subr.mxu0 %v6365
    %6915 = vmatpush1.msra.mxu0 %v6364
    %6916 = vmatprep.subr.mxu0 %v6369
    %6917 = vmatpush1.msra.mxu0 %v6368
    %6918 = vmatprep.subr.mxu0 %v6373
    %6919 = vmatpush1.msra.mxu0 %v6372
    %6920 = vmatprep.subr.mxu0 %v6377
    %6921 = vmatpush1.msra.mxu0 %v6376
    %6922 = vmatprep.subr.mxu0 %v6381
    %6923 = vmatpush1.msra.mxu0 %v6380
    %6924 = vmatprep.subr.mxu0 %v6385
    %6925 = vmatpush1.msra.mxu0 %v6384
    %6926 = vmatprep.subr.mxu0 %v6389
    %6927 = vmatpush1.msra.mxu0 %v6388
    %6928 = vmatprep.subr.mxu0 %v6393
    %6929 = vmatpush1.msra.mxu0 %v6392
    %6930 = vmatprep.subr.mxu0 %v6397
    %6931 = vmatpush1.msra.mxu0 %v6396
    %6932 = vmatprep.subr.mxu0 %v6401
    %6933 = vmatpush1.msra.mxu0 %v6400
    %6934 = vmatprep.subr.mxu0 %v6405
    %6935 = vmatpush1.msra.mxu0 %v6404
    %6936 = vmatprep.subr.mxu0 %v6409
    %6937 = vmatpush1.msra.mxu0 %v6408
    %6938 = vmatprep.subr.mxu0 %v6413
    %6939 = vmatpush1.msra.mxu0 %v6412
    %6940 = vmatprep.subr.mxu0 %v6417
    %6941 = vmatpush1.msra.mxu0 %v6416
    %6942 = vmatprep.subr.mxu0 %v6421
    %6943 = vmatpush1.msra.mxu0 %v6420
    %6944 = vmatprep.subr.mxu0 %v6425
    %6945 = vmatpush1.msra.mxu0 %v6424
    %6946 = vmatprep.subr.mxu0 %v6429
    %6947 = vmatpush1.msra.mxu0 %v6428
    %6948 = vmatprep.subr.mxu0 %v6433
    %6949 = vmatpush1.msra.mxu0 %v6432
    %6950 = vmatprep.subr.mxu0 %v6437
    %6951 = vmatpush1.msra.mxu0 %v6436
    %6952 = vmatprep.subr.mxu0 %v6441
    %6953 = vmatpush1.msra.mxu0 %v6440
    %6954 = vmatprep.mubr.f32.mxu0 %v6603
    %6955 = vmatmul.mubr.f32.gmra.mrb[0].mxu0 %v6602
    %v6956 = vpop.f32.mrb[0].mxu0
    %v6957 = vadd.f32 0.0, %v6956
    %v6958 = vpop.f32.mrb[0].mxu0
    %v6959 = vadd.f32 0.0, %v6958
    %6960 = vmatprep.mubr.f32.mxu0 %v6639
    %6961 = vmatmul.mubr.f32.gmra.mrb[0].mxu0 %v6638
    %v6962 = vpop.f32.mrb[0].mxu0
    %v6963 = vadd.f32 0.0, %v6962
    %v6964 = vpop.f32.mrb[0].mxu0
    %v6965 = vadd.f32 0.0, %v6964
    %6966 = vmatprep.mubr.f32.mxu0 %v6675
    %6967 = vmatmul.mubr.f32.gmra.mrb[0].mxu0 %v6674
    %v6968 = vpop.f32.mrb[0].mxu0
    %v6969 = vadd.f32 0.0, %v6968
    %v6970 = vpop.f32.mrb[0].mxu0
    %v6971 = vadd.f32 0.0, %v6970
    %6972 = vmatprep.mubr.f32.mxu0 %v6694
    %6973 = vmatmul.mubr.f32.gmra.mrb[0].mxu0 %v6686
    %v6974 = vpop.f32.mrb[0].mxu0
    %v6975 = vadd.f32 0.0, %v6974
    %v6976 = vpop.f32.mrb[0].mxu0
    %v6977 = vadd.f32 0.0, %v6976
    %6978 = vdwg.mxu0
    %6979 = vmatprep.subr.mxu0 %v6445
    %6980 = vmatpush1.msra.mxu0 %v6444
    %6981 = vmatprep.subr.mxu0 %v6449
    %6982 = vmatpush1.msra.mxu0 %v6448
    %6983 = vmatprep.subr.mxu0 %v6453
    %6984 = vmatpush1.msra.mxu0 %v6452
    %6985 = vmatprep.subr.mxu0 %v6457
    %6986 = vmatpush1.msra.mxu0 %v6456
    %6987 = vmatprep.subr.mxu0 %v6461
    %6988 = vmatpush1.msra.mxu0 %v6460
    %6989 = vmatprep.subr.mxu0 %v6465
    %6990 = vmatpush1.msra.mxu0 %v6464
    %6991 = vmatprep.subr.mxu0 %v6469
    %6992 = vmatpush1.msra.mxu0 %v6468
    %6993 = vmatprep.subr.mxu0 %v6473
    %6994 = vmatpush1.msra.mxu0 %v6472
    %6995 = vmatprep.subr.mxu0 %v6477
    %6996 = vmatpush1.msra.mxu0 %v6476
    %6997 = vmatprep.subr.mxu0 %v6481
    %6998 = vmatpush1.msra.mxu0 %v6480
    %6999 = vmatprep.subr.mxu0 %v6485
    %7000 = vmatpush1.msra.mxu0 %v6484
    %7001 = vmatprep.subr.mxu0 %v6489
    %7002 = vmatpush1.msra.mxu0 %v6488
    %7003 = vmatprep.subr.mxu0 %v6493
    %7004 = vmatpush1.msra.mxu0 %v6492
    %7005 = vmatprep.subr.mxu0 %v6497
    %7006 = vmatpush1.msra.mxu0 %v6496
    %7007 = vmatprep.subr.mxu0 %v6501
    %7008 = vmatpush1.msra.mxu0 %v6500
    %7009 = vmatprep.subr.mxu0 %v6505
    %7010 = vmatpush1.msra.mxu0 %v6504
    %7011 = vmatprep.subr.mxu0 %v6509
    %7012 = vmatpush1.msra.mxu0 %v6508
    %7013 = vmatprep.subr.mxu0 %v6513
    %7014 = vmatpush1.msra.mxu0 %v6512
    %7015 = vmatprep.subr.mxu0 %v6517
    %7016 = vmatpush1.msra.mxu0 %v6516
    %7017 = vmatprep.subr.mxu0 %v6521
    %7018 = vmatpush1.msra.mxu0 %v6520
    %7019 = vmatprep.subr.mxu0 %v6525
    %7020 = vmatpush1.msra.mxu0 %v6524
    %7021 = vmatprep.subr.mxu0 %v6529
    %7022 = vmatpush1.msra.mxu0 %v6528
    %7023 = vmatprep.subr.mxu0 %v6533
    %7024 = vmatpush1.msra.mxu0 %v6532
    %7025 = vmatprep.subr.mxu0 %v6537
    %7026 = vmatpush1.msra.mxu0 %v6536
    %7027 = vmatprep.subr.mxu0 %v6541
    %7028 = vmatpush1.msra.mxu0 %v6540
    %7029 = vmatprep.subr.mxu0 %v6545
    %7030 = vmatpush1.msra.mxu0 %v6544
    %7031 = vmatprep.subr.mxu0 %v6549
    %7032 = vmatpush1.msra.mxu0 %v6548
    %7033 = vmatprep.subr.mxu0 %v6553
    %7034 = vmatpush1.msra.mxu0 %v6552
    %7035 = vmatprep.subr.mxu0 %v6557
    %7036 = vmatpush1.msra.mxu0 %v6556
    %7037 = vmatprep.subr.mxu0 %v6561
    %7038 = vmatpush1.msra.mxu0 %v6560
    %7039 = vmatprep.subr.mxu0 %v6565
    %7040 = vmatpush1.msra.mxu0 %v6564
    %7041 = vmatprep.subr.mxu0 %v6569
    %7042 = vmatpush1.msra.mxu0 %v6568
    %7043 = vmatprep.mubr.f32.mxu0 %v6605
    %7044 = vmatmul.mubr.f32.gmra.mrb[0].mxu0 %v6604
    %v7045 = vpop.f32.mrb[0].mxu0
    %v7046 = vadd.f32 %v6957, %v7045
    %v7047 = vpop.f32.mrb[0].mxu0
    %v7048 = vadd.f32 %v6959, %v7047
    %7049 = vmatprep.mubr.f32.mxu0 %v6641
    %7050 = vmatmul.mubr.f32.gmra.mrb[0].mxu0 %v6640
    %v7051 = vpop.f32.mrb[0].mxu0
    %v7052 = vadd.f32 %v6963, %v7051
    %v7053 = vpop.f32.mrb[0].mxu0
    %v7054 = vadd.f32 %v6965, %v7053
    %7055 = vmatprep.mubr.f32.mxu0 %v6677
    %7056 = vmatmul.mubr.f32.gmra.mrb[0].mxu0 %v6676
    %v7057 = vpop.f32.mrb[0].mxu0
    %v7058 = vadd.f32 %v6969, %v7057
    %v7059 = vpop.f32.mrb[0].mxu0
    %v7060 = vadd.f32 %v6971, %v7059
    %7061 = vmatprep.mubr.f32.mxu0 %v6695
    %7062 = vmatmul.mubr.f32.gmra.mrb[0].mxu0 %v6693
    %v7063 = vpop.f32.mrb[0].mxu0
    %v7064 = vadd.f32 %v6975, %v7063
    %v7065 = vpop.f32.mrb[0].mxu0
    %v7066 = vadd.f32 %v6977, %v7065
    %7067 = vdwg.mxu0
    %v7068 = vcombine.low %v5723, %v5724
    %v7069 = vcombine.high %v5723, %v5724
    %v7070 = vcombine.low %v5725, %v5726
    %v7071 = vcombine.high %v5725, %v5726
    %v7073 = vunpack.c.l.s4 1983009808
    %v7074 = vunpack.c.0.s8 %v7073
    %v7075 = vlaneseq
    %v7076 = vshrl.u32 %v7075, 7
    %v7077 = vsub.s32 %v7074, %v7076
    %v7078 = vrot.slane %v7068, %v7077
    %v7080 = vunpack.c.l.s4 1983009808
    %v7081 = vunpack.c.0.s8 %v7080
    %v7082 = vlaneseq
    %v7083 = vshrl.u32 %v7082, 7
    %v7084 = vsub.s32 %v7081, %v7083
    %v7085 = vrot.slane %v7069, %v7084
    %v7087 = vunpack.c.l.s4 1983009808
    %v7088 = vunpack.c.0.s8 %v7087
    %v7089 = vlaneseq
    %v7090 = vshrl.u32 %v7089, 7
    %v7091 = vsub.s32 %v7088, %v7090
    %v7092 = vrot.slane %v7070, %v7091
    %v7094 = vunpack.c.l.s4 1983009808
    %v7095 = vunpack.c.0.s8 %v7094
    %v7096 = vlaneseq
    %v7097 = vshrl.u32 %v7096, 7
    %v7098 = vsub.s32 %v7095, %v7097
    %v7099 = vrot.slane %v7071, %v7098
    %v7100 = vcombine.low %v7078, %v7092
    %v7101 = vcombine.high %v7078, %v7092
    %v7102 = vcombine.low %v7085, %v7099
    %v7103 = vcombine.high %v7085, %v7099
    %v7104 = vcombine.low %v5759, %v5760
    %v7105 = vcombine.high %v5759, %v5760
    %v7106 = vcombine.low %v5761, %v5794
    %v7107 = vcombine.high %v5761, %v5794
    %v7109 = vunpack.c.l.s4 1983009808
    %v7110 = vunpack.c.0.s8 %v7109
    %v7111 = vlaneseq
    %v7112 = vshrl.u32 %v7111, 7
    %v7113 = vsub.s32 %v7110, %v7112
    %v7114 = vrot.slane %v7104, %v7113
    %v7116 = vunpack.c.l.s4 1983009808
    %v7117 = vunpack.c.0.s8 %v7116
    %v7118 = vlaneseq
    %v7119 = vshrl.u32 %v7118, 7
    %v7120 = vsub.s32 %v7117, %v7119
    %v7121 = vrot.slane %v7105, %v7120
    %v7123 = vunpack.c.l.s4 1983009808
    %v7124 = vunpack.c.0.s8 %v7123
    %v7125 = vlaneseq
    %v7126 = vshrl.u32 %v7125, 7
    %v7127 = vsub.s32 %v7124, %v7126
    %v7128 = vrot.slane %v7106, %v7127
    %v7130 = vunpack.c.l.s4 1983009808
    %v7131 = vunpack.c.0.s8 %v7130
    %v7132 = vlaneseq
    %v7133 = vshrl.u32 %v7132, 7
    %v7134 = vsub.s32 %v7131, %v7133
    %v7135 = vrot.slane %v7107, %v7134
    %v7136 = vcombine.low %v7114, %v7128
    %v7137 = vcombine.high %v7114, %v7128
    %v7138 = vcombine.low %v7121, %v7135
    %v7139 = vcombine.high %v7121, %v7135
    %v7140 = vcombine.low %v5795, %v5796
    %v7141 = vcombine.high %v5795, %v5796
    %v7142 = vcombine.low %v5797, %v5830
    %v7143 = vcombine.high %v5797, %v5830
    %v7145 = vunpack.c.l.s4 1983009808
    %v7146 = vunpack.c.0.s8 %v7145
    %v7147 = vlaneseq
    %v7148 = vshrl.u32 %v7147, 7
    %v7149 = vsub.s32 %v7146, %v7148
    %v7150 = vrot.slane %v7140, %v7149
    %v7152 = vunpack.c.l.s4 1983009808
    %v7153 = vunpack.c.0.s8 %v7152
    %v7154 = vlaneseq
    %v7155 = vshrl.u32 %v7154, 7
    %v7156 = vsub.s32 %v7153, %v7155
    %v7157 = vrot.slane %v7141, %v7156
    %v7159 = vunpack.c.l.s4 1983009808
    %v7160 = vunpack.c.0.s8 %v7159
    %v7161 = vlaneseq
    %v7162 = vshrl.u32 %v7161, 7
    %v7163 = vsub.s32 %v7160, %v7162
    %v7164 = vrot.slane %v7142, %v7163
    %v7166 = vunpack.c.l.s4 1983009808
    %v7167 = vunpack.c.0.s8 %v7166
    %v7168 = vlaneseq
    %v7169 = vshrl.u32 %v7168, 7
    %v7170 = vsub.s32 %v7167, %v7169
    %v7171 = vrot.slane %v7143, %v7170
    %v7172 = vcombine.low %v7150, %v7164
    %v7173 = vcombine.high %v7150, %v7164
    %v7174 = vcombine.low %v7157, %v7171
    %v7175 = vcombine.high %v7157, %v7171
    %v7176 = vcombine.low %v5831, %v5832
    %v7177 = vcombine.high %v5831, %v5832
    %v7179 = vunpack.c.l.s4 1983009808
    %v7180 = vunpack.c.0.s8 %v7179
    %v7181 = vlaneseq
    %v7182 = vshrl.u32 %v7181, 7
    %v7183 = vsub.s32 %v7180, %v7182
    %v7184 = vrot.slane %v7176, %v7183
    %v7186 = vunpack.c.l.s4 1983009808
    %v7187 = vunpack.c.0.s8 %v7186
    %v7188 = vlaneseq
    %v7189 = vshrl.u32 %v7188, 7
    %v7190 = vsub.s32 %v7187, %v7189
    %v7191 = vrot.slane %v7177, %v7190
    %v7192 = vcombine.high %v7184, %v7184
    %v7193 = vcombine.high %v7191, %v7191
    %7210 = vmatprep.subr.mxu0 %v5834
    %7211 = vmatpush1.msra.mxu0 %v5833
    %7212 = vmatprep.subr.mxu0 %v5838
    %7213 = vmatpush1.msra.mxu0 %v5837
    %7214 = vmatprep.subr.mxu0 %v5842
    %7215 = vmatpush1.msra.mxu0 %v5841
    %7216 = vmatprep.subr.mxu0 %v5846
    %7217 = vmatpush1.msra.mxu0 %v5845
    %7218 = vmatprep.subr.mxu0 %v5850
    %7219 = vmatpush1.msra.mxu0 %v5849
    %7220 = vmatprep.subr.mxu0 %v5854
    %7221 = vmatpush1.msra.mxu0 %v5853
    %7222 = vmatprep.subr.mxu0 %v5858
    %7223 = vmatpush1.msra.mxu0 %v5857
    %7224 = vmatprep.subr.mxu0 %v5862
    %7225 = vmatpush1.msra.mxu0 %v5861
    %7226 = vmatprep.subr.mxu0 %v5866
    %7227 = vmatpush1.msra.mxu0 %v5865
    %7228 = vmatprep.subr.mxu0 %v5870
    %7229 = vmatpush1.msra.mxu0 %v5869
    %7230 = vmatprep.subr.mxu0 %v5874
    %7231 = vmatpush1.msra.mxu0 %v5873
    %7232 = vmatprep.subr.mxu0 %v5878
    %7233 = vmatpush1.msra.mxu0 %v5877
    %7234 = vmatprep.subr.mxu0 %v5882
    %7235 = vmatpush1.msra.mxu0 %v5881
    %7236 = vmatprep.subr.mxu0 %v5886
    %7237 = vmatpush1.msra.mxu0 %v5885
    %7238 = vmatprep.subr.mxu0 %v5890
    %7239 = vmatpush1.msra.mxu0 %v5889
    %7240 = vmatprep.subr.mxu0 %v5894
    %7241 = vmatpush1.msra.mxu0 %v5893
    %7242 = vmatprep.subr.mxu0 %v5898
    %7243 = vmatpush1.msra.mxu0 %v5897
    %7244 = vmatprep.subr.mxu0 %v5902
    %7245 = vmatpush1.msra.mxu0 %v5901
    %7246 = vmatprep.subr.mxu0 %v5906
    %7247 = vmatpush1.msra.mxu0 %v5905
    %7248 = vmatprep.subr.mxu0 %v5910
    %7249 = vmatpush1.msra.mxu0 %v5909
    %7250 = vmatprep.subr.mxu0 %v5914
    %7251 = vmatpush1.msra.mxu0 %v5913
    %7252 = vmatprep.subr.mxu0 %v5918
    %7253 = vmatpush1.msra.mxu0 %v5917
    %7254 = vmatprep.subr.mxu0 %v5922
    %7255 = vmatpush1.msra.mxu0 %v5921
    %7256 = vmatprep.subr.mxu0 %v5926
    %7257 = vmatpush1.msra.mxu0 %v5925
    %7258 = vmatprep.subr.mxu0 %v5930
    %7259 = vmatpush1.msra.mxu0 %v5929
    %7260 = vmatprep.subr.mxu0 %v5934
    %7261 = vmatpush1.msra.mxu0 %v5933
    %7262 = vmatprep.subr.mxu0 %v5938
    %7263 = vmatpush1.msra.mxu0 %v5937
    %7264 = vmatprep.subr.mxu0 %v5942
    %7265 = vmatpush1.msra.mxu0 %v5941
    %7266 = vmatprep.subr.mxu0 %v5946
    %7267 = vmatpush1.msra.mxu0 %v5945
    %7268 = vmatprep.subr.mxu0 %v5950
    %7269 = vmatpush1.msra.mxu0 %v5949
    %7270 = vmatprep.subr.mxu0 %v5954
    %7271 = vmatpush1.msra.mxu0 %v5953
    %7272 = vmatprep.subr.mxu0 %v5958
    %7273 = vmatpush1.msra.mxu0 %v5957
    %7274 = vmatprep.mubr.f32.mxu0 %v7101
    %7275 = vmatmul.mubr.f32.gmra.mrb[0].mxu0 %v7100
    %v7276 = vpop.f32.mrb[0].mxu0
    %v7277 = vadd.f32 %v6868, %v7276
    %v7278 = vpop.f32.mrb[0].mxu0
    %v7279 = vadd.f32 %v6870, %v7278
    %7280 = vmatprep.mubr.f32.mxu0 %v7137
    %7281 = vmatmul.mubr.f32.gmra.mrb[0].mxu0 %v7136
    %v7282 = vpop.f32.mrb[0].mxu0
    %v7283 = vadd.f32 %v6874, %v7282
    %v7284 = vpop.f32.mrb[0].mxu0
    %v7285 = vadd.f32 %v6876, %v7284
    %7286 = vmatprep.mubr.f32.mxu0 %v7173
    %7287 = vmatmul.mubr.f32.gmra.mrb[0].mxu0 %v7172
    %v7288 = vpop.f32.mrb[0].mxu0
    %v7289 = vadd.f32 %v6880, %v7288
    %v7290 = vpop.f32.mrb[0].mxu0
    %v7291 = vadd.f32 %v6882, %v7290
    %7292 = vmatprep.mubr.f32.mxu0 %v7192
    %7293 = vmatmul.mubr.f32.gmra.mrb[0].mxu0 %v7184
    %v7294 = vpop.f32.mrb[0].mxu0
    %v7295 = vadd.f32 %v6886, %v7294
    %v7296 = vpop.f32.mrb[0].mxu0
    %v7297 = vadd.f32 %v6888, %v7296
    %7298 = vdwg.mxu0
    %7299 = vmatprep.subr.mxu0 %v5962
    %7300 = vmatpush1.msra.mxu0 %v5961
    %7301 = vmatprep.subr.mxu0 %v5966
    %7302 = vmatpush1.msra.mxu0 %v5965
    %7303 = vmatprep.subr.mxu0 %v5970
    %7304 = vmatpush1.msra.mxu0 %v5969
    %7305 = vmatprep.subr.mxu0 %v5974
    %7306 = vmatpush1.msra.mxu0 %v5973
    %7307 = vmatprep.subr.mxu0 %v5978
    %7308 = vmatpush1.msra.mxu0 %v5977
    %7309 = vmatprep.subr.mxu0 %v5982
    %7310 = vmatpush1.msra.mxu0 %v5981
    %7311 = vmatprep.subr.mxu0 %v5986
    %7312 = vmatpush1.msra.mxu0 %v5985
    %7313 = vmatprep.subr.mxu0 %v5990
    %7314 = vmatpush1.msra.mxu0 %v5989
    %7315 = vmatprep.subr.mxu0 %v5994
    %7316 = vmatpush1.msra.mxu0 %v5993
    %7317 = vmatprep.subr.mxu0 %v5998
    %7318 = vmatpush1.msra.mxu0 %v5997
    %7319 = vmatprep.subr.mxu0 %v6002
    %7320 = vmatpush1.msra.mxu0 %v6001
    %7321 = vmatprep.subr.mxu0 %v6006
    %7322 = vmatpush1.msra.mxu0 %v6005
    %7323 = vmatprep.subr.mxu0 %v6010
    %7324 = vmatpush1.msra.mxu0 %v6009
    %7325 = vmatprep.subr.mxu0 %v6014
    %7326 = vmatpush1.msra.mxu0 %v6013
    %7327 = vmatprep.subr.mxu0 %v6018
    %7328 = vmatpush1.msra.mxu0 %v6017
    %7329 = vmatprep.subr.mxu0 %v6022
    %7330 = vmatpush1.msra.mxu0 %v6021
    %7331 = vmatprep.subr.mxu0 %v6026
    %7332 = vmatpush1.msra.mxu0 %v6025
    %7333 = vmatprep.subr.mxu0 %v6030
    %7334 = vmatpush1.msra.mxu0 %v6029
    %7335 = vmatprep.subr.mxu0 %v6034
    %7336 = vmatpush1.msra.mxu0 %v6033
    %7337 = vmatprep.subr.mxu0 %v6038
    %7338 = vmatpush1.msra.mxu0 %v6037
    %7339 = vmatprep.subr.mxu0 %v6042
    %7340 = vmatpush1.msra.mxu0 %v6041
    %7341 = vmatprep.subr.mxu0 %v6046
    %7342 = vmatpush1.msra.mxu0 %v6045
    %7343 = vmatprep.subr.mxu0 %v6050
    %7344 = vmatpush1.msra.mxu0 %v6049
    %7345 = vmatprep.subr.mxu0 %v6054
    %7346 = vmatpush1.msra.mxu0 %v6053
    %7347 = vmatprep.subr.mxu0 %v6058
    %7348 = vmatpush1.msra.mxu0 %v6057
    %7349 = vmatprep.subr.mxu0 %v6062
    %7350 = vmatpush1.msra.mxu0 %v6061
    %7351 = vmatprep.subr.mxu0 %v6066
    %7352 = vmatpush1.msra.mxu0 %v6065
    %7353 = vmatprep.subr.mxu0 %v6070
    %7354 = vmatpush1.msra.mxu0 %v6069
    %7355 = vmatprep.subr.mxu0 %v6074
    %7356 = vmatpush1.msra.mxu0 %v6073
    %7357 = vmatprep.subr.mxu0 %v6078
    %7358 = vmatpush1.msra.mxu0 %v6077
    %7359 = vmatprep.subr.mxu0 %v6082
    %7360 = vmatpush1.msra.mxu0 %v6081
    %7361 = vmatprep.subr.mxu0 %v6086
    %7362 = vmatpush1.msra.mxu0 %v6085
    %7363 = vmatprep.mubr.f32.mxu0 %v7103
    %7364 = vmatmul.mubr.f32.gmra.mrb[0].mxu0 %v7102
    %v7365 = vpop.f32.mrb[0].mxu0
    %v7366 = vadd.f32 %v7277, %v7365
    %v7367 = vpop.f32.mrb[0].mxu0
    %v7368 = vadd.f32 %v7279, %v7367
    %7369 = vmatprep.mubr.f32.mxu0 %v7139
    %7370 = vmatmul.mubr.f32.gmra.mrb[0].mxu0 %v7138
    %v7371 = vpop.f32.mrb[0].mxu0
    %v7372 = vadd.f32 %v7283, %v7371
    %v7373 = vpop.f32.mrb[0].mxu0
    %v7374 = vadd.f32 %v7285, %v7373
    %7375 = vmatprep.mubr.f32.mxu0 %v7175
    %7376 = vmatmul.mubr.f32.gmra.mrb[0].mxu0 %v7174
    %v7377 = vpop.f32.mrb[0].mxu0
    %v7378 = vadd.f32 %v7289, %v7377
    %v7379 = vpop.f32.mrb[0].mxu0
    %v7380 = vadd.f32 %v7291, %v7379
    %7381 = vmatprep.mubr.f32.mxu0 %v7193
    %7382 = vmatmul.mubr.f32.gmra.mrb[0].mxu0 %v7191
    %v7383 = vpop.f32.mrb[0].mxu0
    %v7384 = vadd.f32 %v7295, %v7383
    %v7385 = vpop.f32.mrb[0].mxu0
    %v7386 = vadd.f32 %v7297, %v7385
    %7387 = vdwg.mxu0
    %7388 = vmatprep.subr.mxu0 %v5836
    %7389 = vmatpush1.msra.mxu0 %v5835
    %7390 = vmatprep.subr.mxu0 %v5840
    %7391 = vmatpush1.msra.mxu0 %v5839
    %7392 = vmatprep.subr.mxu0 %v5844
    %7393 = vmatpush1.msra.mxu0 %v5843
    %7394 = vmatprep.subr.mxu0 %v5848
    %7395 = vmatpush1.msra.mxu0 %v5847
    %7396 = vmatprep.subr.mxu0 %v5852
    %7397 = vmatpush1.msra.mxu0 %v5851
    %7398 = vmatprep.subr.mxu0 %v5856
    %7399 = vmatpush1.msra.mxu0 %v5855
    %7400 = vmatprep.subr.mxu0 %v5860
    %7401 = vmatpush1.msra.mxu0 %v5859
    %7402 = vmatprep.subr.mxu0 %v5864
    %7403 = vmatpush1.msra.mxu0 %v5863
    %7404 = vmatprep.subr.mxu0 %v5868
    %7405 = vmatpush1.msra.mxu0 %v5867
    %7406 = vmatprep.subr.mxu0 %v5872
    %7407 = vmatpush1.msra.mxu0 %v5871
    %7408 = vmatprep.subr.mxu0 %v5876
    %7409 = vmatpush1.msra.mxu0 %v5875
    %7410 = vmatprep.subr.mxu0 %v5880
    %7411 = vmatpush1.msra.mxu0 %v5879
    %7412 = vmatprep.subr.mxu0 %v5884
    %7413 = vmatpush1.msra.mxu0 %v5883
    %7414 = vmatprep.subr.mxu0 %v5888
    %7415 = vmatpush1.msra.mxu0 %v5887
    %7416 = vmatprep.subr.mxu0 %v5892
    %7417 = vmatpush1.msra.mxu0 %v5891
    %7418 = vmatprep.subr.mxu0 %v5896
    %7419 = vmatpush1.msra.mxu0 %v5895
    %7420 = vmatprep.subr.mxu0 %v5900
    %7421 = vmatpush1.msra.mxu0 %v5899
    %7422 = vmatprep.subr.mxu0 %v5904
    %7423 = vmatpush1.msra.mxu0 %v5903
    %7424 = vmatprep.subr.mxu0 %v5908
    %7425 = vmatpush1.msra.mxu0 %v5907
    %7426 = vmatprep.subr.mxu0 %v5912
    %7427 = vmatpush1.msra.mxu0 %v5911
    %7428 = vmatprep.subr.mxu0 %v5916
    %7429 = vmatpush1.msra.mxu0 %v5915
    %7430 = vmatprep.subr.mxu0 %v5920
    %7431 = vmatpush1.msra.mxu0 %v5919
    %7432 = vmatprep.subr.mxu0 %v5924
    %7433 = vmatpush1.msra.mxu0 %v5923
    %7434 = vmatprep.subr.mxu0 %v5928
    %7435 = vmatpush1.msra.mxu0 %v5927
    %7436 = vmatprep.subr.mxu0 %v5932
    %7437 = vmatpush1.msra.mxu0 %v5931
    %7438 = vmatprep.subr.mxu0 %v5936
    %7439 = vmatpush1.msra.mxu0 %v5935
    %7440 = vmatprep.subr.mxu0 %v5940
    %7441 = vmatpush1.msra.mxu0 %v5939
    %7442 = vmatprep.subr.mxu0 %v5944
    %7443 = vmatpush1.msra.mxu0 %v5943
    %7444 = vmatprep.subr.mxu0 %v5948
    %7445 = vmatpush1.msra.mxu0 %v5947
    %7446 = vmatprep.subr.mxu0 %v5952
    %7447 = vmatpush1.msra.mxu0 %v5951
    %7448 = vmatprep.subr.mxu0 %v5956
    %7449 = vmatpush1.msra.mxu0 %v5955
    %7450 = vmatprep.subr.mxu0 %v5960
    %7451 = vmatpush1.msra.mxu0 %v5959
    %7452 = vmatprep.mubr.f32.mxu0 %v7101
    %7453 = vmatmul.mubr.f32.gmra.mrb[0].mxu0 %v7100
    %v7454 = vpop.f32.mrb[0].mxu0
    %v7455 = vadd.f32 %v7046, %v7454
    %v7456 = vpop.f32.mrb[0].mxu0
    %v7457 = vadd.f32 %v7048, %v7456
    %7458 = vmatprep.mubr.f32.mxu0 %v7137
    %7459 = vmatmul.mubr.f32.gmra.mrb[0].mxu0 %v7136
    %v7460 = vpop.f32.mrb[0].mxu0
    %v7461 = vadd.f32 %v7052, %v7460
    %v7462 = vpop.f32.mrb[0].mxu0
    %v7463 = vadd.f32 %v7054, %v7462
    %7464 = vmatprep.mubr.f32.mxu0 %v7173
    %7465 = vmatmul.mubr.f32.gmra.mrb[0].mxu0 %v7172
    %v7466 = vpop.f32.mrb[0].mxu0
    %v7467 = vadd.f32 %v7058, %v7466
    %v7468 = vpop.f32.mrb[0].mxu0
    %v7469 = vadd.f32 %v7060, %v7468
    %7470 = vmatprep.mubr.f32.mxu0 %v7192
    %7471 = vmatmul.mubr.f32.gmra.mrb[0].mxu0 %v7184
    %v7472 = vpop.f32.mrb[0].mxu0
    %v7473 = vadd.f32 %v7064, %v7472
    %v7474 = vpop.f32.mrb[0].mxu0
    %v7475 = vadd.f32 %v7066, %v7474
    %7476 = vdwg.mxu0
    %7477 = vmatprep.subr.mxu0 %v5964
    %7478 = vmatpush1.msra.mxu0 %v5963
    %7479 = vmatprep.subr.mxu0 %v5968
    %7480 = vmatpush1.msra.mxu0 %v5967
    %7481 = vmatprep.subr.mxu0 %v5972
    %7482 = vmatpush1.msra.mxu0 %v5971
    %7483 = vmatprep.subr.mxu0 %v5976
    %7484 = vmatpush1.msra.mxu0 %v5975
    %7485 = vmatprep.subr.mxu0 %v5980
    %7486 = vmatpush1.msra.mxu0 %v5979
    %7487 = vmatprep.subr.mxu0 %v5984
    %7488 = vmatpush1.msra.mxu0 %v5983
    %7489 = vmatprep.subr.mxu0 %v5988
    %7490 = vmatpush1.msra.mxu0 %v5987
    %7491 = vmatprep.subr.mxu0 %v5992
    %7492 = vmatpush1.msra.mxu0 %v5991
    %7493 = vmatprep.subr.mxu0 %v5996
    %7494 = vmatpush1.msra.mxu0 %v5995
    %7495 = vmatprep.subr.mxu0 %v6000
    %7496 = vmatpush1.msra.mxu0 %v5999
    %7497 = vmatprep.subr.mxu0 %v6004
    %7498 = vmatpush1.msra.mxu0 %v6003
    %7499 = vmatprep.subr.mxu0 %v6008
    %7500 = vmatpush1.msra.mxu0 %v6007
    %7501 = vmatprep.subr.mxu0 %v6012
    %7502 = vmatpush1.msra.mxu0 %v6011
    %7503 = vmatprep.subr.mxu0 %v6016
    %7504 = vmatpush1.msra.mxu0 %v6015
    %7505 = vmatprep.subr.mxu0 %v6020
    %7506 = vmatpush1.msra.mxu0 %v6019
    %7507 = vmatprep.subr.mxu0 %v6024
    %7508 = vmatpush1.msra.mxu0 %v6023
    %7509 = vmatprep.subr.mxu0 %v6028
    %7510 = vmatpush1.msra.mxu0 %v6027
    %7511 = vmatprep.subr.mxu0 %v6032
    %7512 = vmatpush1.msra.mxu0 %v6031
    %7513 = vmatprep.subr.mxu0 %v6036
    %7514 = vmatpush1.msra.mxu0 %v6035
    %7515 = vmatprep.subr.mxu0 %v6040
    %7516 = vmatpush1.msra.mxu0 %v6039
    %7517 = vmatprep.subr.mxu0 %v6044
    %7518 = vmatpush1.msra.mxu0 %v6043
    %7519 = vmatprep.subr.mxu0 %v6048
    %7520 = vmatpush1.msra.mxu0 %v6047
    %7521 = vmatprep.subr.mxu0 %v6052
    %7522 = vmatpush1.msra.mxu0 %v6051
    %7523 = vmatprep.subr.mxu0 %v6056
    %7524 = vmatpush1.msra.mxu0 %v6055
    %7525 = vmatprep.subr.mxu0 %v6060
    %7526 = vmatpush1.msra.mxu0 %v6059
    %7527 = vmatprep.subr.mxu0 %v6064
    %7528 = vmatpush1.msra.mxu0 %v6063
    %7529 = vmatprep.subr.mxu0 %v6068
    %7530 = vmatpush1.msra.mxu0 %v6067
    %7531 = vmatprep.subr.mxu0 %v6072
    %7532 = vmatpush1.msra.mxu0 %v6071
    %7533 = vmatprep.subr.mxu0 %v6076
    %7534 = vmatpush1.msra.mxu0 %v6075
    %7535 = vmatprep.subr.mxu0 %v6080
    %7536 = vmatpush1.msra.mxu0 %v6079
    %7537 = vmatprep.subr.mxu0 %v6084
    %7538 = vmatpush1.msra.mxu0 %v6083
    %7539 = vmatprep.subr.mxu0 %v6088
    %7540 = vmatpush1.msra.mxu0 %v6087
    %7541 = vmatprep.mubr.f32.mxu0 %v7103
    %7542 = vmatmul.mubr.f32.gmra.mrb[0].mxu0 %v7102
    %v7543 = vpop.f32.mrb[0].mxu0
    %v7544 = vadd.f32 %v7455, %v7543
    %v7545 = vpop.f32.mrb[0].mxu0
    %v7546 = vadd.f32 %v7457, %v7545
    %7547 = vmatprep.mubr.f32.mxu0 %v7139
    %7548 = vmatmul.mubr.f32.gmra.mrb[0].mxu0 %v7138
    %v7549 = vpop.f32.mrb[0].mxu0
    %v7550 = vadd.f32 %v7461, %v7549
    %v7551 = vpop.f32.mrb[0].mxu0
    %v7552 = vadd.f32 %v7463, %v7551
    %7553 = vmatprep.mubr.f32.mxu0 %v7175
    %7554 = vmatmul.mubr.f32.gmra.mrb[0].mxu0 %v7174
    %v7555 = vpop.f32.mrb[0].mxu0
    %v7556 = vadd.f32 %v7467, %v7555
    %v7557 = vpop.f32.mrb[0].mxu0
    %v7558 = vadd.f32 %v7469, %v7557
    %7559 = vmatprep.mubr.f32.mxu0 %v7193
    %7560 = vmatmul.mubr.f32.gmra.mrb[0].mxu0 %v7191
    %v7561 = vpop.f32.mrb[0].mxu0
    %v7562 = vadd.f32 %v7473, %v7561
    %v7563 = vpop.f32.mrb[0].mxu0
    %v7564 = vadd.f32 %v7475, %v7563
    %7565 = vdwg.mxu0
    %v7566 = vld [vmem:[#allocation2] sm:$0xfc]
    %v7567 = vld [vmem:[#allocation2 + $0x8] sm:$0xfc]
    %v7568 = vld [vmem:[#allocation2 + $0x10] sm:$0xfc]
    %v7569 = vld [vmem:[#allocation2 + $0x18] sm:$0xfc]
    %v7570 = vld [vmem:[#allocation2 + $0x20] sm:$0xff]
    %v7571 = vld [vmem:[#allocation2 + $0x28] sm:$0xff]
    %v7572 = vld [vmem:[#allocation2 + $0x30] sm:$0xff]
    %v7573 = vld [vmem:[#allocation2 + $0x38] sm:$0xff]
    %v7574 = vld [vmem:[#allocation2 + $0x40] sm:$0xfc]
    %v7575 = vld [vmem:[#allocation2 + $0x48] sm:$0xfc]
    %v7576 = vld [vmem:[#allocation2 + $0x50] sm:$0xfc]
    %v7577 = vld [vmem:[#allocation2 + $0x58] sm:$0xfc]
    %v7578 = vld [vmem:[#allocation2 + $0x60] sm:$0xff]
    %v7579 = vld [vmem:[#allocation2 + $0x68] sm:$0xff]
    %v7580 = vld [vmem:[#allocation2 + $0x70] sm:$0xff]
    %v7581 = vld [vmem:[#allocation2 + $0x78] sm:$0xff]
    %v7598 = vcombine.low %v7566, %v7567
    %v7599 = vcombine.high %v7566, %v7567
    %v7600 = vcombine.low %v7568, %v7569
    %v7601 = vcombine.high %v7568, %v7569
    %v7603 = vunpack.c.l.s4 1983009808
    %v7604 = vunpack.c.0.s8 %v7603
    %v7605 = vlaneseq
    %v7606 = vshrl.u32 %v7605, 7
    %v7607 = vsub.s32 %v7604, %v7606
    %v7608 = vrot.slane %v7598, %v7607
    %v7610 = vunpack.c.l.s4 1983009808
    %v7611 = vunpack.c.0.s8 %v7610
    %v7612 = vlaneseq
    %v7613 = vshrl.u32 %v7612, 7
    %v7614 = vsub.s32 %v7611, %v7613
    %v7615 = vrot.slane %v7599, %v7614
    %v7617 = vunpack.c.l.s4 1983009808
    %v7618 = vunpack.c.0.s8 %v7617
    %v7619 = vlaneseq
    %v7620 = vshrl.u32 %v7619, 7
    %v7621 = vsub.s32 %v7618, %v7620
    %v7622 = vrot.slane %v7600, %v7621
    %v7624 = vunpack.c.l.s4 1983009808
    %v7625 = vunpack.c.0.s8 %v7624
    %v7626 = vlaneseq
    %v7627 = vshrl.u32 %v7626, 7
    %v7628 = vsub.s32 %v7625, %v7627
    %v7629 = vrot.slane %v7601, %v7628
    %v7630 = vcombine.high %v7608, %v7622
    %v7631 = vcombine.low %v7615, %v7629
    %v7632 = vcombine.high %v7615, %v7629
    %v7633 = vcombine.low %v7570, %v7571
    %v7634 = vcombine.high %v7570, %v7571
    %v7635 = vcombine.low %v7572, %v7573
    %v7636 = vcombine.high %v7572, %v7573
    %v7638 = vunpack.c.l.s4 1983009808
    %v7639 = vunpack.c.0.s8 %v7638
    %v7640 = vlaneseq
    %v7641 = vshrl.u32 %v7640, 7
    %v7642 = vsub.s32 %v7639, %v7641
    %v7643 = vrot.slane %v7633, %v7642
    %v7645 = vunpack.c.l.s4 1983009808
    %v7646 = vunpack.c.0.s8 %v7645
    %v7647 = vlaneseq
    %v7648 = vshrl.u32 %v7647, 7
    %v7649 = vsub.s32 %v7646, %v7648
    %v7650 = vrot.slane %v7634, %v7649
    %v7652 = vunpack.c.l.s4 1983009808
    %v7653 = vunpack.c.0.s8 %v7652
    %v7654 = vlaneseq
    %v7655 = vshrl.u32 %v7654, 7
    %v7656 = vsub.s32 %v7653, %v7655
    %v7657 = vrot.slane %v7635, %v7656
    %v7659 = vunpack.c.l.s4 1983009808
    %v7660 = vunpack.c.0.s8 %v7659
    %v7661 = vlaneseq
    %v7662 = vshrl.u32 %v7661, 7
    %v7663 = vsub.s32 %v7660, %v7662
    %v7664 = vrot.slane %v7636, %v7663
    %v7665 = vcombine.low %v7643, %v7657
    %v7666 = vcombine.high %v7643, %v7657
    %v7667 = vcombine.low %v7650, %v7664
    %v7668 = vcombine.high %v7650, %v7664
    %v7669 = vcombine.low %v7574, %v7575
    %v7670 = vcombine.high %v7574, %v7575
    %v7671 = vcombine.low %v7576, %v7577
    %v7672 = vcombine.high %v7576, %v7577
    %v7674 = vunpack.c.l.s4 1983009808
    %v7675 = vunpack.c.0.s8 %v7674
    %v7676 = vlaneseq
    %v7677 = vshrl.u32 %v7676, 7
    %v7678 = vsub.s32 %v7675, %v7677
    %v7679 = vrot.slane %v7669, %v7678
    %v7681 = vunpack.c.l.s4 1983009808
    %v7682 = vunpack.c.0.s8 %v7681
    %v7683 = vlaneseq
    %v7684 = vshrl.u32 %v7683, 7
    %v7685 = vsub.s32 %v7682, %v7684
    %v7686 = vrot.slane %v7670, %v7685
    %v7688 = vunpack.c.l.s4 1983009808
    %v7689 = vunpack.c.0.s8 %v7688
    %v7690 = vlaneseq
    %v7691 = vshrl.u32 %v7690, 7
    %v7692 = vsub.s32 %v7689, %v7691
    %v7693 = vrot.slane %v7671, %v7692
    %v7695 = vunpack.c.l.s4 1983009808
    %v7696 = vunpack.c.0.s8 %v7695
    %v7697 = vlaneseq
    %v7698 = vshrl.u32 %v7697, 7
    %v7699 = vsub.s32 %v7696, %v7698
    %v7700 = vrot.slane %v7672, %v7699
    %v7701 = vcombine.high %v7679, %v7693
    %v7702 = vcombine.low %v7686, %v7700
    %v7703 = vcombine.high %v7686, %v7700
    %v7704 = vcombine.low %v7578, %v7579
    %v7705 = vcombine.high %v7578, %v7579
    %v7706 = vcombine.low %v7580, %v7581
    %v7707 = vcombine.high %v7580, %v7581
    %v7709 = vunpack.c.l.s4 1983009808
    %v7710 = vunpack.c.0.s8 %v7709
    %v7711 = vlaneseq
    %v7712 = vshrl.u32 %v7711, 7
    %v7713 = vsub.s32 %v7710, %v7712
    %v7714 = vrot.slane %v7704, %v7713
    %v7716 = vunpack.c.l.s4 1983009808
    %v7717 = vunpack.c.0.s8 %v7716
    %v7718 = vlaneseq
    %v7719 = vshrl.u32 %v7718, 7
    %v7720 = vsub.s32 %v7717, %v7719
    %v7721 = vrot.slane %v7705, %v7720
    %v7723 = vunpack.c.l.s4 1983009808
    %v7724 = vunpack.c.0.s8 %v7723
    %v7725 = vlaneseq
    %v7726 = vshrl.u32 %v7725, 7
    %v7727 = vsub.s32 %v7724, %v7726
    %v7728 = vrot.slane %v7706, %v7727
    %v7730 = vunpack.c.l.s4 1983009808
    %v7731 = vunpack.c.0.s8 %v7730
    %v7732 = vlaneseq
    %v7733 = vshrl.u32 %v7732, 7
    %v7734 = vsub.s32 %v7731, %v7733
    %v7735 = vrot.slane %v7707, %v7734
    %v7736 = vcombine.low %v7714, %v7728
    %v7737 = vcombine.high %v7714, %v7728
    %v7738 = vcombine.low %v7721, %v7735
    %v7739 = vcombine.high %v7721, %v7735
    %s7740 = scalar_lea.vmem [#allocation8], 4096
    %v7741 = vld [vmem:[%s7740] sm:$0xff]
    %v7742 = vld [vmem:[%s7740 + $0x8] sm:$0xff]
    %v7743 = vld [vmem:[%s7740 + $0x10] sm:$0xff]
    %v7744 = vld [vmem:[%s7740 + $0x18] sm:$0xff]
    %v7745 = vld [vmem:[%s7740 + $0x20] sm:$0xff]
    %v7746 = vld [vmem:[%s7740 + $0x28] sm:$0xff]
    %v7747 = vld [vmem:[%s7740 + $0x30] sm:$0xff]
    %v7748 = vld [vmem:[%s7740 + $0x38] sm:$0xff]
    %v7749 = vld [vmem:[%s7740 + $0x40] sm:$0xff]
    %v7750 = vld [vmem:[%s7740 + $0x48] sm:$0xff]
    %v7751 = vld [vmem:[%s7740 + $0x50] sm:$0xff]
    %v7752 = vld [vmem:[%s7740 + $0x58] sm:$0xff]
    %v7753 = vld [vmem:[%s7740 + $0x60] sm:$0xff]
    %v7754 = vld [vmem:[%s7740 + $0x68] sm:$0xff]
    %v7755 = vld [vmem:[%s7740 + $0x70] sm:$0xff]
    %v7756 = vld [vmem:[%s7740 + $0x78] sm:$0xff]
    %v7757 = vld [vmem:[%s7740 + $0x80] sm:$0xff]
    %v7758 = vld [vmem:[%s7740 + $0x88] sm:$0xff]
    %v7759 = vld [vmem:[%s7740 + $0x90] sm:$0xff]
    %v7760 = vld [vmem:[%s7740 + $0x98] sm:$0xff]
    %v7761 = vld [vmem:[%s7740 + $0xa0] sm:$0xff]
    %v7762 = vld [vmem:[%s7740 + $0xa8] sm:$0xff]
    %v7763 = vld [vmem:[%s7740 + $0xb0] sm:$0xff]
    %v7764 = vld [vmem:[%s7740 + $0xb8] sm:$0xff]
    %v7765 = vld [vmem:[%s7740 + $0xc0] sm:$0xff]
    %v7766 = vld [vmem:[%s7740 + $0xc8] sm:$0xff]
    %v7767 = vld [vmem:[%s7740 + $0xd0] sm:$0xff]
    %v7768 = vld [vmem:[%s7740 + $0xd8] sm:$0xff]
    %v7769 = vld [vmem:[%s7740 + $0xe0] sm:$0xff]
    %v7770 = vld [vmem:[%s7740 + $0xe8] sm:$0xff]
    %v7771 = vld [vmem:[%s7740 + $0xf0] sm:$0xff]
    %v7772 = vld [vmem:[%s7740 + $0xf8] sm:$0xff]
    %v7773 = vld [vmem:[%s7740 + $0x100] sm:$0xff]
    %v7774 = vld [vmem:[%s7740 + $0x108] sm:$0xff]
    %v7775 = vld [vmem:[%s7740 + $0x110] sm:$0xff]
    %v7776 = vld [vmem:[%s7740 + $0x118] sm:$0xff]
    %v7777 = vld [vmem:[%s7740 + $0x120] sm:$0xff]
    %v7778 = vld [vmem:[%s7740 + $0x128] sm:$0xff]
    %v7779 = vld [vmem:[%s7740 + $0x130] sm:$0xff]
    %v7780 = vld [vmem:[%s7740 + $0x138] sm:$0xff]
    %v7781 = vld [vmem:[%s7740 + $0x140] sm:$0xff]
    %v7782 = vld [vmem:[%s7740 + $0x148] sm:$0xff]
    %v7783 = vld [vmem:[%s7740 + $0x150] sm:$0xff]
    %v7784 = vld [vmem:[%s7740 + $0x158] sm:$0xff]
    %v7785 = vld [vmem:[%s7740 + $0x160] sm:$0xff]
    %v7786 = vld [vmem:[%s7740 + $0x168] sm:$0xff]
    %v7787 = vld [vmem:[%s7740 + $0x170] sm:$0xff]
    %v7788 = vld [vmem:[%s7740 + $0x178] sm:$0xff]
    %v7789 = vld [vmem:[%s7740 + $0x180] sm:$0xff]
    %v7790 = vld [vmem:[%s7740 + $0x188] sm:$0xff]
    %v7791 = vld [vmem:[%s7740 + $0x190] sm:$0xff]
    %v7792 = vld [vmem:[%s7740 + $0x198] sm:$0xff]
    %v7793 = vld [vmem:[%s7740 + $0x1a0] sm:$0xff]
    %v7794 = vld [vmem:[%s7740 + $0x1a8] sm:$0xff]
    %v7795 = vld [vmem:[%s7740 + $0x1b0] sm:$0xff]
    %v7796 = vld [vmem:[%s7740 + $0x1b8] sm:$0xff]
    %v7797 = vld [vmem:[%s7740 + $0x1c0] sm:$0xff]
    %v7798 = vld [vmem:[%s7740 + $0x1c8] sm:$0xff]
    %v7799 = vld [vmem:[%s7740 + $0x1d0] sm:$0xff]
    %v7800 = vld [vmem:[%s7740 + $0x1d8] sm:$0xff]
    %v7801 = vld [vmem:[%s7740 + $0x1e0] sm:$0xff]
    %v7802 = vld [vmem:[%s7740 + $0x1e8] sm:$0xff]
    %v7803 = vld [vmem:[%s7740 + $0x1f0] sm:$0xff]
    %v7804 = vld [vmem:[%s7740 + $0x1f8] sm:$0xff]
    %v7805 = vld [vmem:[%s7740 + $0x200] sm:$0xff]
    %v7806 = vld [vmem:[%s7740 + $0x208] sm:$0xff]
    %v7807 = vld [vmem:[%s7740 + $0x210] sm:$0xff]
    %v7808 = vld [vmem:[%s7740 + $0x218] sm:$0xff]
    %v7809 = vld [vmem:[%s7740 + $0x220] sm:$0xff]
    %v7810 = vld [vmem:[%s7740 + $0x228] sm:$0xff]
    %v7811 = vld [vmem:[%s7740 + $0x230] sm:$0xff]
    %v7812 = vld [vmem:[%s7740 + $0x238] sm:$0xff]
    %v7813 = vld [vmem:[%s7740 + $0x240] sm:$0xff]
    %v7814 = vld [vmem:[%s7740 + $0x248] sm:$0xff]
    %v7815 = vld [vmem:[%s7740 + $0x250] sm:$0xff]
    %v7816 = vld [vmem:[%s7740 + $0x258] sm:$0xff]
    %v7817 = vld [vmem:[%s7740 + $0x260] sm:$0xff]
    %v7818 = vld [vmem:[%s7740 + $0x268] sm:$0xff]
    %v7819 = vld [vmem:[%s7740 + $0x270] sm:$0xff]
    %v7820 = vld [vmem:[%s7740 + $0x278] sm:$0xff]
    %v7821 = vld [vmem:[%s7740 + $0x280] sm:$0xff]
    %v7822 = vld [vmem:[%s7740 + $0x288] sm:$0xff]
    %v7823 = vld [vmem:[%s7740 + $0x290] sm:$0xff]
    %v7824 = vld [vmem:[%s7740 + $0x298] sm:$0xff]
    %v7825 = vld [vmem:[%s7740 + $0x2a0] sm:$0xff]
    %v7826 = vld [vmem:[%s7740 + $0x2a8] sm:$0xff]
    %v7827 = vld [vmem:[%s7740 + $0x2b0] sm:$0xff]
    %v7828 = vld [vmem:[%s7740 + $0x2b8] sm:$0xff]
    %v7829 = vld [vmem:[%s7740 + $0x2c0] sm:$0xff]
    %v7830 = vld [vmem:[%s7740 + $0x2c8] sm:$0xff]
    %v7831 = vld [vmem:[%s7740 + $0x2d0] sm:$0xff]
    %v7832 = vld [vmem:[%s7740 + $0x2d8] sm:$0xff]
    %v7833 = vld [vmem:[%s7740 + $0x2e0] sm:$0xff]
    %v7834 = vld [vmem:[%s7740 + $0x2e8] sm:$0xff]
    %v7835 = vld [vmem:[%s7740 + $0x2f0] sm:$0xff]
    %v7836 = vld [vmem:[%s7740 + $0x2f8] sm:$0xff]
    %v7837 = vld [vmem:[%s7740 + $0x300] sm:$0xff]
    %v7838 = vld [vmem:[%s7740 + $0x308] sm:$0xff]
    %v7839 = vld [vmem:[%s7740 + $0x310] sm:$0xff]
    %v7840 = vld [vmem:[%s7740 + $0x318] sm:$0xff]
    %v7841 = vld [vmem:[%s7740 + $0x320] sm:$0xff]
    %v7842 = vld [vmem:[%s7740 + $0x328] sm:$0xff]
    %v7843 = vld [vmem:[%s7740 + $0x330] sm:$0xff]
    %v7844 = vld [vmem:[%s7740 + $0x338] sm:$0xff]
    %v7845 = vld [vmem:[%s7740 + $0x340] sm:$0xff]
    %v7846 = vld [vmem:[%s7740 + $0x348] sm:$0xff]
    %v7847 = vld [vmem:[%s7740 + $0x350] sm:$0xff]
    %v7848 = vld [vmem:[%s7740 + $0x358] sm:$0xff]
    %v7849 = vld [vmem:[%s7740 + $0x360] sm:$0xff]
    %v7850 = vld [vmem:[%s7740 + $0x368] sm:$0xff]
    %v7851 = vld [vmem:[%s7740 + $0x370] sm:$0xff]
    %v7852 = vld [vmem:[%s7740 + $0x378] sm:$0xff]
    %v7853 = vld [vmem:[%s7740 + $0x380] sm:$0xff]
    %v7854 = vld [vmem:[%s7740 + $0x388] sm:$0xff]
    %v7855 = vld [vmem:[%s7740 + $0x390] sm:$0xff]
    %v7856 = vld [vmem:[%s7740 + $0x398] sm:$0xff]
    %v7857 = vld [vmem:[%s7740 + $0x3a0] sm:$0xff]
    %v7858 = vld [vmem:[%s7740 + $0x3a8] sm:$0xff]
    %v7859 = vld [vmem:[%s7740 + $0x3b0] sm:$0xff]
    %v7860 = vld [vmem:[%s7740 + $0x3b8] sm:$0xff]
    %v7861 = vld [vmem:[%s7740 + $0x3c0] sm:$0xff]
    %v7862 = vld [vmem:[%s7740 + $0x3c8] sm:$0xff]
    %v7863 = vld [vmem:[%s7740 + $0x3d0] sm:$0xff]
    %v7864 = vld [vmem:[%s7740 + $0x3d8] sm:$0xff]
    %v7865 = vld [vmem:[%s7740 + $0x3e0] sm:$0xff]
    %v7866 = vld [vmem:[%s7740 + $0x3e8] sm:$0xff]
    %v7867 = vld [vmem:[%s7740 + $0x3f0] sm:$0xff]
    %v7868 = vld [vmem:[%s7740 + $0x3f8] sm:$0xff]
    %v7869 = vld [vmem:[%s7740 + $0x400] sm:$0xff]
    %v7870 = vld [vmem:[%s7740 + $0x408] sm:$0xff]
    %v7871 = vld [vmem:[%s7740 + $0x410] sm:$0xff]
    %v7872 = vld [vmem:[%s7740 + $0x418] sm:$0xff]
    %v7873 = vld [vmem:[%s7740 + $0x420] sm:$0xff]
    %v7874 = vld [vmem:[%s7740 + $0x428] sm:$0xff]
    %v7875 = vld [vmem:[%s7740 + $0x430] sm:$0xff]
    %v7876 = vld [vmem:[%s7740 + $0x438] sm:$0xff]
    %v7877 = vld [vmem:[%s7740 + $0x440] sm:$0xff]
    %v7878 = vld [vmem:[%s7740 + $0x448] sm:$0xff]
    %v7879 = vld [vmem:[%s7740 + $0x450] sm:$0xff]
    %v7880 = vld [vmem:[%s7740 + $0x458] sm:$0xff]
    %v7881 = vld [vmem:[%s7740 + $0x460] sm:$0xff]
    %v7882 = vld [vmem:[%s7740 + $0x468] sm:$0xff]
    %v7883 = vld [vmem:[%s7740 + $0x470] sm:$0xff]
    %v7884 = vld [vmem:[%s7740 + $0x478] sm:$0xff]
    %v7885 = vld [vmem:[%s7740 + $0x480] sm:$0xff]
    %v7886 = vld [vmem:[%s7740 + $0x488] sm:$0xff]
    %v7887 = vld [vmem:[%s7740 + $0x490] sm:$0xff]
    %v7888 = vld [vmem:[%s7740 + $0x498] sm:$0xff]
    %v7889 = vld [vmem:[%s7740 + $0x4a0] sm:$0xff]
    %v7890 = vld [vmem:[%s7740 + $0x4a8] sm:$0xff]
    %v7891 = vld [vmem:[%s7740 + $0x4b0] sm:$0xff]
    %v7892 = vld [vmem:[%s7740 + $0x4b8] sm:$0xff]
    %v7893 = vld [vmem:[%s7740 + $0x4c0] sm:$0xff]
    %v7894 = vld [vmem:[%s7740 + $0x4c8] sm:$0xff]
    %v7895 = vld [vmem:[%s7740 + $0x4d0] sm:$0xff]
    %v7896 = vld [vmem:[%s7740 + $0x4d8] sm:$0xff]
    %v7897 = vld [vmem:[%s7740 + $0x4e0] sm:$0xff]
    %v7898 = vld [vmem:[%s7740 + $0x4e8] sm:$0xff]
    %v7899 = vld [vmem:[%s7740 + $0x4f0] sm:$0xff]
    %v7900 = vld [vmem:[%s7740 + $0x4f8] sm:$0xff]
    %v7901 = vld [vmem:[%s7740 + $0x500] sm:$0xff]
    %v7902 = vld [vmem:[%s7740 + $0x508] sm:$0xff]
    %v7903 = vld [vmem:[%s7740 + $0x510] sm:$0xff]
    %v7904 = vld [vmem:[%s7740 + $0x518] sm:$0xff]
    %v7905 = vld [vmem:[%s7740 + $0x520] sm:$0xff]
    %v7906 = vld [vmem:[%s7740 + $0x528] sm:$0xff]
    %v7907 = vld [vmem:[%s7740 + $0x530] sm:$0xff]
    %v7908 = vld [vmem:[%s7740 + $0x538] sm:$0xff]
    %v7909 = vld [vmem:[%s7740 + $0x540] sm:$0xff]
    %v7910 = vld [vmem:[%s7740 + $0x548] sm:$0xff]
    %v7911 = vld [vmem:[%s7740 + $0x550] sm:$0xff]
    %v7912 = vld [vmem:[%s7740 + $0x558] sm:$0xff]
    %v7913 = vld [vmem:[%s7740 + $0x560] sm:$0xff]
    %v7914 = vld [vmem:[%s7740 + $0x568] sm:$0xff]
    %v7915 = vld [vmem:[%s7740 + $0x570] sm:$0xff]
    %v7916 = vld [vmem:[%s7740 + $0x578] sm:$0xff]
    %v7917 = vld [vmem:[%s7740 + $0x580] sm:$0xff]
    %v7918 = vld [vmem:[%s7740 + $0x588] sm:$0xff]
    %v7919 = vld [vmem:[%s7740 + $0x590] sm:$0xff]
    %v7920 = vld [vmem:[%s7740 + $0x598] sm:$0xff]
    %v7921 = vld [vmem:[%s7740 + $0x5a0] sm:$0xff]
    %v7922 = vld [vmem:[%s7740 + $0x5a8] sm:$0xff]
    %v7923 = vld [vmem:[%s7740 + $0x5b0] sm:$0xff]
    %v7924 = vld [vmem:[%s7740 + $0x5b8] sm:$0xff]
    %v7925 = vld [vmem:[%s7740 + $0x5c0] sm:$0xff]
    %v7926 = vld [vmem:[%s7740 + $0x5c8] sm:$0xff]
    %v7927 = vld [vmem:[%s7740 + $0x5d0] sm:$0xff]
    %v7928 = vld [vmem:[%s7740 + $0x5d8] sm:$0xff]
    %v7929 = vld [vmem:[%s7740 + $0x5e0] sm:$0xff]
    %v7930 = vld [vmem:[%s7740 + $0x5e8] sm:$0xff]
    %v7931 = vld [vmem:[%s7740 + $0x5f0] sm:$0xff]
    %v7932 = vld [vmem:[%s7740 + $0x5f8] sm:$0xff]
    %v7933 = vld [vmem:[%s7740 + $0x600] sm:$0xff]
    %v7934 = vld [vmem:[%s7740 + $0x608] sm:$0xff]
    %v7935 = vld [vmem:[%s7740 + $0x610] sm:$0xff]
    %v7936 = vld [vmem:[%s7740 + $0x618] sm:$0xff]
    %v7937 = vld [vmem:[%s7740 + $0x620] sm:$0xff]
    %v7938 = vld [vmem:[%s7740 + $0x628] sm:$0xff]
    %v7939 = vld [vmem:[%s7740 + $0x630] sm:$0xff]
    %v7940 = vld [vmem:[%s7740 + $0x638] sm:$0xff]
    %v7941 = vld [vmem:[%s7740 + $0x640] sm:$0xff]
    %v7942 = vld [vmem:[%s7740 + $0x648] sm:$0xff]
    %v7943 = vld [vmem:[%s7740 + $0x650] sm:$0xff]
    %v7944 = vld [vmem:[%s7740 + $0x658] sm:$0xff]
    %v7945 = vld [vmem:[%s7740 + $0x660] sm:$0xff]
    %v7946 = vld [vmem:[%s7740 + $0x668] sm:$0xff]
    %v7947 = vld [vmem:[%s7740 + $0x670] sm:$0xff]
    %v7948 = vld [vmem:[%s7740 + $0x678] sm:$0xff]
    %v7949 = vld [vmem:[%s7740 + $0x680] sm:$0xff]
    %v7950 = vld [vmem:[%s7740 + $0x688] sm:$0xff]
    %v7951 = vld [vmem:[%s7740 + $0x690] sm:$0xff]
    %v7952 = vld [vmem:[%s7740 + $0x698] sm:$0xff]
    %v7953 = vld [vmem:[%s7740 + $0x6a0] sm:$0xff]
    %v7954 = vld [vmem:[%s7740 + $0x6a8] sm:$0xff]
    %v7955 = vld [vmem:[%s7740 + $0x6b0] sm:$0xff]
    %v7956 = vld [vmem:[%s7740 + $0x6b8] sm:$0xff]
    %v7957 = vld [vmem:[%s7740 + $0x6c0] sm:$0xff]
    %v7958 = vld [vmem:[%s7740 + $0x6c8] sm:$0xff]
    %v7959 = vld [vmem:[%s7740 + $0x6d0] sm:$0xff]
    %v7960 = vld [vmem:[%s7740 + $0x6d8] sm:$0xff]
    %v7961 = vld [vmem:[%s7740 + $0x6e0] sm:$0xff]
    %v7962 = vld [vmem:[%s7740 + $0x6e8] sm:$0xff]
    %v7963 = vld [vmem:[%s7740 + $0x6f0] sm:$0xff]
    %v7964 = vld [vmem:[%s7740 + $0x6f8] sm:$0xff]
    %v7965 = vld [vmem:[%s7740 + $0x700] sm:$0xff]
    %v7966 = vld [vmem:[%s7740 + $0x708] sm:$0xff]
    %v7967 = vld [vmem:[%s7740 + $0x710] sm:$0xff]
    %v7968 = vld [vmem:[%s7740 + $0x718] sm:$0xff]
    %v7969 = vld [vmem:[%s7740 + $0x720] sm:$0xff]
    %v7970 = vld [vmem:[%s7740 + $0x728] sm:$0xff]
    %v7971 = vld [vmem:[%s7740 + $0x730] sm:$0xff]
    %v7972 = vld [vmem:[%s7740 + $0x738] sm:$0xff]
    %v7973 = vld [vmem:[%s7740 + $0x740] sm:$0xff]
    %v7974 = vld [vmem:[%s7740 + $0x748] sm:$0xff]
    %v7975 = vld [vmem:[%s7740 + $0x750] sm:$0xff]
    %v7976 = vld [vmem:[%s7740 + $0x758] sm:$0xff]
    %v7977 = vld [vmem:[%s7740 + $0x760] sm:$0xff]
    %v7978 = vld [vmem:[%s7740 + $0x768] sm:$0xff]
    %v7979 = vld [vmem:[%s7740 + $0x770] sm:$0xff]
    %v7980 = vld [vmem:[%s7740 + $0x778] sm:$0xff]
    %v7981 = vld [vmem:[%s7740 + $0x780] sm:$0xff]
    %v7982 = vld [vmem:[%s7740 + $0x788] sm:$0xff]
    %v7983 = vld [vmem:[%s7740 + $0x790] sm:$0xff]
    %v7984 = vld [vmem:[%s7740 + $0x798] sm:$0xff]
    %v7985 = vld [vmem:[%s7740 + $0x7a0] sm:$0xff]
    %v7986 = vld [vmem:[%s7740 + $0x7a8] sm:$0xff]
    %v7987 = vld [vmem:[%s7740 + $0x7b0] sm:$0xff]
    %v7988 = vld [vmem:[%s7740 + $0x7b8] sm:$0xff]
    %v7989 = vld [vmem:[%s7740 + $0x7c0] sm:$0xff]
    %v7990 = vld [vmem:[%s7740 + $0x7c8] sm:$0xff]
    %v7991 = vld [vmem:[%s7740 + $0x7d0] sm:$0xff]
    %v7992 = vld [vmem:[%s7740 + $0x7d8] sm:$0xff]
    %v7993 = vld [vmem:[%s7740 + $0x7e0] sm:$0xff]
    %v7994 = vld [vmem:[%s7740 + $0x7e8] sm:$0xff]
    %v7995 = vld [vmem:[%s7740 + $0x7f0] sm:$0xff]
    %v7996 = vld [vmem:[%s7740 + $0x7f8] sm:$0xff]
    %v7997 = vcombine.low %v7630, %v7631
    %v7998 = vcombine.high %v7630, %v7631
    %v7999 = vcombine.low %v7632, %v7665
    %v8000 = vcombine.high %v7632, %v7665
    %v8002 = vunpack.c.l.s4 1983009808
    %v8003 = vunpack.c.0.s8 %v8002
    %v8004 = vlaneseq
    %v8005 = vshrl.u32 %v8004, 7
    %v8006 = vsub.s32 %v8003, %v8005
    %v8007 = vrot.slane %v7997, %v8006
    %v8009 = vunpack.c.l.s4 1983009808
    %v8010 = vunpack.c.0.s8 %v8009
    %v8011 = vlaneseq
    %v8012 = vshrl.u32 %v8011, 7
    %v8013 = vsub.s32 %v8010, %v8012
    %v8014 = vrot.slane %v7998, %v8013
    %v8016 = vunpack.c.l.s4 1983009808
    %v8017 = vunpack.c.0.s8 %v8016
    %v8018 = vlaneseq
    %v8019 = vshrl.u32 %v8018, 7
    %v8020 = vsub.s32 %v8017, %v8019
    %v8021 = vrot.slane %v7999, %v8020
    %v8023 = vunpack.c.l.s4 1983009808
    %v8024 = vunpack.c.0.s8 %v8023
    %v8025 = vlaneseq
    %v8026 = vshrl.u32 %v8025, 7
    %v8027 = vsub.s32 %v8024, %v8026
    %v8028 = vrot.slane %v8000, %v8027
    %v8029 = vcombine.low %v8007, %v8021
    %v8030 = vcombine.high %v8007, %v8021
    %v8031 = vcombine.low %v8014, %v8028
    %v8032 = vcombine.high %v8014, %v8028
    %v8033 = vcombine.low %v7666, %v7667
    %v8034 = vcombine.high %v7666, %v7667
    %v8035 = vcombine.low %v7668, %v7701
    %v8036 = vcombine.high %v7668, %v7701
    %v8038 = vunpack.c.l.s4 1983009808
    %v8039 = vunpack.c.0.s8 %v8038
    %v8040 = vlaneseq
    %v8041 = vshrl.u32 %v8040, 7
    %v8042 = vsub.s32 %v8039, %v8041
    %v8043 = vrot.slane %v8033, %v8042
    %v8045 = vunpack.c.l.s4 1983009808
    %v8046 = vunpack.c.0.s8 %v8045
    %v8047 = vlaneseq
    %v8048 = vshrl.u32 %v8047, 7
    %v8049 = vsub.s32 %v8046, %v8048
    %v8050 = vrot.slane %v8034, %v8049
    %v8052 = vunpack.c.l.s4 1983009808
    %v8053 = vunpack.c.0.s8 %v8052
    %v8054 = vlaneseq
    %v8055 = vshrl.u32 %v8054, 7
    %v8056 = vsub.s32 %v8053, %v8055
    %v8057 = vrot.slane %v8035, %v8056
    %v8059 = vunpack.c.l.s4 1983009808
    %v8060 = vunpack.c.0.s8 %v8059
    %v8061 = vlaneseq
    %v8062 = vshrl.u32 %v8061, 7
    %v8063 = vsub.s32 %v8060, %v8062
    %v8064 = vrot.slane %v8036, %v8063
    %v8065 = vcombine.low %v8043, %v8057
    %v8066 = vcombine.high %v8043, %v8057
    %v8067 = vcombine.low %v8050, %v8064
    %v8068 = vcombine.high %v8050, %v8064
    %v8069 = vcombine.low %v7702, %v7703
    %v8070 = vcombine.high %v7702, %v7703
    %v8071 = vcombine.low %v7736, %v7737
    %v8072 = vcombine.high %v7736, %v7737
    %v8074 = vunpack.c.l.s4 1983009808
    %v8075 = vunpack.c.0.s8 %v8074
    %v8076 = vlaneseq
    %v8077 = vshrl.u32 %v8076, 7
    %v8078 = vsub.s32 %v8075, %v8077
    %v8079 = vrot.slane %v8069, %v8078
    %v8081 = vunpack.c.l.s4 1983009808
    %v8082 = vunpack.c.0.s8 %v8081
    %v8083 = vlaneseq
    %v8084 = vshrl.u32 %v8083, 7
    %v8085 = vsub.s32 %v8082, %v8084
    %v8086 = vrot.slane %v8070, %v8085
    %v8088 = vunpack.c.l.s4 1983009808
    %v8089 = vunpack.c.0.s8 %v8088
    %v8090 = vlaneseq
    %v8091 = vshrl.u32 %v8090, 7
    %v8092 = vsub.s32 %v8089, %v8091
    %v8093 = vrot.slane %v8071, %v8092
    %v8095 = vunpack.c.l.s4 1983009808
    %v8096 = vunpack.c.0.s8 %v8095
    %v8097 = vlaneseq
    %v8098 = vshrl.u32 %v8097, 7
    %v8099 = vsub.s32 %v8096, %v8098
    %v8100 = vrot.slane %v8072, %v8099
    %v8101 = vcombine.low %v8079, %v8093
    %v8102 = vcombine.high %v8079, %v8093
    %v8103 = vcombine.low %v8086, %v8100
    %v8104 = vcombine.high %v8086, %v8100
    %v8105 = vcombine.low %v7738, %v7739
    %v8106 = vcombine.high %v7738, %v7739
    %v8108 = vunpack.c.l.s4 1983009808
    %v8109 = vunpack.c.0.s8 %v8108
    %v8110 = vlaneseq
    %v8111 = vshrl.u32 %v8110, 7
    %v8112 = vsub.s32 %v8109, %v8111
    %v8113 = vrot.slane %v8105, %v8112
    %v8115 = vunpack.c.l.s4 1983009808
    %v8116 = vunpack.c.0.s8 %v8115
    %v8117 = vlaneseq
    %v8118 = vshrl.u32 %v8117, 7
    %v8119 = vsub.s32 %v8116, %v8118
    %v8120 = vrot.slane %v8106, %v8119
    %v8121 = vcombine.high %v8113, %v8113
    %v8122 = vcombine.high %v8120, %v8120
    %8139 = vmatprep.subr.mxu0 %v7742
    %8140 = vmatpush1.msra.mxu0 %v7741
    %8141 = vmatprep.subr.mxu0 %v7746
    %8142 = vmatpush1.msra.mxu0 %v7745
    %8143 = vmatprep.subr.mxu0 %v7750
    %8144 = vmatpush1.msra.mxu0 %v7749
    %8145 = vmatprep.subr.mxu0 %v7754
    %8146 = vmatpush1.msra.mxu0 %v7753
    %8147 = vmatprep.subr.mxu0 %v7758
    %8148 = vmatpush1.msra.mxu0 %v7757
    %8149 = vmatprep.subr.mxu0 %v7762
    %8150 = vmatpush1.msra.mxu0 %v7761
    %8151 = vmatprep.subr.mxu0 %v7766
    %8152 = vmatpush1.msra.mxu0 %v7765
    %8153 = vmatprep.subr.mxu0 %v7770
    %8154 = vmatpush1.msra.mxu0 %v7769
    %8155 = vmatprep.subr.mxu0 %v7774
    %8156 = vmatpush1.msra.mxu0 %v7773
    %8157 = vmatprep.subr.mxu0 %v7778
    %8158 = vmatpush1.msra.mxu0 %v7777
    %8159 = vmatprep.subr.mxu0 %v7782
    %8160 = vmatpush1.msra.mxu0 %v7781
    %8161 = vmatprep.subr.mxu0 %v7786
    %8162 = vmatpush1.msra.mxu0 %v7785
    %8163 = vmatprep.subr.mxu0 %v7790
    %8164 = vmatpush1.msra.mxu0 %v7789
    %8165 = vmatprep.subr.mxu0 %v7794
    %8166 = vmatpush1.msra.mxu0 %v7793
    %8167 = vmatprep.subr.mxu0 %v7798
    %8168 = vmatpush1.msra.mxu0 %v7797
    %8169 = vmatprep.subr.mxu0 %v7802
    %8170 = vmatpush1.msra.mxu0 %v7801
    %8171 = vmatprep.subr.mxu0 %v7806
    %8172 = vmatpush1.msra.mxu0 %v7805
    %8173 = vmatprep.subr.mxu0 %v7810
    %8174 = vmatpush1.msra.mxu0 %v7809
    %8175 = vmatprep.subr.mxu0 %v7814
    %8176 = vmatpush1.msra.mxu0 %v7813
    %8177 = vmatprep.subr.mxu0 %v7818
    %8178 = vmatpush1.msra.mxu0 %v7817
    %8179 = vmatprep.subr.mxu0 %v7822
    %8180 = vmatpush1.msra.mxu0 %v7821
    %8181 = vmatprep.subr.mxu0 %v7826
    %8182 = vmatpush1.msra.mxu0 %v7825
    %8183 = vmatprep.subr.mxu0 %v7830
    %8184 = vmatpush1.msra.mxu0 %v7829
    %8185 = vmatprep.subr.mxu0 %v7834
    %8186 = vmatpush1.msra.mxu0 %v7833
    %8187 = vmatprep.subr.mxu0 %v7838
    %8188 = vmatpush1.msra.mxu0 %v7837
    %8189 = vmatprep.subr.mxu0 %v7842
    %8190 = vmatpush1.msra.mxu0 %v7841
    %8191 = vmatprep.subr.mxu0 %v7846
    %8192 = vmatpush1.msra.mxu0 %v7845
    %8193 = vmatprep.subr.mxu0 %v7850
    %8194 = vmatpush1.msra.mxu0 %v7849
    %8195 = vmatprep.subr.mxu0 %v7854
    %8196 = vmatpush1.msra.mxu0 %v7853
    %8197 = vmatprep.subr.mxu0 %v7858
    %8198 = vmatpush1.msra.mxu0 %v7857
    %8199 = vmatprep.subr.mxu0 %v7862
    %8200 = vmatpush1.msra.mxu0 %v7861
    %8201 = vmatprep.subr.mxu0 %v7866
    %8202 = vmatpush1.msra.mxu0 %v7865
    %8203 = vmatprep.mubr.f32.mxu0 %v8030
    %8204 = vmatmul.mubr.f32.gmra.mrb[0].mxu0 %v8029
    %v8205 = vpop.f32.mrb[0].mxu0
    %v8206 = vadd.f32 0.0, %v8205
    %v8207 = vpop.f32.mrb[0].mxu0
    %v8208 = vadd.f32 0.0, %v8207
    %8209 = vmatprep.mubr.f32.mxu0 %v8066
    %8210 = vmatmul.mubr.f32.gmra.mrb[0].mxu0 %v8065
    %v8211 = vpop.f32.mrb[0].mxu0
    %v8212 = vadd.f32 0.0, %v8211
    %v8213 = vpop.f32.mrb[0].mxu0
    %v8214 = vadd.f32 0.0, %v8213
    %8215 = vmatprep.mubr.f32.mxu0 %v8102
    %8216 = vmatmul.mubr.f32.gmra.mrb[0].mxu0 %v8101
    %v8217 = vpop.f32.mrb[0].mxu0
    %v8218 = vadd.f32 0.0, %v8217
    %v8219 = vpop.f32.mrb[0].mxu0
    %v8220 = vadd.f32 0.0, %v8219
    %8221 = vmatprep.mubr.f32.mxu0 %v8121
    %8222 = vmatmul.mubr.f32.gmra.mrb[0].mxu0 %v8113
    %v8223 = vpop.f32.mrb[0].mxu0
    %v8224 = vadd.f32 0.0, %v8223
    %v8225 = vpop.f32.mrb[0].mxu0
    %v8226 = vadd.f32 0.0, %v8225
    %8227 = vdwg.mxu0
    %8228 = vmatprep.subr.mxu0 %v7870
    %8229 = vmatpush1.msra.mxu0 %v7869
    %8230 = vmatprep.subr.mxu0 %v7874
    %8231 = vmatpush1.msra.mxu0 %v7873
    %8232 = vmatprep.subr.mxu0 %v7878
    %8233 = vmatpush1.msra.mxu0 %v7877
    %8234 = vmatprep.subr.mxu0 %v7882
    %8235 = vmatpush1.msra.mxu0 %v7881
    %8236 = vmatprep.subr.mxu0 %v7886
    %8237 = vmatpush1.msra.mxu0 %v7885
    %8238 = vmatprep.subr.mxu0 %v7890
    %8239 = vmatpush1.msra.mxu0 %v7889
    %8240 = vmatprep.subr.mxu0 %v7894
    %8241 = vmatpush1.msra.mxu0 %v7893
    %8242 = vmatprep.subr.mxu0 %v7898
    %8243 = vmatpush1.msra.mxu0 %v7897
    %8244 = vmatprep.subr.mxu0 %v7902
    %8245 = vmatpush1.msra.mxu0 %v7901
    %8246 = vmatprep.subr.mxu0 %v7906
    %8247 = vmatpush1.msra.mxu0 %v7905
    %8248 = vmatprep.subr.mxu0 %v7910
    %8249 = vmatpush1.msra.mxu0 %v7909
    %8250 = vmatprep.subr.mxu0 %v7914
    %8251 = vmatpush1.msra.mxu0 %v7913
    %8252 = vmatprep.subr.mxu0 %v7918
    %8253 = vmatpush1.msra.mxu0 %v7917
    %8254 = vmatprep.subr.mxu0 %v7922
    %8255 = vmatpush1.msra.mxu0 %v7921
    %8256 = vmatprep.subr.mxu0 %v7926
    %8257 = vmatpush1.msra.mxu0 %v7925
    %8258 = vmatprep.subr.mxu0 %v7930
    %8259 = vmatpush1.msra.mxu0 %v7929
    %8260 = vmatprep.subr.mxu0 %v7934
    %8261 = vmatpush1.msra.mxu0 %v7933
    %8262 = vmatprep.subr.mxu0 %v7938
    %8263 = vmatpush1.msra.mxu0 %v7937
    %8264 = vmatprep.subr.mxu0 %v7942
    %8265 = vmatpush1.msra.mxu0 %v7941
    %8266 = vmatprep.subr.mxu0 %v7946
    %8267 = vmatpush1.msra.mxu0 %v7945
    %8268 = vmatprep.subr.mxu0 %v7950
    %8269 = vmatpush1.msra.mxu0 %v7949
    %8270 = vmatprep.subr.mxu0 %v7954
    %8271 = vmatpush1.msra.mxu0 %v7953
    %8272 = vmatprep.subr.mxu0 %v7958
    %8273 = vmatpush1.msra.mxu0 %v7957
    %8274 = vmatprep.subr.mxu0 %v7962
    %8275 = vmatpush1.msra.mxu0 %v7961
    %8276 = vmatprep.subr.mxu0 %v7966
    %8277 = vmatpush1.msra.mxu0 %v7965
    %8278 = vmatprep.subr.mxu0 %v7970
    %8279 = vmatpush1.msra.mxu0 %v7969
    %8280 = vmatprep.subr.mxu0 %v7974
    %8281 = vmatpush1.msra.mxu0 %v7973
    %8282 = vmatprep.subr.mxu0 %v7978
    %8283 = vmatpush1.msra.mxu0 %v7977
    %8284 = vmatprep.subr.mxu0 %v7982
    %8285 = vmatpush1.msra.mxu0 %v7981
    %8286 = vmatprep.subr.mxu0 %v7986
    %8287 = vmatpush1.msra.mxu0 %v7985
    %8288 = vmatprep.subr.mxu0 %v7990
    %8289 = vmatpush1.msra.mxu0 %v7989
    %8290 = vmatprep.subr.mxu0 %v7994
    %8291 = vmatpush1.msra.mxu0 %v7993
    %8292 = vmatprep.mubr.f32.mxu0 %v8032
    %8293 = vmatmul.mubr.f32.gmra.mrb[0].mxu0 %v8031
    %v8294 = vpop.f32.mrb[0].mxu0
    %v8295 = vadd.f32 %v8206, %v8294
    %v8296 = vpop.f32.mrb[0].mxu0
    %v8297 = vadd.f32 %v8208, %v8296
    %8298 = vmatprep.mubr.f32.mxu0 %v8068
    %8299 = vmatmul.mubr.f32.gmra.mrb[0].mxu0 %v8067
    %v8300 = vpop.f32.mrb[0].mxu0
    %v8301 = vadd.f32 %v8212, %v8300
    %v8302 = vpop.f32.mrb[0].mxu0
    %v8303 = vadd.f32 %v8214, %v8302
    %8304 = vmatprep.mubr.f32.mxu0 %v8104
    %8305 = vmatmul.mubr.f32.gmra.mrb[0].mxu0 %v8103
    %v8306 = vpop.f32.mrb[0].mxu0
    %v8307 = vadd.f32 %v8218, %v8306
    %v8308 = vpop.f32.mrb[0].mxu0
    %v8309 = vadd.f32 %v8220, %v8308
    %8310 = vmatprep.mubr.f32.mxu0 %v8122
    %8311 = vmatmul.mubr.f32.gmra.mrb[0].mxu0 %v8120
    %v8312 = vpop.f32.mrb[0].mxu0
    %v8313 = vadd.f32 %v8224, %v8312
    %v8314 = vpop.f32.mrb[0].mxu0
    %v8315 = vadd.f32 %v8226, %v8314
    %8316 = vdwg.mxu0
    %8317 = vmatprep.subr.mxu0 %v7744
    %8318 = vmatpush1.msra.mxu0 %v7743
    %8319 = vmatprep.subr.mxu0 %v7748
    %8320 = vmatpush1.msra.mxu0 %v7747
    %8321 = vmatprep.subr.mxu0 %v7752
    %8322 = vmatpush1.msra.mxu0 %v7751
    %8323 = vmatprep.subr.mxu0 %v7756
    %8324 = vmatpush1.msra.mxu0 %v7755
    %8325 = vmatprep.subr.mxu0 %v7760
    %8326 = vmatpush1.msra.mxu0 %v7759
    %8327 = vmatprep.subr.mxu0 %v7764
    %8328 = vmatpush1.msra.mxu0 %v7763
    %8329 = vmatprep.subr.mxu0 %v7768
    %8330 = vmatpush1.msra.mxu0 %v7767
    %8331 = vmatprep.subr.mxu0 %v7772
    %8332 = vmatpush1.msra.mxu0 %v7771
    %8333 = vmatprep.subr.mxu0 %v7776
    %8334 = vmatpush1.msra.mxu0 %v7775
    %8335 = vmatprep.subr.mxu0 %v7780
    %8336 = vmatpush1.msra.mxu0 %v7779
    %8337 = vmatprep.subr.mxu0 %v7784
    %8338 = vmatpush1.msra.mxu0 %v7783
    %8339 = vmatprep.subr.mxu0 %v7788
    %8340 = vmatpush1.msra.mxu0 %v7787
    %8341 = vmatprep.subr.mxu0 %v7792
    %8342 = vmatpush1.msra.mxu0 %v7791
    %8343 = vmatprep.subr.mxu0 %v7796
    %8344 = vmatpush1.msra.mxu0 %v7795
    %8345 = vmatprep.subr.mxu0 %v7800
    %8346 = vmatpush1.msra.mxu0 %v7799
    %8347 = vmatprep.subr.mxu0 %v7804
    %8348 = vmatpush1.msra.mxu0 %v7803
    %8349 = vmatprep.subr.mxu0 %v7808
    %8350 = vmatpush1.msra.mxu0 %v7807
    %8351 = vmatprep.subr.mxu0 %v7812
    %8352 = vmatpush1.msra.mxu0 %v7811
    %8353 = vmatprep.subr.mxu0 %v7816
    %8354 = vmatpush1.msra.mxu0 %v7815
    %8355 = vmatprep.subr.mxu0 %v7820
    %8356 = vmatpush1.msra.mxu0 %v7819
    %8357 = vmatprep.subr.mxu0 %v7824
    %8358 = vmatpush1.msra.mxu0 %v7823
    %8359 = vmatprep.subr.mxu0 %v7828
    %8360 = vmatpush1.msra.mxu0 %v7827
    %8361 = vmatprep.subr.mxu0 %v7832
    %8362 = vmatpush1.msra.mxu0 %v7831
    %8363 = vmatprep.subr.mxu0 %v7836
    %8364 = vmatpush1.msra.mxu0 %v7835
    %8365 = vmatprep.subr.mxu0 %v7840
    %8366 = vmatpush1.msra.mxu0 %v7839
    %8367 = vmatprep.subr.mxu0 %v7844
    %8368 = vmatpush1.msra.mxu0 %v7843
    %8369 = vmatprep.subr.mxu0 %v7848
    %8370 = vmatpush1.msra.mxu0 %v7847
    %8371 = vmatprep.subr.mxu0 %v7852
    %8372 = vmatpush1.msra.mxu0 %v7851
    %8373 = vmatprep.subr.mxu0 %v7856
    %8374 = vmatpush1.msra.mxu0 %v7855
    %8375 = vmatprep.subr.mxu0 %v7860
    %8376 = vmatpush1.msra.mxu0 %v7859
    %8377 = vmatprep.subr.mxu0 %v7864
    %8378 = vmatpush1.msra.mxu0 %v7863
    %8379 = vmatprep.subr.mxu0 %v7868
    %8380 = vmatpush1.msra.mxu0 %v7867
    %8381 = vmatprep.mubr.f32.mxu0 %v8030
    %8382 = vmatmul.mubr.f32.gmra.mrb[0].mxu0 %v8029
    %v8383 = vpop.f32.mrb[0].mxu0
    %v8384 = vadd.f32 0.0, %v8383
    %v8385 = vpop.f32.mrb[0].mxu0
    %v8386 = vadd.f32 0.0, %v8385
    %8387 = vmatprep.mubr.f32.mxu0 %v8066
    %8388 = vmatmul.mubr.f32.gmra.mrb[0].mxu0 %v8065
    %v8389 = vpop.f32.mrb[0].mxu0
    %v8390 = vadd.f32 0.0, %v8389
    %v8391 = vpop.f32.mrb[0].mxu0
    %v8392 = vadd.f32 0.0, %v8391
    %8393 = vmatprep.mubr.f32.mxu0 %v8102
    %8394 = vmatmul.mubr.f32.gmra.mrb[0].mxu0 %v8101
    %v8395 = vpop.f32.mrb[0].mxu0
    %v8396 = vadd.f32 0.0, %v8395
    %v8397 = vpop.f32.mrb[0].mxu0
    %v8398 = vadd.f32 0.0, %v8397
    %8399 = vmatprep.mubr.f32.mxu0 %v8121
    %8400 = vmatmul.mubr.f32.gmra.mrb[0].mxu0 %v8113
    %v8401 = vpop.f32.mrb[0].mxu0
    %v8402 = vadd.f32 0.0, %v8401
    %v8403 = vpop.f32.mrb[0].mxu0
    %v8404 = vadd.f32 0.0, %v8403
    %8405 = vdwg.mxu0
    %8406 = vmatprep.subr.mxu0 %v7872
    %8407 = vmatpush1.msra.mxu0 %v7871
    %8408 = vmatprep.subr.mxu0 %v7876
    %8409 = vmatpush1.msra.mxu0 %v7875
    %8410 = vmatprep.subr.mxu0 %v7880
    %8411 = vmatpush1.msra.mxu0 %v7879
    %8412 = vmatprep.subr.mxu0 %v7884
    %8413 = vmatpush1.msra.mxu0 %v7883
    %8414 = vmatprep.subr.mxu0 %v7888
    %8415 = vmatpush1.msra.mxu0 %v7887
    %8416 = vmatprep.subr.mxu0 %v7892
    %8417 = vmatpush1.msra.mxu0 %v7891
    %8418 = vmatprep.subr.mxu0 %v7896
    %8419 = vmatpush1.msra.mxu0 %v7895
    %8420 = vmatprep.subr.mxu0 %v7900
    %8421 = vmatpush1.msra.mxu0 %v7899
    %8422 = vmatprep.subr.mxu0 %v7904
    %8423 = vmatpush1.msra.mxu0 %v7903
    %8424 = vmatprep.subr.mxu0 %v7908
    %8425 = vmatpush1.msra.mxu0 %v7907
    %8426 = vmatprep.subr.mxu0 %v7912
    %8427 = vmatpush1.msra.mxu0 %v7911
    %8428 = vmatprep.subr.mxu0 %v7916
    %8429 = vmatpush1.msra.mxu0 %v7915
    %8430 = vmatprep.subr.mxu0 %v7920
    %8431 = vmatpush1.msra.mxu0 %v7919
    %8432 = vmatprep.subr.mxu0 %v7924
    %8433 = vmatpush1.msra.mxu0 %v7923
    %8434 = vmatprep.subr.mxu0 %v7928
    %8435 = vmatpush1.msra.mxu0 %v7927
    %8436 = vmatprep.subr.mxu0 %v7932
    %8437 = vmatpush1.msra.mxu0 %v7931
    %8438 = vmatprep.subr.mxu0 %v7936
    %8439 = vmatpush1.msra.mxu0 %v7935
    %8440 = vmatprep.subr.mxu0 %v7940
    %8441 = vmatpush1.msra.mxu0 %v7939
    %8442 = vmatprep.subr.mxu0 %v7944
    %8443 = vmatpush1.msra.mxu0 %v7943
    %8444 = vmatprep.subr.mxu0 %v7948
    %8445 = vmatpush1.msra.mxu0 %v7947
    %8446 = vmatprep.subr.mxu0 %v7952
    %8447 = vmatpush1.msra.mxu0 %v7951
    %8448 = vmatprep.subr.mxu0 %v7956
    %8449 = vmatpush1.msra.mxu0 %v7955
    %8450 = vmatprep.subr.mxu0 %v7960
    %8451 = vmatpush1.msra.mxu0 %v7959
    %8452 = vmatprep.subr.mxu0 %v7964
    %8453 = vmatpush1.msra.mxu0 %v7963
    %8454 = vmatprep.subr.mxu0 %v7968
    %8455 = vmatpush1.msra.mxu0 %v7967
    %8456 = vmatprep.subr.mxu0 %v7972
    %8457 = vmatpush1.msra.mxu0 %v7971
    %8458 = vmatprep.subr.mxu0 %v7976
    %8459 = vmatpush1.msra.mxu0 %v7975
    %8460 = vmatprep.subr.mxu0 %v7980
    %8461 = vmatpush1.msra.mxu0 %v7979
    %8462 = vmatprep.subr.mxu0 %v7984
    %8463 = vmatpush1.msra.mxu0 %v7983
    %8464 = vmatprep.subr.mxu0 %v7988
    %8465 = vmatpush1.msra.mxu0 %v7987
    %8466 = vmatprep.subr.mxu0 %v7992
    %8467 = vmatpush1.msra.mxu0 %v7991
    %8468 = vmatprep.subr.mxu0 %v7996
    %8469 = vmatpush1.msra.mxu0 %v7995
    %8470 = vmatprep.mubr.f32.mxu0 %v8032
    %8471 = vmatmul.mubr.f32.gmra.mrb[0].mxu0 %v8031
    %v8472 = vpop.f32.mrb[0].mxu0
    %v8473 = vadd.f32 %v8384, %v8472
    %v8474 = vpop.f32.mrb[0].mxu0
    %v8475 = vadd.f32 %v8386, %v8474
    %8476 = vmatprep.mubr.f32.mxu0 %v8068
    %8477 = vmatmul.mubr.f32.gmra.mrb[0].mxu0 %v8067
    %v8478 = vpop.f32.mrb[0].mxu0
    %v8479 = vadd.f32 %v8390, %v8478
    %v8480 = vpop.f32.mrb[0].mxu0
    %v8481 = vadd.f32 %v8392, %v8480
    %8482 = vmatprep.mubr.f32.mxu0 %v8104
    %8483 = vmatmul.mubr.f32.gmra.mrb[0].mxu0 %v8103
    %v8484 = vpop.f32.mrb[0].mxu0
    %v8485 = vadd.f32 %v8396, %v8484
    %v8486 = vpop.f32.mrb[0].mxu0
    %v8487 = vadd.f32 %v8398, %v8486
    %8488 = vmatprep.mubr.f32.mxu0 %v8122
    %8489 = vmatmul.mubr.f32.gmra.mrb[0].mxu0 %v8120
    %v8490 = vpop.f32.mrb[0].mxu0
    %v8491 = vadd.f32 %v8402, %v8490
    %v8492 = vpop.f32.mrb[0].mxu0
    %v8493 = vadd.f32 %v8404, %v8492
    %8494 = vdwg.mxu0
    %v8495 = vadd.f32 %v7366, %v8295
    %v8496 = vadd.f32 %v7368, %v8297
    %v8497 = vadd.f32 %v7544, %v8473
    %v8498 = vadd.f32 %v7546, %v8475
    %v8499 = vadd.f32 %v7372, %v8301
    %v8500 = vadd.f32 %v7374, %v8303
    %v8501 = vadd.f32 %v7550, %v8479
    %v8502 = vadd.f32 %v7552, %v8481
    %v8503 = vadd.f32 %v7378, %v8307
    %v8504 = vadd.f32 %v7380, %v8309
    %v8505 = vadd.f32 %v7556, %v8485
    %v8506 = vadd.f32 %v7558, %v8487
    %v8507 = vadd.f32 %v7384, %v8313
    %v8508 = vadd.f32 %v7386, %v8315
    %v8509 = vadd.f32 %v7562, %v8491
    %v8510 = vadd.f32 %v7564, %v8493
    %v8511 = vld [vmem:[#allocation9] sm:$0xf]
    %v8513 = vlaneseq
    %v8514 = vshrl.u32 %v8513, 7
    %v8515 = vsub.s32 0, %v8514
    %v8516 = vrot.slane %v8511, %v8515
    %v8517 = vlaneseq
    %v8518 = vshrl.u32 %v8517, 7
    %v8519 = vsub.s32 1, %v8518
    %v8520 = vrot.slane %v8511, %v8519
    %v8521 = vlaneseq
    %v8522 = vshrl.u32 %v8521, 7
    %v8523 = vsub.s32 2, %v8522
    %v8524 = vrot.slane %v8511, %v8523
    %v8525 = vlaneseq
    %v8526 = vshrl.u32 %v8525, 7
    %v8527 = vsub.s32 3, %v8526
    %v8528 = vrot.slane %v8511, %v8527
    %v8533 = vadd.f32 %v8495, %v8516
    %v8534 = vadd.f32 %v8496, %v8520
    %v8535 = vadd.f32 %v8497, %v8524
    %v8536 = vadd.f32 %v8498, %v8528
    %v8537 = vadd.f32 %v8499, %v8516
    %v8538 = vadd.f32 %v8500, %v8520
    %v8539 = vadd.f32 %v8501, %v8524
    %v8540 = vadd.f32 %v8502, %v8528
    %v8541 = vadd.f32 %v8503, %v8516
    %v8542 = vadd.f32 %v8504, %v8520
    %v8543 = vadd.f32 %v8505, %v8524
    %v8544 = vadd.f32 %v8506, %v8528
    %v8545 = vadd.f32 %v8507, %v8516
    %v8546 = vadd.f32 %v8508, %v8520
    %v8547 = vadd.f32 %v8509, %v8524
    %v8548 = vadd.f32 %v8510, %v8528
    %v8549 = vmax.f32 %v8533, 0.0
    %v8550 = vmax.f32 %v8534, 0.0
    %v8551 = vmax.f32 %v8535, 0.0
    %v8552 = vmax.f32 %v8536, 0.0
    %v8553 = vmax.f32 %v8537, 0.0
    %v8554 = vmax.f32 %v8538, 0.0
    %v8555 = vmax.f32 %v8539, 0.0
    %v8556 = vmax.f32 %v8540, 0.0
    %v8557 = vmax.f32 %v8541, 0.0
    %v8558 = vmax.f32 %v8542, 0.0
    %v8559 = vmax.f32 %v8543, 0.0
    %v8560 = vmax.f32 %v8544, 0.0
    %v8561 = vmax.f32 %v8545, 0.0
    %v8562 = vmax.f32 %v8546, 0.0
    %v8563 = vmax.f32 %v8547, 0.0
    %v8564 = vmax.f32 %v8548, 0.0
    %v8581 = vcombine.low %v8549, %v8550
    %v8582 = vcombine.high %v8549, %v8550
    %v8583 = vcombine.low %v8551, %v8552
    %v8584 = vcombine.high %v8551, %v8552
    %v8586 = vunpack.c.l.s4 1983009808
    %v8587 = vunpack.c.0.s8 %v8586
    %v8588 = vlaneseq
    %v8589 = vshrl.u32 %v8588, 7
    %v8590 = vsub.s32 %v8587, %v8589
    %v8591 = vrot.slane %v8581, %v8590
    %v8593 = vunpack.c.l.s4 1983009808
    %v8594 = vunpack.c.0.s8 %v8593
    %v8595 = vlaneseq
    %v8596 = vshrl.u32 %v8595, 7
    %v8597 = vsub.s32 %v8594, %v8596
    %v8598 = vrot.slane %v8582, %v8597
    %v8600 = vunpack.c.l.s4 1983009808
    %v8601 = vunpack.c.0.s8 %v8600
    %v8602 = vlaneseq
    %v8603 = vshrl.u32 %v8602, 7
    %v8604 = vsub.s32 %v8601, %v8603
    %v8605 = vrot.slane %v8583, %v8604
    %v8607 = vunpack.c.l.s4 1983009808
    %v8608 = vunpack.c.0.s8 %v8607
    %v8609 = vlaneseq
    %v8610 = vshrl.u32 %v8609, 7
    %v8611 = vsub.s32 %v8608, %v8610
    %v8612 = vrot.slane %v8584, %v8611
    %v8613 = vcombine.low %v8591, %v8605
    %v8614 = vcombine.high %v8591, %v8605
    %v8615 = vcombine.low %v8598, %v8612
    %v8616 = vcombine.high %v8598, %v8612
    %v8617 = vcombine.low %v8553, %v8554
    %v8618 = vcombine.high %v8553, %v8554
    %v8619 = vcombine.low %v8555, %v8556
    %v8620 = vcombine.high %v8555, %v8556
    %v8622 = vunpack.c.l.s4 1983009808
    %v8623 = vunpack.c.0.s8 %v8622
    %v8624 = vlaneseq
    %v8625 = vshrl.u32 %v8624, 7
    %v8626 = vsub.s32 %v8623, %v8625
    %v8627 = vrot.slane %v8617, %v8626
    %v8629 = vunpack.c.l.s4 1983009808
    %v8630 = vunpack.c.0.s8 %v8629
    %v8631 = vlaneseq
    %v8632 = vshrl.u32 %v8631, 7
    %v8633 = vsub.s32 %v8630, %v8632
    %v8634 = vrot.slane %v8618, %v8633
    %v8636 = vunpack.c.l.s4 1983009808
    %v8637 = vunpack.c.0.s8 %v8636
    %v8638 = vlaneseq
    %v8639 = vshrl.u32 %v8638, 7
    %v8640 = vsub.s32 %v8637, %v8639
    %v8641 = vrot.slane %v8619, %v8640
    %v8643 = vunpack.c.l.s4 1983009808
    %v8644 = vunpack.c.0.s8 %v8643
    %v8645 = vlaneseq
    %v8646 = vshrl.u32 %v8645, 7
    %v8647 = vsub.s32 %v8644, %v8646
    %v8648 = vrot.slane %v8620, %v8647
    %v8649 = vcombine.low %v8627, %v8641
    %v8650 = vcombine.high %v8627, %v8641
    %v8651 = vcombine.low %v8634, %v8648
    %v8652 = vcombine.high %v8634, %v8648
    %v8653 = vcombine.low %v8557, %v8558
    %v8654 = vcombine.high %v8557, %v8558
    %v8655 = vcombine.low %v8559, %v8560
    %v8656 = vcombine.high %v8559, %v8560
    %v8658 = vunpack.c.l.s4 1983009808
    %v8659 = vunpack.c.0.s8 %v8658
    %v8660 = vlaneseq
    %v8661 = vshrl.u32 %v8660, 7
    %v8662 = vsub.s32 %v8659, %v8661
    %v8663 = vrot.slane %v8653, %v8662
    %v8665 = vunpack.c.l.s4 1983009808
    %v8666 = vunpack.c.0.s8 %v8665
    %v8667 = vlaneseq
    %v8668 = vshrl.u32 %v8667, 7
    %v8669 = vsub.s32 %v8666, %v8668
    %v8670 = vrot.slane %v8654, %v8669
    %v8672 = vunpack.c.l.s4 1983009808
    %v8673 = vunpack.c.0.s8 %v8672
    %v8674 = vlaneseq
    %v8675 = vshrl.u32 %v8674, 7
    %v8676 = vsub.s32 %v8673, %v8675
    %v8677 = vrot.slane %v8655, %v8676
    %v8679 = vunpack.c.l.s4 1983009808
    %v8680 = vunpack.c.0.s8 %v8679
    %v8681 = vlaneseq
    %v8682 = vshrl.u32 %v8681, 7
    %v8683 = vsub.s32 %v8680, %v8682
    %v8684 = vrot.slane %v8656, %v8683
    %v8685 = vcombine.low %v8663, %v8677
    %v8686 = vcombine.high %v8663, %v8677
    %v8687 = vcombine.low %v8670, %v8684
    %v8688 = vcombine.high %v8670, %v8684
    %v8689 = vcombine.low %v8561, %v8562
    %v8690 = vcombine.low %v8563, %v8564
    %v8692 = vunpack.c.l.s4 1983009808
    %v8693 = vunpack.c.0.s8 %v8692
    %v8694 = vlaneseq
    %v8695 = vshrl.u32 %v8694, 7
    %v8696 = vsub.s32 %v8693, %v8695
    %v8697 = vrot.slane %v8689, %v8696
    %v8699 = vunpack.c.l.s4 1983009808
    %v8700 = vunpack.c.0.s8 %v8699
    %v8701 = vlaneseq
    %v8702 = vshrl.u32 %v8701, 7
    %v8703 = vsub.s32 %v8700, %v8702
    %v8704 = vrot.slane %v8690, %v8703
    %v8705 = vcombine.low %v8697, %v8704
    %v8706 = vcombine.high %v8697, %v8704
    %v8707 = vcombine.high %v8613, %v8613
    %v8709 = vunpack.c.l.s4 1983009808
    %v8710 = vunpack.c.0.s8 %v8709
    %v8711 = vlaneseq
    %v8712 = vshrl.u32 %v8711, 7
    %v8713 = vsub.s32 %v8710, %v8712
    %v8714 = vrot.slane %v8613, %v8713
    %v8716 = vunpack.c.l.s4 1983009808
    %v8717 = vunpack.c.0.s8 %v8716
    %v8718 = vlaneseq
    %v8719 = vshrl.u32 %v8718, 7
    %v8720 = vsub.s32 %v8717, %v8719
    %v8721 = vrot.slane %v8707, %v8720
    %v8722 = vcombine.high %v8714, %v8714
    %v8723 = vcombine.high %v8721, %v8721
    %v8724 = vcombine.high %v8614, %v8614
    %v8726 = vunpack.c.l.s4 1983009808
    %v8727 = vunpack.c.0.s8 %v8726
    %v8728 = vlaneseq
    %v8729 = vshrl.u32 %v8728, 7
    %v8730 = vsub.s32 %v8727, %v8729
    %v8731 = vrot.slane %v8614, %v8730
    %v8733 = vunpack.c.l.s4 1983009808
    %v8734 = vunpack.c.0.s8 %v8733
    %v8735 = vlaneseq
    %v8736 = vshrl.u32 %v8735, 7
    %v8737 = vsub.s32 %v8734, %v8736
    %v8738 = vrot.slane %v8724, %v8737
    %v8739 = vcombine.high %v8731, %v8731
    %v8740 = vcombine.high %v8738, %v8738
    %v8741 = vcombine.high %v8615, %v8615
    %v8743 = vunpack.c.l.s4 1983009808
    %v8744 = vunpack.c.0.s8 %v8743
    %v8745 = vlaneseq
    %v8746 = vshrl.u32 %v8745, 7
    %v8747 = vsub.s32 %v8744, %v8746
    %v8748 = vrot.slane %v8615, %v8747
    %v8750 = vunpack.c.l.s4 1983009808
    %v8751 = vunpack.c.0.s8 %v8750
    %v8752 = vlaneseq
    %v8753 = vshrl.u32 %v8752, 7
    %v8754 = vsub.s32 %v8751, %v8753
    %v8755 = vrot.slane %v8741, %v8754
    %v8756 = vcombine.high %v8748, %v8748
    %v8757 = vcombine.high %v8755, %v8755
    %v8758 = vcombine.high %v8616, %v8616
    %v8760 = vunpack.c.l.s4 1983009808
    %v8761 = vunpack.c.0.s8 %v8760
    %v8762 = vlaneseq
    %v8763 = vshrl.u32 %v8762, 7
    %v8764 = vsub.s32 %v8761, %v8763
    %v8765 = vrot.slane %v8616, %v8764
    %v8767 = vunpack.c.l.s4 1983009808
    %v8768 = vunpack.c.0.s8 %v8767
    %v8769 = vlaneseq
    %v8770 = vshrl.u32 %v8769, 7
    %v8771 = vsub.s32 %v8768, %v8770
    %v8772 = vrot.slane %v8758, %v8771
    %v8773 = vcombine.high %v8765, %v8765
    %v8774 = vcombine.high %v8772, %v8772
    %v8775 = vcombine.high %v8649, %v8649
    %v8777 = vunpack.c.l.s4 1983009808
    %v8778 = vunpack.c.0.s8 %v8777
    %v8779 = vlaneseq
    %v8780 = vshrl.u32 %v8779, 7
    %v8781 = vsub.s32 %v8778, %v8780
    %v8782 = vrot.slane %v8649, %v8781
    %v8784 = vunpack.c.l.s4 1983009808
    %v8785 = vunpack.c.0.s8 %v8784
    %v8786 = vlaneseq
    %v8787 = vshrl.u32 %v8786, 7
    %v8788 = vsub.s32 %v8785, %v8787
    %v8789 = vrot.slane %v8775, %v8788
    %v8790 = vcombine.high %v8782, %v8782
    %v8791 = vcombine.high %v8789, %v8789
    %v8792 = vcombine.high %v8650, %v8650
    %v8794 = vunpack.c.l.s4 1983009808
    %v8795 = vunpack.c.0.s8 %v8794
    %v8796 = vlaneseq
    %v8797 = vshrl.u32 %v8796, 7
    %v8798 = vsub.s32 %v8795, %v8797
    %v8799 = vrot.slane %v8650, %v8798
    %v8801 = vunpack.c.l.s4 1983009808
    %v8802 = vunpack.c.0.s8 %v8801
    %v8803 = vlaneseq
    %v8804 = vshrl.u32 %v8803, 7
    %v8805 = vsub.s32 %v8802, %v8804
    %v8806 = vrot.slane %v8792, %v8805
    %v8807 = vcombine.high %v8799, %v8799
    %v8808 = vcombine.high %v8806, %v8806
    %v8809 = vcombine.high %v8651, %v8651
    %v8811 = vunpack.c.l.s4 1983009808
    %v8812 = vunpack.c.0.s8 %v8811
    %v8813 = vlaneseq
    %v8814 = vshrl.u32 %v8813, 7
    %v8815 = vsub.s32 %v8812, %v8814
    %v8816 = vrot.slane %v8651, %v8815
    %v8818 = vunpack.c.l.s4 1983009808
    %v8819 = vunpack.c.0.s8 %v8818
    %v8820 = vlaneseq
    %v8821 = vshrl.u32 %v8820, 7
    %v8822 = vsub.s32 %v8819, %v8821
    %v8823 = vrot.slane %v8809, %v8822
    %v8824 = vcombine.high %v8816, %v8816
    %v8825 = vcombine.high %v8823, %v8823
    %v8826 = vcombine.high %v8652, %v8652
    %v8828 = vunpack.c.l.s4 1983009808
    %v8829 = vunpack.c.0.s8 %v8828
    %v8830 = vlaneseq
    %v8831 = vshrl.u32 %v8830, 7
    %v8832 = vsub.s32 %v8829, %v8831
    %v8833 = vrot.slane %v8652, %v8832
    %v8835 = vunpack.c.l.s4 1983009808
    %v8836 = vunpack.c.0.s8 %v8835
    %v8837 = vlaneseq
    %v8838 = vshrl.u32 %v8837, 7
    %v8839 = vsub.s32 %v8836, %v8838
    %v8840 = vrot.slane %v8826, %v8839
    %v8841 = vcombine.high %v8833, %v8833
    %v8842 = vcombine.high %v8840, %v8840
    %v8843 = vcombine.high %v8685, %v8685
    %v8845 = vunpack.c.l.s4 1983009808
    %v8846 = vunpack.c.0.s8 %v8845
    %v8847 = vlaneseq
    %v8848 = vshrl.u32 %v8847, 7
    %v8849 = vsub.s32 %v8846, %v8848
    %v8850 = vrot.slane %v8685, %v8849
    %v8852 = vunpack.c.l.s4 1983009808
    %v8853 = vunpack.c.0.s8 %v8852
    %v8854 = vlaneseq
    %v8855 = vshrl.u32 %v8854, 7
    %v8856 = vsub.s32 %v8853, %v8855
    %v8857 = vrot.slane %v8843, %v8856
    %v8858 = vcombine.high %v8850, %v8850
    %v8859 = vcombine.high %v8857, %v8857
    %v8860 = vcombine.high %v8686, %v8686
    %v8862 = vunpack.c.l.s4 1983009808
    %v8863 = vunpack.c.0.s8 %v8862
    %v8864 = vlaneseq
    %v8865 = vshrl.u32 %v8864, 7
    %v8866 = vsub.s32 %v8863, %v8865
    %v8867 = vrot.slane %v8686, %v8866
    %v8869 = vunpack.c.l.s4 1983009808
    %v8870 = vunpack.c.0.s8 %v8869
    %v8871 = vlaneseq
    %v8872 = vshrl.u32 %v8871, 7
    %v8873 = vsub.s32 %v8870, %v8872
    %v8874 = vrot.slane %v8860, %v8873
    %v8875 = vcombine.high %v8867, %v8867
    %v8876 = vcombine.high %v8874, %v8874
    %v8877 = vcombine.high %v8687, %v8687
    %v8879 = vunpack.c.l.s4 1983009808
    %v8880 = vunpack.c.0.s8 %v8879
    %v8881 = vlaneseq
    %v8882 = vshrl.u32 %v8881, 7
    %v8883 = vsub.s32 %v8880, %v8882
    %v8884 = vrot.slane %v8687, %v8883
    %v8886 = vunpack.c.l.s4 1983009808
    %v8887 = vunpack.c.0.s8 %v8886
    %v8888 = vlaneseq
    %v8889 = vshrl.u32 %v8888, 7
    %v8890 = vsub.s32 %v8887, %v8889
    %v8891 = vrot.slane %v8877, %v8890
    %v8892 = vcombine.high %v8884, %v8884
    %v8893 = vcombine.high %v8891, %v8891
    %v8894 = vcombine.high %v8688, %v8688
    %v8896 = vunpack.c.l.s4 1983009808
    %v8897 = vunpack.c.0.s8 %v8896
    %v8898 = vlaneseq
    %v8899 = vshrl.u32 %v8898, 7
    %v8900 = vsub.s32 %v8897, %v8899
    %v8901 = vrot.slane %v8688, %v8900
    %v8903 = vunpack.c.l.s4 1983009808
    %v8904 = vunpack.c.0.s8 %v8903
    %v8905 = vlaneseq
    %v8906 = vshrl.u32 %v8905, 7
    %v8907 = vsub.s32 %v8904, %v8906
    %v8908 = vrot.slane %v8894, %v8907
    %v8909 = vcombine.high %v8901, %v8901
    %v8910 = vcombine.high %v8908, %v8908
    %v8911 = vcombine.high %v8705, %v8705
    %v8913 = vunpack.c.l.s4 1983009808
    %v8914 = vunpack.c.0.s8 %v8913
    %v8915 = vlaneseq
    %v8916 = vshrl.u32 %v8915, 7
    %v8917 = vsub.s32 %v8914, %v8916
    %v8918 = vrot.slane %v8705, %v8917
    %v8920 = vunpack.c.l.s4 1983009808
    %v8921 = vunpack.c.0.s8 %v8920
    %v8922 = vlaneseq
    %v8923 = vshrl.u32 %v8922, 7
    %v8924 = vsub.s32 %v8921, %v8923
    %v8925 = vrot.slane %v8911, %v8924
    %v8926 = vcombine.high %v8918, %v8918
    %v8927 = vcombine.high %v8925, %v8925
    %v8928 = vcombine.high %v8706, %v8706
    %v8930 = vunpack.c.l.s4 1983009808
    %v8931 = vunpack.c.0.s8 %v8930
    %v8932 = vlaneseq
    %v8933 = vshrl.u32 %v8932, 7
    %v8934 = vsub.s32 %v8931, %v8933
    %v8935 = vrot.slane %v8706, %v8934
    %v8937 = vunpack.c.l.s4 1983009808
    %v8938 = vunpack.c.0.s8 %v8937
    %v8939 = vlaneseq
    %v8940 = vshrl.u32 %v8939, 7
    %v8941 = vsub.s32 %v8938, %v8940
    %v8942 = vrot.slane %v8928, %v8941
    %v8943 = vcombine.high %v8935, %v8935
    %v8944 = vcombine.high %v8942, %v8942
    %v9001 = vsel %vm1218, %v8714, -inf
    %v9002 = vrot.slane %v9001, 4
    %v9003 = vmax.f32 %v9001, %v9002
    %v9004 = vrot.slane %v9003, 2
    %v9005 = vmax.f32 %v9003, %v9004
    %v9006 = vrot.slane %v9005, 1
    %v9007 = vmax.f32 %v9005, %v9006
    %v9008 = vsel %vm1218, %v8722, -inf
    %v9009 = vrot.slane %v9008, 4
    %v9010 = vmax.f32 %v9008, %v9009
    %v9011 = vrot.slane %v9010, 2
    %v9012 = vmax.f32 %v9010, %v9011
    %v9013 = vrot.slane %v9012, 1
    %v9014 = vmax.f32 %v9012, %v9013
    %v9015 = vsel %vm1218, %v8721, -inf
    %v9016 = vrot.slane %v9015, 4
    %v9017 = vmax.f32 %v9015, %v9016
    %v9018 = vrot.slane %v9017, 2
    %v9019 = vmax.f32 %v9017, %v9018
    %v9020 = vrot.slane %v9019, 1
    %v9021 = vmax.f32 %v9019, %v9020
    %v9022 = vsel %vm1218, %v8723, -inf
    %v9023 = vrot.slane %v9022, 4
    %v9024 = vmax.f32 %v9022, %v9023
    %v9025 = vrot.slane %v9024, 2
    %v9026 = vmax.f32 %v9024, %v9025
    %v9027 = vrot.slane %v9026, 1
    %v9028 = vmax.f32 %v9026, %v9027
    %v9029 = vsel %vm1218, %v8731, -inf
    %v9030 = vrot.slane %v9029, 4
    %v9031 = vmax.f32 %v9029, %v9030
    %v9032 = vrot.slane %v9031, 2
    %v9033 = vmax.f32 %v9031, %v9032
    %v9034 = vrot.slane %v9033, 1
    %v9035 = vmax.f32 %v9033, %v9034
    %v9036 = vsel %vm1218, %v8739, -inf
    %v9037 = vrot.slane %v9036, 4
    %v9038 = vmax.f32 %v9036, %v9037
    %v9039 = vrot.slane %v9038, 2
    %v9040 = vmax.f32 %v9038, %v9039
    %v9041 = vrot.slane %v9040, 1
    %v9042 = vmax.f32 %v9040, %v9041
    %v9043 = vsel %vm1218, %v8738, -inf
    %v9044 = vrot.slane %v9043, 4
    %v9045 = vmax.f32 %v9043, %v9044
    %v9046 = vrot.slane %v9045, 2
    %v9047 = vmax.f32 %v9045, %v9046
    %v9048 = vrot.slane %v9047, 1
    %v9049 = vmax.f32 %v9047, %v9048
    %v9050 = vsel %vm1218, %v8740, -inf
    %v9051 = vrot.slane %v9050, 4
    %v9052 = vmax.f32 %v9050, %v9051
    %v9053 = vrot.slane %v9052, 2
    %v9054 = vmax.f32 %v9052, %v9053
    %v9055 = vrot.slane %v9054, 1
    %v9056 = vmax.f32 %v9054, %v9055
    %v9057 = vsel %vm1218, %v8748, -inf
    %v9058 = vrot.slane %v9057, 4
    %v9059 = vmax.f32 %v9057, %v9058
    %v9060 = vrot.slane %v9059, 2
    %v9061 = vmax.f32 %v9059, %v9060
    %v9062 = vrot.slane %v9061, 1
    %v9063 = vmax.f32 %v9061, %v9062
    %v9064 = vsel %vm1218, %v8756, -inf
    %v9065 = vrot.slane %v9064, 4
    %v9066 = vmax.f32 %v9064, %v9065
    %v9067 = vrot.slane %v9066, 2
    %v9068 = vmax.f32 %v9066, %v9067
    %v9069 = vrot.slane %v9068, 1
    %v9070 = vmax.f32 %v9068, %v9069
    %v9071 = vsel %vm1218, %v8755, -inf
    %v9072 = vrot.slane %v9071, 4
    %v9073 = vmax.f32 %v9071, %v9072
    %v9074 = vrot.slane %v9073, 2
    %v9075 = vmax.f32 %v9073, %v9074
    %v9076 = vrot.slane %v9075, 1
    %v9077 = vmax.f32 %v9075, %v9076
    %v9078 = vsel %vm1218, %v8757, -inf
    %v9079 = vrot.slane %v9078, 4
    %v9080 = vmax.f32 %v9078, %v9079
    %v9081 = vrot.slane %v9080, 2
    %v9082 = vmax.f32 %v9080, %v9081
    %v9083 = vrot.slane %v9082, 1
    %v9084 = vmax.f32 %v9082, %v9083
    %v9085 = vsel %vm1218, %v8765, -inf
    %v9086 = vrot.slane %v9085, 4
    %v9087 = vmax.f32 %v9085, %v9086
    %v9088 = vrot.slane %v9087, 2
    %v9089 = vmax.f32 %v9087, %v9088
    %v9090 = vrot.slane %v9089, 1
    %v9091 = vmax.f32 %v9089, %v9090
    %v9092 = vsel %vm1218, %v8773, -inf
    %v9093 = vrot.slane %v9092, 4
    %v9094 = vmax.f32 %v9092, %v9093
    %v9095 = vrot.slane %v9094, 2
    %v9096 = vmax.f32 %v9094, %v9095
    %v9097 = vrot.slane %v9096, 1
    %v9098 = vmax.f32 %v9096, %v9097
    %v9099 = vsel %vm1218, %v8772, -inf
    %v9100 = vrot.slane %v9099, 4
    %v9101 = vmax.f32 %v9099, %v9100
    %v9102 = vrot.slane %v9101, 2
    %v9103 = vmax.f32 %v9101, %v9102
    %v9104 = vrot.slane %v9103, 1
    %v9105 = vmax.f32 %v9103, %v9104
    %v9106 = vsel %vm1218, %v8774, -inf
    %v9107 = vrot.slane %v9106, 4
    %v9108 = vmax.f32 %v9106, %v9107
    %v9109 = vrot.slane %v9108, 2
    %v9110 = vmax.f32 %v9108, %v9109
    %v9111 = vrot.slane %v9110, 1
    %v9112 = vmax.f32 %v9110, %v9111
    %v9113 = vsel %vm1218, %v8782, -inf
    %v9114 = vrot.slane %v9113, 4
    %v9115 = vmax.f32 %v9113, %v9114
    %v9116 = vrot.slane %v9115, 2
    %v9117 = vmax.f32 %v9115, %v9116
    %v9118 = vrot.slane %v9117, 1
    %v9119 = vmax.f32 %v9117, %v9118
    %v9120 = vsel %vm1218, %v8790, -inf
    %v9121 = vrot.slane %v9120, 4
    %v9122 = vmax.f32 %v9120, %v9121
    %v9123 = vrot.slane %v9122, 2
    %v9124 = vmax.f32 %v9122, %v9123
    %v9125 = vrot.slane %v9124, 1
    %v9126 = vmax.f32 %v9124, %v9125
    %v9127 = vsel %vm1218, %v8789, -inf
    %v9128 = vrot.slane %v9127, 4
    %v9129 = vmax.f32 %v9127, %v9128
    %v9130 = vrot.slane %v9129, 2
    %v9131 = vmax.f32 %v9129, %v9130
    %v9132 = vrot.slane %v9131, 1
    %v9133 = vmax.f32 %v9131, %v9132
    %v9134 = vsel %vm1218, %v8791, -inf
    %v9135 = vrot.slane %v9134, 4
    %v9136 = vmax.f32 %v9134, %v9135
    %v9137 = vrot.slane %v9136, 2
    %v9138 = vmax.f32 %v9136, %v9137
    %v9139 = vrot.slane %v9138, 1
    %v9140 = vmax.f32 %v9138, %v9139
    %v9141 = vsel %vm1218, %v8799, -inf
    %v9142 = vrot.slane %v9141, 4
    %v9143 = vmax.f32 %v9141, %v9142
    %v9144 = vrot.slane %v9143, 2
    %v9145 = vmax.f32 %v9143, %v9144
    %v9146 = vrot.slane %v9145, 1
    %v9147 = vmax.f32 %v9145, %v9146
    %v9148 = vsel %vm1218, %v8807, -inf
    %v9149 = vrot.slane %v9148, 4
    %v9150 = vmax.f32 %v9148, %v9149
    %v9151 = vrot.slane %v9150, 2
    %v9152 = vmax.f32 %v9150, %v9151
    %v9153 = vrot.slane %v9152, 1
    %v9154 = vmax.f32 %v9152, %v9153
    %v9155 = vsel %vm1218, %v8806, -inf
    %v9156 = vrot.slane %v9155, 4
    %v9157 = vmax.f32 %v9155, %v9156
    %v9158 = vrot.slane %v9157, 2
    %v9159 = vmax.f32 %v9157, %v9158
    %v9160 = vrot.slane %v9159, 1
    %v9161 = vmax.f32 %v9159, %v9160
    %v9162 = vsel %vm1218, %v8808, -inf
    %v9163 = vrot.slane %v9162, 4
    %v9164 = vmax.f32 %v9162, %v9163
    %v9165 = vrot.slane %v9164, 2
    %v9166 = vmax.f32 %v9164, %v9165
    %v9167 = vrot.slane %v9166, 1
    %v9168 = vmax.f32 %v9166, %v9167
    %v9169 = vsel %vm1218, %v8816, -inf
    %v9170 = vrot.slane %v9169, 4
    %v9171 = vmax.f32 %v9169, %v9170
    %v9172 = vrot.slane %v9171, 2
    %v9173 = vmax.f32 %v9171, %v9172
    %v9174 = vrot.slane %v9173, 1
    %v9175 = vmax.f32 %v9173, %v9174
    %v9176 = vsel %vm1218, %v8824, -inf
    %v9177 = vrot.slane %v9176, 4
    %v9178 = vmax.f32 %v9176, %v9177
    %v9179 = vrot.slane %v9178, 2
    %v9180 = vmax.f32 %v9178, %v9179
    %v9181 = vrot.slane %v9180, 1
    %v9182 = vmax.f32 %v9180, %v9181
    %v9183 = vsel %vm1218, %v8823, -inf
    %v9184 = vrot.slane %v9183, 4
    %v9185 = vmax.f32 %v9183, %v9184
    %v9186 = vrot.slane %v9185, 2
    %v9187 = vmax.f32 %v9185, %v9186
    %v9188 = vrot.slane %v9187, 1
    %v9189 = vmax.f32 %v9187, %v9188
    %v9190 = vsel %vm1218, %v8825, -inf
    %v9191 = vrot.slane %v9190, 4
    %v9192 = vmax.f32 %v9190, %v9191
    %v9193 = vrot.slane %v9192, 2
    %v9194 = vmax.f32 %v9192, %v9193
    %v9195 = vrot.slane %v9194, 1
    %v9196 = vmax.f32 %v9194, %v9195
    %v9197 = vsel %vm1218, %v8833, -inf
    %v9198 = vrot.slane %v9197, 4
    %v9199 = vmax.f32 %v9197, %v9198
    %v9200 = vrot.slane %v9199, 2
    %v9201 = vmax.f32 %v9199, %v9200
    %v9202 = vrot.slane %v9201, 1
    %v9203 = vmax.f32 %v9201, %v9202
    %v9204 = vsel %vm1218, %v8841, -inf
    %v9205 = vrot.slane %v9204, 4
    %v9206 = vmax.f32 %v9204, %v9205
    %v9207 = vrot.slane %v9206, 2
    %v9208 = vmax.f32 %v9206, %v9207
    %v9209 = vrot.slane %v9208, 1
    %v9210 = vmax.f32 %v9208, %v9209
    %v9211 = vsel %vm1218, %v8840, -inf
    %v9212 = vrot.slane %v9211, 4
    %v9213 = vmax.f32 %v9211, %v9212
    %v9214 = vrot.slane %v9213, 2
    %v9215 = vmax.f32 %v9213, %v9214
    %v9216 = vrot.slane %v9215, 1
    %v9217 = vmax.f32 %v9215, %v9216
    %v9218 = vsel %vm1218, %v8842, -inf
    %v9219 = vrot.slane %v9218, 4
    %v9220 = vmax.f32 %v9218, %v9219
    %v9221 = vrot.slane %v9220, 2
    %v9222 = vmax.f32 %v9220, %v9221
    %v9223 = vrot.slane %v9222, 1
    %v9224 = vmax.f32 %v9222, %v9223
    %v9225 = vsel %vm1218, %v8850, -inf
    %v9226 = vrot.slane %v9225, 4
    %v9227 = vmax.f32 %v9225, %v9226
    %v9228 = vrot.slane %v9227, 2
    %v9229 = vmax.f32 %v9227, %v9228
    %v9230 = vrot.slane %v9229, 1
    %v9231 = vmax.f32 %v9229, %v9230
    %v9232 = vsel %vm1218, %v8858, -inf
    %v9233 = vrot.slane %v9232, 4
    %v9234 = vmax.f32 %v9232, %v9233
    %v9235 = vrot.slane %v9234, 2
    %v9236 = vmax.f32 %v9234, %v9235
    %v9237 = vrot.slane %v9236, 1
    %v9238 = vmax.f32 %v9236, %v9237
    %v9239 = vsel %vm1218, %v8857, -inf
    %v9240 = vrot.slane %v9239, 4
    %v9241 = vmax.f32 %v9239, %v9240
    %v9242 = vrot.slane %v9241, 2
    %v9243 = vmax.f32 %v9241, %v9242
    %v9244 = vrot.slane %v9243, 1
    %v9245 = vmax.f32 %v9243, %v9244
    %v9246 = vsel %vm1218, %v8859, -inf
    %v9247 = vrot.slane %v9246, 4
    %v9248 = vmax.f32 %v9246, %v9247
    %v9249 = vrot.slane %v9248, 2
    %v9250 = vmax.f32 %v9248, %v9249
    %v9251 = vrot.slane %v9250, 1
    %v9252 = vmax.f32 %v9250, %v9251
    %v9253 = vsel %vm1218, %v8867, -inf
    %v9254 = vrot.slane %v9253, 4
    %v9255 = vmax.f32 %v9253, %v9254
    %v9256 = vrot.slane %v9255, 2
    %v9257 = vmax.f32 %v9255, %v9256
    %v9258 = vrot.slane %v9257, 1
    %v9259 = vmax.f32 %v9257, %v9258
    %v9260 = vsel %vm1218, %v8875, -inf
    %v9261 = vrot.slane %v9260, 4
    %v9262 = vmax.f32 %v9260, %v9261
    %v9263 = vrot.slane %v9262, 2
    %v9264 = vmax.f32 %v9262, %v9263
    %v9265 = vrot.slane %v9264, 1
    %v9266 = vmax.f32 %v9264, %v9265
    %v9267 = vsel %vm1218, %v8874, -inf
    %v9268 = vrot.slane %v9267, 4
    %v9269 = vmax.f32 %v9267, %v9268
    %v9270 = vrot.slane %v9269, 2
    %v9271 = vmax.f32 %v9269, %v9270
    %v9272 = vrot.slane %v9271, 1
    %v9273 = vmax.f32 %v9271, %v9272
    %v9274 = vsel %vm1218, %v8876, -inf
    %v9275 = vrot.slane %v9274, 4
    %v9276 = vmax.f32 %v9274, %v9275
    %v9277 = vrot.slane %v9276, 2
    %v9278 = vmax.f32 %v9276, %v9277
    %v9279 = vrot.slane %v9278, 1
    %v9280 = vmax.f32 %v9278, %v9279
    %v9281 = vsel %vm1218, %v8884, -inf
    %v9282 = vrot.slane %v9281, 4
    %v9283 = vmax.f32 %v9281, %v9282
    %v9284 = vrot.slane %v9283, 2
    %v9285 = vmax.f32 %v9283, %v9284
    %v9286 = vrot.slane %v9285, 1
    %v9287 = vmax.f32 %v9285, %v9286
    %v9288 = vsel %vm1218, %v8892, -inf
    %v9289 = vrot.slane %v9288, 4
    %v9290 = vmax.f32 %v9288, %v9289
    %v9291 = vrot.slane %v9290, 2
    %v9292 = vmax.f32 %v9290, %v9291
    %v9293 = vrot.slane %v9292, 1
    %v9294 = vmax.f32 %v9292, %v9293
    %v9295 = vsel %vm1218, %v8891, -inf
    %v9296 = vrot.slane %v9295, 4
    %v9297 = vmax.f32 %v9295, %v9296
    %v9298 = vrot.slane %v9297, 2
    %v9299 = vmax.f32 %v9297, %v9298
    %v9300 = vrot.slane %v9299, 1
    %v9301 = vmax.f32 %v9299, %v9300
    %v9302 = vsel %vm1218, %v8893, -inf
    %v9303 = vrot.slane %v9302, 4
    %v9304 = vmax.f32 %v9302, %v9303
    %v9305 = vrot.slane %v9304, 2
    %v9306 = vmax.f32 %v9304, %v9305
    %v9307 = vrot.slane %v9306, 1
    %v9308 = vmax.f32 %v9306, %v9307
    %v9309 = vsel %vm1218, %v8901, -inf
    %v9310 = vrot.slane %v9309, 4
    %v9311 = vmax.f32 %v9309, %v9310
    %v9312 = vrot.slane %v9311, 2
    %v9313 = vmax.f32 %v9311, %v9312
    %v9314 = vrot.slane %v9313, 1
    %v9315 = vmax.f32 %v9313, %v9314
    %v9316 = vsel %vm1218, %v8909, -inf
    %v9317 = vrot.slane %v9316, 4
    %v9318 = vmax.f32 %v9316, %v9317
    %v9319 = vrot.slane %v9318, 2
    %v9320 = vmax.f32 %v9318, %v9319
    %v9321 = vrot.slane %v9320, 1
    %v9322 = vmax.f32 %v9320, %v9321
    %v9323 = vsel %vm1218, %v8908, -inf
    %v9324 = vrot.slane %v9323, 4
    %v9325 = vmax.f32 %v9323, %v9324
    %v9326 = vrot.slane %v9325, 2
    %v9327 = vmax.f32 %v9325, %v9326
    %v9328 = vrot.slane %v9327, 1
    %v9329 = vmax.f32 %v9327, %v9328
    %v9330 = vsel %vm1218, %v8910, -inf
    %v9331 = vrot.slane %v9330, 4
    %v9332 = vmax.f32 %v9330, %v9331
    %v9333 = vrot.slane %v9332, 2
    %v9334 = vmax.f32 %v9332, %v9333
    %v9335 = vrot.slane %v9334, 1
    %v9336 = vmax.f32 %v9334, %v9335
    %v9337 = vsel %vm1218, %v8918, -inf
    %v9338 = vrot.slane %v9337, 4
    %v9339 = vmax.f32 %v9337, %v9338
    %v9340 = vrot.slane %v9339, 2
    %v9341 = vmax.f32 %v9339, %v9340
    %v9342 = vrot.slane %v9341, 1
    %v9343 = vmax.f32 %v9341, %v9342
    %v9344 = vsel %vm1218, %v8926, -inf
    %v9345 = vrot.slane %v9344, 4
    %v9346 = vmax.f32 %v9344, %v9345
    %v9347 = vrot.slane %v9346, 2
    %v9348 = vmax.f32 %v9346, %v9347
    %v9349 = vrot.slane %v9348, 1
    %v9350 = vmax.f32 %v9348, %v9349
    %v9351 = vsel %vm1218, %v8925, -inf
    %v9352 = vrot.slane %v9351, 4
    %v9353 = vmax.f32 %v9351, %v9352
    %v9354 = vrot.slane %v9353, 2
    %v9355 = vmax.f32 %v9353, %v9354
    %v9356 = vrot.slane %v9355, 1
    %v9357 = vmax.f32 %v9355, %v9356
    %v9358 = vsel %vm1218, %v8927, -inf
    %v9359 = vrot.slane %v9358, 4
    %v9360 = vmax.f32 %v9358, %v9359
    %v9361 = vrot.slane %v9360, 2
    %v9362 = vmax.f32 %v9360, %v9361
    %v9363 = vrot.slane %v9362, 1
    %v9364 = vmax.f32 %v9362, %v9363
    %v9365 = vsel %vm1218, %v8935, -inf
    %v9366 = vrot.slane %v9365, 4
    %v9367 = vmax.f32 %v9365, %v9366
    %v9368 = vrot.slane %v9367, 2
    %v9369 = vmax.f32 %v9367, %v9368
    %v9370 = vrot.slane %v9369, 1
    %v9371 = vmax.f32 %v9369, %v9370
    %v9372 = vsel %vm1218, %v8943, -inf
    %v9373 = vrot.slane %v9372, 4
    %v9374 = vmax.f32 %v9372, %v9373
    %v9375 = vrot.slane %v9374, 2
    %v9376 = vmax.f32 %v9374, %v9375
    %v9377 = vrot.slane %v9376, 1
    %v9378 = vmax.f32 %v9376, %v9377
    %v9379 = vsel %vm1218, %v8942, -inf
    %v9380 = vrot.slane %v9379, 4
    %v9381 = vmax.f32 %v9379, %v9380
    %v9382 = vrot.slane %v9381, 2
    %v9383 = vmax.f32 %v9381, %v9382
    %v9384 = vrot.slane %v9383, 1
    %v9385 = vmax.f32 %v9383, %v9384
    %v9386 = vsel %vm1218, %v8944, -inf
    %v9387 = vrot.slane %v9386, 4
    %v9388 = vmax.f32 %v9386, %v9387
    %v9389 = vrot.slane %v9388, 2
    %v9390 = vmax.f32 %v9388, %v9389
    %v9391 = vrot.slane %v9390, 1
    %v9392 = vmax.f32 %v9390, %v9391
    %v9393 = vmax.f32 %v9007, %v9021
    %v9394 = vmax.f32 %v9014, %v9028
    %v9395 = vmax.f32 %v9035, %v9049
    %v9396 = vmax.f32 %v9042, %v9056
    %v9397 = vmax.f32 %v9063, %v9077
    %v9398 = vmax.f32 %v9070, %v9084
    %v9399 = vmax.f32 %v9091, %v9105
    %v9400 = vmax.f32 %v9098, %v9112
    %v9401 = vmax.f32 %v9119, %v9133
    %v9402 = vmax.f32 %v9126, %v9140
    %v9403 = vmax.f32 %v9147, %v9161
    %v9404 = vmax.f32 %v9154, %v9168
    %v9405 = vmax.f32 %v9175, %v9189
    %v9406 = vmax.f32 %v9182, %v9196
    %v9407 = vmax.f32 %v9203, %v9217
    %v9408 = vmax.f32 %v9210, %v9224
    %v9409 = vmax.f32 %v9231, %v9245
    %v9410 = vmax.f32 %v9238, %v9252
    %v9411 = vmax.f32 %v9259, %v9273
    %v9412 = vmax.f32 %v9266, %v9280
    %v9413 = vmax.f32 %v9287, %v9301
    %v9414 = vmax.f32 %v9294, %v9308
    %v9415 = vmax.f32 %v9315, %v9329
    %v9416 = vmax.f32 %v9322, %v9336
    %v9417 = vmax.f32 %v9343, %v9357
    %v9418 = vmax.f32 %v9350, %v9364
    %v9419 = vmax.f32 %v9371, %v9385
    %v9420 = vmax.f32 %v9378, %v9392
    %v9449 = vsel %vm5554, %v9395, %v9393
    %v9450 = vsel %vm5524, %v9397, %v9449
    %v9451 = vsel %vm5526, %v9399, %v9450
    %v9452 = vsel %vm5528, %v9401, %v9451
    %v9453 = vsel %vm5530, %v9403, %v9452
    %v9454 = vsel %vm5532, %v9405, %v9453
    %v9455 = vsel %vm5554, %v9396, %v9394
    %v9456 = vsel %vm5524, %v9398, %v9455
    %v9457 = vsel %vm5526, %v9400, %v9456
    %v9458 = vsel %vm5528, %v9402, %v9457
    %v9459 = vsel %vm5530, %v9404, %v9458
    %v9460 = vsel %vm5532, %v9406, %v9459
    %v9461 = vsel %vm5554, %v9409, %v9407
    %v9462 = vsel %vm5524, %v9411, %v9461
    %v9463 = vsel %vm5526, %v9413, %v9462
    %v9464 = vsel %vm5528, %v9415, %v9463
    %v9465 = vsel %vm5530, %v9417, %v9464
    %v9466 = vsel %vm5532, %v9419, %v9465
    %v9467 = vsel %vm5554, %v9410, %v9408
    %v9468 = vsel %vm5524, %v9412, %v9467
    %v9469 = vsel %vm5526, %v9414, %v9468
    %v9470 = vsel %vm5528, %v9416, %v9469
    %v9471 = vsel %vm5530, %v9418, %v9470
    %v9472 = vsel %vm5532, %v9420, %v9471
    %v9477 = vcombine.high %v9454, 0.0
    %v9479 = vunpack.c.l.s4 1983009808
    %v9480 = vunpack.c.0.s8 %v9479
    %v9481 = vlaneseq
    %v9482 = vshrl.u32 %v9481, 7
    %v9483 = vsub.s32 %v9480, %v9482
    %v9484 = vrot.slane %v9454, %v9483
    %v9486 = vunpack.c.l.s4 1983009808
    %v9487 = vunpack.c.0.s8 %v9486
    %v9488 = vlaneseq
    %v9489 = vshrl.u32 %v9488, 7
    %v9490 = vsub.s32 %v9487, %v9489
    %v9491 = vrot.slane %v9477, %v9490
    %v9492 = vcombine.high %v9466, 0.0
    %v9494 = vunpack.c.l.s4 1983009808
    %v9495 = vunpack.c.0.s8 %v9494
    %v9496 = vlaneseq
    %v9497 = vshrl.u32 %v9496, 7
    %v9498 = vsub.s32 %v9495, %v9497
    %v9499 = vrot.slane %v9466, %v9498
    %v9501 = vunpack.c.l.s4 1983009808
    %v9502 = vunpack.c.0.s8 %v9501
    %v9503 = vlaneseq
    %v9504 = vshrl.u32 %v9503, 7
    %v9505 = vsub.s32 %v9502, %v9504
    %v9506 = vrot.slane %v9492, %v9505
    %v9507 = vcombine.low %v9484, %v9499
    %v9508 = vcombine.high %v9484, %v9499
    %v9510 = vunpack.c.l.s4 1934713408
    %v9511 = vunpack.c.0.s8 %v9510
    %v9512 = vlaneseq
    %v9513 = vshrl.u32 %v9512, 7
    %v9514 = vsub.s32 %v9511, %v9513
    %v9515 = vrot.slane %v9507, %v9514
    %v9517 = vunpack.c.l.s4 1934713408
    %v9518 = vunpack.c.0.s8 %v9517
    %v9519 = vlaneseq
    %v9520 = vshrl.u32 %v9519, 7
    %v9521 = vsub.s32 %v9518, %v9520
    %v9522 = vrot.slane %v9508, %v9521
    %v9523 = vcombine.low %v9491, %v9506
    %v9524 = vcombine.high %v9491, %v9506
    %v9526 = vunpack.c.l.s4 1934713408
    %v9527 = vunpack.c.0.s8 %v9526
    %v9528 = vlaneseq
    %v9529 = vshrl.u32 %v9528, 7
    %v9530 = vsub.s32 %v9527, %v9529
    %v9531 = vrot.slane %v9523, %v9530
    %v9532 = vcombine.high %v9515, 0.0
    %v9533 = vcombine.high %v9522, 0.0
    %v9534 = vcombine.high %v9531, 0.0
    %v9536 = vunpack.c.l.s4 1934713408
    %v9537 = vunpack.c.0.s8 %v9536
    %v9538 = vlaneseq
    %v9539 = vshrl.u32 %v9538, 7
    %v9540 = vsub.s32 %v9537, %v9539
    %v9541 = vrot.slane %v9524, %v9540
    %v9542 = vcombine.high %v9460, 0.0
    %v9544 = vunpack.c.l.s4 1983009808
    %v9545 = vunpack.c.0.s8 %v9544
    %v9546 = vlaneseq
    %v9547 = vshrl.u32 %v9546, 7
    %v9548 = vsub.s32 %v9545, %v9547
    %v9549 = vrot.slane %v9460, %v9548
    %v9551 = vunpack.c.l.s4 1983009808
    %v9552 = vunpack.c.0.s8 %v9551
    %v9553 = vlaneseq
    %v9554 = vshrl.u32 %v9553, 7
    %v9555 = vsub.s32 %v9552, %v9554
    %v9556 = vrot.slane %v9542, %v9555
    %v9557 = vcombine.high %v9472, 0.0
    %v9559 = vunpack.c.l.s4 1983009808
    %v9560 = vunpack.c.0.s8 %v9559
    %v9561 = vlaneseq
    %v9562 = vshrl.u32 %v9561, 7
    %v9563 = vsub.s32 %v9560, %v9562
    %v9564 = vrot.slane %v9472, %v9563
    %v9566 = vunpack.c.l.s4 1983009808
    %v9567 = vunpack.c.0.s8 %v9566
    %v9568 = vlaneseq
    %v9569 = vshrl.u32 %v9568, 7
    %v9570 = vsub.s32 %v9567, %v9569
    %v9571 = vrot.slane %v9557, %v9570
    %v9572 = vcombine.low %v9549, %v9564
    %v9573 = vcombine.high %v9549, %v9564
    %v9575 = vunpack.c.l.s4 1934713408
    %v9576 = vunpack.c.0.s8 %v9575
    %v9577 = vlaneseq
    %v9578 = vshrl.u32 %v9577, 7
    %v9579 = vsub.s32 %v9576, %v9578
    %v9580 = vrot.slane %v9572, %v9579
    %v9582 = vunpack.c.l.s4 1934713408
    %v9583 = vunpack.c.0.s8 %v9582
    %v9584 = vlaneseq
    %v9585 = vshrl.u32 %v9584, 7
    %v9586 = vsub.s32 %v9583, %v9585
    %v9587 = vrot.slane %v9573, %v9586
    %v9588 = vcombine.low %v9556, %v9571
    %v9589 = vcombine.high %v9556, %v9571
    %v9591 = vunpack.c.l.s4 1934713408
    %v9592 = vunpack.c.0.s8 %v9591
    %v9593 = vlaneseq
    %v9594 = vshrl.u32 %v9593, 7
    %v9595 = vsub.s32 %v9592, %v9594
    %v9596 = vrot.slane %v9588, %v9595
    %v9597 = vcombine.high %v9580, 0.0
    %v9598 = vcombine.high %v9587, 0.0
    %v9599 = vcombine.high %v9596, 0.0
    %v9601 = vunpack.c.l.s4 1934713408
    %v9602 = vunpack.c.0.s8 %v9601
    %v9603 = vlaneseq
    %v9604 = vshrl.u32 %v9603, 7
    %v9605 = vsub.s32 %v9602, %v9604
    %v9606 = vrot.slane %v9589, %v9605
    %v9607 = vld [vmem:[#allocation11] sm:$0xff]
    %v9608 = vld [vmem:[#allocation11 + $0x8] sm:$0xff]
    %v9609 = vld [vmem:[#allocation11 + $0x10] sm:$0xff]
    %v9610 = vld [vmem:[#allocation11 + $0x18] sm:$0xff]
    %v9611 = vld [vmem:[#allocation11 + $0x20] sm:$0xff]
    %v9612 = vld [vmem:[#allocation11 + $0x28] sm:$0xff]
    %v9613 = vld [vmem:[#allocation11 + $0x30] sm:$0xff]
    %v9614 = vld [vmem:[#allocation11 + $0x38] sm:$0xff]
    %v9615 = vld [vmem:[#allocation11 + $0x40] sm:$0xff]
    %v9616 = vld [vmem:[#allocation11 + $0x48] sm:$0xff]
    %v9617 = vld [vmem:[#allocation11 + $0x50] sm:$0xff]
    %v9618 = vld [vmem:[#allocation11 + $0x58] sm:$0xff]
    %v9619 = vld [vmem:[#allocation11 + $0x60] sm:$0xff]
    %v9620 = vld [vmem:[#allocation11 + $0x68] sm:$0xff]
    %v9621 = vld [vmem:[#allocation11 + $0x70] sm:$0xff]
    %v9622 = vld [vmem:[#allocation11 + $0x78] sm:$0xff]
    %v9623 = vld [vmem:[#allocation11 + $0x80] sm:$0xff]
    %v9624 = vld [vmem:[#allocation11 + $0x88] sm:$0xff]
    %v9625 = vld [vmem:[#allocation11 + $0x90] sm:$0xff]
    %v9626 = vld [vmem:[#allocation11 + $0x98] sm:$0xff]
    %v9627 = vld [vmem:[#allocation11 + $0xa0] sm:$0xff]
    %v9628 = vld [vmem:[#allocation11 + $0xa8] sm:$0xff]
    %v9629 = vld [vmem:[#allocation11 + $0xb0] sm:$0xff]
    %v9630 = vld [vmem:[#allocation11 + $0xb8] sm:$0xff]
    %v9631 = vld [vmem:[#allocation11 + $0xc0] sm:$0xff]
    %v9632 = vld [vmem:[#allocation11 + $0xc8] sm:$0xff]
    %v9633 = vld [vmem:[#allocation11 + $0xd0] sm:$0xff]
    %v9634 = vld [vmem:[#allocation11 + $0xd8] sm:$0xff]
    %v9635 = vld [vmem:[#allocation11 + $0xe0] sm:$0xff]
    %v9636 = vld [vmem:[#allocation11 + $0xe8] sm:$0xff]
    %v9637 = vld [vmem:[#allocation11 + $0xf0] sm:$0xff]
    %v9638 = vld [vmem:[#allocation11 + $0xf8] sm:$0xff]
    %v9639 = vld [vmem:[#allocation11 + $0x100] sm:$0xff]
    %v9640 = vld [vmem:[#allocation11 + $0x108] sm:$0xff]
    %v9641 = vld [vmem:[#allocation11 + $0x110] sm:$0xff]
    %v9642 = vld [vmem:[#allocation11 + $0x118] sm:$0xff]
    %v9643 = vld [vmem:[#allocation11 + $0x120] sm:$0xff]
    %v9644 = vld [vmem:[#allocation11 + $0x128] sm:$0xff]
    %v9645 = vld [vmem:[#allocation11 + $0x130] sm:$0xff]
    %v9646 = vld [vmem:[#allocation11 + $0x138] sm:$0xff]
    %v9647 = vld [vmem:[#allocation11 + $0x140] sm:$0xff]
    %v9648 = vld [vmem:[#allocation11 + $0x148] sm:$0xff]
    %v9649 = vld [vmem:[#allocation11 + $0x150] sm:$0xff]
    %v9650 = vld [vmem:[#allocation11 + $0x158] sm:$0xff]
    %v9651 = vld [vmem:[#allocation11 + $0x160] sm:$0xff]
    %v9652 = vld [vmem:[#allocation11 + $0x168] sm:$0xff]
    %v9653 = vld [vmem:[#allocation11 + $0x170] sm:$0xff]
    %v9654 = vld [vmem:[#allocation11 + $0x178] sm:$0xff]
    %v9655 = vld [vmem:[#allocation11 + $0x180] sm:$0xff]
    %v9656 = vld [vmem:[#allocation11 + $0x188] sm:$0xff]
    %v9657 = vld [vmem:[#allocation11 + $0x190] sm:$0xff]
    %v9658 = vld [vmem:[#allocation11 + $0x198] sm:$0xff]
    %v9659 = vld [vmem:[#allocation11 + $0x1a0] sm:$0xff]
    %v9660 = vld [vmem:[#allocation11 + $0x1a8] sm:$0xff]
    %v9661 = vld [vmem:[#allocation11 + $0x1b0] sm:$0xff]
    %v9662 = vld [vmem:[#allocation11 + $0x1b8] sm:$0xff]
    %v9663 = vld [vmem:[#allocation11 + $0x1c0] sm:$0xff]
    %v9664 = vld [vmem:[#allocation11 + $0x1c8] sm:$0xff]
    %v9665 = vld [vmem:[#allocation11 + $0x1d0] sm:$0xff]
    %v9666 = vld [vmem:[#allocation11 + $0x1d8] sm:$0xff]
    %v9667 = vld [vmem:[#allocation11 + $0x1e0] sm:$0xff]
    %v9668 = vld [vmem:[#allocation11 + $0x1e8] sm:$0xff]
    %v9669 = vld [vmem:[#allocation11 + $0x1f0] sm:$0xff]
    %v9670 = vld [vmem:[#allocation11 + $0x1f8] sm:$0xff]
    %v9671 = vld [vmem:[#allocation11 + $0x200] sm:$0xff]
    %v9672 = vld [vmem:[#allocation11 + $0x208] sm:$0xff]
    %v9673 = vld [vmem:[#allocation11 + $0x210] sm:$0xff]
    %v9674 = vld [vmem:[#allocation11 + $0x218] sm:$0xff]
    %v9675 = vld [vmem:[#allocation11 + $0x220] sm:$0xff]
    %v9676 = vld [vmem:[#allocation11 + $0x228] sm:$0xff]
    %v9677 = vld [vmem:[#allocation11 + $0x230] sm:$0xff]
    %v9678 = vld [vmem:[#allocation11 + $0x238] sm:$0xff]
    %v9679 = vld [vmem:[#allocation11 + $0x240] sm:$0xff]
    %v9680 = vld [vmem:[#allocation11 + $0x248] sm:$0xff]
    %v9681 = vld [vmem:[#allocation11 + $0x250] sm:$0xff]
    %v9682 = vld [vmem:[#allocation11 + $0x258] sm:$0xff]
    %v9683 = vld [vmem:[#allocation11 + $0x260] sm:$0xff]
    %v9684 = vld [vmem:[#allocation11 + $0x268] sm:$0xff]
    %v9685 = vld [vmem:[#allocation11 + $0x270] sm:$0xff]
    %v9686 = vld [vmem:[#allocation11 + $0x278] sm:$0xff]
    %v9687 = vld [vmem:[#allocation11 + $0x280] sm:$0xff]
    %v9688 = vld [vmem:[#allocation11 + $0x288] sm:$0xff]
    %v9689 = vld [vmem:[#allocation11 + $0x290] sm:$0xff]
    %v9690 = vld [vmem:[#allocation11 + $0x298] sm:$0xff]
    %v9691 = vld [vmem:[#allocation11 + $0x2a0] sm:$0xff]
    %v9692 = vld [vmem:[#allocation11 + $0x2a8] sm:$0xff]
    %v9693 = vld [vmem:[#allocation11 + $0x2b0] sm:$0xff]
    %v9694 = vld [vmem:[#allocation11 + $0x2b8] sm:$0xff]
    %v9695 = vld [vmem:[#allocation11 + $0x2c0] sm:$0xff]
    %v9696 = vld [vmem:[#allocation11 + $0x2c8] sm:$0xff]
    %v9697 = vld [vmem:[#allocation11 + $0x2d0] sm:$0xff]
    %v9698 = vld [vmem:[#allocation11 + $0x2d8] sm:$0xff]
    %v9699 = vld [vmem:[#allocation11 + $0x2e0] sm:$0xff]
    %v9700 = vld [vmem:[#allocation11 + $0x2e8] sm:$0xff]
    %v9701 = vld [vmem:[#allocation11 + $0x2f0] sm:$0xff]
    %v9702 = vld [vmem:[#allocation11 + $0x2f8] sm:$0xff]
    %v9703 = vld [vmem:[#allocation11 + $0x300] sm:$0xff]
    %v9704 = vld [vmem:[#allocation11 + $0x308] sm:$0xff]
    %v9705 = vld [vmem:[#allocation11 + $0x310] sm:$0xff]
    %v9706 = vld [vmem:[#allocation11 + $0x318] sm:$0xff]
    %v9707 = vld [vmem:[#allocation11 + $0x320] sm:$0xff]
    %v9708 = vld [vmem:[#allocation11 + $0x328] sm:$0xff]
    %v9709 = vld [vmem:[#allocation11 + $0x330] sm:$0xff]
    %v9710 = vld [vmem:[#allocation11 + $0x338] sm:$0xff]
    %v9711 = vld [vmem:[#allocation11 + $0x340] sm:$0xff]
    %v9712 = vld [vmem:[#allocation11 + $0x348] sm:$0xff]
    %v9713 = vld [vmem:[#allocation11 + $0x350] sm:$0xff]
    %v9714 = vld [vmem:[#allocation11 + $0x358] sm:$0xff]
    %v9715 = vld [vmem:[#allocation11 + $0x360] sm:$0xff]
    %v9716 = vld [vmem:[#allocation11 + $0x368] sm:$0xff]
    %v9717 = vld [vmem:[#allocation11 + $0x370] sm:$0xff]
    %v9718 = vld [vmem:[#allocation11 + $0x378] sm:$0xff]
    %v9719 = vld [vmem:[#allocation11 + $0x380] sm:$0xff]
    %v9720 = vld [vmem:[#allocation11 + $0x388] sm:$0xff]
    %v9721 = vld [vmem:[#allocation11 + $0x390] sm:$0xff]
    %v9722 = vld [vmem:[#allocation11 + $0x398] sm:$0xff]
    %v9723 = vld [vmem:[#allocation11 + $0x3a0] sm:$0xff]
    %v9724 = vld [vmem:[#allocation11 + $0x3a8] sm:$0xff]
    %v9725 = vld [vmem:[#allocation11 + $0x3b0] sm:$0xff]
    %v9726 = vld [vmem:[#allocation11 + $0x3b8] sm:$0xff]
    %v9727 = vld [vmem:[#allocation11 + $0x3c0] sm:$0xff]
    %v9728 = vld [vmem:[#allocation11 + $0x3c8] sm:$0xff]
    %v9729 = vld [vmem:[#allocation11 + $0x3d0] sm:$0xff]
    %v9730 = vld [vmem:[#allocation11 + $0x3d8] sm:$0xff]
    %v9731 = vld [vmem:[#allocation11 + $0x3e0] sm:$0xff]
    %v9732 = vld [vmem:[#allocation11 + $0x3e8] sm:$0xff]
    %v9733 = vld [vmem:[#allocation11 + $0x3f0] sm:$0xff]
    %v9734 = vld [vmem:[#allocation11 + $0x3f8] sm:$0xff]
    %v9735 = vld [vmem:[#allocation11 + $0x400] sm:$0xff]
    %v9736 = vld [vmem:[#allocation11 + $0x408] sm:$0xff]
    %v9737 = vld [vmem:[#allocation11 + $0x410] sm:$0xff]
    %v9738 = vld [vmem:[#allocation11 + $0x418] sm:$0xff]
    %v9739 = vld [vmem:[#allocation11 + $0x420] sm:$0xff]
    %v9740 = vld [vmem:[#allocation11 + $0x428] sm:$0xff]
    %v9741 = vld [vmem:[#allocation11 + $0x430] sm:$0xff]
    %v9742 = vld [vmem:[#allocation11 + $0x438] sm:$0xff]
    %v9743 = vld [vmem:[#allocation11 + $0x440] sm:$0xff]
    %v9744 = vld [vmem:[#allocation11 + $0x448] sm:$0xff]
    %v9745 = vld [vmem:[#allocation11 + $0x450] sm:$0xff]
    %v9746 = vld [vmem:[#allocation11 + $0x458] sm:$0xff]
    %v9747 = vld [vmem:[#allocation11 + $0x460] sm:$0xff]
    %v9748 = vld [vmem:[#allocation11 + $0x468] sm:$0xff]
    %v9749 = vld [vmem:[#allocation11 + $0x470] sm:$0xff]
    %v9750 = vld [vmem:[#allocation11 + $0x478] sm:$0xff]
    %v9751 = vld [vmem:[#allocation11 + $0x480] sm:$0xff]
    %v9752 = vld [vmem:[#allocation11 + $0x488] sm:$0xff]
    %v9753 = vld [vmem:[#allocation11 + $0x490] sm:$0xff]
    %v9754 = vld [vmem:[#allocation11 + $0x498] sm:$0xff]
    %v9755 = vld [vmem:[#allocation11 + $0x4a0] sm:$0xff]
    %v9756 = vld [vmem:[#allocation11 + $0x4a8] sm:$0xff]
    %v9757 = vld [vmem:[#allocation11 + $0x4b0] sm:$0xff]
    %v9758 = vld [vmem:[#allocation11 + $0x4b8] sm:$0xff]
    %v9759 = vld [vmem:[#allocation11 + $0x4c0] sm:$0xff]
    %v9760 = vld [vmem:[#allocation11 + $0x4c8] sm:$0xff]
    %v9761 = vld [vmem:[#allocation11 + $0x4d0] sm:$0xff]
    %v9762 = vld [vmem:[#allocation11 + $0x4d8] sm:$0xff]
    %v9763 = vld [vmem:[#allocation11 + $0x4e0] sm:$0xff]
    %v9764 = vld [vmem:[#allocation11 + $0x4e8] sm:$0xff]
    %v9765 = vld [vmem:[#allocation11 + $0x4f0] sm:$0xff]
    %v9766 = vld [vmem:[#allocation11 + $0x4f8] sm:$0xff]
    %v9767 = vld [vmem:[#allocation11 + $0x500] sm:$0xff]
    %v9768 = vld [vmem:[#allocation11 + $0x508] sm:$0xff]
    %v9769 = vld [vmem:[#allocation11 + $0x510] sm:$0xff]
    %v9770 = vld [vmem:[#allocation11 + $0x518] sm:$0xff]
    %v9771 = vld [vmem:[#allocation11 + $0x520] sm:$0xff]
    %v9772 = vld [vmem:[#allocation11 + $0x528] sm:$0xff]
    %v9773 = vld [vmem:[#allocation11 + $0x530] sm:$0xff]
    %v9774 = vld [vmem:[#allocation11 + $0x538] sm:$0xff]
    %v9775 = vld [vmem:[#allocation11 + $0x540] sm:$0xff]
    %v9776 = vld [vmem:[#allocation11 + $0x548] sm:$0xff]
    %v9777 = vld [vmem:[#allocation11 + $0x550] sm:$0xff]
    %v9778 = vld [vmem:[#allocation11 + $0x558] sm:$0xff]
    %v9779 = vld [vmem:[#allocation11 + $0x560] sm:$0xff]
    %v9780 = vld [vmem:[#allocation11 + $0x568] sm:$0xff]
    %v9781 = vld [vmem:[#allocation11 + $0x570] sm:$0xff]
    %v9782 = vld [vmem:[#allocation11 + $0x578] sm:$0xff]
    %v9783 = vld [vmem:[#allocation11 + $0x580] sm:$0xff]
    %v9784 = vld [vmem:[#allocation11 + $0x588] sm:$0xff]
    %v9785 = vld [vmem:[#allocation11 + $0x590] sm:$0xff]
    %v9786 = vld [vmem:[#allocation11 + $0x598] sm:$0xff]
    %v9787 = vld [vmem:[#allocation11 + $0x5a0] sm:$0xff]
    %v9788 = vld [vmem:[#allocation11 + $0x5a8] sm:$0xff]
    %v9789 = vld [vmem:[#allocation11 + $0x5b0] sm:$0xff]
    %v9790 = vld [vmem:[#allocation11 + $0x5b8] sm:$0xff]
    %v9791 = vld [vmem:[#allocation11 + $0x5c0] sm:$0xff]
    %v9792 = vld [vmem:[#allocation11 + $0x5c8] sm:$0xff]
    %v9793 = vld [vmem:[#allocation11 + $0x5d0] sm:$0xff]
    %v9794 = vld [vmem:[#allocation11 + $0x5d8] sm:$0xff]
    %v9795 = vld [vmem:[#allocation11 + $0x5e0] sm:$0xff]
    %v9796 = vld [vmem:[#allocation11 + $0x5e8] sm:$0xff]
    %v9797 = vld [vmem:[#allocation11 + $0x5f0] sm:$0xff]
    %v9798 = vld [vmem:[#allocation11 + $0x5f8] sm:$0xff]
    %v9799 = vld [vmem:[#allocation11 + $0x600] sm:$0xff]
    %v9800 = vld [vmem:[#allocation11 + $0x608] sm:$0xff]
    %v9801 = vld [vmem:[#allocation11 + $0x610] sm:$0xff]
    %v9802 = vld [vmem:[#allocation11 + $0x618] sm:$0xff]
    %v9803 = vld [vmem:[#allocation11 + $0x620] sm:$0xff]
    %v9804 = vld [vmem:[#allocation11 + $0x628] sm:$0xff]
    %v9805 = vld [vmem:[#allocation11 + $0x630] sm:$0xff]
    %v9806 = vld [vmem:[#allocation11 + $0x638] sm:$0xff]
    %v9807 = vld [vmem:[#allocation11 + $0x640] sm:$0xff]
    %v9808 = vld [vmem:[#allocation11 + $0x648] sm:$0xff]
    %v9809 = vld [vmem:[#allocation11 + $0x650] sm:$0xff]
    %v9810 = vld [vmem:[#allocation11 + $0x658] sm:$0xff]
    %v9811 = vld [vmem:[#allocation11 + $0x660] sm:$0xff]
    %v9812 = vld [vmem:[#allocation11 + $0x668] sm:$0xff]
    %v9813 = vld [vmem:[#allocation11 + $0x670] sm:$0xff]
    %v9814 = vld [vmem:[#allocation11 + $0x678] sm:$0xff]
    %v9815 = vld [vmem:[#allocation11 + $0x680] sm:$0xff]
    %v9816 = vld [vmem:[#allocation11 + $0x688] sm:$0xff]
    %v9817 = vld [vmem:[#allocation11 + $0x690] sm:$0xff]
    %v9818 = vld [vmem:[#allocation11 + $0x698] sm:$0xff]
    %v9819 = vld [vmem:[#allocation11 + $0x6a0] sm:$0xff]
    %v9820 = vld [vmem:[#allocation11 + $0x6a8] sm:$0xff]
    %v9821 = vld [vmem:[#allocation11 + $0x6b0] sm:$0xff]
    %v9822 = vld [vmem:[#allocation11 + $0x6b8] sm:$0xff]
    %v9823 = vld [vmem:[#allocation11 + $0x6c0] sm:$0xff]
    %v9824 = vld [vmem:[#allocation11 + $0x6c8] sm:$0xff]
    %v9825 = vld [vmem:[#allocation11 + $0x6d0] sm:$0xff]
    %v9826 = vld [vmem:[#allocation11 + $0x6d8] sm:$0xff]
    %v9827 = vld [vmem:[#allocation11 + $0x6e0] sm:$0xff]
    %v9828 = vld [vmem:[#allocation11 + $0x6e8] sm:$0xff]
    %v9829 = vld [vmem:[#allocation11 + $0x6f0] sm:$0xff]
    %v9830 = vld [vmem:[#allocation11 + $0x6f8] sm:$0xff]
    %v9831 = vld [vmem:[#allocation12] sm:$0x1]
    %v9833 = vlaneseq
    %v9834 = vshrl.u32 %v9833, 7
    %v9835 = vsub.s32 0, %v9834
    %v9836 = vrot.slane %v9831, %v9835
    %9838 = vmatprep.subr.mxu0 0.0
    %9839 = vmatpush1.msra.mxu0 %v9607
    %9840 = vmatprep.subr.mxu0 0.0
    %9841 = vmatpush1.msra.mxu0 %v9608
    %9842 = vmatprep.subr.mxu0 0.0
    %9843 = vmatpush1.msra.mxu0 %v9609
    %9844 = vmatprep.subr.mxu0 0.0
    %9845 = vmatpush1.msra.mxu0 %v9610
    %9846 = vmatprep.subr.mxu0 0.0
    %9847 = vmatpush1.msra.mxu0 %v9611
    %9848 = vmatprep.subr.mxu0 0.0
    %9849 = vmatpush1.msra.mxu0 %v9612
    %9850 = vmatprep.subr.mxu0 0.0
    %9851 = vmatpush1.msra.mxu0 %v9613
    %9852 = vmatprep.subr.mxu0 0.0
    %9853 = vmatpush1.msra.mxu0 %v9614
    %9854 = vmatprep.subr.mxu0 0.0
    %9855 = vmatpush1.msra.mxu0 %v9615
    %9856 = vmatprep.subr.mxu0 0.0
    %9857 = vmatpush1.msra.mxu0 %v9616
    %9858 = vmatprep.subr.mxu0 0.0
    %9859 = vmatpush1.msra.mxu0 %v9617
    %9860 = vmatprep.subr.mxu0 0.0
    %9861 = vmatpush1.msra.mxu0 %v9618
    %9862 = vmatprep.subr.mxu0 0.0
    %9863 = vmatpush1.msra.mxu0 %v9619
    %9864 = vmatprep.subr.mxu0 0.0
    %9865 = vmatpush1.msra.mxu0 %v9620
    %9866 = vmatprep.subr.mxu0 0.0
    %9867 = vmatpush1.msra.mxu0 %v9621
    %9868 = vmatprep.subr.mxu0 0.0
    %9869 = vmatpush1.msra.mxu0 %v9622
    %9870 = vmatprep.subr.mxu0 0.0
    %9871 = vmatpush1.msra.mxu0 %v9623
    %9872 = vmatprep.subr.mxu0 0.0
    %9873 = vmatpush1.msra.mxu0 %v9624
    %9874 = vmatprep.subr.mxu0 0.0
    %9875 = vmatpush1.msra.mxu0 %v9625
    %9876 = vmatprep.subr.mxu0 0.0
    %9877 = vmatpush1.msra.mxu0 %v9626
    %9878 = vmatprep.subr.mxu0 0.0
    %9879 = vmatpush1.msra.mxu0 %v9627
    %9880 = vmatprep.subr.mxu0 0.0
    %9881 = vmatpush1.msra.mxu0 %v9628
    %9882 = vmatprep.subr.mxu0 0.0
    %9883 = vmatpush1.msra.mxu0 %v9629
    %9884 = vmatprep.subr.mxu0 0.0
    %9885 = vmatpush1.msra.mxu0 %v9630
    %9886 = vmatprep.subr.mxu0 0.0
    %9887 = vmatpush1.msra.mxu0 %v9631
    %9888 = vmatprep.subr.mxu0 0.0
    %9889 = vmatpush1.msra.mxu0 %v9632
    %9890 = vmatprep.subr.mxu0 0.0
    %9891 = vmatpush1.msra.mxu0 %v9633
    %9892 = vmatprep.subr.mxu0 0.0
    %9893 = vmatpush1.msra.mxu0 %v9634
    %9894 = vmatprep.subr.mxu0 0.0
    %9895 = vmatpush1.msra.mxu0 %v9635
    %9896 = vmatprep.subr.mxu0 0.0
    %9897 = vmatpush1.msra.mxu0 %v9636
    %9898 = vmatprep.subr.mxu0 0.0
    %9899 = vmatpush1.msra.mxu0 %v9637
    %9900 = vmatprep.subr.mxu0 0.0
    %9901 = vmatpush1.msra.mxu0 %v9638
    %9902 = vmatprep.mubr.f32.mxu0 %v9580
    %9903 = vmatmul.mubr.f32.gmra.mrb[0].mxu0 %v9515
    %v9904 = vpop.f32.mrb[0].mxu0
    %v9905 = vadd.f32 %v9836, %v9904
    %v9906 = vpop.f32.mrb[0].mxu0
    %9907 = vdwg.mxu0
    %9908 = vmatprep.subr.mxu0 0.0
    %9909 = vmatpush1.msra.mxu0 %v9639
    %9910 = vmatprep.subr.mxu0 0.0
    %9911 = vmatpush1.msra.mxu0 %v9640
    %9912 = vmatprep.subr.mxu0 0.0
    %9913 = vmatpush1.msra.mxu0 %v9641
    %9914 = vmatprep.subr.mxu0 0.0
    %9915 = vmatpush1.msra.mxu0 %v9642
    %9916 = vmatprep.subr.mxu0 0.0
    %9917 = vmatpush1.msra.mxu0 %v9643
    %9918 = vmatprep.subr.mxu0 0.0
    %9919 = vmatpush1.msra.mxu0 %v9644
    %9920 = vmatprep.subr.mxu0 0.0
    %9921 = vmatpush1.msra.mxu0 %v9645
    %9922 = vmatprep.subr.mxu0 0.0
    %9923 = vmatpush1.msra.mxu0 %v9646
    %9924 = vmatprep.subr.mxu0 0.0
    %9925 = vmatpush1.msra.mxu0 %v9647
    %9926 = vmatprep.subr.mxu0 0.0
    %9927 = vmatpush1.msra.mxu0 %v9648
    %9928 = vmatprep.subr.mxu0 0.0
    %9929 = vmatpush1.msra.mxu0 %v9649
    %9930 = vmatprep.subr.mxu0 0.0
    %9931 = vmatpush1.msra.mxu0 %v9650
    %9932 = vmatprep.subr.mxu0 0.0
    %9933 = vmatpush1.msra.mxu0 %v9651
    %9934 = vmatprep.subr.mxu0 0.0
    %9935 = vmatpush1.msra.mxu0 %v9652
    %9936 = vmatprep.subr.mxu0 0.0
    %9937 = vmatpush1.msra.mxu0 %v9653
    %9938 = vmatprep.subr.mxu0 0.0
    %9939 = vmatpush1.msra.mxu0 %v9654
    %9940 = vmatprep.subr.mxu0 0.0
    %9941 = vmatpush1.msra.mxu0 %v9655
    %9942 = vmatprep.subr.mxu0 0.0
    %9943 = vmatpush1.msra.mxu0 %v9656
    %9944 = vmatprep.subr.mxu0 0.0
    %9945 = vmatpush1.msra.mxu0 %v9657
    %9946 = vmatprep.subr.mxu0 0.0
    %9947 = vmatpush1.msra.mxu0 %v9658
    %9948 = vmatprep.subr.mxu0 0.0
    %9949 = vmatpush1.msra.mxu0 %v9659
    %9950 = vmatprep.subr.mxu0 0.0
    %9951 = vmatpush1.msra.mxu0 %v9660
    %9952 = vmatprep.subr.mxu0 0.0
    %9953 = vmatpush1.msra.mxu0 %v9661
    %9954 = vmatprep.subr.mxu0 0.0
    %9955 = vmatpush1.msra.mxu0 %v9662
    %9956 = vmatprep.subr.mxu0 0.0
    %9957 = vmatpush1.msra.mxu0 %v9663
    %9958 = vmatprep.subr.mxu0 0.0
    %9959 = vmatpush1.msra.mxu0 %v9664
    %9960 = vmatprep.subr.mxu0 0.0
    %9961 = vmatpush1.msra.mxu0 %v9665
    %9962 = vmatprep.subr.mxu0 0.0
    %9963 = vmatpush1.msra.mxu0 %v9666
    %9964 = vmatprep.subr.mxu0 0.0
    %9965 = vmatpush1.msra.mxu0 %v9667
    %9966 = vmatprep.subr.mxu0 0.0
    %9967 = vmatpush1.msra.mxu0 %v9668
    %9968 = vmatprep.subr.mxu0 0.0
    %9969 = vmatpush1.msra.mxu0 %v9669
    %9970 = vmatprep.subr.mxu0 0.0
    %9971 = vmatpush1.msra.mxu0 %v9670
    %9972 = vmatprep.mubr.f32.mxu0 %v9597
    %9973 = vmatmul.mubr.f32.gmra.mrb[0].mxu0 %v9532
    %v9974 = vpop.f32.mrb[0].mxu0
    %v9975 = vadd.f32 %v9905, %v9974
    %v9976 = vpop.f32.mrb[0].mxu0
    %9977 = vdwg.mxu0
    %9978 = vmatprep.subr.mxu0 0.0
    %9979 = vmatpush1.msra.mxu0 %v9671
    %9980 = vmatprep.subr.mxu0 0.0
    %9981 = vmatpush1.msra.mxu0 %v9672
    %9982 = vmatprep.subr.mxu0 0.0
    %9983 = vmatpush1.msra.mxu0 %v9673
    %9984 = vmatprep.subr.mxu0 0.0
    %9985 = vmatpush1.msra.mxu0 %v9674
    %9986 = vmatprep.subr.mxu0 0.0
    %9987 = vmatpush1.msra.mxu0 %v9675
    %9988 = vmatprep.subr.mxu0 0.0
    %9989 = vmatpush1.msra.mxu0 %v9676
    %9990 = vmatprep.subr.mxu0 0.0
    %9991 = vmatpush1.msra.mxu0 %v9677
    %9992 = vmatprep.subr.mxu0 0.0
    %9993 = vmatpush1.msra.mxu0 %v9678
    %9994 = vmatprep.subr.mxu0 0.0
    %9995 = vmatpush1.msra.mxu0 %v9679
    %9996 = vmatprep.subr.mxu0 0.0
    %9997 = vmatpush1.msra.mxu0 %v9680
    %9998 = vmatprep.subr.mxu0 0.0
    %9999 = vmatpush1.msra.mxu0 %v9681
    %10000 = vmatprep.subr.mxu0 0.0
    %10001 = vmatpush1.msra.mxu0 %v9682
    %10002 = vmatprep.subr.mxu0 0.0
    %10003 = vmatpush1.msra.mxu0 %v9683
    %10004 = vmatprep.subr.mxu0 0.0
    %10005 = vmatpush1.msra.mxu0 %v9684
    %10006 = vmatprep.subr.mxu0 0.0
    %10007 = vmatpush1.msra.mxu0 %v9685
    %10008 = vmatprep.subr.mxu0 0.0
    %10009 = vmatpush1.msra.mxu0 %v9686
    %10010 = vmatprep.subr.mxu0 0.0
    %10011 = vmatpush1.msra.mxu0 %v9687
    %10012 = vmatprep.subr.mxu0 0.0
    %10013 = vmatpush1.msra.mxu0 %v9688
    %10014 = vmatprep.subr.mxu0 0.0
    %10015 = vmatpush1.msra.mxu0 %v9689
    %10016 = vmatprep.subr.mxu0 0.0
    %10017 = vmatpush1.msra.mxu0 %v9690
    %10018 = vmatprep.subr.mxu0 0.0
    %10019 = vmatpush1.msra.mxu0 %v9691
    %10020 = vmatprep.subr.mxu0 0.0
    %10021 = vmatpush1.msra.mxu0 %v9692
    %10022 = vmatprep.subr.mxu0 0.0
    %10023 = vmatpush1.msra.mxu0 %v9693
    %10024 = vmatprep.subr.mxu0 0.0
    %10025 = vmatpush1.msra.mxu0 %v9694
    %10026 = vmatprep.subr.mxu0 0.0
    %10027 = vmatpush1.msra.mxu0 %v9695
    %10028 = vmatprep.subr.mxu0 0.0
    %10029 = vmatpush1.msra.mxu0 %v9696
    %10030 = vmatprep.subr.mxu0 0.0
    %10031 = vmatpush1.msra.mxu0 %v9697
    %10032 = vmatprep.subr.mxu0 0.0
    %10033 = vmatpush1.msra.mxu0 %v9698
    %10034 = vmatprep.subr.mxu0 0.0
    %10035 = vmatpush1.msra.mxu0 %v9699
    %10036 = vmatprep.subr.mxu0 0.0
    %10037 = vmatpush1.msra.mxu0 %v9700
    %10038 = vmatprep.subr.mxu0 0.0
    %10039 = vmatpush1.msra.mxu0 %v9701
    %10040 = vmatprep.subr.mxu0 0.0
    %10041 = vmatpush1.msra.mxu0 %v9702
    %10042 = vmatprep.mubr.f32.mxu0 %v9587
    %10043 = vmatmul.mubr.f32.gmra.mrb[0].mxu0 %v9522
    %v10044 = vpop.f32.mrb[0].mxu0
    %v10045 = vadd.f32 %v9975, %v10044
    %v10046 = vpop.f32.mrb[0].mxu0
    %10047 = vdwg.mxu0
    %10048 = vmatprep.subr.mxu0 0.0
    %10049 = vmatpush1.msra.mxu0 %v9703
    %10050 = vmatprep.subr.mxu0 0.0
    %10051 = vmatpush1.msra.mxu0 %v9704
    %10052 = vmatprep.subr.mxu0 0.0
    %10053 = vmatpush1.msra.mxu0 %v9705
    %10054 = vmatprep.subr.mxu0 0.0
    %10055 = vmatpush1.msra.mxu0 %v9706
    %10056 = vmatprep.subr.mxu0 0.0
    %10057 = vmatpush1.msra.mxu0 %v9707
    %10058 = vmatprep.subr.mxu0 0.0
    %10059 = vmatpush1.msra.mxu0 %v9708
    %10060 = vmatprep.subr.mxu0 0.0
    %10061 = vmatpush1.msra.mxu0 %v9709
    %10062 = vmatprep.subr.mxu0 0.0
    %10063 = vmatpush1.msra.mxu0 %v9710
    %10064 = vmatprep.subr.mxu0 0.0
    %10065 = vmatpush1.msra.mxu0 %v9711
    %10066 = vmatprep.subr.mxu0 0.0
    %10067 = vmatpush1.msra.mxu0 %v9712
    %10068 = vmatprep.subr.mxu0 0.0
    %10069 = vmatpush1.msra.mxu0 %v9713
    %10070 = vmatprep.subr.mxu0 0.0
    %10071 = vmatpush1.msra.mxu0 %v9714
    %10072 = vmatprep.subr.mxu0 0.0
    %10073 = vmatpush1.msra.mxu0 %v9715
    %10074 = vmatprep.subr.mxu0 0.0
    %10075 = vmatpush1.msra.mxu0 %v9716
    %10076 = vmatprep.subr.mxu0 0.0
    %10077 = vmatpush1.msra.mxu0 %v9717
    %10078 = vmatprep.subr.mxu0 0.0
    %10079 = vmatpush1.msra.mxu0 %v9718
    %10080 = vmatprep.subr.mxu0 0.0
    %10081 = vmatpush1.msra.mxu0 %v9719
    %10082 = vmatprep.subr.mxu0 0.0
    %10083 = vmatpush1.msra.mxu0 %v9720
    %10084 = vmatprep.subr.mxu0 0.0
    %10085 = vmatpush1.msra.mxu0 %v9721
    %10086 = vmatprep.subr.mxu0 0.0
    %10087 = vmatpush1.msra.mxu0 %v9722
    %10088 = vmatprep.subr.mxu0 0.0
    %10089 = vmatpush1.msra.mxu0 %v9723
    %10090 = vmatprep.subr.mxu0 0.0
    %10091 = vmatpush1.msra.mxu0 %v9724
    %10092 = vmatprep.subr.mxu0 0.0
    %10093 = vmatpush1.msra.mxu0 %v9725
    %10094 = vmatprep.subr.mxu0 0.0
    %10095 = vmatpush1.msra.mxu0 %v9726
    %10096 = vmatprep.subr.mxu0 0.0
    %10097 = vmatpush1.msra.mxu0 %v9727
    %10098 = vmatprep.subr.mxu0 0.0
    %10099 = vmatpush1.msra.mxu0 %v9728
    %10100 = vmatprep.subr.mxu0 0.0
    %10101 = vmatpush1.msra.mxu0 %v9729
    %10102 = vmatprep.subr.mxu0 0.0
    %10103 = vmatpush1.msra.mxu0 %v9730
    %10104 = vmatprep.subr.mxu0 0.0
    %10105 = vmatpush1.msra.mxu0 %v9731
    %10106 = vmatprep.subr.mxu0 0.0
    %10107 = vmatpush1.msra.mxu0 %v9732
    %10108 = vmatprep.subr.mxu0 0.0
    %10109 = vmatpush1.msra.mxu0 %v9733
    %10110 = vmatprep.subr.mxu0 0.0
    %10111 = vmatpush1.msra.mxu0 %v9734
    %10112 = vmatprep.mubr.f32.mxu0 %v9598
    %10113 = vmatmul.mubr.f32.gmra.mrb[0].mxu0 %v9533
    %v10114 = vpop.f32.mrb[0].mxu0
    %v10115 = vadd.f32 %v10045, %v10114
    %v10116 = vpop.f32.mrb[0].mxu0
    %10117 = vdwg.mxu0
    %10118 = vmatprep.subr.mxu0 0.0
    %10119 = vmatpush1.msra.mxu0 %v9735
    %10120 = vmatprep.subr.mxu0 0.0
    %10121 = vmatpush1.msra.mxu0 %v9736
    %10122 = vmatprep.subr.mxu0 0.0
    %10123 = vmatpush1.msra.mxu0 %v9737
    %10124 = vmatprep.subr.mxu0 0.0
    %10125 = vmatpush1.msra.mxu0 %v9738
    %10126 = vmatprep.subr.mxu0 0.0
    %10127 = vmatpush1.msra.mxu0 %v9739
    %10128 = vmatprep.subr.mxu0 0.0
    %10129 = vmatpush1.msra.mxu0 %v9740
    %10130 = vmatprep.subr.mxu0 0.0
    %10131 = vmatpush1.msra.mxu0 %v9741
    %10132 = vmatprep.subr.mxu0 0.0
    %10133 = vmatpush1.msra.mxu0 %v9742
    %10134 = vmatprep.subr.mxu0 0.0
    %10135 = vmatpush1.msra.mxu0 %v9743
    %10136 = vmatprep.subr.mxu0 0.0
    %10137 = vmatpush1.msra.mxu0 %v9744
    %10138 = vmatprep.subr.mxu0 0.0
    %10139 = vmatpush1.msra.mxu0 %v9745
    %10140 = vmatprep.subr.mxu0 0.0
    %10141 = vmatpush1.msra.mxu0 %v9746
    %10142 = vmatprep.subr.mxu0 0.0
    %10143 = vmatpush1.msra.mxu0 %v9747
    %10144 = vmatprep.subr.mxu0 0.0
    %10145 = vmatpush1.msra.mxu0 %v9748
    %10146 = vmatprep.subr.mxu0 0.0
    %10147 = vmatpush1.msra.mxu0 %v9749
    %10148 = vmatprep.subr.mxu0 0.0
    %10149 = vmatpush1.msra.mxu0 %v9750
    %10150 = vmatprep.subr.mxu0 0.0
    %10151 = vmatpush1.msra.mxu0 %v9751
    %10152 = vmatprep.subr.mxu0 0.0
    %10153 = vmatpush1.msra.mxu0 %v9752
    %10154 = vmatprep.subr.mxu0 0.0
    %10155 = vmatpush1.msra.mxu0 %v9753
    %10156 = vmatprep.subr.mxu0 0.0
    %10157 = vmatpush1.msra.mxu0 %v9754
    %10158 = vmatprep.subr.mxu0 0.0
    %10159 = vmatpush1.msra.mxu0 %v9755
    %10160 = vmatprep.subr.mxu0 0.0
    %10161 = vmatpush1.msra.mxu0 %v9756
    %10162 = vmatprep.subr.mxu0 0.0
    %10163 = vmatpush1.msra.mxu0 %v9757
    %10164 = vmatprep.subr.mxu0 0.0
    %10165 = vmatpush1.msra.mxu0 %v9758
    %10166 = vmatprep.subr.mxu0 0.0
    %10167 = vmatpush1.msra.mxu0 %v9759
    %10168 = vmatprep.subr.mxu0 0.0
    %10169 = vmatpush1.msra.mxu0 %v9760
    %10170 = vmatprep.subr.mxu0 0.0
    %10171 = vmatpush1.msra.mxu0 %v9761
    %10172 = vmatprep.subr.mxu0 0.0
    %10173 = vmatpush1.msra.mxu0 %v9762
    %10174 = vmatprep.subr.mxu0 0.0
    %10175 = vmatpush1.msra.mxu0 %v9763
    %10176 = vmatprep.subr.mxu0 0.0
    %10177 = vmatpush1.msra.mxu0 %v9764
    %10178 = vmatprep.subr.mxu0 0.0
    %10179 = vmatpush1.msra.mxu0 %v9765
    %10180 = vmatprep.subr.mxu0 0.0
    %10181 = vmatpush1.msra.mxu0 %v9766
    %10182 = vmatprep.mubr.f32.mxu0 %v9596
    %10183 = vmatmul.mubr.f32.gmra.mrb[0].mxu0 %v9531
    %v10184 = vpop.f32.mrb[0].mxu0
    %v10185 = vadd.f32 %v10115, %v10184
    %v10186 = vpop.f32.mrb[0].mxu0
    %10187 = vdwg.mxu0
    %10188 = vmatprep.subr.mxu0 0.0
    %10189 = vmatpush1.msra.mxu0 %v9767
    %10190 = vmatprep.subr.mxu0 0.0
    %10191 = vmatpush1.msra.mxu0 %v9768
    %10192 = vmatprep.subr.mxu0 0.0
    %10193 = vmatpush1.msra.mxu0 %v9769
    %10194 = vmatprep.subr.mxu0 0.0
    %10195 = vmatpush1.msra.mxu0 %v9770
    %10196 = vmatprep.subr.mxu0 0.0
    %10197 = vmatpush1.msra.mxu0 %v9771
    %10198 = vmatprep.subr.mxu0 0.0
    %10199 = vmatpush1.msra.mxu0 %v9772
    %10200 = vmatprep.subr.mxu0 0.0
    %10201 = vmatpush1.msra.mxu0 %v9773
    %10202 = vmatprep.subr.mxu0 0.0
    %10203 = vmatpush1.msra.mxu0 %v9774
    %10204 = vmatprep.subr.mxu0 0.0
    %10205 = vmatpush1.msra.mxu0 %v9775
    %10206 = vmatprep.subr.mxu0 0.0
    %10207 = vmatpush1.msra.mxu0 %v9776
    %10208 = vmatprep.subr.mxu0 0.0
    %10209 = vmatpush1.msra.mxu0 %v9777
    %10210 = vmatprep.subr.mxu0 0.0
    %10211 = vmatpush1.msra.mxu0 %v9778
    %10212 = vmatprep.subr.mxu0 0.0
    %10213 = vmatpush1.msra.mxu0 %v9779
    %10214 = vmatprep.subr.mxu0 0.0
    %10215 = vmatpush1.msra.mxu0 %v9780
    %10216 = vmatprep.subr.mxu0 0.0
    %10217 = vmatpush1.msra.mxu0 %v9781
    %10218 = vmatprep.subr.mxu0 0.0
    %10219 = vmatpush1.msra.mxu0 %v9782
    %10220 = vmatprep.subr.mxu0 0.0
    %10221 = vmatpush1.msra.mxu0 %v9783
    %10222 = vmatprep.subr.mxu0 0.0
    %10223 = vmatpush1.msra.mxu0 %v9784
    %10224 = vmatprep.subr.mxu0 0.0
    %10225 = vmatpush1.msra.mxu0 %v9785
    %10226 = vmatprep.subr.mxu0 0.0
    %10227 = vmatpush1.msra.mxu0 %v9786
    %10228 = vmatprep.subr.mxu0 0.0
    %10229 = vmatpush1.msra.mxu0 %v9787
    %10230 = vmatprep.subr.mxu0 0.0
    %10231 = vmatpush1.msra.mxu0 %v9788
    %10232 = vmatprep.subr.mxu0 0.0
    %10233 = vmatpush1.msra.mxu0 %v9789
    %10234 = vmatprep.subr.mxu0 0.0
    %10235 = vmatpush1.msra.mxu0 %v9790
    %10236 = vmatprep.subr.mxu0 0.0
    %10237 = vmatpush1.msra.mxu0 %v9791
    %10238 = vmatprep.subr.mxu0 0.0
    %10239 = vmatpush1.msra.mxu0 %v9792
    %10240 = vmatprep.subr.mxu0 0.0
    %10241 = vmatpush1.msra.mxu0 %v9793
    %10242 = vmatprep.subr.mxu0 0.0
    %10243 = vmatpush1.msra.mxu0 %v9794
    %10244 = vmatprep.subr.mxu0 0.0
    %10245 = vmatpush1.msra.mxu0 %v9795
    %10246 = vmatprep.subr.mxu0 0.0
    %10247 = vmatpush1.msra.mxu0 %v9796
    %10248 = vmatprep.subr.mxu0 0.0
    %10249 = vmatpush1.msra.mxu0 %v9797
    %10250 = vmatprep.subr.mxu0 0.0
    %10251 = vmatpush1.msra.mxu0 %v9798
    %10252 = vmatprep.mubr.f32.mxu0 %v9599
    %10253 = vmatmul.mubr.f32.gmra.mrb[0].mxu0 %v9534
    %v10254 = vpop.f32.mrb[0].mxu0
    %v10255 = vadd.f32 %v10185, %v10254
    %v10256 = vpop.f32.mrb[0].mxu0
    %10257 = vdwg.mxu0
    %10258 = vmatprep.subr.mxu0 0.0
    %10259 = vmatpush1.msra.mxu0 %v9799
    %10260 = vmatprep.subr.mxu0 0.0
    %10261 = vmatpush1.msra.mxu0 %v9800
    %10262 = vmatprep.subr.mxu0 0.0
    %10263 = vmatpush1.msra.mxu0 %v9801
    %10264 = vmatprep.subr.mxu0 0.0
    %10265 = vmatpush1.msra.mxu0 %v9802
    %10266 = vmatprep.subr.mxu0 0.0
    %10267 = vmatpush1.msra.mxu0 %v9803
    %10268 = vmatprep.subr.mxu0 0.0
    %10269 = vmatpush1.msra.mxu0 %v9804
    %10270 = vmatprep.subr.mxu0 0.0
    %10271 = vmatpush1.msra.mxu0 %v9805
    %10272 = vmatprep.subr.mxu0 0.0
    %10273 = vmatpush1.msra.mxu0 %v9806
    %10274 = vmatprep.subr.mxu0 0.0
    %10275 = vmatpush1.msra.mxu0 %v9807
    %10276 = vmatprep.subr.mxu0 0.0
    %10277 = vmatpush1.msra.mxu0 %v9808
    %10278 = vmatprep.subr.mxu0 0.0
    %10279 = vmatpush1.msra.mxu0 %v9809
    %10280 = vmatprep.subr.mxu0 0.0
    %10281 = vmatpush1.msra.mxu0 %v9810
    %10282 = vmatprep.subr.mxu0 0.0
    %10283 = vmatpush1.msra.mxu0 %v9811
    %10284 = vmatprep.subr.mxu0 0.0
    %10285 = vmatpush1.msra.mxu0 %v9812
    %10286 = vmatprep.subr.mxu0 0.0
    %10287 = vmatpush1.msra.mxu0 %v9813
    %10288 = vmatprep.subr.mxu0 0.0
    %10289 = vmatpush1.msra.mxu0 %v9814
    %10290 = vmatprep.subr.mxu0 0.0
    %10291 = vmatpush1.msra.mxu0 %v9815
    %10292 = vmatprep.subr.mxu0 0.0
    %10293 = vmatpush1.msra.mxu0 %v9816
    %10294 = vmatprep.subr.mxu0 0.0
    %10295 = vmatpush1.msra.mxu0 %v9817
    %10296 = vmatprep.subr.mxu0 0.0
    %10297 = vmatpush1.msra.mxu0 %v9818
    %10298 = vmatprep.subr.mxu0 0.0
    %10299 = vmatpush1.msra.mxu0 %v9819
    %10300 = vmatprep.subr.mxu0 0.0
    %10301 = vmatpush1.msra.mxu0 %v9820
    %10302 = vmatprep.subr.mxu0 0.0
    %10303 = vmatpush1.msra.mxu0 %v9821
    %10304 = vmatprep.subr.mxu0 0.0
    %10305 = vmatpush1.msra.mxu0 %v9822
    %10306 = vmatprep.subr.mxu0 0.0
    %10307 = vmatpush1.msra.mxu0 %v9823
    %10308 = vmatprep.subr.mxu0 0.0
    %10309 = vmatpush1.msra.mxu0 %v9824
    %10310 = vmatprep.subr.mxu0 0.0
    %10311 = vmatpush1.msra.mxu0 %v9825
    %10312 = vmatprep.subr.mxu0 0.0
    %10313 = vmatpush1.msra.mxu0 %v9826
    %10314 = vmatprep.subr.mxu0 0.0
    %10315 = vmatpush1.msra.mxu0 %v9827
    %10316 = vmatprep.subr.mxu0 0.0
    %10317 = vmatpush1.msra.mxu0 %v9828
    %10318 = vmatprep.subr.mxu0 0.0
    %10319 = vmatpush1.msra.mxu0 %v9829
    %10320 = vmatprep.subr.mxu0 0.0
    %10321 = vmatpush1.msra.mxu0 %v9830
    %10322 = vmatprep.mubr.f32.mxu0 %v9606
    %10323 = vmatmul.mubr.f32.gmra.mrb[0].mxu0 %v9541
    %v10324 = vpop.f32.mrb[0].mxu0
    %v10325 = vadd.f32 %v10255, %v10324
    %v10326 = vpop.f32.mrb[0].mxu0
    %10327 = vdwg.mxu0
    %v10328 = vmax.f32 %v10325, 0.0
    %v10329 = vld [vmem:[#allocation14] sm:$0xff]
    %v10330 = vld [vmem:[#allocation14 + $0x8] sm:$0xff]
    %v10331 = vld [vmem:[#allocation14 + $0x10] sm:$0xff]
    %v10332 = vld [vmem:[#allocation14 + $0x18] sm:$0xff]
    %v10333 = vld [vmem:[#allocation14 + $0x20] sm:$0xff]
    %v10334 = vld [vmem:[#allocation14 + $0x28] sm:$0xff]
    %v10335 = vld [vmem:[#allocation14 + $0x30] sm:$0xff]
    %v10336 = vld [vmem:[#allocation14 + $0x38] sm:$0xff]
    %v10337 = vld [vmem:[#allocation14 + $0x40] sm:$0xff]
    %v10338 = vld [vmem:[#allocation14 + $0x48] sm:$0xff]
    %v10339 = vld [vmem:[#allocation14 + $0x50] sm:$0xff]
    %v10340 = vld [vmem:[#allocation14 + $0x58] sm:$0xff]
    %v10341 = vld [vmem:[#allocation14 + $0x60] sm:$0xff]
    %v10342 = vld [vmem:[#allocation14 + $0x68] sm:$0xff]
    %v10343 = vld [vmem:[#allocation14 + $0x70] sm:$0xff]
    %v10344 = vld [vmem:[#allocation14 + $0x78] sm:$0xff]
    %v10345 = vld [vmem:[#allocation15] sm:$0x1]
    %v10347 = vlaneseq
    %v10348 = vshrl.u32 %v10347, 7
    %v10349 = vsub.s32 0, %v10348
    %v10350 = vrot.slane %v10345, %v10349
    %10352 = vmatprep.subr.mxu0 0.0
    %10353 = vmatpush1.msra.mxu0 %v10329
    %10354 = vmatprep.subr.mxu0 0.0
    %10355 = vmatpush1.msra.mxu0 %v10330
    %10356 = vmatprep.subr.mxu0 0.0
    %10357 = vmatpush1.msra.mxu0 %v10331
    %10358 = vmatprep.subr.mxu0 0.0
    %10359 = vmatpush1.msra.mxu0 %v10332
    %10360 = vmatprep.subr.mxu0 0.0
    %10361 = vmatpush1.msra.mxu0 %v10333
    %10362 = vmatprep.subr.mxu0 0.0
    %10363 = vmatpush1.msra.mxu0 %v10334
    %10364 = vmatprep.subr.mxu0 0.0
    %10365 = vmatpush1.msra.mxu0 %v10335
    %10366 = vmatprep.subr.mxu0 0.0
    %10367 = vmatpush1.msra.mxu0 %v10336
    %10368 = vmatprep.subr.mxu0 0.0
    %10369 = vmatpush1.msra.mxu0 %v10337
    %10370 = vmatprep.subr.mxu0 0.0
    %10371 = vmatpush1.msra.mxu0 %v10338
    %10372 = vmatprep.subr.mxu0 0.0
    %10373 = vmatpush1.msra.mxu0 %v10339
    %10374 = vmatprep.subr.mxu0 0.0
    %10375 = vmatpush1.msra.mxu0 %v10340
    %10376 = vmatprep.subr.mxu0 0.0
    %10377 = vmatpush1.msra.mxu0 %v10341
    %10378 = vmatprep.subr.mxu0 0.0
    %10379 = vmatpush1.msra.mxu0 %v10342
    %10380 = vmatprep.subr.mxu0 0.0
    %10381 = vmatpush1.msra.mxu0 %v10343
    %10382 = vmatprep.subr.mxu0 0.0
    %10383 = vmatpush1.msra.mxu0 %v10344
    %10384 = vmatprep.subr.mxu0 0.0
    %10385 = vmatpush1.msra.mxu0 0.0
    %10386 = vmatprep.subr.mxu0 0.0
    %10387 = vmatpush1.msra.mxu0 0.0
    %10388 = vmatprep.subr.mxu0 0.0
    %10389 = vmatpush1.msra.mxu0 0.0
    %10390 = vmatprep.subr.mxu0 0.0
    %10391 = vmatpush1.msra.mxu0 0.0
    %10392 = vmatprep.subr.mxu0 0.0
    %10393 = vmatpush1.msra.mxu0 0.0
    %10394 = vmatprep.subr.mxu0 0.0
    %10395 = vmatpush1.msra.mxu0 0.0
    %10396 = vmatprep.subr.mxu0 0.0
    %10397 = vmatpush1.msra.mxu0 0.0
    %10398 = vmatprep.subr.mxu0 0.0
    %10399 = vmatpush1.msra.mxu0 0.0
    %10400 = vmatprep.subr.mxu0 0.0
    %10401 = vmatpush1.msra.mxu0 0.0
    %10402 = vmatprep.subr.mxu0 0.0
    %10403 = vmatpush1.msra.mxu0 0.0
    %10404 = vmatprep.subr.mxu0 0.0
    %10405 = vmatpush1.msra.mxu0 0.0
    %10406 = vmatprep.subr.mxu0 0.0
    %10407 = vmatpush1.msra.mxu0 0.0
    %10408 = vmatprep.subr.mxu0 0.0
    %10409 = vmatpush1.msra.mxu0 0.0
    %10410 = vmatprep.subr.mxu0 0.0
    %10411 = vmatpush1.msra.mxu0 0.0
    %10412 = vmatprep.subr.mxu0 0.0
    %10413 = vmatpush1.msra.mxu0 0.0
    %10414 = vmatprep.subr.mxu0 0.0
    %10415 = vmatpush1.msra.mxu0 0.0
    %10416 = vmatprep.mubr.f32.mxu0 0.0
    %10417 = vmatmul.mubr.f32.gmra.mrb[0].mxu0 %v10328
    %v10418 = vpop.f32.mrb[0].mxu0
    %v10419 = vadd.f32 %v10350, %v10418
    %v10420 = vpop.f32.mrb[0].mxu0
    %10421 = vdwg.mxu0
    %10422 = vst [vmem:[#allocation17] sm:$0x3] %v10419
    // Predicated region
    $region70: #{lenet_forward.1} parent=1 // pred_check
      _
    $region71: #{lenet_forward.1} parent=1 // pred_check_branch
      %10424 = sbr.rel (0) target = $region73
    $region72: #{lenet_forward.1} parent=1 // pred_region
      %s10426 = ssub.s32 32, 32
      %10427 = vsyncadd [#allocation5], %s10426
      %s10429 = sshll.u32 [#allocation17], 4
      %s10430 = int_to_ptr.vmem [resolvable:$true] %s10429
      %10432 = dma.vmem_to_hbm [thread:$0]  %s10430, 32, %s9, [#allocation5]
    $region73: #{lenet_forward.1} parent=1 // pred_fallthru
      _
    // Predicated region
    $region74: #{lenet_forward.1} parent=1 // pred_check
      _
    $region75: #{lenet_forward.1} parent=1 // pred_check_branch
      %10434 = sbr.rel (0) target = $region77
    $region76: #{lenet_forward.1} parent=1 // pred_region
      %10435 = dma.done [#allocation5], 32
    $region77: #{lenet_forward.1} parent=1 // pred_fallthru
      _
    %10436 = vsyncpa [#allocation4], 1
    %10437 = vsyncpa [#allocation7], 1
    %10438 = vsyncpa [#allocation10], 1
    %10439 = vsyncpa [#allocation13], 1
    %10440 = vsyncpa [#allocation16], 1
    %10441 = vsyncpa [#allocation5], 1

</llo_original>
